<compile_context>
chip_gen: v6e
topology: v6e:2x2x1
jax: 0.10.0
libtpu: 0.0.40
codegen_flags: <defaults>
</compile_context>

<pallas_src>
import math
import functools

import jax
import jax.numpy as jnp
from jax.experimental import pallas as pl
from jax.experimental.pallas import tpu as pltpu

EPS = 1e-5
LANE = 128                              # pad channel dims to lane multiples
VMEM_LIMIT_BYTES = 48 * 1024 * 1024     # explicit scoped-VMEM cap (v7x-safe)


def _cpad(c):
    return ((c + LANE - 1) // LANE) * LANE


def _pick_tile(total, target):
    """Largest tile <= target that divides `total` and is a sublane multiple
    of 8 (or the full extent)."""
    for t in range(min(total, target), 0, -1):
        if total % t == 0 and (t % 8 == 0 or t == total):
            return t
    return total


# ----------------------------- Pallas kernels -----------------------------

def _front_kernel(pe_ref, po_ref, w_ref, b_ref, s_ref, t_ref, o_ref):
    """5x5 Conv2d(1->C) as an im2col matmul + bias + BN2d + ReLU, with the
    MaxPool2d((1,2)) over freq fused as an elementwise max of the even/odd
    freq-column results.  Row-tiled; bf16 in, f32 accumulate, bf16 out."""
    def branch(p_ref):
        y = jnp.dot(p_ref[...], w_ref[...], preferred_element_type=jnp.float32)
        y = (y + b_ref[...]) * s_ref[...] + t_ref[...]
        return jnp.maximum(y, 0.0)
    o_ref[...] = jnp.maximum(branch(pe_ref), branch(po_ref)).astype(o_ref.dtype)


def _make_block_kernel(stride, has_ds, L_out):
    """Fully fused BasicBlock1D: conv1(stride)+BN1+ReLU, conv2+BN2, residual
    (1x1-conv downsample or identity) add, final ReLU — one pallas_call.
    Input block is the halo-padded (L_in+2, NB, Cin) tile; conv taps are built
    in-kernel, flattened to (L_out*NB, Cin) so the MXU sees a big M."""

    def kernel(xp_ref, w1_ref, s1_ref, t1_ref, w2_ref, s2_ref, t2_ref, *rest):
        if has_ds:
            wd_ref, sd_ref, td_ref, o_ref = rest
        else:
            (o_ref,) = rest
        _, NB, Cin = xp_ref.shape
        Cout = o_ref.shape[-1]
        M = L_out * NB

        def tap(k):
            # k-th conv tap of the L-padded input, flattened to (L_out*NB, Cin).
            if stride == 1:
                return xp_ref[k:k + L_out].reshape(M, Cin)
            slabs = [xp_ref[k + stride * l] for l in range(L_out)]
            return slabs[0] if len(slabs) == 1 else jnp.concatenate(slabs, axis=0)

        tap1 = tap(1)                 # also the downsample / identity input

        # conv1 (3 shifted matmuls) + BN1 + ReLU
        acc = jnp.dot(tap(0), w1_ref[0], preferred_element_type=jnp.float32)
        acc = acc + jnp.dot(tap1, w1_ref[1], preferred_element_type=jnp.float32)
        acc = acc + jnp.dot(tap(2), w1_ref[2], preferred_element_type=jnp.float32)
        h1 = jnp.maximum(acc * s1_ref[...] + t1_ref[...], 0.0)   # (M, Cout) f32

        # conv2 (stride 1) + BN2; intermediate stays in VMEM/vregs
        h1_3d = h1.reshape(L_out, NB, Cout)
        z = jnp.zeros((1, NB, Cout), jnp.float32)
        h1p = jnp.concatenate([z, h1_3d, z], axis=0)             # (L_out+2, NB, Cout)

        def h1_tap(k):
            return h1p[k:k + L_out].reshape(M, Cout).astype(jnp.bfloat16)

        acc2 = jnp.dot(h1_tap(0), w2_ref[0], preferred_element_type=jnp.float32)
        acc2 = acc2 + jnp.dot(h1_tap(1), w2_ref[1], preferred_element_type=jnp.float32)
        acc2 = acc2 + jnp.dot(h1_tap(2), w2_ref[2], preferred_element_type=jnp.float32)
        y = acc2 * s2_ref[...] + t2_ref[...]

        # residual path
        if has_ds:
            res = jnp.dot(tap1, wd_ref[0], preferred_element_type=jnp.float32)
            res = res * sd_ref[...] + td_ref[...]
        else:
            res = tap1.astype(jnp.float32)     # identity (stride 1, Cin == Cout)

        y = jnp.maximum(y + res, 0.0)
        o_ref[...] = y.reshape(L_out, NB, Cout).astype(o_ref.dtype)

    return kernel


def _pool_bn_kernel(x_ref, s_ref, t_ref, o_ref):
    # AdaptiveAvgPool1d(1) over L + final BatchNorm1d, batched over NB samples.
    m = jnp.mean(x_ref[...].astype(jnp.float32), axis=0)        # (NB, C)
    o_ref[...] = m * s_ref[...] + t_ref[...]


# ----------------------------- Pallas wrappers -----------------------------

def conv2d_bn_relu_maxpool_front(x, w_mat, bias, scale, shift, *, row_tile=512):
    """Conv2d(1->C,5x5,pad 2) + BN2d + ReLU + MaxPool2d((1,2)) in one kernel.

    x: (b, T, F) f32.  Returns (F2, b*T, Cp) bf16, the L-major layout used by
    the 1-D residual stages.  Im2col patch extraction is wrapper-side XLA glue.
    """
    b, T, F = x.shape
    N, F2 = b * T, F // 2
    Cp = w_mat.shape[1]
    R2 = N * F2

    xp = jnp.pad(x, ((0, 0), (2, 2), (2, 2)))
    patches = jnp.stack(
        [xp[:, i:i + T, j:j + F] for i in range(5) for j in range(5)], axis=-1)
    patches = patches[:, :, :F2 * 2, :].reshape(N, F2, 2, 25)
    patches = jnp.transpose(patches, (1, 0, 2, 3))      # rows ordered (f2, n)
    pe = patches[:, :, 0, :].reshape(R2, 25).astype(jnp.bfloat16)
    po = patches[:, :, 1, :].reshape(R2, 25).astype(jnp.bfloat16)

    TM = _pick_tile(R2, row_tile)
    out = pl.pallas_call(
        _front_kernel,
        grid=(R2 // TM,),
        in_specs=[
            pl.BlockSpec((TM, 25), lambda i: (i, 0)),
            pl.BlockSpec((TM, 25), lambda i: (i, 0)),
            pl.BlockSpec((25, Cp), lambda i: (0, 0)),
            pl.BlockSpec((1, Cp), lambda i: (0, 0)),
            pl.BlockSpec((1, Cp), lambda i: (0, 0)),
            pl.BlockSpec((1, Cp), lambda i: (0, 0)),
        ],
        out_specs=pl.BlockSpec((TM, Cp), lambda i: (i, 0)),
        out_shape=jax.ShapeDtypeStruct((R2, Cp), jnp.bfloat16),
        compiler_params=pltpu.CompilerParams(
            dimension_semantics=("parallel",),
            vmem_limit_bytes=VMEM_LIMIT_BYTES),
    )(pe, po, w_mat, bias, scale, shift)
    return out.reshape(F2, N, Cp)


def fused_basic_block(h, blk, *, sample_tile=256):
    """One BasicBlock1D as a single pallas_call.  h: (L_in, N, Cin_p) bf16."""
    L_in, N, Cin_p = h.shape
    stride = blk["stride"]
    L_out = (L_in + 2 - 3) // stride + 1
    Cout_p = blk["w1"].shape[2]
    has_ds = blk["wd"] is not None
    NB = _pick_tile(N, sample_tile)

    hp = jnp.pad(h, ((1, 1), (0, 0), (0, 0)))        # halo for the 3-tap conv

    inputs = [hp, blk["w1"], blk["s1"], blk["t1"],
              blk["w2"], blk["s2"], blk["t2"]]
    in_specs = [
        pl.BlockSpec((L_in + 2, NB, Cin_p), lambda i: (0, i, 0)),
        pl.BlockSpec((3, Cin_p, Cout_p), lambda i: (0, 0, 0)),
        pl.BlockSpec((1, Cout_p), lambda i: (0, 0)),
        pl.BlockSpec((1, Cout_p), lambda i: (0, 0)),
        pl.BlockSpec((3, Cout_p, Cout_p), lambda i: (0, 0, 0)),
        pl.BlockSpec((1, Cout_p), lambda i: (0, 0)),
        pl.BlockSpec((1, Cout_p), lambda i: (0, 0)),
    ]
    if has_ds:
        inputs += [blk["wd"], blk["sd"], blk["td"]]
        in_specs += [
            pl.BlockSpec((1, Cin_p, Cout_p), lambda i: (0, 0, 0)),
            pl.BlockSpec((1, Cout_p), lambda i: (0, 0)),
            pl.BlockSpec((1, Cout_p), lambda i: (0, 0)),
        ]

    return pl.pallas_call(
        _make_block_kernel(stride, has_ds, L_out),
        grid=(N // NB,),
        in_specs=in_specs,
        out_specs=pl.BlockSpec((L_out, NB, Cout_p), lambda i: (0, i, 0)),
        out_shape=jax.ShapeDtypeStruct((L_out, N, Cout_p), jnp.bfloat16),
        compiler_params=pltpu.CompilerParams(
            dimension_semantics=("parallel",),
            vmem_limit_bytes=VMEM_LIMIT_BYTES),
    )(*inputs)


def avgpool_bn(h, scale, shift, *, sample_tile=512):
    """h: (L, N, Cp) bf16 -> (N, Cp) f32: mean over L + final BatchNorm1d."""
    L, N, Cp = h.shape
    NB = _pick_tile(N, sample_tile)
    return pl.pallas_call(
        _pool_bn_kernel,
        grid=(N // NB,),
        in_specs=[
            pl.BlockSpec((L, NB, Cp), lambda i: (0, i, 0)),
            pl.BlockSpec((1, Cp), lambda i: (0, 0)),
            pl.BlockSpec((1, Cp), lambda i: (0, 0)),
        ],
        out_specs=pl.BlockSpec((NB, Cp), lambda i: (i, 0)),
        out_shape=jax.ShapeDtypeStruct((N, Cp), jnp.float32),
        compiler_params=pltpu.CompilerParams(
            dimension_semantics=("parallel",),
            vmem_limit_bytes=VMEM_LIMIT_BYTES),
    )(h, scale, shift)


# ----------------------------- parameters -----------------------------

def _bn_params(c, cp):
    gamma = jnp.ones((c,), jnp.float32)
    beta = jnp.zeros((c,), jnp.float32)
    mean = jnp.zeros((c,), jnp.float32)
    var = jnp.ones((c,), jnp.float32)
    scale = gamma / jnp.sqrt(var + EPS)
    shift = beta - mean * scale
    scale = jnp.pad(scale, (0, cp - c), constant_values=1.0).reshape(1, cp)
    shift = jnp.pad(shift, (0, cp - c)).reshape(1, cp)
    return scale, shift


def _conv1d_weight(key, cout, cin, k, cin_p, cout_p):
    # matches ResNet1D init: normal(0, sqrt(2 / (kernel_size * out_channels)))
    std = math.sqrt(2.0 / (k * cout))
    w = std * jax.random.normal(key, (cout, cin, k), dtype=jnp.float32)
    w = jnp.transpose(w, (2, 1, 0))                      # (K, Cin, Cout)
    w = jnp.pad(w, ((0, 0), (0, cin_p - cin), (0, cout_p - cout)))
    return w.astype(jnp.bfloat16)


def init_params(key, in_dim, out_dim):
    keys = iter(jax.random.split(key, 64))
    cp0 = _cpad(in_dim)
    params = {}
    # Conv2d(1->in_dim, 5x5, bias=True) front, stored as an im2col (25, Cp) matrix.
    w2d = 0.1 * jax.random.normal(next(keys), (in_dim, 1, 5, 5), jnp.float32)
    b2d = 0.01 * jax.random.normal(next(keys), (in_dim,), jnp.float32)
    wmat = jnp.transpose(w2d.reshape(in_dim, 25))        # (25, in_dim)
    params["w2d_mat"] = jnp.pad(wmat, ((0, 0), (0, cp0 - in_dim))).astype(jnp.bfloat16)
    params["b2d"] = jnp.pad(b2d, (0, cp0 - in_dim)).reshape(1, cp0)
    params["bn2d"] = _bn_params(in_dim, cp0)

    layers_cfg = [(64, 2, 1), (128, 2, 2), (256, 2, 2), (out_dim, 2, 2)]
    inplanes = in_dim
    layers = []
    for planes, blocks, stride in layers_cfg:
        layer = []
        for bidx in range(blocks):
            s = stride if bidx == 0 else 1
            cin_p, cout_p = _cpad(inplanes), _cpad(planes)
            blk = {"stride": s}
            blk["w1"] = _conv1d_weight(next(keys), planes, inplanes, 3, cin_p, cout_p)
            blk["s1"], blk["t1"] = _bn_params(planes, cout_p)
            blk["w2"] = _conv1d_weight(next(keys), planes, planes, 3, cout_p, cout_p)
            blk["s2"], blk["t2"] = _bn_params(planes, cout_p)
            if bidx == 0 and (s != 1 or inplanes != planes):
                blk["wd"] = _conv1d_weight(next(keys), planes, inplanes, 1, cin_p, cout_p)
                blk["sd"], blk["td"] = _bn_params(planes, cout_p)
            else:
                blk["wd"] = None
            layer.append(blk)
            inplanes = planes
        layers.append(layer)
    params["layers"] = layers
    params["bn_final"] = _bn_params(out_dim, _cpad(out_dim))
    return params


# ----------------------------- forward -----------------------------

def resnet1d_forward(params, x, x_lens, in_dim, out_dim):
    b, T, F = x.shape
    # Conv2d + BN2d + ReLU + MaxPool2d((1,2)) fused -> (F2, b*T, Cp0) bf16.
    h = conv2d_bn_relu_maxpool_front(
        x, params["w2d_mat"], params["b2d"], *params["bn2d"])
    # layer1..layer4: each BasicBlock1D is one fused pallas_call.
    for layer in params["layers"]:
        for blk in layer:
            h = fused_basic_block(h, blk)
    # AdaptiveAvgPool1d(1) + BatchNorm1d(out_dim), batched over samples.
    y = avgpool_bn(h, *params["bn_final"])               # (b*T, Cp_out) f32
    y = y[:, :out_dim].reshape(b, T, out_dim)            # strip channel padding
    # TODO(synk): the 4-frame temporal mean below runs as plain XLA ops; it
    # could be fused into the pooling kernel for a small extra saving.
    if T % 4 != 0:
        y = y[:, : -(T % 4), :]
    y = y.reshape(b, y.shape[1] // 4, 4, out_dim).mean(axis=2)
    return y, x_lens // 4


# ----------------------------- main -----------------------------

if __name__ == "__main__":
    in_dim, out_dim = 4, 32
    b, T, F = 2, 8, 16

    key = jax.random.PRNGKey(0)
    kp, kx = jax.random.split(key)
    params = init_params(kp, in_dim, out_dim)

    x = jax.random.normal(kx, (b, T, F), dtype=jnp.float32)
    x_lens = jnp.array([8, 6], dtype=jnp.int32)

    fwd = jax.jit(functools.partial(resnet1d_forward, params,
                                    in_dim=in_dim, out_dim=out_dim))
    y, y_lens = fwd(x, x_lens)
    jax.block_until_ready((y, y_lens))

    assert y.shape == (b, T // 4, out_dim), y.shape
    assert y_lens.shape == (b,)
    assert bool(jnp.all(jnp.isfinite(y)))
    print("KERNEL_OK")
</pallas_src>

<mosaic_0001>
module attributes {stable_mosaic.version = 11 : i64} {
  func.func @_front_kernel(%arg0: i32, %arg1: memref<128x25xbf16, #tpu.memory_space<vmem>>, %arg2: memref<128x25xbf16, #tpu.memory_space<vmem>>, %arg3: memref<25x128xbf16, #tpu.memory_space<vmem>>, %arg4: memref<1x128xf32, #tpu.memory_space<vmem>>, %arg5: memref<1x128xf32, #tpu.memory_space<vmem>>, %arg6: memref<1x128xf32, #tpu.memory_space<vmem>>, %arg7: memref<128x128xbf16, #tpu.memory_space<vmem>>) attributes {dimension_semantics = [#tpu.dimension_semantics<parallel>], iteration_bounds = array<i64: 1>, scalar_prefetch = 0 : i64, scratch_operands = 0 : i64, tpu.core_type = #tpu.core_type<tc>, window_params = [{transform_indices = @transform_0, window_bounds = array<i64: 128, 25>}, {transform_indices = @transform_1, window_bounds = array<i64: 128, 25>}, {pipeline_mode = #tpu.pipeline_mode<synchronous>, transform_indices = @transform_2, window_bounds = array<i64: 25, 128>}, {pipeline_mode = #tpu.pipeline_mode<synchronous>, transform_indices = @transform_3, window_bounds = array<i64: 1, 128>}, {pipeline_mode = #tpu.pipeline_mode<synchronous>, transform_indices = @transform_4, window_bounds = array<i64: 1, 128>}, {pipeline_mode = #tpu.pipeline_mode<synchronous>, transform_indices = @transform_5, window_bounds = array<i64: 1, 128>}, {transform_indices = @transform_6, window_bounds = array<i64: 128, 128>}]} {
    %c0 = arith.constant 0 : index
    %c0_0 = arith.constant 0 : index
    %0 = vector.load %arg1[%c0, %c0_0] : memref<128x25xbf16, #tpu.memory_space<vmem>>, vector<128x25xbf16>
    %c0_1 = arith.constant 0 : index
    %c0_2 = arith.constant 0 : index
    %1 = vector.load %arg3[%c0_1, %c0_2] : memref<25x128xbf16, #tpu.memory_space<vmem>>, vector<25x128xbf16>
    %cst = arith.constant dense<0.000000e+00> : vector<128x128xf32>
    %2 = tpu.matmul %0, %1, %cst {dimension_numbers = #tpu.dot_dimension_numbers<[1], [0], [0], [1], [0, 0, 1, 1], [], []>} : vector<128x25xbf16>, vector<25x128xbf16>, vector<128x128xf32> -> vector<128x128xf32>
    %c0_3 = arith.constant 0 : index
    %c0_4 = arith.constant 0 : index
    %3 = vector.load %arg4[%c0_3, %c0_4] : memref<1x128xf32, #tpu.memory_space<vmem>>, vector<1x128xf32>
    %4 = vector.broadcast %3 : vector<1x128xf32> to vector<128x128xf32>
    %5 = arith.addf %2, %4 : vector<128x128xf32>
    %c0_5 = arith.constant 0 : index
    %c0_6 = arith.constant 0 : index
    %6 = vector.load %arg5[%c0_5, %c0_6] : memref<1x128xf32, #tpu.memory_space<vmem>>, vector<1x128xf32>
    %7 = vector.broadcast %6 : vector<1x128xf32> to vector<128x128xf32>
    %8 = arith.mulf %5, %7 : vector<128x128xf32>
    %c0_7 = arith.constant 0 : index
    %c0_8 = arith.constant 0 : index
    %9 = vector.load %arg6[%c0_7, %c0_8] : memref<1x128xf32, #tpu.memory_space<vmem>>, vector<1x128xf32>
    %10 = vector.broadcast %9 : vector<1x128xf32> to vector<128x128xf32>
    %11 = arith.addf %8, %10 : vector<128x128xf32>
    %cst_9 = arith.constant 0.000000e+00 : f32
    %12 = vector.broadcast %cst_9 : f32 to vector<128x128xf32>
    %13 = arith.maximumf %11, %12 : vector<128x128xf32>
    %c0_10 = arith.constant 0 : index
    %c0_11 = arith.constant 0 : index
    %14 = vector.load %arg2[%c0_10, %c0_11] : memref<128x25xbf16, #tpu.memory_space<vmem>>, vector<128x25xbf16>
    %c0_12 = arith.constant 0 : index
    %c0_13 = arith.constant 0 : index
    %15 = vector.load %arg3[%c0_12, %c0_13] : memref<25x128xbf16, #tpu.memory_space<vmem>>, vector<25x128xbf16>
    %cst_14 = arith.constant dense<0.000000e+00> : vector<128x128xf32>
    %16 = tpu.matmul %14, %15, %cst_14 {dimension_numbers = #tpu.dot_dimension_numbers<[1], [0], [0], [1], [0, 0, 1, 1], [], []>} : vector<128x25xbf16>, vector<25x128xbf16>, vector<128x128xf32> -> vector<128x128xf32>
    %c0_15 = arith.constant 0 : index
    %c0_16 = arith.constant 0 : index
    %17 = vector.load %arg4[%c0_15, %c0_16] : memref<1x128xf32, #tpu.memory_space<vmem>>, vector<1x128xf32>
    %18 = vector.broadcast %17 : vector<1x128xf32> to vector<128x128xf32>
    %19 = arith.addf %16, %18 : vector<128x128xf32>
    %c0_17 = arith.constant 0 : index
    %c0_18 = arith.constant 0 : index
    %20 = vector.load %arg5[%c0_17, %c0_18] : memref<1x128xf32, #tpu.memory_space<vmem>>, vector<1x128xf32>
    %21 = vector.broadcast %20 : vector<1x128xf32> to vector<128x128xf32>
    %22 = arith.mulf %19, %21 : vector<128x128xf32>
    %c0_19 = arith.constant 0 : index
    %c0_20 = arith.constant 0 : index
    %23 = vector.load %arg6[%c0_19, %c0_20] : memref<1x128xf32, #tpu.memory_space<vmem>>, vector<1x128xf32>
    %24 = vector.broadcast %23 : vector<1x128xf32> to vector<128x128xf32>
    %25 = arith.addf %22, %24 : vector<128x128xf32>
    %cst_21 = arith.constant 0.000000e+00 : f32
    %26 = vector.broadcast %cst_21 : f32 to vector<128x128xf32>
    %27 = arith.maximumf %25, %26 : vector<128x128xf32>
    %28 = arith.maximumf %13, %27 : vector<128x128xf32>
    %29 = arith.truncf %28 : vector<128x128xf32> to vector<128x128xbf16>
    %c0_22 = arith.constant 0 : index
    %c0_23 = arith.constant 0 : index
    %30 = vector.load %arg7[%c0_22, %c0_23] : memref<128x128xbf16, #tpu.memory_space<vmem>>, vector<128x128xbf16>
    tpu.vector_store %arg7[%c0_22, %c0_23], %29 {strides = array<i32>} : memref<128x128xbf16, #tpu.memory_space<vmem>>, vector<128x128xbf16>,
    return
  }
  func.func @transform_0(%arg0: i32) -> (i32, i32) {
    %c0_i32 = arith.constant 0 : i32
    %c0_i32_0 = arith.constant 0 : i32
    return %arg0, %c0_i32 : i32, i32
  }
  func.func @transform_1(%arg0: i32) -> (i32, i32) {
    %c0_i32 = arith.constant 0 : i32
    %c0_i32_0 = arith.constant 0 : i32
    return %arg0, %c0_i32 : i32, i32
  }
  func.func @transform_2(%arg0: i32) -> (i32, i32) {
    %c0_i32 = arith.constant 0 : i32
    %c0_i32_0 = arith.constant 0 : i32
    %c0_i32_1 = arith.constant 0 : i32
    return %c0_i32, %c0_i32_0 : i32, i32
  }
  func.func @transform_3(%arg0: i32) -> (i32, i32) {
    %c0_i32 = arith.constant 0 : i32
    %c0_i32_0 = arith.constant 0 : i32
    %c0_i32_1 = arith.constant 0 : i32
    return %c0_i32, %c0_i32_0 : i32, i32
  }
  func.func @transform_4(%arg0: i32) -> (i32, i32) {
    %c0_i32 = arith.constant 0 : i32
    %c0_i32_0 = arith.constant 0 : i32
    %c0_i32_1 = arith.constant 0 : i32
    return %c0_i32, %c0_i32_0 : i32, i32
  }
  func.func @transform_5(%arg0: i32) -> (i32, i32) {
    %c0_i32 = arith.constant 0 : i32
    %c0_i32_0 = arith.constant 0 : i32
    %c0_i32_1 = arith.constant 0 : i32
    return %c0_i32, %c0_i32_0 : i32, i32
  }
  func.func @transform_6(%arg0: i32) -> (i32, i32) {
    %c0_i32 = arith.constant 0 : i32
    %c0_i32_0 = arith.constant 0 : i32
    return %arg0, %c0_i32 : i32, i32
  }
}

module attributes {stable_mosaic.version = 11 : i64} {
  func.func @kernel(%arg0: i32, %arg1: memref<10x16x128xbf16, #tpu.memory_space<vmem>>, %arg2: memref<3x128x128xbf16, #tpu.memory_space<vmem>>, %arg3: memref<1x128xf32, #tpu.memory_space<vmem>>, %arg4: memref<1x128xf32, #tpu.memory_space<vmem>>, %arg5: memref<3x128x128xbf16, #tpu.memory_space<vmem>>, %arg6: memref<1x128xf32, #tpu.memory_space<vmem>>, %arg7: memref<1x128xf32, #tpu.memory_space<vmem>>, %arg8: memref<1x128x128xbf16, #tpu.memory_space<vmem>>, %arg9: memref<1x128xf32, #tpu.memory_space<vmem>>, %arg10: memref<1x128xf32, #tpu.memory_space<vmem>>, %arg11: memref<8x16x128xbf16, #tpu.memory_space<vmem>>) attributes {dimension_semantics = [#tpu.dimension_semantics<parallel>], iteration_bounds = array<i64: 1>, scalar_prefetch = 0 : i64, scratch_operands = 0 : i64, tpu.core_type = #tpu.core_type<tc>, window_params = [{transform_indices = @transform_0, window_bounds = array<i64: 10, 16, 128>}, {pipeline_mode = #tpu.pipeline_mode<synchronous>, transform_indices = @transform_1, window_bounds = array<i64: 3, 128, 128>}, {pipeline_mode = #tpu.pipeline_mode<synchronous>, transform_indices = @transform_2, window_bounds = array<i64: 1, 128>}, {pipeline_mode = #tpu.pipeline_mode<synchronous>, transform_indices = @transform_3, window_bounds = array<i64: 1, 128>}, {pipeline_mode = #tpu.pipeline_mode<synchronous>, transform_indices = @transform_4, window_bounds = array<i64: 3, 128, 128>}, {pipeline_mode = #tpu.pipeline_mode<synchronous>, transform_indices = @transform_5, window_bounds = array<i64: 1, 128>}, {pipeline_mode = #tpu.pipeline_mode<synchronous>, transform_indices = @transform_6, window_bounds = array<i64: 1, 128>}, {pipeline_mode = #tpu.pipeline_mode<synchronous>, transform_indices = @transform_7, window_bounds = array<i64: 1, 128, 128>}, {pipeline_mode = #tpu.pipeline_mode<synchronous>, transform_indices = @transform_8, window_bounds = array<i64: 1, 128>}, {pipeline_mode = #tpu.pipeline_mode<synchronous>, transform_indices = @transform_9, window_bounds = array<i64: 1, 128>}, {transform_indices = @transform_10, window_bounds = array<i64: 8, 16, 128>}]} {
    %c1 = arith.constant 1 : index
    %c0 = arith.constant 0 : index
    %c0_0 = arith.constant 0 : index
    %0 = vector.load %arg1[%c1, %c0, %c0_0] : memref<10x16x128xbf16, #tpu.memory_space<vmem>>, vector<8x16x128xbf16>
    %1 = vector.shape_cast %0 : vector<8x16x128xbf16> to vector<128x128xbf16>
    %c0_1 = arith.constant 0 : index
    %c0_2 = arith.constant 0 : index
    %c0_3 = arith.constant 0 : index
    %2 = vector.load %arg1[%c0_1, %c0_2, %c0_3] : memref<10x16x128xbf16, #tpu.memory_space<vmem>>, vector<8x16x128xbf16>
    %3 = vector.shape_cast %2 : vector<8x16x128xbf16> to vector<128x128xbf16>
    %c0_4 = arith.constant 0 : index
    %c0_5 = arith.constant 0 : index
    %c0_6 = arith.constant 0 : index
    %4 = vector.load %arg2[%c0_4, %c0_5, %c0_6] : memref<3x128x128xbf16, #tpu.memory_space<vmem>>, vector<1x128x128xbf16>
    %5 = vector.shape_cast %4 : vector<1x128x128xbf16> to vector<128x128xbf16>
    %cst = arith.constant dense<0.000000e+00> : vector<128x128xf32>
    %6 = tpu.matmul %3, %5, %cst {dimension_numbers = #tpu.dot_dimension_numbers<[1], [0], [0], [1], [0, 0, 1, 1], [], []>} : vector<128x128xbf16>, vector<128x128xbf16>, vector<128x128xf32> -> vector<128x128xf32>
    %c1_7 = arith.constant 1 : index
    %c0_8 = arith.constant 0 : index
    %c0_9 = arith.constant 0 : index
    %7 = vector.load %arg2[%c1_7, %c0_8, %c0_9] : memref<3x128x128xbf16, #tpu.memory_space<vmem>>, vector<1x128x128xbf16>
    %8 = vector.shape_cast %7 : vector<1x128x128xbf16> to vector<128x128xbf16>
    %cst_10 = arith.constant dense<0.000000e+00> : vector<128x128xf32>
    %9 = tpu.matmul %1, %8, %cst_10 {dimension_numbers = #tpu.dot_dimension_numbers<[1], [0], [0], [1], [0, 0, 1, 1], [], []>} : vector<128x128xbf16>, vector<128x128xbf16>, vector<128x128xf32> -> vector<128x128xf32>
    %10 = arith.addf %6, %9 : vector<128x128xf32>
    %c2 = arith.constant 2 : index
    %c0_11 = arith.constant 0 : index
    %c0_12 = arith.constant 0 : index
    %11 = vector.load %arg1[%c2, %c0_11, %c0_12] : memref<10x16x128xbf16, #tpu.memory_space<vmem>>, vector<8x16x128xbf16>
    %12 = vector.shape_cast %11 : vector<8x16x128xbf16> to vector<128x128xbf16>
    %c2_13 = arith.constant 2 : index
    %c0_14 = arith.constant 0 : index
    %c0_15 = arith.constant 0 : index
    %13 = vector.load %arg2[%c2_13, %c0_14, %c0_15] : memref<3x128x128xbf16, #tpu.memory_space<vmem>>, vector<1x128x128xbf16>
    %14 = vector.shape_cast %13 : vector<1x128x128xbf16> to vector<128x128xbf16>
    %cst_16 = arith.constant dense<0.000000e+00> : vector<128x128xf32>
    %15 = tpu.matmul %12, %14, %cst_16 {dimension_numbers = #tpu.dot_dimension_numbers<[1], [0], [0], [1], [0, 0, 1, 1], [], []>} : vector<128x128xbf16>, vector<128x128xbf16>, vector<128x128xf32> -> vector<128x128xf32>
    %16 = arith.addf %10, %15 : vector<128x128xf32>
    %c0_17 = arith.constant 0 : index
    %c0_18 = arith.constant 0 : index
    %17 = vector.load %arg3[%c0_17, %c0_18] : memref<1x128xf32, #tpu.memory_space<vmem>>, vector<1x128xf32>
    %18 = vector.broadcast %17 : vector<1x128xf32> to vector<128x128xf32>
    %19 = arith.mulf %16, %18 : vector<128x128xf32>
    %c0_19 = arith.constant 0 : index
    %c0_20 = arith.constant 0 : index
    %20 = vector.load %arg4[%c0_19, %c0_20] : memref<1x128xf32, #tpu.memory_space<vmem>>, vector<1x128xf32>
    %21 = vector.broadcast %20 : vector<1x128xf32> to vector<128x128xf32>
    %22 = arith.addf %19, %21 : vector<128x128xf32>
    %cst_21 = arith.constant 0.000000e+00 : f32
    %23 = vector.broadcast %cst_21 : f32 to vector<128x128xf32>
    %24 = arith.maximumf %22, %23 : vector<128x128xf32>
    %25 = vector.shape_cast %24 : vector<128x128xf32> to vector<8x16x128xf32>
    %cst_22 = arith.constant 0.000000e+00 : f32
    %26 = vector.broadcast %cst_22 : f32 to vector<1x16x128xf32>
    %27 = tpu.concatenate %26, %25, %26 in 0 : vector<1x16x128xf32>, vector<8x16x128xf32>, vector<1x16x128xf32> -> vector<10x16x128xf32>
    %28 = vector.extract_strided_slice %27 {offsets = [0, 0, 0], sizes = [8, 16, 128], strides = [1, 1, 1]} : vector<10x16x128xf32> to vector<8x16x128xf32>
    %29 = vector.shape_cast %28 : vector<8x16x128xf32> to vector<128x128xf32>
    %30 = arith.truncf %29 : vector<128x128xf32> to vector<128x128xbf16>
    %c0_23 = arith.constant 0 : index
    %c0_24 = arith.constant 0 : index
    %c0_25 = arith.constant 0 : index
    %31 = vector.load %arg5[%c0_23, %c0_24, %c0_25] : memref<3x128x128xbf16, #tpu.memory_space<vmem>>, vector<1x128x128xbf16>
    %32 = vector.shape_cast %31 : vector<1x128x128xbf16> to vector<128x128xbf16>
    %cst_26 = arith.constant dense<0.000000e+00> : vector<128x128xf32>
    %33 = tpu.matmul %30, %32, %cst_26 {dimension_numbers = #tpu.dot_dimension_numbers<[1], [0], [0], [1], [0, 0, 1, 1], [], []>} : vector<128x128xbf16>, vector<128x128xbf16>, vector<128x128xf32> -> vector<128x128xf32>
    %34 = vector.extract_strided_slice %27 {offsets = [1, 0, 0], sizes = [8, 16, 128], strides = [1, 1, 1]} : vector<10x16x128xf32> to vector<8x16x128xf32>
    %35 = vector.shape_cast %34 : vector<8x16x128xf32> to vector<128x128xf32>
    %36 = arith.truncf %35 : vector<128x128xf32> to vector<128x128xbf16>
    %c1_27 = arith.constant 1 : index
    %c0_28 = arith.constant 0 : index
    %c0_29 = arith.constant 0 : index
    %37 = vector.load %arg5[%c1_27, %c0_28, %c0_29] : memref<3x128x128xbf16, #tpu.memory_space<vmem>>, vector<1x128x128xbf16>
    %38 = vector.shape_cast %37 : vector<1x128x128xbf16> to vector<128x128xbf16>
    %cst_30 = arith.constant dense<0.000000e+00> : vector<128x128xf32>
    %39 = tpu.matmul %36, %38, %cst_30 {dimension_numbers = #tpu.dot_dimension_numbers<[1], [0], [0], [1], [0, 0, 1, 1], [], []>} : vector<128x128xbf16>, vector<128x128xbf16>, vector<128x128xf32> -> vector<128x128xf32>
    %40 = arith.addf %33, %39 : vector<128x128xf32>
    %41 = vector.extract_strided_slice %27 {offsets = [2, 0, 0], sizes = [8, 16, 128], strides = [1, 1, 1]} : vector<10x16x128xf32> to vector<8x16x128xf32>
    %42 = vector.shape_cast %41 : vector<8x16x128xf32> to vector<128x128xf32>
    %43 = arith.truncf %42 : vector<128x128xf32> to vector<128x128xbf16>
    %c2_31 = arith.constant 2 : index
    %c0_32 = arith.constant 0 : index
    %c0_33 = arith.constant 0 : index
    %44 = vector.load %arg5[%c2_31, %c0_32, %c0_33] : memref<3x128x128xbf16, #tpu.memory_space<vmem>>, vector<1x128x128xbf16>
    %45 = vector.shape_cast %44 : vector<1x128x128xbf16> to vector<128x128xbf16>
    %cst_34 = arith.constant dense<0.000000e+00> : vector<128x128xf32>
    %46 = tpu.matmul %43, %45, %cst_34 {dimension_numbers = #tpu.dot_dimension_numbers<[1], [0], [0], [1], [0, 0, 1, 1], [], []>} : vector<128x128xbf16>, vector<128x128xbf16>, vector<128x128xf32> -> vector<128x128xf32>
    %47 = arith.addf %40, %46 : vector<128x128xf32>
    %c0_35 = arith.constant 0 : index
    %c0_36 = arith.constant 0 : index
    %48 = vector.load %arg6[%c0_35, %c0_36] : memref<1x128xf32, #tpu.memory_space<vmem>>, vector<1x128xf32>
    %49 = vector.broadcast %48 : vector<1x128xf32> to vector<128x128xf32>
    %50 = arith.mulf %47, %49 : vector<128x128xf32>
    %c0_37 = arith.constant 0 : index
    %c0_38 = arith.constant 0 : index
    %51 = vector.load %arg7[%c0_37, %c0_38] : memref<1x128xf32, #tpu.memory_space<vmem>>, vector<1x128xf32>
    %52 = vector.broadcast %51 : vector<1x128xf32> to vector<128x128xf32>
    %53 = arith.addf %50, %52 : vector<128x128xf32>
    %c0_39 = arith.constant 0 : index
    %c0_40 = arith.constant 0 : index
    %c0_41 = arith.constant 0 : index
    %54 = vector.load %arg8[%c0_39, %c0_40, %c0_41] : memref<1x128x128xbf16, #tpu.memory_space<vmem>>, vector<1x128x128xbf16>
    %55 = vector.shape_cast %54 : vector<1x128x128xbf16> to vector<128x128xbf16>
    %cst_42 = arith.constant dense<0.000000e+00> : vector<128x128xf32>
    %56 = tpu.matmul %1, %55, %cst_42 {dimension_numbers = #tpu.dot_dimension_numbers<[1], [0], [0], [1], [0, 0, 1, 1], [], []>} : vector<128x128xbf16>, vector<128x128xbf16>, vector<128x128xf32> -> vector<128x128xf32>
    %c0_43 = arith.constant 0 : index
    %c0_44 = arith.constant 0 : index
    %57 = vector.load %arg9[%c0_43, %c0_44] : memref<1x128xf32, #tpu.memory_space<vmem>>, vector<1x128xf32>
    %58 = vector.broadcast %57 : vector<1x128xf32> to vector<128x128xf32>
    %59 = arith.mulf %56, %58 : vector<128x128xf32>
    %c0_45 = arith.constant 0 : index
    %c0_46 = arith.constant 0 : index
    %60 = vector.load %arg10[%c0_45, %c0_46] : memref<1x128xf32, #tpu.memory_space<vmem>>, vector<1x128xf32>
    %61 = vector.broadcast %60 : vector<1x128xf32> to vector<128x128xf32>
    %62 = arith.addf %59, %61 : vector<128x128xf32>
    %63 = arith.addf %53, %62 : vector<128x128xf32>
    %cst_47 = arith.constant 0.000000e+00 : f32
    %64 = vector.broadcast %cst_47 : f32 to vector<128x128xf32>
    %65 = arith.maximumf %63, %64 : vector<128x128xf32>
    %66 = vector.shape_cast %65 : vector<128x128xf32> to vector<8x16x128xf32>
    %67 = arith.truncf %66 : vector<8x16x128xf32> to vector<8x16x128xbf16>
    %c0_48 = arith.constant 0 : index
    %c0_49 = arith.constant 0 : index
    %c0_50 = arith.constant 0 : index
    %68 = vector.load %arg11[%c0_48, %c0_49, %c0_50] : memref<8x16x128xbf16, #tpu.memory_space<vmem>>, vector<8x16x128xbf16>
    tpu.vector_store %arg11[%c0_48, %c0_49, %c0_50], %67 {strides = array<i32>} : memref<8x16x128xbf16, #tpu.memory_space<vmem>>, vector<8x16x128xbf16>,
    return
  }
  func.func @transform_0(%arg0: i32) -> (i32, i32, i32) {
    %c0_i32 = arith.constant 0 : i32
    %c0_i32_0 = arith.constant 0 : i32
    %c0_i32_1 = arith.constant 0 : i32
    return %c0_i32, %arg0, %c0_i32_0 : i32, i32, i32
  }
  func.func @transform_1(%arg0: i32) -> (i32, i32, i32) {
    %c0_i32 = arith.constant 0 : i32
    %c0_i32_0 = arith.constant 0 : i32
    %c0_i32_1 = arith.constant 0 : i32
    %c0_i32_2 = arith.constant 0 : i32
    return %c0_i32, %c0_i32_0, %c0_i32_1 : i32, i32, i32
  }
  func.func @transform_2(%arg0: i32) -> (i32, i32) {
    %c0_i32 = arith.constant 0 : i32
    %c0_i32_0 = arith.constant 0 : i32
    %c0_i32_1 = arith.constant 0 : i32
    return %c0_i32, %c0_i32_0 : i32, i32
  }
  func.func @transform_3(%arg0: i32) -> (i32, i32) {
    %c0_i32 = arith.constant 0 : i32
    %c0_i32_0 = arith.constant 0 : i32
    %c0_i32_1 = arith.constant 0 : i32
    return %c0_i32, %c0_i32_0 : i32, i32
  }
  func.func @transform_4(%arg0: i32) -> (i32, i32, i32) {
    %c0_i32 = arith.constant 0 : i32
    %c0_i32_0 = arith.constant 0 : i32
    %c0_i32_1 = arith.constant 0 : i32
    %c0_i32_2 = arith.constant 0 : i32
    return %c0_i32, %c0_i32_0, %c0_i32_1 : i32, i32, i32
  }
  func.func @transform_5(%arg0: i32) -> (i32, i32) {
    %c0_i32 = arith.constant 0 : i32
    %c0_i32_0 = arith.constant 0 : i32
    %c0_i32_1 = arith.constant 0 : i32
    return %c0_i32, %c0_i32_0 : i32, i32
  }
  func.func @transform_6(%arg0: i32) -> (i32, i32) {
    %c0_i32 = arith.constant 0 : i32
    %c0_i32_0 = arith.constant 0 : i32
    %c0_i32_1 = arith.constant 0 : i32
    return %c0_i32, %c0_i32_0 : i32, i32
  }
  func.func @transform_7(%arg0: i32) -> (i32, i32, i32) {
    %c0_i32 = arith.constant 0 : i32
    %c0_i32_0 = arith.constant 0 : i32
    %c0_i32_1 = arith.constant 0 : i32
    %c0_i32_2 = arith.constant 0 : i32
    return %c0_i32, %c0_i32_0, %c0_i32_1 : i32, i32, i32
  }
  func.func @transform_8(%arg0: i32) -> (i32, i32) {
    %c0_i32 = arith.constant 0 : i32
    %c0_i32_0 = arith.constant 0 : i32
    %c0_i32_1 = arith.constant 0 : i32
    return %c0_i32, %c0_i32_0 : i32, i32
  }
  func.func @transform_9(%arg0: i32) -> (i32, i32) {
    %c0_i32 = arith.constant 0 : i32
    %c0_i32_0 = arith.constant 0 : i32
    %c0_i32_1 = arith.constant 0 : i32
    return %c0_i32, %c0_i32_0 : i32, i32
  }
  func.func @transform_10(%arg0: i32) -> (i32, i32, i32) {
    %c0_i32 = arith.constant 0 : i32
    %c0_i32_0 = arith.constant 0 : i32
    %c0_i32_1 = arith.constant 0 : i32
    return %c0_i32, %arg0, %c0_i32_0 : i32, i32, i32
  }
}

module attributes {stable_mosaic.version = 11 : i64} {
  func.func @kernel(%arg0: i32, %arg1: memref<10x16x128xbf16, #tpu.memory_space<vmem>>, %arg2: memref<3x128x128xbf16, #tpu.memory_space<vmem>>, %arg3: memref<1x128xf32, #tpu.memory_space<vmem>>, %arg4: memref<1x128xf32, #tpu.memory_space<vmem>>, %arg5: memref<3x128x128xbf16, #tpu.memory_space<vmem>>, %arg6: memref<1x128xf32, #tpu.memory_space<vmem>>, %arg7: memref<1x128xf32, #tpu.memory_space<vmem>>, %arg8: memref<8x16x128xbf16, #tpu.memory_space<vmem>>) attributes {dimension_semantics = [#tpu.dimension_semantics<parallel>], iteration_bounds = array<i64: 1>, scalar_prefetch = 0 : i64, scratch_operands = 0 : i64, tpu.core_type = #tpu.core_type<tc>, window_params = [{transform_indices = @transform_0, window_bounds = array<i64: 10, 16, 128>}, {pipeline_mode = #tpu.pipeline_mode<synchronous>, transform_indices = @transform_1, window_bounds = array<i64: 3, 128, 128>}, {pipeline_mode = #tpu.pipeline_mode<synchronous>, transform_indices = @transform_2, window_bounds = array<i64: 1, 128>}, {pipeline_mode = #tpu.pipeline_mode<synchronous>, transform_indices = @transform_3, window_bounds = array<i64: 1, 128>}, {pipeline_mode = #tpu.pipeline_mode<synchronous>, transform_indices = @transform_4, window_bounds = array<i64: 3, 128, 128>}, {pipeline_mode = #tpu.pipeline_mode<synchronous>, transform_indices = @transform_5, window_bounds = array<i64: 1, 128>}, {pipeline_mode = #tpu.pipeline_mode<synchronous>, transform_indices = @transform_6, window_bounds = array<i64: 1, 128>}, {transform_indices = @transform_7, window_bounds = array<i64: 8, 16, 128>}]} {
    %c1 = arith.constant 1 : index
    %c0 = arith.constant 0 : index
    %c0_0 = arith.constant 0 : index
    %0 = vector.load %arg1[%c1, %c0, %c0_0] : memref<10x16x128xbf16, #tpu.memory_space<vmem>>, vector<8x16x128xbf16>
    %1 = vector.shape_cast %0 : vector<8x16x128xbf16> to vector<128x128xbf16>
    %c0_1 = arith.constant 0 : index
    %c0_2 = arith.constant 0 : index
    %c0_3 = arith.constant 0 : index
    %2 = vector.load %arg1[%c0_1, %c0_2, %c0_3] : memref<10x16x128xbf16, #tpu.memory_space<vmem>>, vector<8x16x128xbf16>
    %3 = vector.shape_cast %2 : vector<8x16x128xbf16> to vector<128x128xbf16>
    %c0_4 = arith.constant 0 : index
    %c0_5 = arith.constant 0 : index
    %c0_6 = arith.constant 0 : index
    %4 = vector.load %arg2[%c0_4, %c0_5, %c0_6] : memref<3x128x128xbf16, #tpu.memory_space<vmem>>, vector<1x128x128xbf16>
    %5 = vector.shape_cast %4 : vector<1x128x128xbf16> to vector<128x128xbf16>
    %cst = arith.constant dense<0.000000e+00> : vector<128x128xf32>
    %6 = tpu.matmul %3, %5, %cst {dimension_numbers = #tpu.dot_dimension_numbers<[1], [0], [0], [1], [0, 0, 1, 1], [], []>} : vector<128x128xbf16>, vector<128x128xbf16>, vector<128x128xf32> -> vector<128x128xf32>
    %c1_7 = arith.constant 1 : index
    %c0_8 = arith.constant 0 : index
    %c0_9 = arith.constant 0 : index
    %7 = vector.load %arg2[%c1_7, %c0_8, %c0_9] : memref<3x128x128xbf16, #tpu.memory_space<vmem>>, vector<1x128x128xbf16>
    %8 = vector.shape_cast %7 : vector<1x128x128xbf16> to vector<128x128xbf16>
    %cst_10 = arith.constant dense<0.000000e+00> : vector<128x128xf32>
    %9 = tpu.matmul %1, %8, %cst_10 {dimension_numbers = #tpu.dot_dimension_numbers<[1], [0], [0], [1], [0, 0, 1, 1], [], []>} : vector<128x128xbf16>, vector<128x128xbf16>, vector<128x128xf32> -> vector<128x128xf32>
    %10 = arith.addf %6, %9 : vector<128x128xf32>
    %c2 = arith.constant 2 : index
    %c0_11 = arith.constant 0 : index
    %c0_12 = arith.constant 0 : index
    %11 = vector.load %arg1[%c2, %c0_11, %c0_12] : memref<10x16x128xbf16, #tpu.memory_space<vmem>>, vector<8x16x128xbf16>
    %12 = vector.shape_cast %11 : vector<8x16x128xbf16> to vector<128x128xbf16>
    %c2_13 = arith.constant 2 : index
    %c0_14 = arith.constant 0 : index
    %c0_15 = arith.constant 0 : index
    %13 = vector.load %arg2[%c2_13, %c0_14, %c0_15] : memref<3x128x128xbf16, #tpu.memory_space<vmem>>, vector<1x128x128xbf16>
    %14 = vector.shape_cast %13 : vector<1x128x128xbf16> to vector<128x128xbf16>
    %cst_16 = arith.constant dense<0.000000e+00> : vector<128x128xf32>
    %15 = tpu.matmul %12, %14, %cst_16 {dimension_numbers = #tpu.dot_dimension_numbers<[1], [0], [0], [1], [0, 0, 1, 1], [], []>} : vector<128x128xbf16>, vector<128x128xbf16>, vector<128x128xf32> -> vector<128x128xf32>
    %16 = arith.addf %10, %15 : vector<128x128xf32>
    %c0_17 = arith.constant 0 : index
    %c0_18 = arith.constant 0 : index
    %17 = vector.load %arg3[%c0_17, %c0_18] : memref<1x128xf32, #tpu.memory_space<vmem>>, vector<1x128xf32>
    %18 = vector.broadcast %17 : vector<1x128xf32> to vector<128x128xf32>
    %19 = arith.mulf %16, %18 : vector<128x128xf32>
    %c0_19 = arith.constant 0 : index
    %c0_20 = arith.constant 0 : index
    %20 = vector.load %arg4[%c0_19, %c0_20] : memref<1x128xf32, #tpu.memory_space<vmem>>, vector<1x128xf32>
    %21 = vector.broadcast %20 : vector<1x128xf32> to vector<128x128xf32>
    %22 = arith.addf %19, %21 : vector<128x128xf32>
    %cst_21 = arith.constant 0.000000e+00 : f32
    %23 = vector.broadcast %cst_21 : f32 to vector<128x128xf32>
    %24 = arith.maximumf %22, %23 : vector<128x128xf32>
    %25 = vector.shape_cast %24 : vector<128x128xf32> to vector<8x16x128xf32>
    %cst_22 = arith.constant 0.000000e+00 : f32
    %26 = vector.broadcast %cst_22 : f32 to vector<1x16x128xf32>
    %27 = tpu.concatenate %26, %25, %26 in 0 : vector<1x16x128xf32>, vector<8x16x128xf32>, vector<1x16x128xf32> -> vector<10x16x128xf32>
    %28 = vector.extract_strided_slice %27 {offsets = [0, 0, 0], sizes = [8, 16, 128], strides = [1, 1, 1]} : vector<10x16x128xf32> to vector<8x16x128xf32>
    %29 = vector.shape_cast %28 : vector<8x16x128xf32> to vector<128x128xf32>
    %30 = arith.truncf %29 : vector<128x128xf32> to vector<128x128xbf16>
    %c0_23 = arith.constant 0 : index
    %c0_24 = arith.constant 0 : index
    %c0_25 = arith.constant 0 : index
    %31 = vector.load %arg5[%c0_23, %c0_24, %c0_25] : memref<3x128x128xbf16, #tpu.memory_space<vmem>>, vector<1x128x128xbf16>
    %32 = vector.shape_cast %31 : vector<1x128x128xbf16> to vector<128x128xbf16>
    %cst_26 = arith.constant dense<0.000000e+00> : vector<128x128xf32>
    %33 = tpu.matmul %30, %32, %cst_26 {dimension_numbers = #tpu.dot_dimension_numbers<[1], [0], [0], [1], [0, 0, 1, 1], [], []>} : vector<128x128xbf16>, vector<128x128xbf16>, vector<128x128xf32> -> vector<128x128xf32>
    %34 = vector.extract_strided_slice %27 {offsets = [1, 0, 0], sizes = [8, 16, 128], strides = [1, 1, 1]} : vector<10x16x128xf32> to vector<8x16x128xf32>
    %35 = vector.shape_cast %34 : vector<8x16x128xf32> to vector<128x128xf32>
    %36 = arith.truncf %35 : vector<128x128xf32> to vector<128x128xbf16>
    %c1_27 = arith.constant 1 : index
    %c0_28 = arith.constant 0 : index
    %c0_29 = arith.constant 0 : index
    %37 = vector.load %arg5[%c1_27, %c0_28, %c0_29] : memref<3x128x128xbf16, #tpu.memory_space<vmem>>, vector<1x128x128xbf16>
    %38 = vector.shape_cast %37 : vector<1x128x128xbf16> to vector<128x128xbf16>
    %cst_30 = arith.constant dense<0.000000e+00> : vector<128x128xf32>
    %39 = tpu.matmul %36, %38, %cst_30 {dimension_numbers = #tpu.dot_dimension_numbers<[1], [0], [0], [1], [0, 0, 1, 1], [], []>} : vector<128x128xbf16>, vector<128x128xbf16>, vector<128x128xf32> -> vector<128x128xf32>
    %40 = arith.addf %33, %39 : vector<128x128xf32>
    %41 = vector.extract_strided_slice %27 {offsets = [2, 0, 0], sizes = [8, 16, 128], strides = [1, 1, 1]} : vector<10x16x128xf32> to vector<8x16x128xf32>
    %42 = vector.shape_cast %41 : vector<8x16x128xf32> to vector<128x128xf32>
    %43 = arith.truncf %42 : vector<128x128xf32> to vector<128x128xbf16>
    %c2_31 = arith.constant 2 : index
    %c0_32 = arith.constant 0 : index
    %c0_33 = arith.constant 0 : index
    %44 = vector.load %arg5[%c2_31, %c0_32, %c0_33] : memref<3x128x128xbf16, #tpu.memory_space<vmem>>, vector<1x128x128xbf16>
    %45 = vector.shape_cast %44 : vector<1x128x128xbf16> to vector<128x128xbf16>
    %cst_34 = arith.constant dense<0.000000e+00> : vector<128x128xf32>
    %46 = tpu.matmul %43, %45, %cst_34 {dimension_numbers = #tpu.dot_dimension_numbers<[1], [0], [0], [1], [0, 0, 1, 1], [], []>} : vector<128x128xbf16>, vector<128x128xbf16>, vector<128x128xf32> -> vector<128x128xf32>
    %47 = arith.addf %40, %46 : vector<128x128xf32>
    %c0_35 = arith.constant 0 : index
    %c0_36 = arith.constant 0 : index
    %48 = vector.load %arg6[%c0_35, %c0_36] : memref<1x128xf32, #tpu.memory_space<vmem>>, vector<1x128xf32>
    %49 = vector.broadcast %48 : vector<1x128xf32> to vector<128x128xf32>
    %50 = arith.mulf %47, %49 : vector<128x128xf32>
    %c0_37 = arith.constant 0 : index
    %c0_38 = arith.constant 0 : index
    %51 = vector.load %arg7[%c0_37, %c0_38] : memref<1x128xf32, #tpu.memory_space<vmem>>, vector<1x128xf32>
    %52 = vector.broadcast %51 : vector<1x128xf32> to vector<128x128xf32>
    %53 = arith.addf %50, %52 : vector<128x128xf32>
    %54 = arith.extf %1 : vector<128x128xbf16> to vector<128x128xf32>
    %55 = arith.addf %53, %54 : vector<128x128xf32>
    %cst_39 = arith.constant 0.000000e+00 : f32
    %56 = vector.broadcast %cst_39 : f32 to vector<128x128xf32>
    %57 = arith.maximumf %55, %56 : vector<128x128xf32>
    %58 = vector.shape_cast %57 : vector<128x128xf32> to vector<8x16x128xf32>
    %59 = arith.truncf %58 : vector<8x16x128xf32> to vector<8x16x128xbf16>
    %c0_40 = arith.constant 0 : index
    %c0_41 = arith.constant 0 : index
    %c0_42 = arith.constant 0 : index
    %60 = vector.load %arg8[%c0_40, %c0_41, %c0_42] : memref<8x16x128xbf16, #tpu.memory_space<vmem>>, vector<8x16x128xbf16>
    tpu.vector_store %arg8[%c0_40, %c0_41, %c0_42], %59 {strides = array<i32>} : memref<8x16x128xbf16, #tpu.memory_space<vmem>>, vector<8x16x128xbf16>,
    return
  }
  func.func @transform_0(%arg0: i32) -> (i32, i32, i32) {
    %c0_i32 = arith.constant 0 : i32
    %c0_i32_0 = arith.constant 0 : i32
    %c0_i32_1 = arith.constant 0 : i32
    return %c0_i32, %arg0, %c0_i32_0 : i32, i32, i32
  }
  func.func @transform_1(%arg0: i32) -> (i32, i32, i32) {
    %c0_i32 = arith.constant 0 : i32
    %c0_i32_0 = arith.constant 0 : i32
    %c0_i32_1 = arith.constant 0 : i32
    %c0_i32_2 = arith.constant 0 : i32
    return %c0_i32, %c0_i32_0, %c0_i32_1 : i32, i32, i32
  }
  func.func @transform_2(%arg0: i32) -> (i32, i32) {
    %c0_i32 = arith.constant 0 : i32
    %c0_i32_0 = arith.constant 0 : i32
    %c0_i32_1 = arith.constant 0 : i32
    return %c0_i32, %c0_i32_0 : i32, i32
  }
  func.func @transform_3(%arg0: i32) -> (i32, i32) {
    %c0_i32 = arith.constant 0 : i32
    %c0_i32_0 = arith.constant 0 : i32
    %c0_i32_1 = arith.constant 0 : i32
    return %c0_i32, %c0_i32_0 : i32, i32
  }
  func.func @transform_4(%arg0: i32) -> (i32, i32, i32) {
    %c0_i32 = arith.constant 0 : i32
    %c0_i32_0 = arith.constant 0 : i32
    %c0_i32_1 = arith.constant 0 : i32
    %c0_i32_2 = arith.constant 0 : i32
    return %c0_i32, %c0_i32_0, %c0_i32_1 : i32, i32, i32
  }
  func.func @transform_5(%arg0: i32) -> (i32, i32) {
    %c0_i32 = arith.constant 0 : i32
    %c0_i32_0 = arith.constant 0 : i32
    %c0_i32_1 = arith.constant 0 : i32
    return %c0_i32, %c0_i32_0 : i32, i32
  }
  func.func @transform_6(%arg0: i32) -> (i32, i32) {
    %c0_i32 = arith.constant 0 : i32
    %c0_i32_0 = arith.constant 0 : i32
    %c0_i32_1 = arith.constant 0 : i32
    return %c0_i32, %c0_i32_0 : i32, i32
  }
  func.func @transform_7(%arg0: i32) -> (i32, i32, i32) {
    %c0_i32 = arith.constant 0 : i32
    %c0_i32_0 = arith.constant 0 : i32
    %c0_i32_1 = arith.constant 0 : i32
    return %c0_i32, %arg0, %c0_i32_0 : i32, i32, i32
  }
}

module attributes {stable_mosaic.version = 11 : i64} {
  func.func @kernel(%arg0: i32, %arg1: memref<10x16x128xbf16, #tpu.memory_space<vmem>>, %arg2: memref<3x128x128xbf16, #tpu.memory_space<vmem>>, %arg3: memref<1x128xf32, #tpu.memory_space<vmem>>, %arg4: memref<1x128xf32, #tpu.memory_space<vmem>>, %arg5: memref<3x128x128xbf16, #tpu.memory_space<vmem>>, %arg6: memref<1x128xf32, #tpu.memory_space<vmem>>, %arg7: memref<1x128xf32, #tpu.memory_space<vmem>>, %arg8: memref<1x128x128xbf16, #tpu.memory_space<vmem>>, %arg9: memref<1x128xf32, #tpu.memory_space<vmem>>, %arg10: memref<1x128xf32, #tpu.memory_space<vmem>>, %arg11: memref<4x16x128xbf16, #tpu.memory_space<vmem>>) attributes {dimension_semantics = [#tpu.dimension_semantics<parallel>], iteration_bounds = array<i64: 1>, scalar_prefetch = 0 : i64, scratch_operands = 0 : i64, tpu.core_type = #tpu.core_type<tc>, window_params = [{transform_indices = @transform_0, window_bounds = array<i64: 10, 16, 128>}, {pipeline_mode = #tpu.pipeline_mode<synchronous>, transform_indices = @transform_1, window_bounds = array<i64: 3, 128, 128>}, {pipeline_mode = #tpu.pipeline_mode<synchronous>, transform_indices = @transform_2, window_bounds = array<i64: 1, 128>}, {pipeline_mode = #tpu.pipeline_mode<synchronous>, transform_indices = @transform_3, window_bounds = array<i64: 1, 128>}, {pipeline_mode = #tpu.pipeline_mode<synchronous>, transform_indices = @transform_4, window_bounds = array<i64: 3, 128, 128>}, {pipeline_mode = #tpu.pipeline_mode<synchronous>, transform_indices = @transform_5, window_bounds = array<i64: 1, 128>}, {pipeline_mode = #tpu.pipeline_mode<synchronous>, transform_indices = @transform_6, window_bounds = array<i64: 1, 128>}, {pipeline_mode = #tpu.pipeline_mode<synchronous>, transform_indices = @transform_7, window_bounds = array<i64: 1, 128, 128>}, {pipeline_mode = #tpu.pipeline_mode<synchronous>, transform_indices = @transform_8, window_bounds = array<i64: 1, 128>}, {pipeline_mode = #tpu.pipeline_mode<synchronous>, transform_indices = @transform_9, window_bounds = array<i64: 1, 128>}, {transform_indices = @transform_10, window_bounds = array<i64: 4, 16, 128>}]} {
    %c1 = arith.constant 1 : index
    %c0 = arith.constant 0 : index
    %c0_0 = arith.constant 0 : index
    %0 = vector.load %arg1[%c1, %c0, %c0_0] : memref<10x16x128xbf16, #tpu.memory_space<vmem>>, vector<1x16x128xbf16>
    %1 = vector.shape_cast %0 : vector<1x16x128xbf16> to vector<16x128xbf16>
    %c3 = arith.constant 3 : index
    %c0_1 = arith.constant 0 : index
    %c0_2 = arith.constant 0 : index
    %2 = vector.load %arg1[%c3, %c0_1, %c0_2] : memref<10x16x128xbf16, #tpu.memory_space<vmem>>, vector<1x16x128xbf16>
    %3 = vector.shape_cast %2 : vector<1x16x128xbf16> to vector<16x128xbf16>
    %c5 = arith.constant 5 : index
    %c0_3 = arith.constant 0 : index
    %c0_4 = arith.constant 0 : index
    %4 = vector.load %arg1[%c5, %c0_3, %c0_4] : memref<10x16x128xbf16, #tpu.memory_space<vmem>>, vector<1x16x128xbf16>
    %5 = vector.shape_cast %4 : vector<1x16x128xbf16> to vector<16x128xbf16>
    %c7 = arith.constant 7 : index
    %c0_5 = arith.constant 0 : index
    %c0_6 = arith.constant 0 : index
    %6 = vector.load %arg1[%c7, %c0_5, %c0_6] : memref<10x16x128xbf16, #tpu.memory_space<vmem>>, vector<1x16x128xbf16>
    %7 = vector.shape_cast %6 : vector<1x16x128xbf16> to vector<16x128xbf16>
    %8 = tpu.concatenate %1, %3, %5, %7 in 0 : vector<16x128xbf16>, vector<16x128xbf16>, vector<16x128xbf16>, vector<16x128xbf16> -> vector<64x128xbf16>
    %c0_7 = arith.constant 0 : index
    %c0_8 = arith.constant 0 : index
    %c0_9 = arith.constant 0 : index
    %9 = vector.load %arg1[%c0_7, %c0_8, %c0_9] : memref<10x16x128xbf16, #tpu.memory_space<vmem>>, vector<1x16x128xbf16>
    %10 = vector.shape_cast %9 : vector<1x16x128xbf16> to vector<16x128xbf16>
    %c2 = arith.constant 2 : index
    %c0_10 = arith.constant 0 : index
    %c0_11 = arith.constant 0 : index
    %11 = vector.load %arg1[%c2, %c0_10, %c0_11] : memref<10x16x128xbf16, #tpu.memory_space<vmem>>, vector<1x16x128xbf16>
    %12 = vector.shape_cast %11 : vector<1x16x128xbf16> to vector<16x128xbf16>
    %c4 = arith.constant 4 : index
    %c0_12 = arith.constant 0 : index
    %c0_13 = arith.constant 0 : index
    %13 = vector.load %arg1[%c4, %c0_12, %c0_13] : memref<10x16x128xbf16, #tpu.memory_space<vmem>>, vector<1x16x128xbf16>
    %14 = vector.shape_cast %13 : vector<1x16x128xbf16> to vector<16x128xbf16>
    %c6 = arith.constant 6 : index
    %c0_14 = arith.constant 0 : index
    %c0_15 = arith.constant 0 : index
    %15 = vector.load %arg1[%c6, %c0_14, %c0_15] : memref<10x16x128xbf16, #tpu.memory_space<vmem>>, vector<1x16x128xbf16>
    %16 = vector.shape_cast %15 : vector<1x16x128xbf16> to vector<16x128xbf16>
    %17 = tpu.concatenate %10, %12, %14, %16 in 0 : vector<16x128xbf16>, vector<16x128xbf16>, vector<16x128xbf16>, vector<16x128xbf16> -> vector<64x128xbf16>
    %c0_16 = arith.constant 0 : index
    %c0_17 = arith.constant 0 : index
    %c0_18 = arith.constant 0 : index
    %18 = vector.load %arg2[%c0_16, %c0_17, %c0_18] : memref<3x128x128xbf16, #tpu.memory_space<vmem>>, vector<1x128x128xbf16>
    %19 = vector.shape_cast %18 : vector<1x128x128xbf16> to vector<128x128xbf16>
    %cst = arith.constant dense<0.000000e+00> : vector<64x128xf32>
    %20 = tpu.matmul %17, %19, %cst {dimension_numbers = #tpu.dot_dimension_numbers<[1], [0], [0], [1], [0, 0, 1, 1], [], []>} : vector<64x128xbf16>, vector<128x128xbf16>, vector<64x128xf32> -> vector<64x128xf32>
    %c1_19 = arith.constant 1 : index
    %c0_20 = arith.constant 0 : index
    %c0_21 = arith.constant 0 : index
    %21 = vector.load %arg2[%c1_19, %c0_20, %c0_21] : memref<3x128x128xbf16, #tpu.memory_space<vmem>>, vector<1x128x128xbf16>
    %22 = vector.shape_cast %21 : vector<1x128x128xbf16> to vector<128x128xbf16>
    %cst_22 = arith.constant dense<0.000000e+00> : vector<64x128xf32>
    %23 = tpu.matmul %8, %22, %cst_22 {dimension_numbers = #tpu.dot_dimension_numbers<[1], [0], [0], [1], [0, 0, 1, 1], [], []>} : vector<64x128xbf16>, vector<128x128xbf16>, vector<64x128xf32> -> vector<64x128xf32>
    %24 = arith.addf %20, %23 : vector<64x128xf32>
    %c2_23 = arith.constant 2 : index
    %c0_24 = arith.constant 0 : index
    %c0_25 = arith.constant 0 : index
    %25 = vector.load %arg1[%c2_23, %c0_24, %c0_25] : memref<10x16x128xbf16, #tpu.memory_space<vmem>>, vector<1x16x128xbf16>
    %26 = vector.shape_cast %25 : vector<1x16x128xbf16> to vector<16x128xbf16>
    %c4_26 = arith.constant 4 : index
    %c0_27 = arith.constant 0 : index
    %c0_28 = arith.constant 0 : index
    %27 = vector.load %arg1[%c4_26, %c0_27, %c0_28] : memref<10x16x128xbf16, #tpu.memory_space<vmem>>, vector<1x16x128xbf16>
    %28 = vector.shape_cast %27 : vector<1x16x128xbf16> to vector<16x128xbf16>
    %c6_29 = arith.constant 6 : index
    %c0_30 = arith.constant 0 : index
    %c0_31 = arith.constant 0 : index
    %29 = vector.load %arg1[%c6_29, %c0_30, %c0_31] : memref<10x16x128xbf16, #tpu.memory_space<vmem>>, vector<1x16x128xbf16>
    %30 = vector.shape_cast %29 : vector<1x16x128xbf16> to vector<16x128xbf16>
    %c8 = arith.constant 8 : index
    %c0_32 = arith.constant 0 : index
    %c0_33 = arith.constant 0 : index
    %31 = vector.load %arg1[%c8, %c0_32, %c0_33] : memref<10x16x128xbf16, #tpu.memory_space<vmem>>, vector<1x16x128xbf16>
    %32 = vector.shape_cast %31 : vector<1x16x128xbf16> to vector<16x128xbf16>
    %33 = tpu.concatenate %26, %28, %30, %32 in 0 : vector<16x128xbf16>, vector<16x128xbf16>, vector<16x128xbf16>, vector<16x128xbf16> -> vector<64x128xbf16>
    %c2_34 = arith.constant 2 : index
    %c0_35 = arith.constant 0 : index
    %c0_36 = arith.constant 0 : index
    %34 = vector.load %arg2[%c2_34, %c0_35, %c0_36] : memref<3x128x128xbf16, #tpu.memory_space<vmem>>, vector<1x128x128xbf16>
    %35 = vector.shape_cast %34 : vector<1x128x128xbf16> to vector<128x128xbf16>
    %cst_37 = arith.constant dense<0.000000e+00> : vector<64x128xf32>
    %36 = tpu.matmul %33, %35, %cst_37 {dimension_numbers = #tpu.dot_dimension_numbers<[1], [0], [0], [1], [0, 0, 1, 1], [], []>} : vector<64x128xbf16>, vector<128x128xbf16>, vector<64x128xf32> -> vector<64x128xf32>
    %37 = arith.addf %24, %36 : vector<64x128xf32>
    %c0_38 = arith.constant 0 : index
    %c0_39 = arith.constant 0 : index
    %38 = vector.load %arg3[%c0_38, %c0_39] : memref<1x128xf32, #tpu.memory_space<vmem>>, vector<1x128xf32>
    %39 = vector.broadcast %38 : vector<1x128xf32> to vector<64x128xf32>
    %40 = arith.mulf %37, %39 : vector<64x128xf32>
    %c0_40 = arith.constant 0 : index
    %c0_41 = arith.constant 0 : index
    %41 = vector.load %arg4[%c0_40, %c0_41] : memref<1x128xf32, #tpu.memory_space<vmem>>, vector<1x128xf32>
    %42 = vector.broadcast %41 : vector<1x128xf32> to vector<64x128xf32>
    %43 = arith.addf %40, %42 : vector<64x128xf32>
    %cst_42 = arith.constant 0.000000e+00 : f32
    %44 = vector.broadcast %cst_42 : f32 to vector<64x128xf32>
    %45 = arith.maximumf %43, %44 : vector<64x128xf32>
    %46 = vector.shape_cast %45 : vector<64x128xf32> to vector<4x16x128xf32>
    %cst_43 = arith.constant 0.000000e+00 : f32
    %47 = vector.broadcast %cst_43 : f32 to vector<1x16x128xf32>
    %48 = tpu.concatenate %47, %46, %47 in 0 : vector<1x16x128xf32>, vector<4x16x128xf32>, vector<1x16x128xf32> -> vector<6x16x128xf32>
    %49 = vector.extract_strided_slice %48 {offsets = [0, 0, 0], sizes = [4, 16, 128], strides = [1, 1, 1]} : vector<6x16x128xf32> to vector<4x16x128xf32>
    %50 = vector.shape_cast %49 : vector<4x16x128xf32> to vector<64x128xf32>
    %51 = arith.truncf %50 : vector<64x128xf32> to vector<64x128xbf16>
    %c0_44 = arith.constant 0 : index
    %c0_45 = arith.constant 0 : index
    %c0_46 = arith.constant 0 : index
    %52 = vector.load %arg5[%c0_44, %c0_45, %c0_46] : memref<3x128x128xbf16, #tpu.memory_space<vmem>>, vector<1x128x128xbf16>
    %53 = vector.shape_cast %52 : vector<1x128x128xbf16> to vector<128x128xbf16>
    %cst_47 = arith.constant dense<0.000000e+00> : vector<64x128xf32>
    %54 = tpu.matmul %51, %53, %cst_47 {dimension_numbers = #tpu.dot_dimension_numbers<[1], [0], [0], [1], [0, 0, 1, 1], [], []>} : vector<64x128xbf16>, vector<128x128xbf16>, vector<64x128xf32> -> vector<64x128xf32>
    %55 = vector.extract_strided_slice %48 {offsets = [1, 0, 0], sizes = [4, 16, 128], strides = [1, 1, 1]} : vector<6x16x128xf32> to vector<4x16x128xf32>
    %56 = vector.shape_cast %55 : vector<4x16x128xf32> to vector<64x128xf32>
    %57 = arith.truncf %56 : vector<64x128xf32> to vector<64x128xbf16>
    %c1_48 = arith.constant 1 : index
    %c0_49 = arith.constant 0 : index
    %c0_50 = arith.constant 0 : index
    %58 = vector.load %arg5[%c1_48, %c0_49, %c0_50] : memref<3x128x128xbf16, #tpu.memory_space<vmem>>, vector<1x128x128xbf16>
    %59 = vector.shape_cast %58 : vector<1x128x128xbf16> to vector<128x128xbf16>
    %cst_51 = arith.constant dense<0.000000e+00> : vector<64x128xf32>
    %60 = tpu.matmul %57, %59, %cst_51 {dimension_numbers = #tpu.dot_dimension_numbers<[1], [0], [0], [1], [0, 0, 1, 1], [], []>} : vector<64x128xbf16>, vector<128x128xbf16>, vector<64x128xf32> -> vector<64x128xf32>
    %61 = arith.addf %54, %60 : vector<64x128xf32>
    %62 = vector.extract_strided_slice %48 {offsets = [2, 0, 0], sizes = [4, 16, 128], strides = [1, 1, 1]} : vector<6x16x128xf32> to vector<4x16x128xf32>
    %63 = vector.shape_cast %62 : vector<4x16x128xf32> to vector<64x128xf32>
    %64 = arith.truncf %63 : vector<64x128xf32> to vector<64x128xbf16>
    %c2_52 = arith.constant 2 : index
    %c0_53 = arith.constant 0 : index
    %c0_54 = arith.constant 0 : index
    %65 = vector.load %arg5[%c2_52, %c0_53, %c0_54] : memref<3x128x128xbf16, #tpu.memory_space<vmem>>, vector<1x128x128xbf16>
    %66 = vector.shape_cast %65 : vector<1x128x128xbf16> to vector<128x128xbf16>
    %cst_55 = arith.constant dense<0.000000e+00> : vector<64x128xf32>
    %67 = tpu.matmul %64, %66, %cst_55 {dimension_numbers = #tpu.dot_dimension_numbers<[1], [0], [0], [1], [0, 0, 1, 1], [], []>} : vector<64x128xbf16>, vector<128x128xbf16>, vector<64x128xf32> -> vector<64x128xf32>
    %68 = arith.addf %61, %67 : vector<64x128xf32>
    %c0_56 = arith.constant 0 : index
    %c0_57 = arith.constant 0 : index
    %69 = vector.load %arg6[%c0_56, %c0_57] : memref<1x128xf32, #tpu.memory_space<vmem>>, vector<1x128xf32>
    %70 = vector.broadcast %69 : vector<1x128xf32> to vector<64x128xf32>
    %71 = arith.mulf %68, %70 : vector<64x128xf32>
    %c0_58 = arith.constant 0 : index
    %c0_59 = arith.constant 0 : index
    %72 = vector.load %arg7[%c0_58, %c0_59] : memref<1x128xf32, #tpu.memory_space<vmem>>, vector<1x128xf32>
    %73 = vector.broadcast %72 : vector<1x128xf32> to vector<64x128xf32>
    %74 = arith.addf %71, %73 : vector<64x128xf32>
    %c0_60 = arith.constant 0 : index
    %c0_61 = arith.constant 0 : index
    %c0_62 = arith.constant 0 : index
    %75 = vector.load %arg8[%c0_60, %c0_61, %c0_62] : memref<1x128x128xbf16, #tpu.memory_space<vmem>>, vector<1x128x128xbf16>
    %76 = vector.shape_cast %75 : vector<1x128x128xbf16> to vector<128x128xbf16>
    %cst_63 = arith.constant dense<0.000000e+00> : vector<64x128xf32>
    %77 = tpu.matmul %8, %76, %cst_63 {dimension_numbers = #tpu.dot_dimension_numbers<[1], [0], [0], [1], [0, 0, 1, 1], [], []>} : vector<64x128xbf16>, vector<128x128xbf16>, vector<64x128xf32> -> vector<64x128xf32>
    %c0_64 = arith.constant 0 : index
    %c0_65 = arith.constant 0 : index
    %78 = vector.load %arg9[%c0_64, %c0_65] : memref<1x128xf32, #tpu.memory_space<vmem>>, vector<1x128xf32>
    %79 = vector.broadcast %78 : vector<1x128xf32> to vector<64x128xf32>
    %80 = arith.mulf %77, %79 : vector<64x128xf32>
    %c0_66 = arith.constant 0 : index
    %c0_67 = arith.constant 0 : index
    %81 = vector.load %arg10[%c0_66, %c0_67] : memref<1x128xf32, #tpu.memory_space<vmem>>, vector<1x128xf32>
    %82 = vector.broadcast %81 : vector<1x128xf32> to vector<64x128xf32>
    %83 = arith.addf %80, %82 : vector<64x128xf32>
    %84 = arith.addf %74, %83 : vector<64x128xf32>
    %cst_68 = arith.constant 0.000000e+00 : f32
    %85 = vector.broadcast %cst_68 : f32 to vector<64x128xf32>
    %86 = arith.maximumf %84, %85 : vector<64x128xf32>
    %87 = vector.shape_cast %86 : vector<64x128xf32> to vector<4x16x128xf32>
    %88 = arith.truncf %87 : vector<4x16x128xf32> to vector<4x16x128xbf16>
    %c0_69 = arith.constant 0 : index
    %c0_70 = arith.constant 0 : index
    %c0_71 = arith.constant 0 : index
    %89 = vector.load %arg11[%c0_69, %c0_70, %c0_71] : memref<4x16x128xbf16, #tpu.memory_space<vmem>>, vector<4x16x128xbf16>
    tpu.vector_store %arg11[%c0_69, %c0_70, %c0_71], %88 {strides = array<i32>} : memref<4x16x128xbf16, #tpu.memory_space<vmem>>, vector<4x16x128xbf16>,
    return
  }
  func.func @transform_0(%arg0: i32) -> (i32, i32, i32) {
    %c0_i32 = arith.constant 0 : i32
    %c0_i32_0 = arith.constant 0 : i32
    %c0_i32_1 = arith.constant 0 : i32
    return %c0_i32, %arg0, %c0_i32_0 : i32, i32, i32
  }
  func.func @transform_1(%arg0: i32) -> (i32, i32, i32) {
    %c0_i32 = arith.constant 0 : i32
    %c0_i32_0 = arith.constant 0 : i32
    %c0_i32_1 = arith.constant 0 : i32
    %c0_i32_2 = arith.constant 0 : i32
    return %c0_i32, %c0_i32_0, %c0_i32_1 : i32, i32, i32
  }
  func.func @transform_2(%arg0: i32) -> (i32, i32) {
    %c0_i32 = arith.constant 0 : i32
    %c0_i32_0 = arith.constant 0 : i32
    %c0_i32_1 = arith.constant 0 : i32
    return %c0_i32, %c0_i32_0 : i32, i32
  }
  func.func @transform_3(%arg0: i32) -> (i32, i32) {
    %c0_i32 = arith.constant 0 : i32
    %c0_i32_0 = arith.constant 0 : i32
    %c0_i32_1 = arith.constant 0 : i32
    return %c0_i32, %c0_i32_0 : i32, i32
  }
  func.func @transform_4(%arg0: i32) -> (i32, i32, i32) {
    %c0_i32 = arith.constant 0 : i32
    %c0_i32_0 = arith.constant 0 : i32
    %c0_i32_1 = arith.constant 0 : i32
    %c0_i32_2 = arith.constant 0 : i32
    return %c0_i32, %c0_i32_0, %c0_i32_1 : i32, i32, i32
  }
  func.func @transform_5(%arg0: i32) -> (i32, i32) {
    %c0_i32 = arith.constant 0 : i32
    %c0_i32_0 = arith.constant 0 : i32
    %c0_i32_1 = arith.constant 0 : i32
    return %c0_i32, %c0_i32_0 : i32, i32
  }
  func.func @transform_6(%arg0: i32) -> (i32, i32) {
    %c0_i32 = arith.constant 0 : i32
    %c0_i32_0 = arith.constant 0 : i32
    %c0_i32_1 = arith.constant 0 : i32
    return %c0_i32, %c0_i32_0 : i32, i32
  }
  func.func @transform_7(%arg0: i32) -> (i32, i32, i32) {
    %c0_i32 = arith.constant 0 : i32
    %c0_i32_0 = arith.constant 0 : i32
    %c0_i32_1 = arith.constant 0 : i32
    %c0_i32_2 = arith.constant 0 : i32
    return %c0_i32, %c0_i32_0, %c0_i32_1 : i32, i32, i32
  }
  func.func @transform_8(%arg0: i32) -> (i32, i32) {
    %c0_i32 = arith.constant 0 : i32
    %c0_i32_0 = arith.constant 0 : i32
    %c0_i32_1 = arith.constant 0 : i32
    return %c0_i32, %c0_i32_0 : i32, i32
  }
  func.func @transform_9(%arg0: i32) -> (i32, i32) {
    %c0_i32 = arith.constant 0 : i32
    %c0_i32_0 = arith.constant 0 : i32
    %c0_i32_1 = arith.constant 0 : i32
    return %c0_i32, %c0_i32_0 : i32, i32
  }
  func.func @transform_10(%arg0: i32) -> (i32, i32, i32) {
    %c0_i32 = arith.constant 0 : i32
    %c0_i32_0 = arith.constant 0 : i32
    %c0_i32_1 = arith.constant 0 : i32
    return %c0_i32, %arg0, %c0_i32_0 : i32, i32, i32
  }
}

module attributes {stable_mosaic.version = 11 : i64} {
  func.func @kernel(%arg0: i32, %arg1: memref<6x16x128xbf16, #tpu.memory_space<vmem>>, %arg2: memref<3x128x128xbf16, #tpu.memory_space<vmem>>, %arg3: memref<1x128xf32, #tpu.memory_space<vmem>>, %arg4: memref<1x128xf32, #tpu.memory_space<vmem>>, %arg5: memref<3x128x128xbf16, #tpu.memory_space<vmem>>, %arg6: memref<1x128xf32, #tpu.memory_space<vmem>>, %arg7: memref<1x128xf32, #tpu.memory_space<vmem>>, %arg8: memref<4x16x128xbf16, #tpu.memory_space<vmem>>) attributes {dimension_semantics = [#tpu.dimension_semantics<parallel>], iteration_bounds = array<i64: 1>, scalar_prefetch = 0 : i64, scratch_operands = 0 : i64, tpu.core_type = #tpu.core_type<tc>, window_params = [{transform_indices = @transform_0, window_bounds = array<i64: 6, 16, 128>}, {pipeline_mode = #tpu.pipeline_mode<synchronous>, transform_indices = @transform_1, window_bounds = array<i64: 3, 128, 128>}, {pipeline_mode = #tpu.pipeline_mode<synchronous>, transform_indices = @transform_2, window_bounds = array<i64: 1, 128>}, {pipeline_mode = #tpu.pipeline_mode<synchronous>, transform_indices = @transform_3, window_bounds = array<i64: 1, 128>}, {pipeline_mode = #tpu.pipeline_mode<synchronous>, transform_indices = @transform_4, window_bounds = array<i64: 3, 128, 128>}, {pipeline_mode = #tpu.pipeline_mode<synchronous>, transform_indices = @transform_5, window_bounds = array<i64: 1, 128>}, {pipeline_mode = #tpu.pipeline_mode<synchronous>, transform_indices = @transform_6, window_bounds = array<i64: 1, 128>}, {transform_indices = @transform_7, window_bounds = array<i64: 4, 16, 128>}]} {
    %c1 = arith.constant 1 : index
    %c0 = arith.constant 0 : index
    %c0_0 = arith.constant 0 : index
    %0 = vector.load %arg1[%c1, %c0, %c0_0] : memref<6x16x128xbf16, #tpu.memory_space<vmem>>, vector<4x16x128xbf16>
    %1 = vector.shape_cast %0 : vector<4x16x128xbf16> to vector<64x128xbf16>
    %c0_1 = arith.constant 0 : index
    %c0_2 = arith.constant 0 : index
    %c0_3 = arith.constant 0 : index
    %2 = vector.load %arg1[%c0_1, %c0_2, %c0_3] : memref<6x16x128xbf16, #tpu.memory_space<vmem>>, vector<4x16x128xbf16>
    %3 = vector.shape_cast %2 : vector<4x16x128xbf16> to vector<64x128xbf16>
    %c0_4 = arith.constant 0 : index
    %c0_5 = arith.constant 0 : index
    %c0_6 = arith.constant 0 : index
    %4 = vector.load %arg2[%c0_4, %c0_5, %c0_6] : memref<3x128x128xbf16, #tpu.memory_space<vmem>>, vector<1x128x128xbf16>
    %5 = vector.shape_cast %4 : vector<1x128x128xbf16> to vector<128x128xbf16>
    %cst = arith.constant dense<0.000000e+00> : vector<64x128xf32>
    %6 = tpu.matmul %3, %5, %cst {dimension_numbers = #tpu.dot_dimension_numbers<[1], [0], [0], [1], [0, 0, 1, 1], [], []>} : vector<64x128xbf16>, vector<128x128xbf16>, vector<64x128xf32> -> vector<64x128xf32>
    %c1_7 = arith.constant 1 : index
    %c0_8 = arith.constant 0 : index
    %c0_9 = arith.constant 0 : index
    %7 = vector.load %arg2[%c1_7, %c0_8, %c0_9] : memref<3x128x128xbf16, #tpu.memory_space<vmem>>, vector<1x128x128xbf16>
    %8 = vector.shape_cast %7 : vector<1x128x128xbf16> to vector<128x128xbf16>
    %cst_10 = arith.constant dense<0.000000e+00> : vector<64x128xf32>
    %9 = tpu.matmul %1, %8, %cst_10 {dimension_numbers = #tpu.dot_dimension_numbers<[1], [0], [0], [1], [0, 0, 1, 1], [], []>} : vector<64x128xbf16>, vector<128x128xbf16>, vector<64x128xf32> -> vector<64x128xf32>
    %10 = arith.addf %6, %9 : vector<64x128xf32>
    %c2 = arith.constant 2 : index
    %c0_11 = arith.constant 0 : index
    %c0_12 = arith.constant 0 : index
    %11 = vector.load %arg1[%c2, %c0_11, %c0_12] : memref<6x16x128xbf16, #tpu.memory_space<vmem>>, vector<4x16x128xbf16>
    %12 = vector.shape_cast %11 : vector<4x16x128xbf16> to vector<64x128xbf16>
    %c2_13 = arith.constant 2 : index
    %c0_14 = arith.constant 0 : index
    %c0_15 = arith.constant 0 : index
    %13 = vector.load %arg2[%c2_13, %c0_14, %c0_15] : memref<3x128x128xbf16, #tpu.memory_space<vmem>>, vector<1x128x128xbf16>
    %14 = vector.shape_cast %13 : vector<1x128x128xbf16> to vector<128x128xbf16>
    %cst_16 = arith.constant dense<0.000000e+00> : vector<64x128xf32>
    %15 = tpu.matmul %12, %14, %cst_16 {dimension_numbers = #tpu.dot_dimension_numbers<[1], [0], [0], [1], [0, 0, 1, 1], [], []>} : vector<64x128xbf16>, vector<128x128xbf16>, vector<64x128xf32> -> vector<64x128xf32>
    %16 = arith.addf %10, %15 : vector<64x128xf32>
    %c0_17 = arith.constant 0 : index
    %c0_18 = arith.constant 0 : index
    %17 = vector.load %arg3[%c0_17, %c0_18] : memref<1x128xf32, #tpu.memory_space<vmem>>, vector<1x128xf32>
    %18 = vector.broadcast %17 : vector<1x128xf32> to vector<64x128xf32>
    %19 = arith.mulf %16, %18 : vector<64x128xf32>
    %c0_19 = arith.constant 0 : index
    %c0_20 = arith.constant 0 : index
    %20 = vector.load %arg4[%c0_19, %c0_20] : memref<1x128xf32, #tpu.memory_space<vmem>>, vector<1x128xf32>
    %21 = vector.broadcast %20 : vector<1x128xf32> to vector<64x128xf32>
    %22 = arith.addf %19, %21 : vector<64x128xf32>
    %cst_21 = arith.constant 0.000000e+00 : f32
    %23 = vector.broadcast %cst_21 : f32 to vector<64x128xf32>
    %24 = arith.maximumf %22, %23 : vector<64x128xf32>
    %25 = vector.shape_cast %24 : vector<64x128xf32> to vector<4x16x128xf32>
    %cst_22 = arith.constant 0.000000e+00 : f32
    %26 = vector.broadcast %cst_22 : f32 to vector<1x16x128xf32>
    %27 = tpu.concatenate %26, %25, %26 in 0 : vector<1x16x128xf32>, vector<4x16x128xf32>, vector<1x16x128xf32> -> vector<6x16x128xf32>
    %28 = vector.extract_strided_slice %27 {offsets = [0, 0, 0], sizes = [4, 16, 128], strides = [1, 1, 1]} : vector<6x16x128xf32> to vector<4x16x128xf32>
    %29 = vector.shape_cast %28 : vector<4x16x128xf32> to vector<64x128xf32>
    %30 = arith.truncf %29 : vector<64x128xf32> to vector<64x128xbf16>
    %c0_23 = arith.constant 0 : index
    %c0_24 = arith.constant 0 : index
    %c0_25 = arith.constant 0 : index
    %31 = vector.load %arg5[%c0_23, %c0_24, %c0_25] : memref<3x128x128xbf16, #tpu.memory_space<vmem>>, vector<1x128x128xbf16>
    %32 = vector.shape_cast %31 : vector<1x128x128xbf16> to vector<128x128xbf16>
    %cst_26 = arith.constant dense<0.000000e+00> : vector<64x128xf32>
    %33 = tpu.matmul %30, %32, %cst_26 {dimension_numbers = #tpu.dot_dimension_numbers<[1], [0], [0], [1], [0, 0, 1, 1], [], []>} : vector<64x128xbf16>, vector<128x128xbf16>, vector<64x128xf32> -> vector<64x128xf32>
    %34 = vector.extract_strided_slice %27 {offsets = [1, 0, 0], sizes = [4, 16, 128], strides = [1, 1, 1]} : vector<6x16x128xf32> to vector<4x16x128xf32>
    %35 = vector.shape_cast %34 : vector<4x16x128xf32> to vector<64x128xf32>
    %36 = arith.truncf %35 : vector<64x128xf32> to vector<64x128xbf16>
    %c1_27 = arith.constant 1 : index
    %c0_28 = arith.constant 0 : index
    %c0_29 = arith.constant 0 : index
    %37 = vector.load %arg5[%c1_27, %c0_28, %c0_29] : memref<3x128x128xbf16, #tpu.memory_space<vmem>>, vector<1x128x128xbf16>
    %38 = vector.shape_cast %37 : vector<1x128x128xbf16> to vector<128x128xbf16>
    %cst_30 = arith.constant dense<0.000000e+00> : vector<64x128xf32>
    %39 = tpu.matmul %36, %38, %cst_30 {dimension_numbers = #tpu.dot_dimension_numbers<[1], [0], [0], [1], [0, 0, 1, 1], [], []>} : vector<64x128xbf16>, vector<128x128xbf16>, vector<64x128xf32> -> vector<64x128xf32>
    %40 = arith.addf %33, %39 : vector<64x128xf32>
    %41 = vector.extract_strided_slice %27 {offsets = [2, 0, 0], sizes = [4, 16, 128], strides = [1, 1, 1]} : vector<6x16x128xf32> to vector<4x16x128xf32>
    %42 = vector.shape_cast %41 : vector<4x16x128xf32> to vector<64x128xf32>
    %43 = arith.truncf %42 : vector<64x128xf32> to vector<64x128xbf16>
    %c2_31 = arith.constant 2 : index
    %c0_32 = arith.constant 0 : index
    %c0_33 = arith.constant 0 : index
    %44 = vector.load %arg5[%c2_31, %c0_32, %c0_33] : memref<3x128x128xbf16, #tpu.memory_space<vmem>>, vector<1x128x128xbf16>
    %45 = vector.shape_cast %44 : vector<1x128x128xbf16> to vector<128x128xbf16>
    %cst_34 = arith.constant dense<0.000000e+00> : vector<64x128xf32>
    %46 = tpu.matmul %43, %45, %cst_34 {dimension_numbers = #tpu.dot_dimension_numbers<[1], [0], [0], [1], [0, 0, 1, 1], [], []>} : vector<64x128xbf16>, vector<128x128xbf16>, vector<64x128xf32> -> vector<64x128xf32>
    %47 = arith.addf %40, %46 : vector<64x128xf32>
    %c0_35 = arith.constant 0 : index
    %c0_36 = arith.constant 0 : index
    %48 = vector.load %arg6[%c0_35, %c0_36] : memref<1x128xf32, #tpu.memory_space<vmem>>, vector<1x128xf32>
    %49 = vector.broadcast %48 : vector<1x128xf32> to vector<64x128xf32>
    %50 = arith.mulf %47, %49 : vector<64x128xf32>
    %c0_37 = arith.constant 0 : index
    %c0_38 = arith.constant 0 : index
    %51 = vector.load %arg7[%c0_37, %c0_38] : memref<1x128xf32, #tpu.memory_space<vmem>>, vector<1x128xf32>
    %52 = vector.broadcast %51 : vector<1x128xf32> to vector<64x128xf32>
    %53 = arith.addf %50, %52 : vector<64x128xf32>
    %54 = arith.extf %1 : vector<64x128xbf16> to vector<64x128xf32>
    %55 = arith.addf %53, %54 : vector<64x128xf32>
    %cst_39 = arith.constant 0.000000e+00 : f32
    %56 = vector.broadcast %cst_39 : f32 to vector<64x128xf32>
    %57 = arith.maximumf %55, %56 : vector<64x128xf32>
    %58 = vector.shape_cast %57 : vector<64x128xf32> to vector<4x16x128xf32>
    %59 = arith.truncf %58 : vector<4x16x128xf32> to vector<4x16x128xbf16>
    %c0_40 = arith.constant 0 : index
    %c0_41 = arith.constant 0 : index
    %c0_42 = arith.constant 0 : index
    %60 = vector.load %arg8[%c0_40, %c0_41, %c0_42] : memref<4x16x128xbf16, #tpu.memory_space<vmem>>, vector<4x16x128xbf16>
    tpu.vector_store %arg8[%c0_40, %c0_41, %c0_42], %59 {strides = array<i32>} : memref<4x16x128xbf16, #tpu.memory_space<vmem>>, vector<4x16x128xbf16>,
    return
  }
  func.func @transform_0(%arg0: i32) -> (i32, i32, i32) {
    %c0_i32 = arith.constant 0 : i32
    %c0_i32_0 = arith.constant 0 : i32
    %c0_i32_1 = arith.constant 0 : i32
    return %c0_i32, %arg0, %c0_i32_0 : i32, i32, i32
  }
  func.func @transform_1(%arg0: i32) -> (i32, i32, i32) {
    %c0_i32 = arith.constant 0 : i32
    %c0_i32_0 = arith.constant 0 : i32
    %c0_i32_1 = arith.constant 0 : i32
    %c0_i32_2 = arith.constant 0 : i32
    return %c0_i32, %c0_i32_0, %c0_i32_1 : i32, i32, i32
  }
  func.func @transform_2(%arg0: i32) -> (i32, i32) {
    %c0_i32 = arith.constant 0 : i32
    %c0_i32_0 = arith.constant 0 : i32
    %c0_i32_1 = arith.constant 0 : i32
    return %c0_i32, %c0_i32_0 : i32, i32
  }
  func.func @transform_3(%arg0: i32) -> (i32, i32) {
    %c0_i32 = arith.constant 0 : i32
    %c0_i32_0 = arith.constant 0 : i32
    %c0_i32_1 = arith.constant 0 : i32
    return %c0_i32, %c0_i32_0 : i32, i32
  }
  func.func @transform_4(%arg0: i32) -> (i32, i32, i32) {
    %c0_i32 = arith.constant 0 : i32
    %c0_i32_0 = arith.constant 0 : i32
    %c0_i32_1 = arith.constant 0 : i32
    %c0_i32_2 = arith.constant 0 : i32
    return %c0_i32, %c0_i32_0, %c0_i32_1 : i32, i32, i32
  }
  func.func @transform_5(%arg0: i32) -> (i32, i32) {
    %c0_i32 = arith.constant 0 : i32
    %c0_i32_0 = arith.constant 0 : i32
    %c0_i32_1 = arith.constant 0 : i32
    return %c0_i32, %c0_i32_0 : i32, i32
  }
  func.func @transform_6(%arg0: i32) -> (i32, i32) {
    %c0_i32 = arith.constant 0 : i32
    %c0_i32_0 = arith.constant 0 : i32
    %c0_i32_1 = arith.constant 0 : i32
    return %c0_i32, %c0_i32_0 : i32, i32
  }
  func.func @transform_7(%arg0: i32) -> (i32, i32, i32) {
    %c0_i32 = arith.constant 0 : i32
    %c0_i32_0 = arith.constant 0 : i32
    %c0_i32_1 = arith.constant 0 : i32
    return %c0_i32, %arg0, %c0_i32_0 : i32, i32, i32
  }
}

module attributes {stable_mosaic.version = 11 : i64} {
  func.func @kernel(%arg0: i32, %arg1: memref<6x16x128xbf16, #tpu.memory_space<vmem>>, %arg2: memref<3x128x256xbf16, #tpu.memory_space<vmem>>, %arg3: memref<1x256xf32, #tpu.memory_space<vmem>>, %arg4: memref<1x256xf32, #tpu.memory_space<vmem>>, %arg5: memref<3x256x256xbf16, #tpu.memory_space<vmem>>, %arg6: memref<1x256xf32, #tpu.memory_space<vmem>>, %arg7: memref<1x256xf32, #tpu.memory_space<vmem>>, %arg8: memref<1x128x256xbf16, #tpu.memory_space<vmem>>, %arg9: memref<1x256xf32, #tpu.memory_space<vmem>>, %arg10: memref<1x256xf32, #tpu.memory_space<vmem>>, %arg11: memref<2x16x256xbf16, #tpu.memory_space<vmem>>) attributes {dimension_semantics = [#tpu.dimension_semantics<parallel>], iteration_bounds = array<i64: 1>, scalar_prefetch = 0 : i64, scratch_operands = 0 : i64, tpu.core_type = #tpu.core_type<tc>, window_params = [{transform_indices = @transform_0, window_bounds = array<i64: 6, 16, 128>}, {pipeline_mode = #tpu.pipeline_mode<synchronous>, transform_indices = @transform_1, window_bounds = array<i64: 3, 128, 256>}, {pipeline_mode = #tpu.pipeline_mode<synchronous>, transform_indices = @transform_2, window_bounds = array<i64: 1, 256>}, {pipeline_mode = #tpu.pipeline_mode<synchronous>, transform_indices = @transform_3, window_bounds = array<i64: 1, 256>}, {pipeline_mode = #tpu.pipeline_mode<synchronous>, transform_indices = @transform_4, window_bounds = array<i64: 3, 256, 256>}, {pipeline_mode = #tpu.pipeline_mode<synchronous>, transform_indices = @transform_5, window_bounds = array<i64: 1, 256>}, {pipeline_mode = #tpu.pipeline_mode<synchronous>, transform_indices = @transform_6, window_bounds = array<i64: 1, 256>}, {pipeline_mode = #tpu.pipeline_mode<synchronous>, transform_indices = @transform_7, window_bounds = array<i64: 1, 128, 256>}, {pipeline_mode = #tpu.pipeline_mode<synchronous>, transform_indices = @transform_8, window_bounds = array<i64: 1, 256>}, {pipeline_mode = #tpu.pipeline_mode<synchronous>, transform_indices = @transform_9, window_bounds = array<i64: 1, 256>}, {transform_indices = @transform_10, window_bounds = array<i64: 2, 16, 256>}]} {
    %c1 = arith.constant 1 : index
    %c0 = arith.constant 0 : index
    %c0_0 = arith.constant 0 : index
    %0 = vector.load %arg1[%c1, %c0, %c0_0] : memref<6x16x128xbf16, #tpu.memory_space<vmem>>, vector<1x16x128xbf16>
    %1 = vector.shape_cast %0 : vector<1x16x128xbf16> to vector<16x128xbf16>
    %c3 = arith.constant 3 : index
    %c0_1 = arith.constant 0 : index
    %c0_2 = arith.constant 0 : index
    %2 = vector.load %arg1[%c3, %c0_1, %c0_2] : memref<6x16x128xbf16, #tpu.memory_space<vmem>>, vector<1x16x128xbf16>
    %3 = vector.shape_cast %2 : vector<1x16x128xbf16> to vector<16x128xbf16>
    %4 = tpu.concatenate %1, %3 in 0 : vector<16x128xbf16>, vector<16x128xbf16> -> vector<32x128xbf16>
    %c0_3 = arith.constant 0 : index
    %c0_4 = arith.constant 0 : index
    %c0_5 = arith.constant 0 : index
    %5 = vector.load %arg1[%c0_3, %c0_4, %c0_5] : memref<6x16x128xbf16, #tpu.memory_space<vmem>>, vector<1x16x128xbf16>
    %6 = vector.shape_cast %5 : vector<1x16x128xbf16> to vector<16x128xbf16>
    %c2 = arith.constant 2 : index
    %c0_6 = arith.constant 0 : index
    %c0_7 = arith.constant 0 : index
    %7 = vector.load %arg1[%c2, %c0_6, %c0_7] : memref<6x16x128xbf16, #tpu.memory_space<vmem>>, vector<1x16x128xbf16>
    %8 = vector.shape_cast %7 : vector<1x16x128xbf16> to vector<16x128xbf16>
    %9 = tpu.concatenate %6, %8 in 0 : vector<16x128xbf16>, vector<16x128xbf16> -> vector<32x128xbf16>
    %c0_8 = arith.constant 0 : index
    %c0_9 = arith.constant 0 : index
    %c0_10 = arith.constant 0 : index
    %10 = vector.load %arg2[%c0_8, %c0_9, %c0_10] : memref<3x128x256xbf16, #tpu.memory_space<vmem>>, vector<1x128x256xbf16>
    %11 = vector.shape_cast %10 : vector<1x128x256xbf16> to vector<128x256xbf16>
    %cst = arith.constant dense<0.000000e+00> : vector<32x256xf32>
    %12 = tpu.matmul %9, %11, %cst {dimension_numbers = #tpu.dot_dimension_numbers<[1], [0], [0], [1], [0, 0, 1, 1], [], []>} : vector<32x128xbf16>, vector<128x256xbf16>, vector<32x256xf32> -> vector<32x256xf32>
    %c1_11 = arith.constant 1 : index
    %c0_12 = arith.constant 0 : index
    %c0_13 = arith.constant 0 : index
    %13 = vector.load %arg2[%c1_11, %c0_12, %c0_13] : memref<3x128x256xbf16, #tpu.memory_space<vmem>>, vector<1x128x256xbf16>
    %14 = vector.shape_cast %13 : vector<1x128x256xbf16> to vector<128x256xbf16>
    %cst_14 = arith.constant dense<0.000000e+00> : vector<32x256xf32>
    %15 = tpu.matmul %4, %14, %cst_14 {dimension_numbers = #tpu.dot_dimension_numbers<[1], [0], [0], [1], [0, 0, 1, 1], [], []>} : vector<32x128xbf16>, vector<128x256xbf16>, vector<32x256xf32> -> vector<32x256xf32>
    %16 = arith.addf %12, %15 : vector<32x256xf32>
    %c2_15 = arith.constant 2 : index
    %c0_16 = arith.constant 0 : index
    %c0_17 = arith.constant 0 : index
    %17 = vector.load %arg1[%c2_15, %c0_16, %c0_17] : memref<6x16x128xbf16, #tpu.memory_space<vmem>>, vector<1x16x128xbf16>
    %18 = vector.shape_cast %17 : vector<1x16x128xbf16> to vector<16x128xbf16>
    %c4 = arith.constant 4 : index
    %c0_18 = arith.constant 0 : index
    %c0_19 = arith.constant 0 : index
    %19 = vector.load %arg1[%c4, %c0_18, %c0_19] : memref<6x16x128xbf16, #tpu.memory_space<vmem>>, vector<1x16x128xbf16>
    %20 = vector.shape_cast %19 : vector<1x16x128xbf16> to vector<16x128xbf16>
    %21 = tpu.concatenate %18, %20 in 0 : vector<16x128xbf16>, vector<16x128xbf16> -> vector<32x128xbf16>
    %c2_20 = arith.constant 2 : index
    %c0_21 = arith.constant 0 : index
    %c0_22 = arith.constant 0 : index
    %22 = vector.load %arg2[%c2_20, %c0_21, %c0_22] : memref<3x128x256xbf16, #tpu.memory_space<vmem>>, vector<1x128x256xbf16>
    %23 = vector.shape_cast %22 : vector<1x128x256xbf16> to vector<128x256xbf16>
    %cst_23 = arith.constant dense<0.000000e+00> : vector<32x256xf32>
    %24 = tpu.matmul %21, %23, %cst_23 {dimension_numbers = #tpu.dot_dimension_numbers<[1], [0], [0], [1], [0, 0, 1, 1], [], []>} : vector<32x128xbf16>, vector<128x256xbf16>, vector<32x256xf32> -> vector<32x256xf32>
    %25 = arith.addf %16, %24 : vector<32x256xf32>
    %c0_24 = arith.constant 0 : index
    %c0_25 = arith.constant 0 : index
    %26 = vector.load %arg3[%c0_24, %c0_25] : memref<1x256xf32, #tpu.memory_space<vmem>>, vector<1x256xf32>
    %27 = vector.broadcast %26 : vector<1x256xf32> to vector<32x256xf32>
    %28 = arith.mulf %25, %27 : vector<32x256xf32>
    %c0_26 = arith.constant 0 : index
    %c0_27 = arith.constant 0 : index
    %29 = vector.load %arg4[%c0_26, %c0_27] : memref<1x256xf32, #tpu.memory_space<vmem>>, vector<1x256xf32>
    %30 = vector.broadcast %29 : vector<1x256xf32> to vector<32x256xf32>
    %31 = arith.addf %28, %30 : vector<32x256xf32>
    %cst_28 = arith.constant 0.000000e+00 : f32
    %32 = vector.broadcast %cst_28 : f32 to vector<32x256xf32>
    %33 = arith.maximumf %31, %32 : vector<32x256xf32>
    %34 = vector.shape_cast %33 : vector<32x256xf32> to vector<2x16x256xf32>
    %cst_29 = arith.constant 0.000000e+00 : f32
    %35 = vector.broadcast %cst_29 : f32 to vector<1x16x256xf32>
    %36 = tpu.concatenate %35, %34, %35 in 0 : vector<1x16x256xf32>, vector<2x16x256xf32>, vector<1x16x256xf32> -> vector<4x16x256xf32>
    %37 = vector.extract_strided_slice %36 {offsets = [0, 0, 0], sizes = [2, 16, 256], strides = [1, 1, 1]} : vector<4x16x256xf32> to vector<2x16x256xf32>
    %38 = vector.shape_cast %37 : vector<2x16x256xf32> to vector<32x256xf32>
    %39 = arith.truncf %38 : vector<32x256xf32> to vector<32x256xbf16>
    %c0_30 = arith.constant 0 : index
    %c0_31 = arith.constant 0 : index
    %c0_32 = arith.constant 0 : index
    %40 = vector.load %arg5[%c0_30, %c0_31, %c0_32] : memref<3x256x256xbf16, #tpu.memory_space<vmem>>, vector<1x256x256xbf16>
    %41 = vector.shape_cast %40 : vector<1x256x256xbf16> to vector<256x256xbf16>
    %cst_33 = arith.constant dense<0.000000e+00> : vector<32x256xf32>
    %42 = tpu.matmul %39, %41, %cst_33 {dimension_numbers = #tpu.dot_dimension_numbers<[1], [0], [0], [1], [0, 0, 1, 1], [], []>} : vector<32x256xbf16>, vector<256x256xbf16>, vector<32x256xf32> -> vector<32x256xf32>
    %43 = vector.extract_strided_slice %36 {offsets = [1, 0, 0], sizes = [2, 16, 256], strides = [1, 1, 1]} : vector<4x16x256xf32> to vector<2x16x256xf32>
    %44 = vector.shape_cast %43 : vector<2x16x256xf32> to vector<32x256xf32>
    %45 = arith.truncf %44 : vector<32x256xf32> to vector<32x256xbf16>
    %c1_34 = arith.constant 1 : index
    %c0_35 = arith.constant 0 : index
    %c0_36 = arith.constant 0 : index
    %46 = vector.load %arg5[%c1_34, %c0_35, %c0_36] : memref<3x256x256xbf16, #tpu.memory_space<vmem>>, vector<1x256x256xbf16>
    %47 = vector.shape_cast %46 : vector<1x256x256xbf16> to vector<256x256xbf16>
    %cst_37 = arith.constant dense<0.000000e+00> : vector<32x256xf32>
    %48 = tpu.matmul %45, %47, %cst_37 {dimension_numbers = #tpu.dot_dimension_numbers<[1], [0], [0], [1], [0, 0, 1, 1], [], []>} : vector<32x256xbf16>, vector<256x256xbf16>, vector<32x256xf32> -> vector<32x256xf32>
    %49 = arith.addf %42, %48 : vector<32x256xf32>
    %50 = vector.extract_strided_slice %36 {offsets = [2, 0, 0], sizes = [2, 16, 256], strides = [1, 1, 1]} : vector<4x16x256xf32> to vector<2x16x256xf32>
    %51 = vector.shape_cast %50 : vector<2x16x256xf32> to vector<32x256xf32>
    %52 = arith.truncf %51 : vector<32x256xf32> to vector<32x256xbf16>
    %c2_38 = arith.constant 2 : index
    %c0_39 = arith.constant 0 : index
    %c0_40 = arith.constant 0 : index
    %53 = vector.load %arg5[%c2_38, %c0_39, %c0_40] : memref<3x256x256xbf16, #tpu.memory_space<vmem>>, vector<1x256x256xbf16>
    %54 = vector.shape_cast %53 : vector<1x256x256xbf16> to vector<256x256xbf16>
    %cst_41 = arith.constant dense<0.000000e+00> : vector<32x256xf32>
    %55 = tpu.matmul %52, %54, %cst_41 {dimension_numbers = #tpu.dot_dimension_numbers<[1], [0], [0], [1], [0, 0, 1, 1], [], []>} : vector<32x256xbf16>, vector<256x256xbf16>, vector<32x256xf32> -> vector<32x256xf32>
    %56 = arith.addf %49, %55 : vector<32x256xf32>
    %c0_42 = arith.constant 0 : index
    %c0_43 = arith.constant 0 : index
    %57 = vector.load %arg6[%c0_42, %c0_43] : memref<1x256xf32, #tpu.memory_space<vmem>>, vector<1x256xf32>
    %58 = vector.broadcast %57 : vector<1x256xf32> to vector<32x256xf32>
    %59 = arith.mulf %56, %58 : vector<32x256xf32>
    %c0_44 = arith.constant 0 : index
    %c0_45 = arith.constant 0 : index
    %60 = vector.load %arg7[%c0_44, %c0_45] : memref<1x256xf32, #tpu.memory_space<vmem>>, vector<1x256xf32>
    %61 = vector.broadcast %60 : vector<1x256xf32> to vector<32x256xf32>
    %62 = arith.addf %59, %61 : vector<32x256xf32>
    %c0_46 = arith.constant 0 : index
    %c0_47 = arith.constant 0 : index
    %c0_48 = arith.constant 0 : index
    %63 = vector.load %arg8[%c0_46, %c0_47, %c0_48] : memref<1x128x256xbf16, #tpu.memory_space<vmem>>, vector<1x128x256xbf16>
    %64 = vector.shape_cast %63 : vector<1x128x256xbf16> to vector<128x256xbf16>
    %cst_49 = arith.constant dense<0.000000e+00> : vector<32x256xf32>
    %65 = tpu.matmul %4, %64, %cst_49 {dimension_numbers = #tpu.dot_dimension_numbers<[1], [0], [0], [1], [0, 0, 1, 1], [], []>} : vector<32x128xbf16>, vector<128x256xbf16>, vector<32x256xf32> -> vector<32x256xf32>
    %c0_50 = arith.constant 0 : index
    %c0_51 = arith.constant 0 : index
    %66 = vector.load %arg9[%c0_50, %c0_51] : memref<1x256xf32, #tpu.memory_space<vmem>>, vector<1x256xf32>
    %67 = vector.broadcast %66 : vector<1x256xf32> to vector<32x256xf32>
    %68 = arith.mulf %65, %67 : vector<32x256xf32>
    %c0_52 = arith.constant 0 : index
    %c0_53 = arith.constant 0 : index
    %69 = vector.load %arg10[%c0_52, %c0_53] : memref<1x256xf32, #tpu.memory_space<vmem>>, vector<1x256xf32>
    %70 = vector.broadcast %69 : vector<1x256xf32> to vector<32x256xf32>
    %71 = arith.addf %68, %70 : vector<32x256xf32>
    %72 = arith.addf %62, %71 : vector<32x256xf32>
    %cst_54 = arith.constant 0.000000e+00 : f32
    %73 = vector.broadcast %cst_54 : f32 to vector<32x256xf32>
    %74 = arith.maximumf %72, %73 : vector<32x256xf32>
    %75 = vector.shape_cast %74 : vector<32x256xf32> to vector<2x16x256xf32>
    %76 = arith.truncf %75 : vector<2x16x256xf32> to vector<2x16x256xbf16>
    %c0_55 = arith.constant 0 : index
    %c0_56 = arith.constant 0 : index
    %c0_57 = arith.constant 0 : index
    %77 = vector.load %arg11[%c0_55, %c0_56, %c0_57] : memref<2x16x256xbf16, #tpu.memory_space<vmem>>, vector<2x16x256xbf16>
    tpu.vector_store %arg11[%c0_55, %c0_56, %c0_57], %76 {strides = array<i32>} : memref<2x16x256xbf16, #tpu.memory_space<vmem>>, vector<2x16x256xbf16>,
    return
  }
  func.func @transform_0(%arg0: i32) -> (i32, i32, i32) {
    %c0_i32 = arith.constant 0 : i32
    %c0_i32_0 = arith.constant 0 : i32
    %c0_i32_1 = arith.constant 0 : i32
    return %c0_i32, %arg0, %c0_i32_0 : i32, i32, i32
  }
  func.func @transform_1(%arg0: i32) -> (i32, i32, i32) {
    %c0_i32 = arith.constant 0 : i32
    %c0_i32_0 = arith.constant 0 : i32
    %c0_i32_1 = arith.constant 0 : i32
    %c0_i32_2 = arith.constant 0 : i32
    return %c0_i32, %c0_i32_0, %c0_i32_1 : i32, i32, i32
  }
  func.func @transform_2(%arg0: i32) -> (i32, i32) {
    %c0_i32 = arith.constant 0 : i32
    %c0_i32_0 = arith.constant 0 : i32
    %c0_i32_1 = arith.constant 0 : i32
    return %c0_i32, %c0_i32_0 : i32, i32
  }
  func.func @transform_3(%arg0: i32) -> (i32, i32) {
    %c0_i32 = arith.constant 0 : i32
    %c0_i32_0 = arith.constant 0 : i32
    %c0_i32_1 = arith.constant 0 : i32
    return %c0_i32, %c0_i32_0 : i32, i32
  }
  func.func @transform_4(%arg0: i32) -> (i32, i32, i32) {
    %c0_i32 = arith.constant 0 : i32
    %c0_i32_0 = arith.constant 0 : i32
    %c0_i32_1 = arith.constant 0 : i32
    %c0_i32_2 = arith.constant 0 : i32
    return %c0_i32, %c0_i32_0, %c0_i32_1 : i32, i32, i32
  }
  func.func @transform_5(%arg0: i32) -> (i32, i32) {
    %c0_i32 = arith.constant 0 : i32
    %c0_i32_0 = arith.constant 0 : i32
    %c0_i32_1 = arith.constant 0 : i32
    return %c0_i32, %c0_i32_0 : i32, i32
  }
  func.func @transform_6(%arg0: i32) -> (i32, i32) {
    %c0_i32 = arith.constant 0 : i32
    %c0_i32_0 = arith.constant 0 : i32
    %c0_i32_1 = arith.constant 0 : i32
    return %c0_i32, %c0_i32_0 : i32, i32
  }
  func.func @transform_7(%arg0: i32) -> (i32, i32, i32) {
    %c0_i32 = arith.constant 0 : i32
    %c0_i32_0 = arith.constant 0 : i32
    %c0_i32_1 = arith.constant 0 : i32
    %c0_i32_2 = arith.constant 0 : i32
    return %c0_i32, %c0_i32_0, %c0_i32_1 : i32, i32, i32
  }
  func.func @transform_8(%arg0: i32) -> (i32, i32) {
    %c0_i32 = arith.constant 0 : i32
    %c0_i32_0 = arith.constant 0 : i32
    %c0_i32_1 = arith.constant 0 : i32
    return %c0_i32, %c0_i32_0 : i32, i32
  }
  func.func @transform_9(%arg0: i32) -> (i32, i32) {
    %c0_i32 = arith.constant 0 : i32
    %c0_i32_0 = arith.constant 0 : i32
    %c0_i32_1 = arith.constant 0 : i32
    return %c0_i32, %c0_i32_0 : i32, i32
  }
  func.func @transform_10(%arg0: i32) -> (i32, i32, i32) {
    %c0_i32 = arith.constant 0 : i32
    %c0_i32_0 = arith.constant 0 : i32
    %c0_i32_1 = arith.constant 0 : i32
    return %c0_i32, %arg0, %c0_i32_0 : i32, i32, i32
  }
}

module attributes {stable_mosaic.version = 11 : i64} {
  func.func @kernel(%arg0: i32, %arg1: memref<4x16x256xbf16, #tpu.memory_space<vmem>>, %arg2: memref<3x256x256xbf16, #tpu.memory_space<vmem>>, %arg3: memref<1x256xf32, #tpu.memory_space<vmem>>, %arg4: memref<1x256xf32, #tpu.memory_space<vmem>>, %arg5: memref<3x256x256xbf16, #tpu.memory_space<vmem>>, %arg6: memref<1x256xf32, #tpu.memory_space<vmem>>, %arg7: memref<1x256xf32, #tpu.memory_space<vmem>>, %arg8: memref<2x16x256xbf16, #tpu.memory_space<vmem>>) attributes {dimension_semantics = [#tpu.dimension_semantics<parallel>], iteration_bounds = array<i64: 1>, scalar_prefetch = 0 : i64, scratch_operands = 0 : i64, tpu.core_type = #tpu.core_type<tc>, window_params = [{transform_indices = @transform_0, window_bounds = array<i64: 4, 16, 256>}, {pipeline_mode = #tpu.pipeline_mode<synchronous>, transform_indices = @transform_1, window_bounds = array<i64: 3, 256, 256>}, {pipeline_mode = #tpu.pipeline_mode<synchronous>, transform_indices = @transform_2, window_bounds = array<i64: 1, 256>}, {pipeline_mode = #tpu.pipeline_mode<synchronous>, transform_indices = @transform_3, window_bounds = array<i64: 1, 256>}, {pipeline_mode = #tpu.pipeline_mode<synchronous>, transform_indices = @transform_4, window_bounds = array<i64: 3, 256, 256>}, {pipeline_mode = #tpu.pipeline_mode<synchronous>, transform_indices = @transform_5, window_bounds = array<i64: 1, 256>}, {pipeline_mode = #tpu.pipeline_mode<synchronous>, transform_indices = @transform_6, window_bounds = array<i64: 1, 256>}, {transform_indices = @transform_7, window_bounds = array<i64: 2, 16, 256>}]} {
    %c1 = arith.constant 1 : index
    %c0 = arith.constant 0 : index
    %c0_0 = arith.constant 0 : index
    %0 = vector.load %arg1[%c1, %c0, %c0_0] : memref<4x16x256xbf16, #tpu.memory_space<vmem>>, vector<2x16x256xbf16>
    %1 = vector.shape_cast %0 : vector<2x16x256xbf16> to vector<32x256xbf16>
    %c0_1 = arith.constant 0 : index
    %c0_2 = arith.constant 0 : index
    %c0_3 = arith.constant 0 : index
    %2 = vector.load %arg1[%c0_1, %c0_2, %c0_3] : memref<4x16x256xbf16, #tpu.memory_space<vmem>>, vector<2x16x256xbf16>
    %3 = vector.shape_cast %2 : vector<2x16x256xbf16> to vector<32x256xbf16>
    %c0_4 = arith.constant 0 : index
    %c0_5 = arith.constant 0 : index
    %c0_6 = arith.constant 0 : index
    %4 = vector.load %arg2[%c0_4, %c0_5, %c0_6] : memref<3x256x256xbf16, #tpu.memory_space<vmem>>, vector<1x256x256xbf16>
    %5 = vector.shape_cast %4 : vector<1x256x256xbf16> to vector<256x256xbf16>
    %cst = arith.constant dense<0.000000e+00> : vector<32x256xf32>
    %6 = tpu.matmul %3, %5, %cst {dimension_numbers = #tpu.dot_dimension_numbers<[1], [0], [0], [1], [0, 0, 1, 1], [], []>} : vector<32x256xbf16>, vector<256x256xbf16>, vector<32x256xf32> -> vector<32x256xf32>
    %c1_7 = arith.constant 1 : index
    %c0_8 = arith.constant 0 : index
    %c0_9 = arith.constant 0 : index
    %7 = vector.load %arg2[%c1_7, %c0_8, %c0_9] : memref<3x256x256xbf16, #tpu.memory_space<vmem>>, vector<1x256x256xbf16>
    %8 = vector.shape_cast %7 : vector<1x256x256xbf16> to vector<256x256xbf16>
    %cst_10 = arith.constant dense<0.000000e+00> : vector<32x256xf32>
    %9 = tpu.matmul %1, %8, %cst_10 {dimension_numbers = #tpu.dot_dimension_numbers<[1], [0], [0], [1], [0, 0, 1, 1], [], []>} : vector<32x256xbf16>, vector<256x256xbf16>, vector<32x256xf32> -> vector<32x256xf32>
    %10 = arith.addf %6, %9 : vector<32x256xf32>
    %c2 = arith.constant 2 : index
    %c0_11 = arith.constant 0 : index
    %c0_12 = arith.constant 0 : index
    %11 = vector.load %arg1[%c2, %c0_11, %c0_12] : memref<4x16x256xbf16, #tpu.memory_space<vmem>>, vector<2x16x256xbf16>
    %12 = vector.shape_cast %11 : vector<2x16x256xbf16> to vector<32x256xbf16>
    %c2_13 = arith.constant 2 : index
    %c0_14 = arith.constant 0 : index
    %c0_15 = arith.constant 0 : index
    %13 = vector.load %arg2[%c2_13, %c0_14, %c0_15] : memref<3x256x256xbf16, #tpu.memory_space<vmem>>, vector<1x256x256xbf16>
    %14 = vector.shape_cast %13 : vector<1x256x256xbf16> to vector<256x256xbf16>
    %cst_16 = arith.constant dense<0.000000e+00> : vector<32x256xf32>
    %15 = tpu.matmul %12, %14, %cst_16 {dimension_numbers = #tpu.dot_dimension_numbers<[1], [0], [0], [1], [0, 0, 1, 1], [], []>} : vector<32x256xbf16>, vector<256x256xbf16>, vector<32x256xf32> -> vector<32x256xf32>
    %16 = arith.addf %10, %15 : vector<32x256xf32>
    %c0_17 = arith.constant 0 : index
    %c0_18 = arith.constant 0 : index
    %17 = vector.load %arg3[%c0_17, %c0_18] : memref<1x256xf32, #tpu.memory_space<vmem>>, vector<1x256xf32>
    %18 = vector.broadcast %17 : vector<1x256xf32> to vector<32x256xf32>
    %19 = arith.mulf %16, %18 : vector<32x256xf32>
    %c0_19 = arith.constant 0 : index
    %c0_20 = arith.constant 0 : index
    %20 = vector.load %arg4[%c0_19, %c0_20] : memref<1x256xf32, #tpu.memory_space<vmem>>, vector<1x256xf32>
    %21 = vector.broadcast %20 : vector<1x256xf32> to vector<32x256xf32>
    %22 = arith.addf %19, %21 : vector<32x256xf32>
    %cst_21 = arith.constant 0.000000e+00 : f32
    %23 = vector.broadcast %cst_21 : f32 to vector<32x256xf32>
    %24 = arith.maximumf %22, %23 : vector<32x256xf32>
    %25 = vector.shape_cast %24 : vector<32x256xf32> to vector<2x16x256xf32>
    %cst_22 = arith.constant 0.000000e+00 : f32
    %26 = vector.broadcast %cst_22 : f32 to vector<1x16x256xf32>
    %27 = tpu.concatenate %26, %25, %26 in 0 : vector<1x16x256xf32>, vector<2x16x256xf32>, vector<1x16x256xf32> -> vector<4x16x256xf32>
    %28 = vector.extract_strided_slice %27 {offsets = [0, 0, 0], sizes = [2, 16, 256], strides = [1, 1, 1]} : vector<4x16x256xf32> to vector<2x16x256xf32>
    %29 = vector.shape_cast %28 : vector<2x16x256xf32> to vector<32x256xf32>
    %30 = arith.truncf %29 : vector<32x256xf32> to vector<32x256xbf16>
    %c0_23 = arith.constant 0 : index
    %c0_24 = arith.constant 0 : index
    %c0_25 = arith.constant 0 : index
    %31 = vector.load %arg5[%c0_23, %c0_24, %c0_25] : memref<3x256x256xbf16, #tpu.memory_space<vmem>>, vector<1x256x256xbf16>
    %32 = vector.shape_cast %31 : vector<1x256x256xbf16> to vector<256x256xbf16>
    %cst_26 = arith.constant dense<0.000000e+00> : vector<32x256xf32>
    %33 = tpu.matmul %30, %32, %cst_26 {dimension_numbers = #tpu.dot_dimension_numbers<[1], [0], [0], [1], [0, 0, 1, 1], [], []>} : vector<32x256xbf16>, vector<256x256xbf16>, vector<32x256xf32> -> vector<32x256xf32>
    %34 = vector.extract_strided_slice %27 {offsets = [1, 0, 0], sizes = [2, 16, 256], strides = [1, 1, 1]} : vector<4x16x256xf32> to vector<2x16x256xf32>
    %35 = vector.shape_cast %34 : vector<2x16x256xf32> to vector<32x256xf32>
    %36 = arith.truncf %35 : vector<32x256xf32> to vector<32x256xbf16>
    %c1_27 = arith.constant 1 : index
    %c0_28 = arith.constant 0 : index
    %c0_29 = arith.constant 0 : index
    %37 = vector.load %arg5[%c1_27, %c0_28, %c0_29] : memref<3x256x256xbf16, #tpu.memory_space<vmem>>, vector<1x256x256xbf16>
    %38 = vector.shape_cast %37 : vector<1x256x256xbf16> to vector<256x256xbf16>
    %cst_30 = arith.constant dense<0.000000e+00> : vector<32x256xf32>
    %39 = tpu.matmul %36, %38, %cst_30 {dimension_numbers = #tpu.dot_dimension_numbers<[1], [0], [0], [1], [0, 0, 1, 1], [], []>} : vector<32x256xbf16>, vector<256x256xbf16>, vector<32x256xf32> -> vector<32x256xf32>
    %40 = arith.addf %33, %39 : vector<32x256xf32>
    %41 = vector.extract_strided_slice %27 {offsets = [2, 0, 0], sizes = [2, 16, 256], strides = [1, 1, 1]} : vector<4x16x256xf32> to vector<2x16x256xf32>
    %42 = vector.shape_cast %41 : vector<2x16x256xf32> to vector<32x256xf32>
    %43 = arith.truncf %42 : vector<32x256xf32> to vector<32x256xbf16>
    %c2_31 = arith.constant 2 : index
    %c0_32 = arith.constant 0 : index
    %c0_33 = arith.constant 0 : index
    %44 = vector.load %arg5[%c2_31, %c0_32, %c0_33] : memref<3x256x256xbf16, #tpu.memory_space<vmem>>, vector<1x256x256xbf16>
    %45 = vector.shape_cast %44 : vector<1x256x256xbf16> to vector<256x256xbf16>
    %cst_34 = arith.constant dense<0.000000e+00> : vector<32x256xf32>
    %46 = tpu.matmul %43, %45, %cst_34 {dimension_numbers = #tpu.dot_dimension_numbers<[1], [0], [0], [1], [0, 0, 1, 1], [], []>} : vector<32x256xbf16>, vector<256x256xbf16>, vector<32x256xf32> -> vector<32x256xf32>
    %47 = arith.addf %40, %46 : vector<32x256xf32>
    %c0_35 = arith.constant 0 : index
    %c0_36 = arith.constant 0 : index
    %48 = vector.load %arg6[%c0_35, %c0_36] : memref<1x256xf32, #tpu.memory_space<vmem>>, vector<1x256xf32>
    %49 = vector.broadcast %48 : vector<1x256xf32> to vector<32x256xf32>
    %50 = arith.mulf %47, %49 : vector<32x256xf32>
    %c0_37 = arith.constant 0 : index
    %c0_38 = arith.constant 0 : index
    %51 = vector.load %arg7[%c0_37, %c0_38] : memref<1x256xf32, #tpu.memory_space<vmem>>, vector<1x256xf32>
    %52 = vector.broadcast %51 : vector<1x256xf32> to vector<32x256xf32>
    %53 = arith.addf %50, %52 : vector<32x256xf32>
    %54 = arith.extf %1 : vector<32x256xbf16> to vector<32x256xf32>
    %55 = arith.addf %53, %54 : vector<32x256xf32>
    %cst_39 = arith.constant 0.000000e+00 : f32
    %56 = vector.broadcast %cst_39 : f32 to vector<32x256xf32>
    %57 = arith.maximumf %55, %56 : vector<32x256xf32>
    %58 = vector.shape_cast %57 : vector<32x256xf32> to vector<2x16x256xf32>
    %59 = arith.truncf %58 : vector<2x16x256xf32> to vector<2x16x256xbf16>
    %c0_40 = arith.constant 0 : index
    %c0_41 = arith.constant 0 : index
    %c0_42 = arith.constant 0 : index
    %60 = vector.load %arg8[%c0_40, %c0_41, %c0_42] : memref<2x16x256xbf16, #tpu.memory_space<vmem>>, vector<2x16x256xbf16>
    tpu.vector_store %arg8[%c0_40, %c0_41, %c0_42], %59 {strides = array<i32>} : memref<2x16x256xbf16, #tpu.memory_space<vmem>>, vector<2x16x256xbf16>,
    return
  }
  func.func @transform_0(%arg0: i32) -> (i32, i32, i32) {
    %c0_i32 = arith.constant 0 : i32
    %c0_i32_0 = arith.constant 0 : i32
    %c0_i32_1 = arith.constant 0 : i32
    return %c0_i32, %arg0, %c0_i32_0 : i32, i32, i32
  }
  func.func @transform_1(%arg0: i32) -> (i32, i32, i32) {
    %c0_i32 = arith.constant 0 : i32
    %c0_i32_0 = arith.constant 0 : i32
    %c0_i32_1 = arith.constant 0 : i32
    %c0_i32_2 = arith.constant 0 : i32
    return %c0_i32, %c0_i32_0, %c0_i32_1 : i32, i32, i32
  }
  func.func @transform_2(%arg0: i32) -> (i32, i32) {
    %c0_i32 = arith.constant 0 : i32
    %c0_i32_0 = arith.constant 0 : i32
    %c0_i32_1 = arith.constant 0 : i32
    return %c0_i32, %c0_i32_0 : i32, i32
  }
  func.func @transform_3(%arg0: i32) -> (i32, i32) {
    %c0_i32 = arith.constant 0 : i32
    %c0_i32_0 = arith.constant 0 : i32
    %c0_i32_1 = arith.constant 0 : i32
    return %c0_i32, %c0_i32_0 : i32, i32
  }
  func.func @transform_4(%arg0: i32) -> (i32, i32, i32) {
    %c0_i32 = arith.constant 0 : i32
    %c0_i32_0 = arith.constant 0 : i32
    %c0_i32_1 = arith.constant 0 : i32
    %c0_i32_2 = arith.constant 0 : i32
    return %c0_i32, %c0_i32_0, %c0_i32_1 : i32, i32, i32
  }
  func.func @transform_5(%arg0: i32) -> (i32, i32) {
    %c0_i32 = arith.constant 0 : i32
    %c0_i32_0 = arith.constant 0 : i32
    %c0_i32_1 = arith.constant 0 : i32
    return %c0_i32, %c0_i32_0 : i32, i32
  }
  func.func @transform_6(%arg0: i32) -> (i32, i32) {
    %c0_i32 = arith.constant 0 : i32
    %c0_i32_0 = arith.constant 0 : i32
    %c0_i32_1 = arith.constant 0 : i32
    return %c0_i32, %c0_i32_0 : i32, i32
  }
  func.func @transform_7(%arg0: i32) -> (i32, i32, i32) {
    %c0_i32 = arith.constant 0 : i32
    %c0_i32_0 = arith.constant 0 : i32
    %c0_i32_1 = arith.constant 0 : i32
    return %c0_i32, %arg0, %c0_i32_0 : i32, i32, i32
  }
}

module attributes {stable_mosaic.version = 11 : i64} {
  func.func @kernel(%arg0: i32, %arg1: memref<4x16x256xbf16, #tpu.memory_space<vmem>>, %arg2: memref<3x256x128xbf16, #tpu.memory_space<vmem>>, %arg3: memref<1x128xf32, #tpu.memory_space<vmem>>, %arg4: memref<1x128xf32, #tpu.memory_space<vmem>>, %arg5: memref<3x128x128xbf16, #tpu.memory_space<vmem>>, %arg6: memref<1x128xf32, #tpu.memory_space<vmem>>, %arg7: memref<1x128xf32, #tpu.memory_space<vmem>>, %arg8: memref<1x256x128xbf16, #tpu.memory_space<vmem>>, %arg9: memref<1x128xf32, #tpu.memory_space<vmem>>, %arg10: memref<1x128xf32, #tpu.memory_space<vmem>>, %arg11: memref<1x16x128xbf16, #tpu.memory_space<vmem>>) attributes {dimension_semantics = [#tpu.dimension_semantics<parallel>], iteration_bounds = array<i64: 1>, scalar_prefetch = 0 : i64, scratch_operands = 0 : i64, tpu.core_type = #tpu.core_type<tc>, window_params = [{transform_indices = @transform_0, window_bounds = array<i64: 4, 16, 256>}, {pipeline_mode = #tpu.pipeline_mode<synchronous>, transform_indices = @transform_1, window_bounds = array<i64: 3, 256, 128>}, {pipeline_mode = #tpu.pipeline_mode<synchronous>, transform_indices = @transform_2, window_bounds = array<i64: 1, 128>}, {pipeline_mode = #tpu.pipeline_mode<synchronous>, transform_indices = @transform_3, window_bounds = array<i64: 1, 128>}, {pipeline_mode = #tpu.pipeline_mode<synchronous>, transform_indices = @transform_4, window_bounds = array<i64: 3, 128, 128>}, {pipeline_mode = #tpu.pipeline_mode<synchronous>, transform_indices = @transform_5, window_bounds = array<i64: 1, 128>}, {pipeline_mode = #tpu.pipeline_mode<synchronous>, transform_indices = @transform_6, window_bounds = array<i64: 1, 128>}, {pipeline_mode = #tpu.pipeline_mode<synchronous>, transform_indices = @transform_7, window_bounds = array<i64: 1, 256, 128>}, {pipeline_mode = #tpu.pipeline_mode<synchronous>, transform_indices = @transform_8, window_bounds = array<i64: 1, 128>}, {pipeline_mode = #tpu.pipeline_mode<synchronous>, transform_indices = @transform_9, window_bounds = array<i64: 1, 128>}, {transform_indices = @transform_10, window_bounds = array<i64: 1, 16, 128>}]} {
    %c1 = arith.constant 1 : index
    %c0 = arith.constant 0 : index
    %c0_0 = arith.constant 0 : index
    %0 = vector.load %arg1[%c1, %c0, %c0_0] : memref<4x16x256xbf16, #tpu.memory_space<vmem>>, vector<1x16x256xbf16>
    %1 = vector.shape_cast %0 : vector<1x16x256xbf16> to vector<16x256xbf16>
    %c0_1 = arith.constant 0 : index
    %c0_2 = arith.constant 0 : index
    %c0_3 = arith.constant 0 : index
    %2 = vector.load %arg1[%c0_1, %c0_2, %c0_3] : memref<4x16x256xbf16, #tpu.memory_space<vmem>>, vector<1x16x256xbf16>
    %3 = vector.shape_cast %2 : vector<1x16x256xbf16> to vector<16x256xbf16>
    %c0_4 = arith.constant 0 : index
    %c0_5 = arith.constant 0 : index
    %c0_6 = arith.constant 0 : index
    %4 = vector.load %arg2[%c0_4, %c0_5, %c0_6] : memref<3x256x128xbf16, #tpu.memory_space<vmem>>, vector<1x256x128xbf16>
    %5 = vector.shape_cast %4 : vector<1x256x128xbf16> to vector<256x128xbf16>
    %cst = arith.constant dense<0.000000e+00> : vector<16x128xf32>
    %6 = tpu.matmul %3, %5, %cst {dimension_numbers = #tpu.dot_dimension_numbers<[1], [0], [0], [1], [0, 0, 1, 1], [], []>} : vector<16x256xbf16>, vector<256x128xbf16>, vector<16x128xf32> -> vector<16x128xf32>
    %c1_7 = arith.constant 1 : index
    %c0_8 = arith.constant 0 : index
    %c0_9 = arith.constant 0 : index
    %7 = vector.load %arg2[%c1_7, %c0_8, %c0_9] : memref<3x256x128xbf16, #tpu.memory_space<vmem>>, vector<1x256x128xbf16>
    %8 = vector.shape_cast %7 : vector<1x256x128xbf16> to vector<256x128xbf16>
    %cst_10 = arith.constant dense<0.000000e+00> : vector<16x128xf32>
    %9 = tpu.matmul %1, %8, %cst_10 {dimension_numbers = #tpu.dot_dimension_numbers<[1], [0], [0], [1], [0, 0, 1, 1], [], []>} : vector<16x256xbf16>, vector<256x128xbf16>, vector<16x128xf32> -> vector<16x128xf32>
    %10 = arith.addf %6, %9 : vector<16x128xf32>
    %c2 = arith.constant 2 : index
    %c0_11 = arith.constant 0 : index
    %c0_12 = arith.constant 0 : index
    %11 = vector.load %arg1[%c2, %c0_11, %c0_12] : memref<4x16x256xbf16, #tpu.memory_space<vmem>>, vector<1x16x256xbf16>
    %12 = vector.shape_cast %11 : vector<1x16x256xbf16> to vector<16x256xbf16>
    %c2_13 = arith.constant 2 : index
    %c0_14 = arith.constant 0 : index
    %c0_15 = arith.constant 0 : index
    %13 = vector.load %arg2[%c2_13, %c0_14, %c0_15] : memref<3x256x128xbf16, #tpu.memory_space<vmem>>, vector<1x256x128xbf16>
    %14 = vector.shape_cast %13 : vector<1x256x128xbf16> to vector<256x128xbf16>
    %cst_16 = arith.constant dense<0.000000e+00> : vector<16x128xf32>
    %15 = tpu.matmul %12, %14, %cst_16 {dimension_numbers = #tpu.dot_dimension_numbers<[1], [0], [0], [1], [0, 0, 1, 1], [], []>} : vector<16x256xbf16>, vector<256x128xbf16>, vector<16x128xf32> -> vector<16x128xf32>
    %16 = arith.addf %10, %15 : vector<16x128xf32>
    %c0_17 = arith.constant 0 : index
    %c0_18 = arith.constant 0 : index
    %17 = vector.load %arg3[%c0_17, %c0_18] : memref<1x128xf32, #tpu.memory_space<vmem>>, vector<1x128xf32>
    %18 = vector.broadcast %17 : vector<1x128xf32> to vector<16x128xf32>
    %19 = arith.mulf %16, %18 : vector<16x128xf32>
    %c0_19 = arith.constant 0 : index
    %c0_20 = arith.constant 0 : index
    %20 = vector.load %arg4[%c0_19, %c0_20] : memref<1x128xf32, #tpu.memory_space<vmem>>, vector<1x128xf32>
    %21 = vector.broadcast %20 : vector<1x128xf32> to vector<16x128xf32>
    %22 = arith.addf %19, %21 : vector<16x128xf32>
    %cst_21 = arith.constant 0.000000e+00 : f32
    %23 = vector.broadcast %cst_21 : f32 to vector<16x128xf32>
    %24 = arith.maximumf %22, %23 : vector<16x128xf32>
    %25 = vector.shape_cast %24 : vector<16x128xf32> to vector<1x16x128xf32>
    %cst_22 = arith.constant 0.000000e+00 : f32
    %26 = vector.broadcast %cst_22 : f32 to vector<1x16x128xf32>
    %27 = tpu.concatenate %26, %25, %26 in 0 : vector<1x16x128xf32>, vector<1x16x128xf32>, vector<1x16x128xf32> -> vector<3x16x128xf32>
    %28 = vector.extract_strided_slice %27 {offsets = [0, 0, 0], sizes = [1, 16, 128], strides = [1, 1, 1]} : vector<3x16x128xf32> to vector<1x16x128xf32>
    %29 = vector.shape_cast %28 : vector<1x16x128xf32> to vector<16x128xf32>
    %30 = arith.truncf %29 : vector<16x128xf32> to vector<16x128xbf16>
    %c0_23 = arith.constant 0 : index
    %c0_24 = arith.constant 0 : index
    %c0_25 = arith.constant 0 : index
    %31 = vector.load %arg5[%c0_23, %c0_24, %c0_25] : memref<3x128x128xbf16, #tpu.memory_space<vmem>>, vector<1x128x128xbf16>
    %32 = vector.shape_cast %31 : vector<1x128x128xbf16> to vector<128x128xbf16>
    %cst_26 = arith.constant dense<0.000000e+00> : vector<16x128xf32>
    %33 = tpu.matmul %30, %32, %cst_26 {dimension_numbers = #tpu.dot_dimension_numbers<[1], [0], [0], [1], [0, 0, 1, 1], [], []>} : vector<16x128xbf16>, vector<128x128xbf16>, vector<16x128xf32> -> vector<16x128xf32>
    %34 = vector.extract_strided_slice %27 {offsets = [1, 0, 0], sizes = [1, 16, 128], strides = [1, 1, 1]} : vector<3x16x128xf32> to vector<1x16x128xf32>
    %35 = vector.shape_cast %34 : vector<1x16x128xf32> to vector<16x128xf32>
    %36 = arith.truncf %35 : vector<16x128xf32> to vector<16x128xbf16>
    %c1_27 = arith.constant 1 : index
    %c0_28 = arith.constant 0 : index
    %c0_29 = arith.constant 0 : index
    %37 = vector.load %arg5[%c1_27, %c0_28, %c0_29] : memref<3x128x128xbf16, #tpu.memory_space<vmem>>, vector<1x128x128xbf16>
    %38 = vector.shape_cast %37 : vector<1x128x128xbf16> to vector<128x128xbf16>
    %cst_30 = arith.constant dense<0.000000e+00> : vector<16x128xf32>
    %39 = tpu.matmul %36, %38, %cst_30 {dimension_numbers = #tpu.dot_dimension_numbers<[1], [0], [0], [1], [0, 0, 1, 1], [], []>} : vector<16x128xbf16>, vector<128x128xbf16>, vector<16x128xf32> -> vector<16x128xf32>
    %40 = arith.addf %33, %39 : vector<16x128xf32>
    %41 = vector.extract_strided_slice %27 {offsets = [2, 0, 0], sizes = [1, 16, 128], strides = [1, 1, 1]} : vector<3x16x128xf32> to vector<1x16x128xf32>
    %42 = vector.shape_cast %41 : vector<1x16x128xf32> to vector<16x128xf32>
    %43 = arith.truncf %42 : vector<16x128xf32> to vector<16x128xbf16>
    %c2_31 = arith.constant 2 : index
    %c0_32 = arith.constant 0 : index
    %c0_33 = arith.constant 0 : index
    %44 = vector.load %arg5[%c2_31, %c0_32, %c0_33] : memref<3x128x128xbf16, #tpu.memory_space<vmem>>, vector<1x128x128xbf16>
    %45 = vector.shape_cast %44 : vector<1x128x128xbf16> to vector<128x128xbf16>
    %cst_34 = arith.constant dense<0.000000e+00> : vector<16x128xf32>
    %46 = tpu.matmul %43, %45, %cst_34 {dimension_numbers = #tpu.dot_dimension_numbers<[1], [0], [0], [1], [0, 0, 1, 1], [], []>} : vector<16x128xbf16>, vector<128x128xbf16>, vector<16x128xf32> -> vector<16x128xf32>
    %47 = arith.addf %40, %46 : vector<16x128xf32>
    %c0_35 = arith.constant 0 : index
    %c0_36 = arith.constant 0 : index
    %48 = vector.load %arg6[%c0_35, %c0_36] : memref<1x128xf32, #tpu.memory_space<vmem>>, vector<1x128xf32>
    %49 = vector.broadcast %48 : vector<1x128xf32> to vector<16x128xf32>
    %50 = arith.mulf %47, %49 : vector<16x128xf32>
    %c0_37 = arith.constant 0 : index
    %c0_38 = arith.constant 0 : index
    %51 = vector.load %arg7[%c0_37, %c0_38] : memref<1x128xf32, #tpu.memory_space<vmem>>, vector<1x128xf32>
    %52 = vector.broadcast %51 : vector<1x128xf32> to vector<16x128xf32>
    %53 = arith.addf %50, %52 : vector<16x128xf32>
    %c0_39 = arith.constant 0 : index
    %c0_40 = arith.constant 0 : index
    %c0_41 = arith.constant 0 : index
    %54 = vector.load %arg8[%c0_39, %c0_40, %c0_41] : memref<1x256x128xbf16, #tpu.memory_space<vmem>>, vector<1x256x128xbf16>
    %55 = vector.shape_cast %54 : vector<1x256x128xbf16> to vector<256x128xbf16>
    %cst_42 = arith.constant dense<0.000000e+00> : vector<16x128xf32>
    %56 = tpu.matmul %1, %55, %cst_42 {dimension_numbers = #tpu.dot_dimension_numbers<[1], [0], [0], [1], [0, 0, 1, 1], [], []>} : vector<16x256xbf16>, vector<256x128xbf16>, vector<16x128xf32> -> vector<16x128xf32>
    %c0_43 = arith.constant 0 : index
    %c0_44 = arith.constant 0 : index
    %57 = vector.load %arg9[%c0_43, %c0_44] : memref<1x128xf32, #tpu.memory_space<vmem>>, vector<1x128xf32>
    %58 = vector.broadcast %57 : vector<1x128xf32> to vector<16x128xf32>
    %59 = arith.mulf %56, %58 : vector<16x128xf32>
    %c0_45 = arith.constant 0 : index
    %c0_46 = arith.constant 0 : index
    %60 = vector.load %arg10[%c0_45, %c0_46] : memref<1x128xf32, #tpu.memory_space<vmem>>, vector<1x128xf32>
    %61 = vector.broadcast %60 : vector<1x128xf32> to vector<16x128xf32>
    %62 = arith.addf %59, %61 : vector<16x128xf32>
    %63 = arith.addf %53, %62 : vector<16x128xf32>
    %cst_47 = arith.constant 0.000000e+00 : f32
    %64 = vector.broadcast %cst_47 : f32 to vector<16x128xf32>
    %65 = arith.maximumf %63, %64 : vector<16x128xf32>
    %66 = vector.shape_cast %65 : vector<16x128xf32> to vector<1x16x128xf32>
    %67 = arith.truncf %66 : vector<1x16x128xf32> to vector<1x16x128xbf16>
    %c0_48 = arith.constant 0 : index
    %c0_49 = arith.constant 0 : index
    %c0_50 = arith.constant 0 : index
    %68 = vector.load %arg11[%c0_48, %c0_49, %c0_50] : memref<1x16x128xbf16, #tpu.memory_space<vmem>>, vector<1x16x128xbf16>
    tpu.vector_store %arg11[%c0_48, %c0_49, %c0_50], %67 {strides = array<i32>} : memref<1x16x128xbf16, #tpu.memory_space<vmem>>, vector<1x16x128xbf16>,
    return
  }
  func.func @transform_0(%arg0: i32) -> (i32, i32, i32) {
    %c0_i32 = arith.constant 0 : i32
    %c0_i32_0 = arith.constant 0 : i32
    %c0_i32_1 = arith.constant 0 : i32
    return %c0_i32, %arg0, %c0_i32_0 : i32, i32, i32
  }
  func.func @transform_1(%arg0: i32) -> (i32, i32, i32) {
    %c0_i32 = arith.constant 0 : i32
    %c0_i32_0 = arith.constant 0 : i32
    %c0_i32_1 = arith.constant 0 : i32
    %c0_i32_2 = arith.constant 0 : i32
    return %c0_i32, %c0_i32_0, %c0_i32_1 : i32, i32, i32
  }
  func.func @transform_2(%arg0: i32) -> (i32, i32) {
    %c0_i32 = arith.constant 0 : i32
    %c0_i32_0 = arith.constant 0 : i32
    %c0_i32_1 = arith.constant 0 : i32
    return %c0_i32, %c0_i32_0 : i32, i32
  }
  func.func @transform_3(%arg0: i32) -> (i32, i32) {
    %c0_i32 = arith.constant 0 : i32
    %c0_i32_0 = arith.constant 0 : i32
    %c0_i32_1 = arith.constant 0 : i32
    return %c0_i32, %c0_i32_0 : i32, i32
  }
  func.func @transform_4(%arg0: i32) -> (i32, i32, i32) {
    %c0_i32 = arith.constant 0 : i32
    %c0_i32_0 = arith.constant 0 : i32
    %c0_i32_1 = arith.constant 0 : i32
    %c0_i32_2 = arith.constant 0 : i32
    return %c0_i32, %c0_i32_0, %c0_i32_1 : i32, i32, i32
  }
  func.func @transform_5(%arg0: i32) -> (i32, i32) {
    %c0_i32 = arith.constant 0 : i32
    %c0_i32_0 = arith.constant 0 : i32
    %c0_i32_1 = arith.constant 0 : i32
    return %c0_i32, %c0_i32_0 : i32, i32
  }
  func.func @transform_6(%arg0: i32) -> (i32, i32) {
    %c0_i32 = arith.constant 0 : i32
    %c0_i32_0 = arith.constant 0 : i32
    %c0_i32_1 = arith.constant 0 : i32
    return %c0_i32, %c0_i32_0 : i32, i32
  }
  func.func @transform_7(%arg0: i32) -> (i32, i32, i32) {
    %c0_i32 = arith.constant 0 : i32
    %c0_i32_0 = arith.constant 0 : i32
    %c0_i32_1 = arith.constant 0 : i32
    %c0_i32_2 = arith.constant 0 : i32
    return %c0_i32, %c0_i32_0, %c0_i32_1 : i32, i32, i32
  }
  func.func @transform_8(%arg0: i32) -> (i32, i32) {
    %c0_i32 = arith.constant 0 : i32
    %c0_i32_0 = arith.constant 0 : i32
    %c0_i32_1 = arith.constant 0 : i32
    return %c0_i32, %c0_i32_0 : i32, i32
  }
  func.func @transform_9(%arg0: i32) -> (i32, i32) {
    %c0_i32 = arith.constant 0 : i32
    %c0_i32_0 = arith.constant 0 : i32
    %c0_i32_1 = arith.constant 0 : i32
    return %c0_i32, %c0_i32_0 : i32, i32
  }
  func.func @transform_10(%arg0: i32) -> (i32, i32, i32) {
    %c0_i32 = arith.constant 0 : i32
    %c0_i32_0 = arith.constant 0 : i32
    %c0_i32_1 = arith.constant 0 : i32
    return %c0_i32, %arg0, %c0_i32_0 : i32, i32, i32
  }
}

module attributes {stable_mosaic.version = 11 : i64} {
  func.func @kernel(%arg0: i32, %arg1: memref<3x16x128xbf16, #tpu.memory_space<vmem>>, %arg2: memref<3x128x128xbf16, #tpu.memory_space<vmem>>, %arg3: memref<1x128xf32, #tpu.memory_space<vmem>>, %arg4: memref<1x128xf32, #tpu.memory_space<vmem>>, %arg5: memref<3x128x128xbf16, #tpu.memory_space<vmem>>, %arg6: memref<1x128xf32, #tpu.memory_space<vmem>>, %arg7: memref<1x128xf32, #tpu.memory_space<vmem>>, %arg8: memref<1x16x128xbf16, #tpu.memory_space<vmem>>) attributes {dimension_semantics = [#tpu.dimension_semantics<parallel>], iteration_bounds = array<i64: 1>, scalar_prefetch = 0 : i64, scratch_operands = 0 : i64, tpu.core_type = #tpu.core_type<tc>, window_params = [{transform_indices = @transform_0, window_bounds = array<i64: 3, 16, 128>}, {pipeline_mode = #tpu.pipeline_mode<synchronous>, transform_indices = @transform_1, window_bounds = array<i64: 3, 128, 128>}, {pipeline_mode = #tpu.pipeline_mode<synchronous>, transform_indices = @transform_2, window_bounds = array<i64: 1, 128>}, {pipeline_mode = #tpu.pipeline_mode<synchronous>, transform_indices = @transform_3, window_bounds = array<i64: 1, 128>}, {pipeline_mode = #tpu.pipeline_mode<synchronous>, transform_indices = @transform_4, window_bounds = array<i64: 3, 128, 128>}, {pipeline_mode = #tpu.pipeline_mode<synchronous>, transform_indices = @transform_5, window_bounds = array<i64: 1, 128>}, {pipeline_mode = #tpu.pipeline_mode<synchronous>, transform_indices = @transform_6, window_bounds = array<i64: 1, 128>}, {transform_indices = @transform_7, window_bounds = array<i64: 1, 16, 128>}]} {
    %c1 = arith.constant 1 : index
    %c0 = arith.constant 0 : index
    %c0_0 = arith.constant 0 : index
    %0 = vector.load %arg1[%c1, %c0, %c0_0] : memref<3x16x128xbf16, #tpu.memory_space<vmem>>, vector<1x16x128xbf16>
    %1 = vector.shape_cast %0 : vector<1x16x128xbf16> to vector<16x128xbf16>
    %c0_1 = arith.constant 0 : index
    %c0_2 = arith.constant 0 : index
    %c0_3 = arith.constant 0 : index
    %2 = vector.load %arg1[%c0_1, %c0_2, %c0_3] : memref<3x16x128xbf16, #tpu.memory_space<vmem>>, vector<1x16x128xbf16>
    %3 = vector.shape_cast %2 : vector<1x16x128xbf16> to vector<16x128xbf16>
    %c0_4 = arith.constant 0 : index
    %c0_5 = arith.constant 0 : index
    %c0_6 = arith.constant 0 : index
    %4 = vector.load %arg2[%c0_4, %c0_5, %c0_6] : memref<3x128x128xbf16, #tpu.memory_space<vmem>>, vector<1x128x128xbf16>
    %5 = vector.shape_cast %4 : vector<1x128x128xbf16> to vector<128x128xbf16>
    %cst = arith.constant dense<0.000000e+00> : vector<16x128xf32>
    %6 = tpu.matmul %3, %5, %cst {dimension_numbers = #tpu.dot_dimension_numbers<[1], [0], [0], [1], [0, 0, 1, 1], [], []>} : vector<16x128xbf16>, vector<128x128xbf16>, vector<16x128xf32> -> vector<16x128xf32>
    %c1_7 = arith.constant 1 : index
    %c0_8 = arith.constant 0 : index
    %c0_9 = arith.constant 0 : index
    %7 = vector.load %arg2[%c1_7, %c0_8, %c0_9] : memref<3x128x128xbf16, #tpu.memory_space<vmem>>, vector<1x128x128xbf16>
    %8 = vector.shape_cast %7 : vector<1x128x128xbf16> to vector<128x128xbf16>
    %cst_10 = arith.constant dense<0.000000e+00> : vector<16x128xf32>
    %9 = tpu.matmul %1, %8, %cst_10 {dimension_numbers = #tpu.dot_dimension_numbers<[1], [0], [0], [1], [0, 0, 1, 1], [], []>} : vector<16x128xbf16>, vector<128x128xbf16>, vector<16x128xf32> -> vector<16x128xf32>
    %10 = arith.addf %6, %9 : vector<16x128xf32>
    %c2 = arith.constant 2 : index
    %c0_11 = arith.constant 0 : index
    %c0_12 = arith.constant 0 : index
    %11 = vector.load %arg1[%c2, %c0_11, %c0_12] : memref<3x16x128xbf16, #tpu.memory_space<vmem>>, vector<1x16x128xbf16>
    %12 = vector.shape_cast %11 : vector<1x16x128xbf16> to vector<16x128xbf16>
    %c2_13 = arith.constant 2 : index
    %c0_14 = arith.constant 0 : index
    %c0_15 = arith.constant 0 : index
    %13 = vector.load %arg2[%c2_13, %c0_14, %c0_15] : memref<3x128x128xbf16, #tpu.memory_space<vmem>>, vector<1x128x128xbf16>
    %14 = vector.shape_cast %13 : vector<1x128x128xbf16> to vector<128x128xbf16>
    %cst_16 = arith.constant dense<0.000000e+00> : vector<16x128xf32>
    %15 = tpu.matmul %12, %14, %cst_16 {dimension_numbers = #tpu.dot_dimension_numbers<[1], [0], [0], [1], [0, 0, 1, 1], [], []>} : vector<16x128xbf16>, vector<128x128xbf16>, vector<16x128xf32> -> vector<16x128xf32>
    %16 = arith.addf %10, %15 : vector<16x128xf32>
    %c0_17 = arith.constant 0 : index
    %c0_18 = arith.constant 0 : index
    %17 = vector.load %arg3[%c0_17, %c0_18] : memref<1x128xf32, #tpu.memory_space<vmem>>, vector<1x128xf32>
    %18 = vector.broadcast %17 : vector<1x128xf32> to vector<16x128xf32>
    %19 = arith.mulf %16, %18 : vector<16x128xf32>
    %c0_19 = arith.constant 0 : index
    %c0_20 = arith.constant 0 : index
    %20 = vector.load %arg4[%c0_19, %c0_20] : memref<1x128xf32, #tpu.memory_space<vmem>>, vector<1x128xf32>
    %21 = vector.broadcast %20 : vector<1x128xf32> to vector<16x128xf32>
    %22 = arith.addf %19, %21 : vector<16x128xf32>
    %cst_21 = arith.constant 0.000000e+00 : f32
    %23 = vector.broadcast %cst_21 : f32 to vector<16x128xf32>
    %24 = arith.maximumf %22, %23 : vector<16x128xf32>
    %25 = vector.shape_cast %24 : vector<16x128xf32> to vector<1x16x128xf32>
    %cst_22 = arith.constant 0.000000e+00 : f32
    %26 = vector.broadcast %cst_22 : f32 to vector<1x16x128xf32>
    %27 = tpu.concatenate %26, %25, %26 in 0 : vector<1x16x128xf32>, vector<1x16x128xf32>, vector<1x16x128xf32> -> vector<3x16x128xf32>
    %28 = vector.extract_strided_slice %27 {offsets = [0, 0, 0], sizes = [1, 16, 128], strides = [1, 1, 1]} : vector<3x16x128xf32> to vector<1x16x128xf32>
    %29 = vector.shape_cast %28 : vector<1x16x128xf32> to vector<16x128xf32>
    %30 = arith.truncf %29 : vector<16x128xf32> to vector<16x128xbf16>
    %c0_23 = arith.constant 0 : index
    %c0_24 = arith.constant 0 : index
    %c0_25 = arith.constant 0 : index
    %31 = vector.load %arg5[%c0_23, %c0_24, %c0_25] : memref<3x128x128xbf16, #tpu.memory_space<vmem>>, vector<1x128x128xbf16>
    %32 = vector.shape_cast %31 : vector<1x128x128xbf16> to vector<128x128xbf16>
    %cst_26 = arith.constant dense<0.000000e+00> : vector<16x128xf32>
    %33 = tpu.matmul %30, %32, %cst_26 {dimension_numbers = #tpu.dot_dimension_numbers<[1], [0], [0], [1], [0, 0, 1, 1], [], []>} : vector<16x128xbf16>, vector<128x128xbf16>, vector<16x128xf32> -> vector<16x128xf32>
    %34 = vector.extract_strided_slice %27 {offsets = [1, 0, 0], sizes = [1, 16, 128], strides = [1, 1, 1]} : vector<3x16x128xf32> to vector<1x16x128xf32>
    %35 = vector.shape_cast %34 : vector<1x16x128xf32> to vector<16x128xf32>
    %36 = arith.truncf %35 : vector<16x128xf32> to vector<16x128xbf16>
    %c1_27 = arith.constant 1 : index
    %c0_28 = arith.constant 0 : index
    %c0_29 = arith.constant 0 : index
    %37 = vector.load %arg5[%c1_27, %c0_28, %c0_29] : memref<3x128x128xbf16, #tpu.memory_space<vmem>>, vector<1x128x128xbf16>
    %38 = vector.shape_cast %37 : vector<1x128x128xbf16> to vector<128x128xbf16>
    %cst_30 = arith.constant dense<0.000000e+00> : vector<16x128xf32>
    %39 = tpu.matmul %36, %38, %cst_30 {dimension_numbers = #tpu.dot_dimension_numbers<[1], [0], [0], [1], [0, 0, 1, 1], [], []>} : vector<16x128xbf16>, vector<128x128xbf16>, vector<16x128xf32> -> vector<16x128xf32>
    %40 = arith.addf %33, %39 : vector<16x128xf32>
    %41 = vector.extract_strided_slice %27 {offsets = [2, 0, 0], sizes = [1, 16, 128], strides = [1, 1, 1]} : vector<3x16x128xf32> to vector<1x16x128xf32>
    %42 = vector.shape_cast %41 : vector<1x16x128xf32> to vector<16x128xf32>
    %43 = arith.truncf %42 : vector<16x128xf32> to vector<16x128xbf16>
    %c2_31 = arith.constant 2 : index
    %c0_32 = arith.constant 0 : index
    %c0_33 = arith.constant 0 : index
    %44 = vector.load %arg5[%c2_31, %c0_32, %c0_33] : memref<3x128x128xbf16, #tpu.memory_space<vmem>>, vector<1x128x128xbf16>
    %45 = vector.shape_cast %44 : vector<1x128x128xbf16> to vector<128x128xbf16>
    %cst_34 = arith.constant dense<0.000000e+00> : vector<16x128xf32>
    %46 = tpu.matmul %43, %45, %cst_34 {dimension_numbers = #tpu.dot_dimension_numbers<[1], [0], [0], [1], [0, 0, 1, 1], [], []>} : vector<16x128xbf16>, vector<128x128xbf16>, vector<16x128xf32> -> vector<16x128xf32>
    %47 = arith.addf %40, %46 : vector<16x128xf32>
    %c0_35 = arith.constant 0 : index
    %c0_36 = arith.constant 0 : index
    %48 = vector.load %arg6[%c0_35, %c0_36] : memref<1x128xf32, #tpu.memory_space<vmem>>, vector<1x128xf32>
    %49 = vector.broadcast %48 : vector<1x128xf32> to vector<16x128xf32>
    %50 = arith.mulf %47, %49 : vector<16x128xf32>
    %c0_37 = arith.constant 0 : index
    %c0_38 = arith.constant 0 : index
    %51 = vector.load %arg7[%c0_37, %c0_38] : memref<1x128xf32, #tpu.memory_space<vmem>>, vector<1x128xf32>
    %52 = vector.broadcast %51 : vector<1x128xf32> to vector<16x128xf32>
    %53 = arith.addf %50, %52 : vector<16x128xf32>
    %54 = arith.extf %1 : vector<16x128xbf16> to vector<16x128xf32>
    %55 = arith.addf %53, %54 : vector<16x128xf32>
    %cst_39 = arith.constant 0.000000e+00 : f32
    %56 = vector.broadcast %cst_39 : f32 to vector<16x128xf32>
    %57 = arith.maximumf %55, %56 : vector<16x128xf32>
    %58 = vector.shape_cast %57 : vector<16x128xf32> to vector<1x16x128xf32>
    %59 = arith.truncf %58 : vector<1x16x128xf32> to vector<1x16x128xbf16>
    %c0_40 = arith.constant 0 : index
    %c0_41 = arith.constant 0 : index
    %c0_42 = arith.constant 0 : index
    %60 = vector.load %arg8[%c0_40, %c0_41, %c0_42] : memref<1x16x128xbf16, #tpu.memory_space<vmem>>, vector<1x16x128xbf16>
    tpu.vector_store %arg8[%c0_40, %c0_41, %c0_42], %59 {strides = array<i32>} : memref<1x16x128xbf16, #tpu.memory_space<vmem>>, vector<1x16x128xbf16>,
    return
  }
  func.func @transform_0(%arg0: i32) -> (i32, i32, i32) {
    %c0_i32 = arith.constant 0 : i32
    %c0_i32_0 = arith.constant 0 : i32
    %c0_i32_1 = arith.constant 0 : i32
    return %c0_i32, %arg0, %c0_i32_0 : i32, i32, i32
  }
  func.func @transform_1(%arg0: i32) -> (i32, i32, i32) {
    %c0_i32 = arith.constant 0 : i32
    %c0_i32_0 = arith.constant 0 : i32
    %c0_i32_1 = arith.constant 0 : i32
    %c0_i32_2 = arith.constant 0 : i32
    return %c0_i32, %c0_i32_0, %c0_i32_1 : i32, i32, i32
  }
  func.func @transform_2(%arg0: i32) -> (i32, i32) {
    %c0_i32 = arith.constant 0 : i32
    %c0_i32_0 = arith.constant 0 : i32
    %c0_i32_1 = arith.constant 0 : i32
    return %c0_i32, %c0_i32_0 : i32, i32
  }
  func.func @transform_3(%arg0: i32) -> (i32, i32) {
    %c0_i32 = arith.constant 0 : i32
    %c0_i32_0 = arith.constant 0 : i32
    %c0_i32_1 = arith.constant 0 : i32
    return %c0_i32, %c0_i32_0 : i32, i32
  }
  func.func @transform_4(%arg0: i32) -> (i32, i32, i32) {
    %c0_i32 = arith.constant 0 : i32
    %c0_i32_0 = arith.constant 0 : i32
    %c0_i32_1 = arith.constant 0 : i32
    %c0_i32_2 = arith.constant 0 : i32
    return %c0_i32, %c0_i32_0, %c0_i32_1 : i32, i32, i32
  }
  func.func @transform_5(%arg0: i32) -> (i32, i32) {
    %c0_i32 = arith.constant 0 : i32
    %c0_i32_0 = arith.constant 0 : i32
    %c0_i32_1 = arith.constant 0 : i32
    return %c0_i32, %c0_i32_0 : i32, i32
  }
  func.func @transform_6(%arg0: i32) -> (i32, i32) {
    %c0_i32 = arith.constant 0 : i32
    %c0_i32_0 = arith.constant 0 : i32
    %c0_i32_1 = arith.constant 0 : i32
    return %c0_i32, %c0_i32_0 : i32, i32
  }
  func.func @transform_7(%arg0: i32) -> (i32, i32, i32) {
    %c0_i32 = arith.constant 0 : i32
    %c0_i32_0 = arith.constant 0 : i32
    %c0_i32_1 = arith.constant 0 : i32
    return %c0_i32, %arg0, %c0_i32_0 : i32, i32, i32
  }
}

module attributes {stable_mosaic.version = 11 : i64} {
  func.func @_pool_bn_kernel(%arg0: i32, %arg1: memref<1x16x128xbf16, #tpu.memory_space<vmem>>, %arg2: memref<1x128xf32, #tpu.memory_space<vmem>>, %arg3: memref<1x128xf32, #tpu.memory_space<vmem>>, %arg4: memref<16x128xf32, #tpu.memory_space<vmem>>) attributes {dimension_semantics = [#tpu.dimension_semantics<parallel>], iteration_bounds = array<i64: 1>, scalar_prefetch = 0 : i64, scratch_operands = 0 : i64, tpu.core_type = #tpu.core_type<tc>, window_params = [{transform_indices = @transform_0, window_bounds = array<i64: 1, 16, 128>}, {pipeline_mode = #tpu.pipeline_mode<synchronous>, transform_indices = @transform_1, window_bounds = array<i64: 1, 128>}, {pipeline_mode = #tpu.pipeline_mode<synchronous>, transform_indices = @transform_2, window_bounds = array<i64: 1, 128>}, {transform_indices = @transform_3, window_bounds = array<i64: 16, 128>}]} {
    %c0 = arith.constant 0 : index
    %c0_0 = arith.constant 0 : index
    %c0_1 = arith.constant 0 : index
    %0 = vector.load %arg1[%c0, %c0_0, %c0_1] : memref<1x16x128xbf16, #tpu.memory_space<vmem>>, vector<1x16x128xbf16>
    %1 = arith.extf %0 : vector<1x16x128xbf16> to vector<1x16x128xf32>
    %cst = arith.constant dense<0.000000e+00> : vector<16x128xf32>
    %2 = vector.multi_reduction <add>, %1, %cst [0] : vector<1x16x128xf32> to vector<16x128xf32>
    %cst_2 = arith.constant 1.000000e+00 : f32
    %3 = vector.broadcast %cst_2 : f32 to vector<16x128xf32>
    %4 = arith.divf %2, %3 : vector<16x128xf32>
    %c0_3 = arith.constant 0 : index
    %c0_4 = arith.constant 0 : index
    %5 = vector.load %arg2[%c0_3, %c0_4] : memref<1x128xf32, #tpu.memory_space<vmem>>, vector<1x128xf32>
    %6 = vector.broadcast %5 : vector<1x128xf32> to vector<16x128xf32>
    %7 = arith.mulf %4, %6 : vector<16x128xf32>
    %c0_5 = arith.constant 0 : index
    %c0_6 = arith.constant 0 : index
    %8 = vector.load %arg3[%c0_5, %c0_6] : memref<1x128xf32, #tpu.memory_space<vmem>>, vector<1x128xf32>
    %9 = vector.broadcast %8 : vector<1x128xf32> to vector<16x128xf32>
    %10 = arith.addf %7, %9 : vector<16x128xf32>
    %c0_7 = arith.constant 0 : index
    %c0_8 = arith.constant 0 : index
    %11 = vector.load %arg4[%c0_7, %c0_8] : memref<16x128xf32, #tpu.memory_space<vmem>>, vector<16x128xf32>
    tpu.vector_store %arg4[%c0_7, %c0_8], %10 {strides = array<i32>} : memref<16x128xf32, #tpu.memory_space<vmem>>, vector<16x128xf32>,
    return
  }
  func.func @transform_0(%arg0: i32) -> (i32, i32, i32) {
    %c0_i32 = arith.constant 0 : i32
    %c0_i32_0 = arith.constant 0 : i32
    %c0_i32_1 = arith.constant 0 : i32
    return %c0_i32, %arg0, %c0_i32_0 : i32, i32, i32
  }
  func.func @transform_1(%arg0: i32) -> (i32, i32) {
    %c0_i32 = arith.constant 0 : i32
    %c0_i32_0 = arith.constant 0 : i32
    %c0_i32_1 = arith.constant 0 : i32
    return %c0_i32, %c0_i32_0 : i32, i32
  }
  func.func @transform_2(%arg0: i32) -> (i32, i32) {
    %c0_i32 = arith.constant 0 : i32
    %c0_i32_0 = arith.constant 0 : i32
    %c0_i32_1 = arith.constant 0 : i32
    return %c0_i32, %c0_i32_0 : i32, i32
  }
  func.func @transform_3(%arg0: i32) -> (i32, i32) {
    %c0_i32 = arith.constant 0 : i32
    %c0_i32_0 = arith.constant 0 : i32
    return %arg0, %c0_i32 : i32, i32
  }
}

</mosaic_0001>

<llo_original>
// kernel: resnet1d_forward.10
$region0: #{resnet1d_forward.10}
  #allocation0 [shape = 'u32[]', space=smem, size = 0x4, offset = 0x4, fixed_abs, tag = 'smem constant byte address 0x4 - core index']
  #allocation1 [shape = 'u32[144,128]{1,0:T(1,128)}', space=vmem, size = 0x12000, scoped, tag = 'internal scratch']
  %s0 = inlined_call_operand.vmem [shape: bf16[128,25], index: 0, kind: input, shape index: {}]
  %s1 = inlined_call_operand.vmem [shape: bf16[128,25], index: 1, kind: input, shape index: {}]
  %s2 = inlined_call_operand.vmem [shape: bf16[25,128], index: 2, kind: input, shape index: {}]
  %s3 = inlined_call_operand.vmem [shape: f32[1,128], index: 3, kind: input, shape index: {}]
  %s4 = inlined_call_operand.vmem [shape: f32[1,128], index: 4, kind: input, shape index: {}]
  %s5 = inlined_call_operand.vmem [shape: f32[1,128], index: 5, kind: input, shape index: {}]
  %s6 = inlined_call_operand.vmem [shape: bf16[128,128], index: 6, kind: output, shape index: {}]
  %s7 = sld [smem:[#allocation0]]
  $region34: #{resnet1d_forward.10} parent=0
    _
  %s9 = ssub.s32 1, %s7
  %s10 = scalar_select 0, %s9, %s7
  // Predicated region
  $region2: #{resnet1d_forward.10} parent=0 // pred_check
    _
  $region3: #{resnet1d_forward.10} parent=0 // pred_check_branch
    %12 = sbr.rel (0) target = $region5
  $region4: #{resnet1d_forward.10} parent=0 // pred_region
    _
  $region5: #{resnet1d_forward.10} parent=0 // pred_fallthru
    _
  // Predicated region
  $region6: #{resnet1d_forward.10} parent=0 // pred_check
    _
  $region7: #{resnet1d_forward.10} parent=0 // pred_check_branch
    %14 = sbr.rel (0) target = $region9
  $region8: #{resnet1d_forward.10} parent=0 // pred_region
    _
  $region9: #{resnet1d_forward.10} parent=0 // pred_fallthru
    _
  // Predicated region
  $region10: #{resnet1d_forward.10} parent=0 // pred_check
    _
  $region11: #{resnet1d_forward.10} parent=0 // pred_check_branch
    %16 = sbr.rel (0) target = $region13
  $region12: #{resnet1d_forward.10} parent=0 // pred_region
    _
  $region13: #{resnet1d_forward.10} parent=0 // pred_fallthru
    _
  // Predicated region
  $region14: #{resnet1d_forward.10} parent=0 // pred_check
    _
  $region15: #{resnet1d_forward.10} parent=0 // pred_check_branch
    %18 = sbr.rel (0) target = $region17
  $region16: #{resnet1d_forward.10} parent=0 // pred_region
    _
  $region17: #{resnet1d_forward.10} parent=0 // pred_fallthru
    _
  // Predicated region
  $region18: #{resnet1d_forward.10} parent=0 // pred_check
    _
  $region19: #{resnet1d_forward.10} parent=0 // pred_check_branch
    %20 = sbr.rel (0) target = $region21
  $region20: #{resnet1d_forward.10} parent=0 // pred_region
    _
  $region21: #{resnet1d_forward.10} parent=0 // pred_fallthru
    _
  // Predicated region
  $region22: #{resnet1d_forward.10} parent=0 // pred_check
    _
  $region23: #{resnet1d_forward.10} parent=0 // pred_check_branch
    %22 = sbr.rel (0) target = $region25
  $region24: #{resnet1d_forward.10} parent=0 // pred_region
    _
  $region25: #{resnet1d_forward.10} parent=0 // pred_fallthru
    _
  %v24 = vld [vmem:[%s0] sm:$0xf]
  %v25 = vld [vmem:[%s0 + $0x4] sm:$0xf]
  %v26 = vld [vmem:[%s0 + $0x8] sm:$0xf]
  %v27 = vld [vmem:[%s0 + $0xc] sm:$0xf]
  %v28 = vld [vmem:[%s0 + $0x10] sm:$0xf]
  %v29 = vld [vmem:[%s0 + $0x14] sm:$0xf]
  %v30 = vld [vmem:[%s0 + $0x18] sm:$0xf]
  %v31 = vld [vmem:[%s0 + $0x1c] sm:$0xf]
  %v32 = vld [vmem:[%s0 + $0x20] sm:$0xf]
  %v33 = vld [vmem:[%s0 + $0x24] sm:$0xf]
  %v34 = vld [vmem:[%s0 + $0x28] sm:$0xf]
  %v35 = vld [vmem:[%s0 + $0x2c] sm:$0xf]
  %v36 = vld [vmem:[%s0 + $0x30] sm:$0xf]
  %v37 = vld [vmem:[%s0 + $0x34] sm:$0xf]
  %v38 = vld [vmem:[%s0 + $0x38] sm:$0xf]
  %v39 = vld [vmem:[%s0 + $0x3c] sm:$0xf]
  %v40 = vld [vmem:[%s2] sm:$0xf]
  %v41 = vld [vmem:[%s2 + $0x4] sm:$0xf]
  %v42 = vld [vmem:[%s2 + $0x8] sm:$0xf]
  %v43 = vld [vmem:[%s2 + $0xc] sm:$0x1]
  %v44 = vld [vmem:[%s3] sm:$0x1]
  %v46 = vlaneseq
  %v47 = vshrl.u32 %v46, 7
  %v48 = vsub.s32 0, %v47
  %v49 = vrot.slane %v44, %v48
  %v67 = vunpack.c.l.b16 %v24
  %v68 = vunpack.c.l.b16 %v25
  %v69 = vunpack.c.l.b16 %v26
  %v70 = vunpack.c.l.b16 %v27
  %v71 = vunpack.c.l.b16 %v28
  %v72 = vunpack.c.l.b16 %v29
  %v73 = vunpack.c.l.b16 %v30
  %v74 = vunpack.c.l.b16 %v31
  %v75 = vunpack.c.l.b16 %v32
  %v76 = vunpack.c.l.b16 %v33
  %v77 = vunpack.c.l.b16 %v34
  %v78 = vunpack.c.l.b16 %v35
  %v79 = vunpack.c.l.b16 %v36
  %v80 = vunpack.c.l.b16 %v37
  %v81 = vunpack.c.l.b16 %v38
  %v82 = vunpack.c.l.b16 %v39
  %v83 = vpack.c.b16 %v68, %v67
  %v84 = vpack.c.b16 %v70, %v69
  %v85 = vpack.c.b16 %v72, %v71
  %v86 = vpack.c.b16 %v74, %v73
  %v87 = vpack.c.b16 %v76, %v75
  %v88 = vpack.c.b16 %v78, %v77
  %v89 = vpack.c.b16 %v80, %v79
  %v90 = vpack.c.b16 %v82, %v81
  %v95 = vunpack.c.l.b16 %v40
  %v96 = vunpack.c.l.b16 %v41
  %v97 = vunpack.c.l.b16 %v42
  %v98 = vunpack.c.l.b16 %v43
  %v99 = vpack.c.b16 %v96, %v95
  %v100 = vpack.c.b16 %v98, %v97
  %vm102 = vcmask 203776
  %v104 = vsel %vm102, %v83, 0
  %v107 = vsel %vm102, %v84, 0
  %v110 = vsel %vm102, %v85, 0
  %v113 = vsel %vm102, %v86, 0
  %v116 = vsel %vm102, %v87, 0
  %v119 = vsel %vm102, %v88, 0
  %v122 = vsel %vm102, %v89, 0
  %v125 = vsel %vm102, %v90, 0
  %vm127 = vcmask 1043456
  %vm128 = vcmask 1044480
  %v129 = vsel %vm127, 4294967295, 65535
  %v130 = vsel %vm128, %v129, 0
  %v132 = vand.u32 %v100, %v130
  %134 = vmatprep.subr.bf16.mxu0 0
  %135 = vmatpush1.bf16.msra.mxu0 0
  %136 = vmatprep.subr.bf16.mxu0 0
  %137 = vmatpush1.bf16.msra.mxu0 0
  %138 = vmatprep.subr.bf16.mxu0 0
  %139 = vmatpush1.bf16.msra.mxu0 0
  %140 = vmatprep.subr.bf16.mxu0 0
  %141 = vmatpush1.bf16.msra.mxu0 0
  %142 = vmatprep.subr.bf16.mxu0 0
  %143 = vmatpush1.bf16.msra.mxu0 0
  %144 = vmatprep.subr.bf16.mxu0 0
  %145 = vmatpush1.bf16.msra.mxu0 0
  %146 = vmatprep.subr.bf16.mxu0 0
  %147 = vmatpush1.bf16.msra.mxu0 %v132
  %148 = vmatprep.subr.bf16.mxu0 0
  %149 = vmatpush1.bf16.msra.mxu0 %v99
  %150 = vmatprep.subr.bf16.mxu0 0
  %151 = vmatpush2.bf16.msra.mxu0 0
  %152 = vmatprep.subr.bf16.mxu0 0
  %153 = vmatpush2.bf16.msra.mxu0 0
  %154 = vmatprep.subr.bf16.mxu0 0
  %155 = vmatpush2.bf16.msra.mxu0 0
  %156 = vmatprep.subr.bf16.mxu0 0
  %157 = vmatpush2.bf16.msra.mxu0 0
  %158 = vmatprep.subr.bf16.mxu0 0
  %159 = vmatpush2.bf16.msra.mxu0 0
  %160 = vmatprep.subr.bf16.mxu0 0
  %161 = vmatpush2.bf16.msra.mxu0 0
  %162 = vmatprep.subr.bf16.mxu0 0
  %163 = vmatpush2.bf16.msra.mxu0 0
  %164 = vmatprep.subr.bf16.mxu0 0
  %165 = vmatpush2.bf16.msra.mxu0 0
  %166 = vmatprep.mubr.bf16.mxu0 0
  %167 = vmatmul.mubr.bf16.gmra.mxu0 %v104
  %v168 = vpop.f32.mrf.mxu0
  %v169 = vadd.f32 %v49, %v168
  %v170 = vpop.f32.mrf.mxu0
  %v171 = vpop.f32.mrf.mxu0
  %v172 = vadd.f32 %v49, %v171
  %v173 = vpop.f32.mrf.mxu0
  %174 = vmatprep.mubr.bf16.mxu0 0
  %175 = vmatmul.mubr.bf16.gmra.mxu0 %v107
  %v176 = vpop.f32.mrf.mxu0
  %v177 = vadd.f32 %v49, %v176
  %v178 = vpop.f32.mrf.mxu0
  %v179 = vpop.f32.mrf.mxu0
  %v180 = vadd.f32 %v49, %v179
  %v181 = vpop.f32.mrf.mxu0
  %182 = vmatprep.mubr.bf16.mxu0 0
  %183 = vmatmul.mubr.bf16.gmra.mxu0 %v110
  %v184 = vpop.f32.mrf.mxu0
  %v185 = vadd.f32 %v49, %v184
  %v186 = vpop.f32.mrf.mxu0
  %v187 = vpop.f32.mrf.mxu0
  %v188 = vadd.f32 %v49, %v187
  %v189 = vpop.f32.mrf.mxu0
  %190 = vmatprep.mubr.bf16.mxu0 0
  %191 = vmatmul.mubr.bf16.gmra.mxu0 %v113
  %v192 = vpop.f32.mrf.mxu0
  %v193 = vadd.f32 %v49, %v192
  %v194 = vpop.f32.mrf.mxu0
  %v195 = vpop.f32.mrf.mxu0
  %v196 = vadd.f32 %v49, %v195
  %v197 = vpop.f32.mrf.mxu0
  %198 = vmatprep.mubr.bf16.mxu0 0
  %199 = vmatmul.mubr.bf16.gmra.mxu0 %v116
  %v200 = vpop.f32.mrf.mxu0
  %v201 = vadd.f32 %v49, %v200
  %v202 = vpop.f32.mrf.mxu0
  %v203 = vpop.f32.mrf.mxu0
  %v204 = vadd.f32 %v49, %v203
  %v205 = vpop.f32.mrf.mxu0
  %206 = vmatprep.mubr.bf16.mxu0 0
  %207 = vmatmul.mubr.bf16.gmra.mxu0 %v119
  %v208 = vpop.f32.mrf.mxu0
  %v209 = vadd.f32 %v49, %v208
  %v210 = vpop.f32.mrf.mxu0
  %v211 = vpop.f32.mrf.mxu0
  %v212 = vadd.f32 %v49, %v211
  %v213 = vpop.f32.mrf.mxu0
  %214 = vmatprep.mubr.bf16.mxu0 0
  %215 = vmatmul.mubr.bf16.gmra.mxu0 %v122
  %v216 = vpop.f32.mrf.mxu0
  %v217 = vadd.f32 %v49, %v216
  %v218 = vpop.f32.mrf.mxu0
  %v219 = vpop.f32.mrf.mxu0
  %v220 = vadd.f32 %v49, %v219
  %v221 = vpop.f32.mrf.mxu0
  %222 = vmatprep.mubr.bf16.mxu0 0
  %223 = vmatmul.mubr.bf16.gmra.mxu0 %v125
  %v224 = vpop.f32.mrf.mxu0
  %v225 = vadd.f32 %v49, %v224
  %v226 = vpop.f32.mrf.mxu0
  %v227 = vpop.f32.mrf.mxu0
  %v228 = vadd.f32 %v49, %v227
  %v229 = vpop.f32.mrf.mxu0
  %230 = vdwg.mxu0
  %v231 = vld [vmem:[%s4] sm:$0x1]
  %v233 = vlaneseq
  %v234 = vshrl.u32 %v233, 7
  %v235 = vsub.s32 0, %v234
  %v236 = vrot.slane %v231, %v235
  %v238 = vmul.f32 %v169, %v236
  %v239 = vmul.f32 %v172, %v236
  %v240 = vmul.f32 %v177, %v236
  %v241 = vmul.f32 %v180, %v236
  %v242 = vmul.f32 %v185, %v236
  %v243 = vmul.f32 %v188, %v236
  %v244 = vmul.f32 %v193, %v236
  %v245 = vmul.f32 %v196, %v236
  %v246 = vmul.f32 %v201, %v236
  %v247 = vmul.f32 %v204, %v236
  %v248 = vmul.f32 %v209, %v236
  %v249 = vmul.f32 %v212, %v236
  %v250 = vmul.f32 %v217, %v236
  %v251 = vmul.f32 %v220, %v236
  %v252 = vmul.f32 %v225, %v236
  %v253 = vmul.f32 %v228, %v236
  %v254 = vld [vmem:[%s5] sm:$0x1]
  %v256 = vlaneseq
  %v257 = vshrl.u32 %v256, 7
  %v258 = vsub.s32 0, %v257
  %v259 = vrot.slane %v254, %v258
  %v261 = vadd.f32 %v238, %v259
  %v262 = vadd.f32 %v239, %v259
  %v263 = vadd.f32 %v240, %v259
  %v264 = vadd.f32 %v241, %v259
  %v265 = vadd.f32 %v242, %v259
  %v266 = vadd.f32 %v243, %v259
  %v267 = vadd.f32 %v244, %v259
  %v268 = vadd.f32 %v245, %v259
  %v269 = vadd.f32 %v246, %v259
  %v270 = vadd.f32 %v247, %v259
  %v271 = vadd.f32 %v248, %v259
  %v272 = vadd.f32 %v249, %v259
  %v273 = vadd.f32 %v250, %v259
  %v274 = vadd.f32 %v251, %v259
  %v275 = vadd.f32 %v252, %v259
  %v276 = vadd.f32 %v253, %v259
  %v277 = vmax.f32 %v261, 0.0
  %v278 = vmax.f32 %v262, 0.0
  %v279 = vmax.f32 %v263, 0.0
  %v280 = vmax.f32 %v264, 0.0
  %v281 = vmax.f32 %v265, 0.0
  %v282 = vmax.f32 %v266, 0.0
  %v283 = vmax.f32 %v267, 0.0
  %v284 = vmax.f32 %v268, 0.0
  %v285 = vmax.f32 %v269, 0.0
  %v286 = vmax.f32 %v270, 0.0
  %v287 = vmax.f32 %v271, 0.0
  %v288 = vmax.f32 %v272, 0.0
  %v289 = vmax.f32 %v273, 0.0
  %v290 = vmax.f32 %v274, 0.0
  %v291 = vmax.f32 %v275, 0.0
  %v292 = vmax.f32 %v276, 0.0
  %v293 = vld [vmem:[%s1] sm:$0xf]
  %v294 = vld [vmem:[%s1 + $0x4] sm:$0xf]
  %v295 = vld [vmem:[%s1 + $0x8] sm:$0xf]
  %v296 = vld [vmem:[%s1 + $0xc] sm:$0xf]
  %v297 = vld [vmem:[%s1 + $0x10] sm:$0xf]
  %v298 = vld [vmem:[%s1 + $0x14] sm:$0xf]
  %v299 = vld [vmem:[%s1 + $0x18] sm:$0xf]
  %v300 = vld [vmem:[%s1 + $0x1c] sm:$0xf]
  %v301 = vld [vmem:[%s1 + $0x20] sm:$0xf]
  %v302 = vld [vmem:[%s1 + $0x24] sm:$0xf]
  %v303 = vld [vmem:[%s1 + $0x28] sm:$0xf]
  %v304 = vld [vmem:[%s1 + $0x2c] sm:$0xf]
  %v305 = vld [vmem:[%s1 + $0x30] sm:$0xf]
  %v306 = vld [vmem:[%s1 + $0x34] sm:$0xf]
  %v307 = vld [vmem:[%s1 + $0x38] sm:$0xf]
  %v308 = vld [vmem:[%s1 + $0x3c] sm:$0xf]
  %v325 = vunpack.c.l.b16 %v293
  %v326 = vunpack.c.l.b16 %v294
  %v327 = vunpack.c.l.b16 %v295
  %v328 = vunpack.c.l.b16 %v296
  %v329 = vunpack.c.l.b16 %v297
  %v330 = vunpack.c.l.b16 %v298
  %v331 = vunpack.c.l.b16 %v299
  %v332 = vunpack.c.l.b16 %v300
  %v333 = vunpack.c.l.b16 %v301
  %v334 = vunpack.c.l.b16 %v302
  %v335 = vunpack.c.l.b16 %v303
  %v336 = vunpack.c.l.b16 %v304
  %v337 = vunpack.c.l.b16 %v305
  %v338 = vunpack.c.l.b16 %v306
  %v339 = vunpack.c.l.b16 %v307
  %v340 = vunpack.c.l.b16 %v308
  %v341 = vpack.c.b16 %v326, %v325
  %v342 = vpack.c.b16 %v328, %v327
  %v343 = vpack.c.b16 %v330, %v329
  %v344 = vpack.c.b16 %v332, %v331
  %v345 = vpack.c.b16 %v334, %v333
  %v346 = vpack.c.b16 %v336, %v335
  %v347 = vpack.c.b16 %v338, %v337
  %v348 = vpack.c.b16 %v340, %v339
  %v350 = vsel %vm102, %v341, 0
  %v353 = vsel %vm102, %v342, 0
  %v356 = vsel %vm102, %v343, 0
  %v359 = vsel %vm102, %v344, 0
  %v362 = vsel %vm102, %v345, 0
  %v365 = vsel %vm102, %v346, 0
  %v368 = vsel %vm102, %v347, 0
  %v371 = vsel %vm102, %v348, 0
  %373 = vmatprep.subr.bf16.mxu0 0
  %374 = vmatpush1.bf16.msra.mxu0 0
  %375 = vmatprep.subr.bf16.mxu0 0
  %376 = vmatpush1.bf16.msra.mxu0 0
  %377 = vmatprep.subr.bf16.mxu0 0
  %378 = vmatpush1.bf16.msra.mxu0 0
  %379 = vmatprep.subr.bf16.mxu0 0
  %380 = vmatpush1.bf16.msra.mxu0 0
  %381 = vmatprep.subr.bf16.mxu0 0
  %382 = vmatpush1.bf16.msra.mxu0 0
  %383 = vmatprep.subr.bf16.mxu0 0
  %384 = vmatpush1.bf16.msra.mxu0 0
  %385 = vmatprep.subr.bf16.mxu0 0
  %386 = vmatpush1.bf16.msra.mxu0 %v132
  %387 = vmatprep.subr.bf16.mxu0 0
  %388 = vmatpush1.bf16.msra.mxu0 %v99
  %389 = vmatprep.subr.bf16.mxu0 0
  %390 = vmatpush2.bf16.msra.mxu0 0
  %391 = vmatprep.subr.bf16.mxu0 0
  %392 = vmatpush2.bf16.msra.mxu0 0
  %393 = vmatprep.subr.bf16.mxu0 0
  %394 = vmatpush2.bf16.msra.mxu0 0
  %395 = vmatprep.subr.bf16.mxu0 0
  %396 = vmatpush2.bf16.msra.mxu0 0
  %397 = vmatprep.subr.bf16.mxu0 0
  %398 = vmatpush2.bf16.msra.mxu0 0
  %399 = vmatprep.subr.bf16.mxu0 0
  %400 = vmatpush2.bf16.msra.mxu0 0
  %401 = vmatprep.subr.bf16.mxu0 0
  %402 = vmatpush2.bf16.msra.mxu0 0
  %403 = vmatprep.subr.bf16.mxu0 0
  %404 = vmatpush2.bf16.msra.mxu0 0
  %405 = vmatprep.mubr.bf16.mxu0 0
  %406 = vmatmul.mubr.bf16.gmra.mxu0 %v350
  %v407 = vpop.f32.mrf.mxu0
  %v408 = vadd.f32 %v49, %v407
  %v409 = vpop.f32.mrf.mxu0
  %v410 = vpop.f32.mrf.mxu0
  %v411 = vadd.f32 %v49, %v410
  %v412 = vpop.f32.mrf.mxu0
  %413 = vmatprep.mubr.bf16.mxu0 0
  %414 = vmatmul.mubr.bf16.gmra.mxu0 %v353
  %v415 = vpop.f32.mrf.mxu0
  %v416 = vadd.f32 %v49, %v415
  %v417 = vpop.f32.mrf.mxu0
  %v418 = vpop.f32.mrf.mxu0
  %v419 = vadd.f32 %v49, %v418
  %v420 = vpop.f32.mrf.mxu0
  %421 = vmatprep.mubr.bf16.mxu0 0
  %422 = vmatmul.mubr.bf16.gmra.mxu0 %v356
  %v423 = vpop.f32.mrf.mxu0
  %v424 = vadd.f32 %v49, %v423
  %v425 = vpop.f32.mrf.mxu0
  %v426 = vpop.f32.mrf.mxu0
  %v427 = vadd.f32 %v49, %v426
  %v428 = vpop.f32.mrf.mxu0
  %429 = vmatprep.mubr.bf16.mxu0 0
  %430 = vmatmul.mubr.bf16.gmra.mxu0 %v359
  %v431 = vpop.f32.mrf.mxu0
  %v432 = vadd.f32 %v49, %v431
  %v433 = vpop.f32.mrf.mxu0
  %v434 = vpop.f32.mrf.mxu0
  %v435 = vadd.f32 %v49, %v434
  %v436 = vpop.f32.mrf.mxu0
  %437 = vmatprep.mubr.bf16.mxu0 0
  %438 = vmatmul.mubr.bf16.gmra.mxu0 %v362
  %v439 = vpop.f32.mrf.mxu0
  %v440 = vadd.f32 %v49, %v439
  %v441 = vpop.f32.mrf.mxu0
  %v442 = vpop.f32.mrf.mxu0
  %v443 = vadd.f32 %v49, %v442
  %v444 = vpop.f32.mrf.mxu0
  %445 = vmatprep.mubr.bf16.mxu0 0
  %446 = vmatmul.mubr.bf16.gmra.mxu0 %v365
  %v447 = vpop.f32.mrf.mxu0
  %v448 = vadd.f32 %v49, %v447
  %v449 = vpop.f32.mrf.mxu0
  %v450 = vpop.f32.mrf.mxu0
  %v451 = vadd.f32 %v49, %v450
  %v452 = vpop.f32.mrf.mxu0
  %453 = vmatprep.mubr.bf16.mxu0 0
  %454 = vmatmul.mubr.bf16.gmra.mxu0 %v368
  %v455 = vpop.f32.mrf.mxu0
  %v456 = vadd.f32 %v49, %v455
  %v457 = vpop.f32.mrf.mxu0
  %v458 = vpop.f32.mrf.mxu0
  %v459 = vadd.f32 %v49, %v458
  %v460 = vpop.f32.mrf.mxu0
  %461 = vmatprep.mubr.bf16.mxu0 0
  %462 = vmatmul.mubr.bf16.gmra.mxu0 %v371
  %v463 = vpop.f32.mrf.mxu0
  %v464 = vadd.f32 %v49, %v463
  %v465 = vpop.f32.mrf.mxu0
  %v466 = vpop.f32.mrf.mxu0
  %v467 = vadd.f32 %v49, %v466
  %v468 = vpop.f32.mrf.mxu0
  %469 = vdwg.mxu0
  %v470 = vmul.f32 %v408, %v236
  %v471 = vmul.f32 %v411, %v236
  %v472 = vmul.f32 %v416, %v236
  %v473 = vmul.f32 %v419, %v236
  %v474 = vmul.f32 %v424, %v236
  %v475 = vmul.f32 %v427, %v236
  %v476 = vmul.f32 %v432, %v236
  %v477 = vmul.f32 %v435, %v236
  %v478 = vmul.f32 %v440, %v236
  %v479 = vmul.f32 %v443, %v236
  %v480 = vmul.f32 %v448, %v236
  %v481 = vmul.f32 %v451, %v236
  %v482 = vmul.f32 %v456, %v236
  %v483 = vmul.f32 %v459, %v236
  %v484 = vmul.f32 %v464, %v236
  %v485 = vmul.f32 %v467, %v236
  %v486 = vadd.f32 %v470, %v259
  %v487 = vadd.f32 %v471, %v259
  %v488 = vadd.f32 %v472, %v259
  %v489 = vadd.f32 %v473, %v259
  %v490 = vadd.f32 %v474, %v259
  %v491 = vadd.f32 %v475, %v259
  %v492 = vadd.f32 %v476, %v259
  %v493 = vadd.f32 %v477, %v259
  %v494 = vadd.f32 %v478, %v259
  %v495 = vadd.f32 %v479, %v259
  %v496 = vadd.f32 %v480, %v259
  %v497 = vadd.f32 %v481, %v259
  %v498 = vadd.f32 %v482, %v259
  %v499 = vadd.f32 %v483, %v259
  %v500 = vadd.f32 %v484, %v259
  %v501 = vadd.f32 %v485, %v259
  %v502 = vmax.f32 %v486, 0.0
  %v503 = vmax.f32 %v487, 0.0
  %v504 = vmax.f32 %v488, 0.0
  %v505 = vmax.f32 %v489, 0.0
  %v506 = vmax.f32 %v490, 0.0
  %v507 = vmax.f32 %v491, 0.0
  %v508 = vmax.f32 %v492, 0.0
  %v509 = vmax.f32 %v493, 0.0
  %v510 = vmax.f32 %v494, 0.0
  %v511 = vmax.f32 %v495, 0.0
  %v512 = vmax.f32 %v496, 0.0
  %v513 = vmax.f32 %v497, 0.0
  %v514 = vmax.f32 %v498, 0.0
  %v515 = vmax.f32 %v499, 0.0
  %v516 = vmax.f32 %v500, 0.0
  %v517 = vmax.f32 %v501, 0.0
  %v518 = vmax.f32 %v277, %v502
  %v519 = vmax.f32 %v278, %v503
  %v520 = vmax.f32 %v279, %v504
  %v521 = vmax.f32 %v280, %v505
  %v522 = vmax.f32 %v281, %v506
  %v523 = vmax.f32 %v282, %v507
  %v524 = vmax.f32 %v283, %v508
  %v525 = vmax.f32 %v284, %v509
  %v526 = vmax.f32 %v285, %v510
  %v527 = vmax.f32 %v286, %v511
  %v528 = vmax.f32 %v287, %v512
  %v529 = vmax.f32 %v288, %v513
  %v530 = vmax.f32 %v289, %v514
  %v531 = vmax.f32 %v290, %v515
  %v532 = vmax.f32 %v291, %v516
  %v533 = vmax.f32 %v292, %v517
  %v534 = vpack.c.bf16 %v519, %v518
  %v535 = vpack.c.bf16 %v521, %v520
  %v536 = vpack.c.bf16 %v523, %v522
  %v537 = vpack.c.bf16 %v525, %v524
  %v538 = vpack.c.bf16 %v527, %v526
  %v539 = vpack.c.bf16 %v529, %v528
  %v540 = vpack.c.bf16 %v531, %v530
  %v541 = vpack.c.bf16 %v533, %v532
  %v550 = vunpack.c.l.b16 %v534
  %v551 = vunpack.c.h.b16 %v534
  %v552 = vunpack.c.l.b16 %v535
  %v553 = vunpack.c.h.b16 %v535
  %v554 = vunpack.c.l.b16 %v536
  %v555 = vunpack.c.h.b16 %v536
  %v556 = vunpack.c.l.b16 %v537
  %v557 = vunpack.c.h.b16 %v537
  %v558 = vunpack.c.l.b16 %v538
  %v559 = vunpack.c.h.b16 %v538
  %v560 = vunpack.c.l.b16 %v539
  %v561 = vunpack.c.h.b16 %v539
  %v562 = vunpack.c.l.b16 %v540
  %v563 = vunpack.c.h.b16 %v540
  %v564 = vunpack.c.l.b16 %v541
  %v565 = vunpack.c.h.b16 %v541
  %v566 = vpack.c.b16 %v550, %v550
  %v567 = vpack.c.b16 %v551, %v551
  %v568 = vpack.c.b16 %v552, %v552
  %v569 = vpack.c.b16 %v553, %v553
  %v570 = vpack.c.b16 %v554, %v554
  %v571 = vpack.c.b16 %v555, %v555
  %v572 = vpack.c.b16 %v556, %v556
  %v573 = vpack.c.b16 %v557, %v557
  %v574 = vpack.c.b16 %v558, %v558
  %v575 = vpack.c.b16 %v559, %v559
  %v576 = vpack.c.b16 %v560, %v560
  %v577 = vpack.c.b16 %v561, %v561
  %v578 = vpack.c.b16 %v562, %v562
  %v579 = vpack.c.b16 %v563, %v563
  %v580 = vpack.c.b16 %v564, %v564
  %v581 = vpack.c.b16 %v565, %v565
  %598 = vst [vmem:[%s6] sm:$0xf] %v566
  %599 = vst [vmem:[%s6 + $0x4] sm:$0xf] %v567
  %600 = vst [vmem:[%s6 + $0x8] sm:$0xf] %v568
  %601 = vst [vmem:[%s6 + $0xc] sm:$0xf] %v569
  %602 = vst [vmem:[%s6 + $0x10] sm:$0xf] %v570
  %603 = vst [vmem:[%s6 + $0x14] sm:$0xf] %v571
  %604 = vst [vmem:[%s6 + $0x18] sm:$0xf] %v572
  %605 = vst [vmem:[%s6 + $0x1c] sm:$0xf] %v573
  %606 = vst [vmem:[%s6 + $0x20] sm:$0xf] %v574
  %607 = vst [vmem:[%s6 + $0x24] sm:$0xf] %v575
  %608 = vst [vmem:[%s6 + $0x28] sm:$0xf] %v576
  %609 = vst [vmem:[%s6 + $0x2c] sm:$0xf] %v577
  %610 = vst [vmem:[%s6 + $0x30] sm:$0xf] %v578
  %611 = vst [vmem:[%s6 + $0x34] sm:$0xf] %v579
  %612 = vst [vmem:[%s6 + $0x38] sm:$0xf] %v580
  %613 = vst [vmem:[%s6 + $0x3c] sm:$0xf] %v581
  // Predicated region
  $region26: #{resnet1d_forward.10} parent=0 // pred_check
    _
  $region27: #{resnet1d_forward.10} parent=0 // pred_check_branch
    %615 = sbr.rel (0) target = $region29
  $region28: #{resnet1d_forward.10} parent=0 // pred_region
    _
  $region29: #{resnet1d_forward.10} parent=0 // pred_fallthru
    _
  // Predicated region
  $region30: #{resnet1d_forward.10} parent=0 // pred_check
    _
  $region31: #{resnet1d_forward.10} parent=0 // pred_check_branch
    %617 = sbr.rel (0) target = $region33
  $region32: #{resnet1d_forward.10} parent=0 // pred_region
    _
  $region33: #{resnet1d_forward.10} parent=0 // pred_fallthru
    _

// kernel: resnet1d_forward.11
$region0: #{resnet1d_forward.11}
  #allocation0 [shape = 'u32[]', space=smem, size = 0x4, offset = 0x4, fixed_abs, tag = 'smem constant byte address 0x4 - core index']
  #allocation1 [shape = 'u32[144,128]{1,0:T(1,128)}', space=vmem, size = 0x12000, scoped, tag = 'internal scratch']
  %s0 = inlined_call_operand.vmem [shape: bf16[10,16,128], index: 0, kind: input, shape index: {}]
  %s1 = inlined_call_operand.vmem [shape: bf16[3,128,128], index: 1, kind: input, shape index: {}]
  %s2 = inlined_call_operand.vmem [shape: f32[1,128], index: 2, kind: input, shape index: {}, may-alias: {2,5,8}]
  %s3 = inlined_call_operand.vmem [shape: f32[1,128], index: 3, kind: input, shape index: {}, may-alias: {3,6,9}]
  %s4 = inlined_call_operand.vmem [shape: bf16[3,128,128], index: 4, kind: input, shape index: {}]
  %s5 = inlined_call_operand.vmem [shape: f32[1,128], index: 5, kind: input, shape index: {}, may-alias: {2,5,8}]
  %s6 = inlined_call_operand.vmem [shape: f32[1,128], index: 6, kind: input, shape index: {}, may-alias: {3,6,9}]
  %s7 = inlined_call_operand.vmem [shape: bf16[1,128,128], index: 7, kind: input, shape index: {}]
  %s8 = inlined_call_operand.vmem [shape: f32[1,128], index: 8, kind: input, shape index: {}, may-alias: {2,5,8}]
  %s9 = inlined_call_operand.vmem [shape: f32[1,128], index: 9, kind: input, shape index: {}, may-alias: {3,6,9}]
  %s10 = inlined_call_operand.vmem [shape: bf16[8,16,128], index: 10, kind: output, shape index: {}]
  %s11 = sld [smem:[#allocation0]]
  $region50: #{resnet1d_forward.11} parent=0
    _
  %s13 = ssub.s32 1, %s11
  %s14 = scalar_select 0, %s13, %s11
  // Predicated region
  $region2: #{resnet1d_forward.11} parent=0 // pred_check
    _
  $region3: #{resnet1d_forward.11} parent=0 // pred_check_branch
    %16 = sbr.rel (0) target = $region5
  $region4: #{resnet1d_forward.11} parent=0 // pred_region
    _
  $region5: #{resnet1d_forward.11} parent=0 // pred_fallthru
    _
  // Predicated region
  $region6: #{resnet1d_forward.11} parent=0 // pred_check
    _
  $region7: #{resnet1d_forward.11} parent=0 // pred_check_branch
    %18 = sbr.rel (0) target = $region9
  $region8: #{resnet1d_forward.11} parent=0 // pred_region
    _
  $region9: #{resnet1d_forward.11} parent=0 // pred_fallthru
    _
  // Predicated region
  $region10: #{resnet1d_forward.11} parent=0 // pred_check
    _
  $region11: #{resnet1d_forward.11} parent=0 // pred_check_branch
    %20 = sbr.rel (0) target = $region13
  $region12: #{resnet1d_forward.11} parent=0 // pred_region
    _
  $region13: #{resnet1d_forward.11} parent=0 // pred_fallthru
    _
  // Predicated region
  $region14: #{resnet1d_forward.11} parent=0 // pred_check
    _
  $region15: #{resnet1d_forward.11} parent=0 // pred_check_branch
    %22 = sbr.rel (0) target = $region17
  $region16: #{resnet1d_forward.11} parent=0 // pred_region
    _
  $region17: #{resnet1d_forward.11} parent=0 // pred_fallthru
    _
  // Predicated region
  $region18: #{resnet1d_forward.11} parent=0 // pred_check
    _
  $region19: #{resnet1d_forward.11} parent=0 // pred_check_branch
    %24 = sbr.rel (0) target = $region21
  $region20: #{resnet1d_forward.11} parent=0 // pred_region
    _
  $region21: #{resnet1d_forward.11} parent=0 // pred_fallthru
    _
  // Predicated region
  $region22: #{resnet1d_forward.11} parent=0 // pred_check
    _
  $region23: #{resnet1d_forward.11} parent=0 // pred_check_branch
    %26 = sbr.rel (0) target = $region25
  $region24: #{resnet1d_forward.11} parent=0 // pred_region
    _
  $region25: #{resnet1d_forward.11} parent=0 // pred_fallthru
    _
  // Predicated region
  $region26: #{resnet1d_forward.11} parent=0 // pred_check
    _
  $region27: #{resnet1d_forward.11} parent=0 // pred_check_branch
    %28 = sbr.rel (0) target = $region29
  $region28: #{resnet1d_forward.11} parent=0 // pred_region
    _
  $region29: #{resnet1d_forward.11} parent=0 // pred_fallthru
    _
  // Predicated region
  $region30: #{resnet1d_forward.11} parent=0 // pred_check
    _
  $region31: #{resnet1d_forward.11} parent=0 // pred_check_branch
    %30 = sbr.rel (0) target = $region33
  $region32: #{resnet1d_forward.11} parent=0 // pred_region
    _
  $region33: #{resnet1d_forward.11} parent=0 // pred_fallthru
    _
  // Predicated region
  $region34: #{resnet1d_forward.11} parent=0 // pred_check
    _
  $region35: #{resnet1d_forward.11} parent=0 // pred_check_branch
    %32 = sbr.rel (0) target = $region37
  $region36: #{resnet1d_forward.11} parent=0 // pred_region
    _
  $region37: #{resnet1d_forward.11} parent=0 // pred_fallthru
    _
  // Predicated region
  $region38: #{resnet1d_forward.11} parent=0 // pred_check
    _
  $region39: #{resnet1d_forward.11} parent=0 // pred_check_branch
    %34 = sbr.rel (0) target = $region41
  $region40: #{resnet1d_forward.11} parent=0 // pred_region
    _
  $region41: #{resnet1d_forward.11} parent=0 // pred_fallthru
    _
  %s36 = scalar_lea.vmem %s0, 8
  %v37 = vld [vmem:[%s36] sm:$0xf]
  %v38 = vld [vmem:[%s36 + $0x4] sm:$0xf]
  %v39 = vld [vmem:[%s36 + $0x8] sm:$0xf]
  %v40 = vld [vmem:[%s36 + $0xc] sm:$0xf]
  %v41 = vld [vmem:[%s36 + $0x10] sm:$0xf]
  %v42 = vld [vmem:[%s36 + $0x14] sm:$0xf]
  %v43 = vld [vmem:[%s36 + $0x18] sm:$0xf]
  %v44 = vld [vmem:[%s36 + $0x1c] sm:$0xf]
  %v45 = vld [vmem:[%s36 + $0x20] sm:$0xf]
  %v46 = vld [vmem:[%s36 + $0x24] sm:$0xf]
  %v47 = vld [vmem:[%s36 + $0x28] sm:$0xf]
  %v48 = vld [vmem:[%s36 + $0x2c] sm:$0xf]
  %v49 = vld [vmem:[%s36 + $0x30] sm:$0xf]
  %v50 = vld [vmem:[%s36 + $0x34] sm:$0xf]
  %v51 = vld [vmem:[%s36 + $0x38] sm:$0xf]
  %v52 = vld [vmem:[%s36 + $0x3c] sm:$0xf]
  %v53 = vld [vmem:[%s0] sm:$0xf]
  %v54 = vld [vmem:[%s0 + $0x4] sm:$0xf]
  %v55 = vld [vmem:[%s0 + $0x8] sm:$0xf]
  %v56 = vld [vmem:[%s0 + $0xc] sm:$0xf]
  %v57 = vld [vmem:[%s0 + $0x10] sm:$0xf]
  %v58 = vld [vmem:[%s0 + $0x14] sm:$0xf]
  %v59 = vld [vmem:[%s0 + $0x18] sm:$0xf]
  %v60 = vld [vmem:[%s0 + $0x1c] sm:$0xf]
  %v61 = vld [vmem:[%s0 + $0x20] sm:$0xf]
  %v62 = vld [vmem:[%s0 + $0x24] sm:$0xf]
  %v63 = vld [vmem:[%s0 + $0x28] sm:$0xf]
  %v64 = vld [vmem:[%s0 + $0x2c] sm:$0xf]
  %v65 = vld [vmem:[%s0 + $0x30] sm:$0xf]
  %v66 = vld [vmem:[%s0 + $0x34] sm:$0xf]
  %v67 = vld [vmem:[%s0 + $0x38] sm:$0xf]
  %v68 = vld [vmem:[%s0 + $0x3c] sm:$0xf]
  %v69 = vld [vmem:[%s1] sm:$0xf]
  %v70 = vld [vmem:[%s1 + $0x4] sm:$0xf]
  %v71 = vld [vmem:[%s1 + $0x8] sm:$0xf]
  %v72 = vld [vmem:[%s1 + $0xc] sm:$0xf]
  %v73 = vld [vmem:[%s1 + $0x10] sm:$0xf]
  %v74 = vld [vmem:[%s1 + $0x14] sm:$0xf]
  %v75 = vld [vmem:[%s1 + $0x18] sm:$0xf]
  %v76 = vld [vmem:[%s1 + $0x1c] sm:$0xf]
  %v77 = vld [vmem:[%s1 + $0x20] sm:$0xf]
  %v78 = vld [vmem:[%s1 + $0x24] sm:$0xf]
  %v79 = vld [vmem:[%s1 + $0x28] sm:$0xf]
  %v80 = vld [vmem:[%s1 + $0x2c] sm:$0xf]
  %v81 = vld [vmem:[%s1 + $0x30] sm:$0xf]
  %v82 = vld [vmem:[%s1 + $0x34] sm:$0xf]
  %v83 = vld [vmem:[%s1 + $0x38] sm:$0xf]
  %v84 = vld [vmem:[%s1 + $0x3c] sm:$0xf]
  %s85 = scalar_lea.vmem %s1, 64
  %v86 = vld [vmem:[%s85] sm:$0xf]
  %v87 = vld [vmem:[%s85 + $0x4] sm:$0xf]
  %v88 = vld [vmem:[%s85 + $0x8] sm:$0xf]
  %v89 = vld [vmem:[%s85 + $0xc] sm:$0xf]
  %v90 = vld [vmem:[%s85 + $0x10] sm:$0xf]
  %v91 = vld [vmem:[%s85 + $0x14] sm:$0xf]
  %v92 = vld [vmem:[%s85 + $0x18] sm:$0xf]
  %v93 = vld [vmem:[%s85 + $0x1c] sm:$0xf]
  %v94 = vld [vmem:[%s85 + $0x20] sm:$0xf]
  %v95 = vld [vmem:[%s85 + $0x24] sm:$0xf]
  %v96 = vld [vmem:[%s85 + $0x28] sm:$0xf]
  %v97 = vld [vmem:[%s85 + $0x2c] sm:$0xf]
  %v98 = vld [vmem:[%s85 + $0x30] sm:$0xf]
  %v99 = vld [vmem:[%s85 + $0x34] sm:$0xf]
  %v100 = vld [vmem:[%s85 + $0x38] sm:$0xf]
  %v101 = vld [vmem:[%s85 + $0x3c] sm:$0xf]
  %v118 = vunpack.c.l.b16 %v37
  %v119 = vunpack.c.l.b16 %v38
  %v120 = vunpack.c.l.b16 %v39
  %v121 = vunpack.c.l.b16 %v40
  %v122 = vunpack.c.l.b16 %v41
  %v123 = vunpack.c.l.b16 %v42
  %v124 = vunpack.c.l.b16 %v43
  %v125 = vunpack.c.l.b16 %v44
  %v126 = vunpack.c.l.b16 %v45
  %v127 = vunpack.c.l.b16 %v46
  %v128 = vunpack.c.l.b16 %v47
  %v129 = vunpack.c.l.b16 %v48
  %v130 = vunpack.c.l.b16 %v49
  %v131 = vunpack.c.l.b16 %v50
  %v132 = vunpack.c.l.b16 %v51
  %v133 = vunpack.c.l.b16 %v52
  %v134 = vpack.c.b16 %v119, %v118
  %v135 = vpack.c.b16 %v121, %v120
  %v136 = vpack.c.b16 %v123, %v122
  %v137 = vpack.c.b16 %v125, %v124
  %v138 = vpack.c.b16 %v127, %v126
  %v139 = vpack.c.b16 %v129, %v128
  %v140 = vpack.c.b16 %v131, %v130
  %v141 = vpack.c.b16 %v133, %v132
  %v166 = vunpack.c.l.b16 %v86
  %v167 = vunpack.c.l.b16 %v87
  %v168 = vunpack.c.l.b16 %v88
  %v169 = vunpack.c.l.b16 %v89
  %v170 = vunpack.c.l.b16 %v90
  %v171 = vunpack.c.l.b16 %v91
  %v172 = vunpack.c.l.b16 %v92
  %v173 = vunpack.c.l.b16 %v93
  %v174 = vunpack.c.l.b16 %v94
  %v175 = vunpack.c.l.b16 %v95
  %v176 = vunpack.c.l.b16 %v96
  %v177 = vunpack.c.l.b16 %v97
  %v178 = vunpack.c.l.b16 %v98
  %v179 = vunpack.c.l.b16 %v99
  %v180 = vunpack.c.l.b16 %v100
  %v181 = vunpack.c.l.b16 %v101
  %v182 = vpack.c.b16 %v167, %v166
  %v183 = vpack.c.b16 %v169, %v168
  %v184 = vpack.c.b16 %v171, %v170
  %v185 = vpack.c.b16 %v173, %v172
  %v186 = vpack.c.b16 %v175, %v174
  %v187 = vpack.c.b16 %v177, %v176
  %v188 = vpack.c.b16 %v179, %v178
  %v189 = vpack.c.b16 %v181, %v180
  %198 = vmatprep.subr.bf16.mxu0 0
  %199 = vmatpush1.bf16.msra.mxu0 %v189
  %200 = vmatprep.subr.bf16.mxu0 0
  %201 = vmatpush1.bf16.msra.mxu0 %v188
  %202 = vmatprep.subr.bf16.mxu0 0
  %203 = vmatpush1.bf16.msra.mxu0 %v187
  %204 = vmatprep.subr.bf16.mxu0 0
  %205 = vmatpush1.bf16.msra.mxu0 %v186
  %206 = vmatprep.subr.bf16.mxu0 0
  %207 = vmatpush1.bf16.msra.mxu0 %v185
  %208 = vmatprep.subr.bf16.mxu0 0
  %209 = vmatpush1.bf16.msra.mxu0 %v184
  %210 = vmatprep.subr.bf16.mxu0 0
  %211 = vmatpush1.bf16.msra.mxu0 %v183
  %212 = vmatprep.subr.bf16.mxu0 0
  %213 = vmatpush1.bf16.msra.mxu0 %v182
  %214 = vmatprep.subr.bf16.mxu0 0
  %215 = vmatpush2.bf16.msra.mxu0 0
  %216 = vmatprep.subr.bf16.mxu0 0
  %217 = vmatpush2.bf16.msra.mxu0 0
  %218 = vmatprep.subr.bf16.mxu0 0
  %219 = vmatpush2.bf16.msra.mxu0 0
  %220 = vmatprep.subr.bf16.mxu0 0
  %221 = vmatpush2.bf16.msra.mxu0 0
  %222 = vmatprep.subr.bf16.mxu0 0
  %223 = vmatpush2.bf16.msra.mxu0 0
  %224 = vmatprep.subr.bf16.mxu0 0
  %225 = vmatpush2.bf16.msra.mxu0 0
  %226 = vmatprep.subr.bf16.mxu0 0
  %227 = vmatpush2.bf16.msra.mxu0 0
  %228 = vmatprep.subr.bf16.mxu0 0
  %229 = vmatpush2.bf16.msra.mxu0 0
  %230 = vmatprep.mubr.bf16.mxu0 0
  %231 = vmatmul.mubr.bf16.gmra.mxu0 %v134
  %v232 = vpop.f32.mrf.mxu0
  %v233 = vadd.f32 0.0, %v232
  %v234 = vpop.f32.mrf.mxu0
  %v235 = vpop.f32.mrf.mxu0
  %v236 = vadd.f32 0.0, %v235
  %v237 = vpop.f32.mrf.mxu0
  %238 = vmatprep.mubr.bf16.mxu0 0
  %239 = vmatmul.mubr.bf16.gmra.mxu0 %v135
  %v240 = vpop.f32.mrf.mxu0
  %v241 = vadd.f32 0.0, %v240
  %v242 = vpop.f32.mrf.mxu0
  %v243 = vpop.f32.mrf.mxu0
  %v244 = vadd.f32 0.0, %v243
  %v245 = vpop.f32.mrf.mxu0
  %246 = vmatprep.mubr.bf16.mxu0 0
  %247 = vmatmul.mubr.bf16.gmra.mxu0 %v136
  %v248 = vpop.f32.mrf.mxu0
  %v249 = vadd.f32 0.0, %v248
  %v250 = vpop.f32.mrf.mxu0
  %v251 = vpop.f32.mrf.mxu0
  %v252 = vadd.f32 0.0, %v251
  %v253 = vpop.f32.mrf.mxu0
  %254 = vmatprep.mubr.bf16.mxu0 0
  %255 = vmatmul.mubr.bf16.gmra.mxu0 %v137
  %v256 = vpop.f32.mrf.mxu0
  %v257 = vadd.f32 0.0, %v256
  %v258 = vpop.f32.mrf.mxu0
  %v259 = vpop.f32.mrf.mxu0
  %v260 = vadd.f32 0.0, %v259
  %v261 = vpop.f32.mrf.mxu0
  %262 = vmatprep.mubr.bf16.mxu0 0
  %263 = vmatmul.mubr.bf16.gmra.mxu0 %v138
  %v264 = vpop.f32.mrf.mxu0
  %v265 = vadd.f32 0.0, %v264
  %v266 = vpop.f32.mrf.mxu0
  %v267 = vpop.f32.mrf.mxu0
  %v268 = vadd.f32 0.0, %v267
  %v269 = vpop.f32.mrf.mxu0
  %270 = vmatprep.mubr.bf16.mxu0 0
  %271 = vmatmul.mubr.bf16.gmra.mxu0 %v139
  %v272 = vpop.f32.mrf.mxu0
  %v273 = vadd.f32 0.0, %v272
  %v274 = vpop.f32.mrf.mxu0
  %v275 = vpop.f32.mrf.mxu0
  %v276 = vadd.f32 0.0, %v275
  %v277 = vpop.f32.mrf.mxu0
  %278 = vmatprep.mubr.bf16.mxu0 0
  %279 = vmatmul.mubr.bf16.gmra.mxu0 %v140
  %v280 = vpop.f32.mrf.mxu0
  %v281 = vadd.f32 0.0, %v280
  %v282 = vpop.f32.mrf.mxu0
  %v283 = vpop.f32.mrf.mxu0
  %v284 = vadd.f32 0.0, %v283
  %v285 = vpop.f32.mrf.mxu0
  %286 = vmatprep.mubr.bf16.mxu0 0
  %287 = vmatmul.mubr.bf16.gmra.mxu0 %v141
  %v288 = vpop.f32.mrf.mxu0
  %v289 = vadd.f32 0.0, %v288
  %v290 = vpop.f32.mrf.mxu0
  %v291 = vpop.f32.mrf.mxu0
  %v292 = vadd.f32 0.0, %v291
  %v293 = vpop.f32.mrf.mxu0
  %294 = vdwg.mxu0
  %v311 = vunpack.c.l.b16 %v53
  %v312 = vunpack.c.l.b16 %v54
  %v313 = vunpack.c.l.b16 %v55
  %v314 = vunpack.c.l.b16 %v56
  %v315 = vunpack.c.l.b16 %v57
  %v316 = vunpack.c.l.b16 %v58
  %v317 = vunpack.c.l.b16 %v59
  %v318 = vunpack.c.l.b16 %v60
  %v319 = vunpack.c.l.b16 %v61
  %v320 = vunpack.c.l.b16 %v62
  %v321 = vunpack.c.l.b16 %v63
  %v322 = vunpack.c.l.b16 %v64
  %v323 = vunpack.c.l.b16 %v65
  %v324 = vunpack.c.l.b16 %v66
  %v325 = vunpack.c.l.b16 %v67
  %v326 = vunpack.c.l.b16 %v68
  %v327 = vpack.c.b16 %v312, %v311
  %v328 = vpack.c.b16 %v314, %v313
  %v329 = vpack.c.b16 %v316, %v315
  %v330 = vpack.c.b16 %v318, %v317
  %v331 = vpack.c.b16 %v320, %v319
  %v332 = vpack.c.b16 %v322, %v321
  %v333 = vpack.c.b16 %v324, %v323
  %v334 = vpack.c.b16 %v326, %v325
  %v359 = vunpack.c.l.b16 %v69
  %v360 = vunpack.c.l.b16 %v70
  %v361 = vunpack.c.l.b16 %v71
  %v362 = vunpack.c.l.b16 %v72
  %v363 = vunpack.c.l.b16 %v73
  %v364 = vunpack.c.l.b16 %v74
  %v365 = vunpack.c.l.b16 %v75
  %v366 = vunpack.c.l.b16 %v76
  %v367 = vunpack.c.l.b16 %v77
  %v368 = vunpack.c.l.b16 %v78
  %v369 = vunpack.c.l.b16 %v79
  %v370 = vunpack.c.l.b16 %v80
  %v371 = vunpack.c.l.b16 %v81
  %v372 = vunpack.c.l.b16 %v82
  %v373 = vunpack.c.l.b16 %v83
  %v374 = vunpack.c.l.b16 %v84
  %v375 = vpack.c.b16 %v360, %v359
  %v376 = vpack.c.b16 %v362, %v361
  %v377 = vpack.c.b16 %v364, %v363
  %v378 = vpack.c.b16 %v366, %v365
  %v379 = vpack.c.b16 %v368, %v367
  %v380 = vpack.c.b16 %v370, %v369
  %v381 = vpack.c.b16 %v372, %v371
  %v382 = vpack.c.b16 %v374, %v373
  %391 = vmatprep.subr.bf16.mxu0 0
  %392 = vmatpush1.bf16.msra.mxu0 %v382
  %393 = vmatprep.subr.bf16.mxu0 0
  %394 = vmatpush1.bf16.msra.mxu0 %v381
  %395 = vmatprep.subr.bf16.mxu0 0
  %396 = vmatpush1.bf16.msra.mxu0 %v380
  %397 = vmatprep.subr.bf16.mxu0 0
  %398 = vmatpush1.bf16.msra.mxu0 %v379
  %399 = vmatprep.subr.bf16.mxu0 0
  %400 = vmatpush1.bf16.msra.mxu0 %v378
  %401 = vmatprep.subr.bf16.mxu0 0
  %402 = vmatpush1.bf16.msra.mxu0 %v377
  %403 = vmatprep.subr.bf16.mxu0 0
  %404 = vmatpush1.bf16.msra.mxu0 %v376
  %405 = vmatprep.subr.bf16.mxu0 0
  %406 = vmatpush1.bf16.msra.mxu0 %v375
  %407 = vmatprep.subr.bf16.mxu0 0
  %408 = vmatpush2.bf16.msra.mxu0 0
  %409 = vmatprep.subr.bf16.mxu0 0
  %410 = vmatpush2.bf16.msra.mxu0 0
  %411 = vmatprep.subr.bf16.mxu0 0
  %412 = vmatpush2.bf16.msra.mxu0 0
  %413 = vmatprep.subr.bf16.mxu0 0
  %414 = vmatpush2.bf16.msra.mxu0 0
  %415 = vmatprep.subr.bf16.mxu0 0
  %416 = vmatpush2.bf16.msra.mxu0 0
  %417 = vmatprep.subr.bf16.mxu0 0
  %418 = vmatpush2.bf16.msra.mxu0 0
  %419 = vmatprep.subr.bf16.mxu0 0
  %420 = vmatpush2.bf16.msra.mxu0 0
  %421 = vmatprep.subr.bf16.mxu0 0
  %422 = vmatpush2.bf16.msra.mxu0 0
  %423 = vmatprep.mubr.bf16.mxu0 0
  %424 = vmatmul.mubr.bf16.gmra.mxu0 %v327
  %v425 = vpop.f32.mrf.mxu0
  %v426 = vadd.f32 %v233, %v425
  %v427 = vpop.f32.mrf.mxu0
  %v428 = vpop.f32.mrf.mxu0
  %v429 = vadd.f32 %v236, %v428
  %v430 = vpop.f32.mrf.mxu0
  %431 = vmatprep.mubr.bf16.mxu0 0
  %432 = vmatmul.mubr.bf16.gmra.mxu0 %v328
  %v433 = vpop.f32.mrf.mxu0
  %v434 = vadd.f32 %v241, %v433
  %v435 = vpop.f32.mrf.mxu0
  %v436 = vpop.f32.mrf.mxu0
  %v437 = vadd.f32 %v244, %v436
  %v438 = vpop.f32.mrf.mxu0
  %439 = vmatprep.mubr.bf16.mxu0 0
  %440 = vmatmul.mubr.bf16.gmra.mxu0 %v329
  %v441 = vpop.f32.mrf.mxu0
  %v442 = vadd.f32 %v249, %v441
  %v443 = vpop.f32.mrf.mxu0
  %v444 = vpop.f32.mrf.mxu0
  %v445 = vadd.f32 %v252, %v444
  %v446 = vpop.f32.mrf.mxu0
  %447 = vmatprep.mubr.bf16.mxu0 0
  %448 = vmatmul.mubr.bf16.gmra.mxu0 %v330
  %v449 = vpop.f32.mrf.mxu0
  %v450 = vadd.f32 %v257, %v449
  %v451 = vpop.f32.mrf.mxu0
  %v452 = vpop.f32.mrf.mxu0
  %v453 = vadd.f32 %v260, %v452
  %v454 = vpop.f32.mrf.mxu0
  %455 = vmatprep.mubr.bf16.mxu0 0
  %456 = vmatmul.mubr.bf16.gmra.mxu0 %v331
  %v457 = vpop.f32.mrf.mxu0
  %v458 = vadd.f32 %v265, %v457
  %v459 = vpop.f32.mrf.mxu0
  %v460 = vpop.f32.mrf.mxu0
  %v461 = vadd.f32 %v268, %v460
  %v462 = vpop.f32.mrf.mxu0
  %463 = vmatprep.mubr.bf16.mxu0 0
  %464 = vmatmul.mubr.bf16.gmra.mxu0 %v332
  %v465 = vpop.f32.mrf.mxu0
  %v466 = vadd.f32 %v273, %v465
  %v467 = vpop.f32.mrf.mxu0
  %v468 = vpop.f32.mrf.mxu0
  %v469 = vadd.f32 %v276, %v468
  %v470 = vpop.f32.mrf.mxu0
  %471 = vmatprep.mubr.bf16.mxu0 0
  %472 = vmatmul.mubr.bf16.gmra.mxu0 %v333
  %v473 = vpop.f32.mrf.mxu0
  %v474 = vadd.f32 %v281, %v473
  %v475 = vpop.f32.mrf.mxu0
  %v476 = vpop.f32.mrf.mxu0
  %v477 = vadd.f32 %v284, %v476
  %v478 = vpop.f32.mrf.mxu0
  %479 = vmatprep.mubr.bf16.mxu0 0
  %480 = vmatmul.mubr.bf16.gmra.mxu0 %v334
  %v481 = vpop.f32.mrf.mxu0
  %v482 = vadd.f32 %v289, %v481
  %v483 = vpop.f32.mrf.mxu0
  %v484 = vpop.f32.mrf.mxu0
  %v485 = vadd.f32 %v292, %v484
  %v486 = vpop.f32.mrf.mxu0
  %487 = vdwg.mxu0
  %s488 = scalar_lea.vmem %s0, 16
  %v489 = vld [vmem:[%s488] sm:$0xf]
  %v490 = vld [vmem:[%s488 + $0x4] sm:$0xf]
  %v491 = vld [vmem:[%s488 + $0x8] sm:$0xf]
  %v492 = vld [vmem:[%s488 + $0xc] sm:$0xf]
  %v493 = vld [vmem:[%s488 + $0x10] sm:$0xf]
  %v494 = vld [vmem:[%s488 + $0x14] sm:$0xf]
  %v495 = vld [vmem:[%s488 + $0x18] sm:$0xf]
  %v496 = vld [vmem:[%s488 + $0x1c] sm:$0xf]
  %v497 = vld [vmem:[%s488 + $0x20] sm:$0xf]
  %v498 = vld [vmem:[%s488 + $0x24] sm:$0xf]
  %v499 = vld [vmem:[%s488 + $0x28] sm:$0xf]
  %v500 = vld [vmem:[%s488 + $0x2c] sm:$0xf]
  %v501 = vld [vmem:[%s488 + $0x30] sm:$0xf]
  %v502 = vld [vmem:[%s488 + $0x34] sm:$0xf]
  %v503 = vld [vmem:[%s488 + $0x38] sm:$0xf]
  %v504 = vld [vmem:[%s488 + $0x3c] sm:$0xf]
  %s505 = scalar_lea.vmem %s1, 128
  %v506 = vld [vmem:[%s505] sm:$0xf]
  %v507 = vld [vmem:[%s505 + $0x4] sm:$0xf]
  %v508 = vld [vmem:[%s505 + $0x8] sm:$0xf]
  %v509 = vld [vmem:[%s505 + $0xc] sm:$0xf]
  %v510 = vld [vmem:[%s505 + $0x10] sm:$0xf]
  %v511 = vld [vmem:[%s505 + $0x14] sm:$0xf]
  %v512 = vld [vmem:[%s505 + $0x18] sm:$0xf]
  %v513 = vld [vmem:[%s505 + $0x1c] sm:$0xf]
  %v514 = vld [vmem:[%s505 + $0x20] sm:$0xf]
  %v515 = vld [vmem:[%s505 + $0x24] sm:$0xf]
  %v516 = vld [vmem:[%s505 + $0x28] sm:$0xf]
  %v517 = vld [vmem:[%s505 + $0x2c] sm:$0xf]
  %v518 = vld [vmem:[%s505 + $0x30] sm:$0xf]
  %v519 = vld [vmem:[%s505 + $0x34] sm:$0xf]
  %v520 = vld [vmem:[%s505 + $0x38] sm:$0xf]
  %v521 = vld [vmem:[%s505 + $0x3c] sm:$0xf]
  %v538 = vunpack.c.l.b16 %v489
  %v539 = vunpack.c.l.b16 %v490
  %v540 = vunpack.c.l.b16 %v491
  %v541 = vunpack.c.l.b16 %v492
  %v542 = vunpack.c.l.b16 %v493
  %v543 = vunpack.c.l.b16 %v494
  %v544 = vunpack.c.l.b16 %v495
  %v545 = vunpack.c.l.b16 %v496
  %v546 = vunpack.c.l.b16 %v497
  %v547 = vunpack.c.l.b16 %v498
  %v548 = vunpack.c.l.b16 %v499
  %v549 = vunpack.c.l.b16 %v500
  %v550 = vunpack.c.l.b16 %v501
  %v551 = vunpack.c.l.b16 %v502
  %v552 = vunpack.c.l.b16 %v503
  %v553 = vunpack.c.l.b16 %v504
  %v554 = vpack.c.b16 %v539, %v538
  %v555 = vpack.c.b16 %v541, %v540
  %v556 = vpack.c.b16 %v543, %v542
  %v557 = vpack.c.b16 %v545, %v544
  %v558 = vpack.c.b16 %v547, %v546
  %v559 = vpack.c.b16 %v549, %v548
  %v560 = vpack.c.b16 %v551, %v550
  %v561 = vpack.c.b16 %v553, %v552
  %v586 = vunpack.c.l.b16 %v506
  %v587 = vunpack.c.l.b16 %v507
  %v588 = vunpack.c.l.b16 %v508
  %v589 = vunpack.c.l.b16 %v509
  %v590 = vunpack.c.l.b16 %v510
  %v591 = vunpack.c.l.b16 %v511
  %v592 = vunpack.c.l.b16 %v512
  %v593 = vunpack.c.l.b16 %v513
  %v594 = vunpack.c.l.b16 %v514
  %v595 = vunpack.c.l.b16 %v515
  %v596 = vunpack.c.l.b16 %v516
  %v597 = vunpack.c.l.b16 %v517
  %v598 = vunpack.c.l.b16 %v518
  %v599 = vunpack.c.l.b16 %v519
  %v600 = vunpack.c.l.b16 %v520
  %v601 = vunpack.c.l.b16 %v521
  %v602 = vpack.c.b16 %v587, %v586
  %v603 = vpack.c.b16 %v589, %v588
  %v604 = vpack.c.b16 %v591, %v590
  %v605 = vpack.c.b16 %v593, %v592
  %v606 = vpack.c.b16 %v595, %v594
  %v607 = vpack.c.b16 %v597, %v596
  %v608 = vpack.c.b16 %v599, %v598
  %v609 = vpack.c.b16 %v601, %v600
  %618 = vmatprep.subr.bf16.mxu0 0
  %619 = vmatpush1.bf16.msra.mxu0 %v609
  %620 = vmatprep.subr.bf16.mxu0 0
  %621 = vmatpush1.bf16.msra.mxu0 %v608
  %622 = vmatprep.subr.bf16.mxu0 0
  %623 = vmatpush1.bf16.msra.mxu0 %v607
  %624 = vmatprep.subr.bf16.mxu0 0
  %625 = vmatpush1.bf16.msra.mxu0 %v606
  %626 = vmatprep.subr.bf16.mxu0 0
  %627 = vmatpush1.bf16.msra.mxu0 %v605
  %628 = vmatprep.subr.bf16.mxu0 0
  %629 = vmatpush1.bf16.msra.mxu0 %v604
  %630 = vmatprep.subr.bf16.mxu0 0
  %631 = vmatpush1.bf16.msra.mxu0 %v603
  %632 = vmatprep.subr.bf16.mxu0 0
  %633 = vmatpush1.bf16.msra.mxu0 %v602
  %634 = vmatprep.subr.bf16.mxu0 0
  %635 = vmatpush2.bf16.msra.mxu0 0
  %636 = vmatprep.subr.bf16.mxu0 0
  %637 = vmatpush2.bf16.msra.mxu0 0
  %638 = vmatprep.subr.bf16.mxu0 0
  %639 = vmatpush2.bf16.msra.mxu0 0
  %640 = vmatprep.subr.bf16.mxu0 0
  %641 = vmatpush2.bf16.msra.mxu0 0
  %642 = vmatprep.subr.bf16.mxu0 0
  %643 = vmatpush2.bf16.msra.mxu0 0
  %644 = vmatprep.subr.bf16.mxu0 0
  %645 = vmatpush2.bf16.msra.mxu0 0
  %646 = vmatprep.subr.bf16.mxu0 0
  %647 = vmatpush2.bf16.msra.mxu0 0
  %648 = vmatprep.subr.bf16.mxu0 0
  %649 = vmatpush2.bf16.msra.mxu0 0
  %650 = vmatprep.mubr.bf16.mxu0 0
  %651 = vmatmul.mubr.bf16.gmra.mxu0 %v554
  %v652 = vpop.f32.mrf.mxu0
  %v653 = vadd.f32 0.0, %v652
  %v654 = vpop.f32.mrf.mxu0
  %v655 = vpop.f32.mrf.mxu0
  %v656 = vadd.f32 0.0, %v655
  %v657 = vpop.f32.mrf.mxu0
  %658 = vmatprep.mubr.bf16.mxu0 0
  %659 = vmatmul.mubr.bf16.gmra.mxu0 %v555
  %v660 = vpop.f32.mrf.mxu0
  %v661 = vadd.f32 0.0, %v660
  %v662 = vpop.f32.mrf.mxu0
  %v663 = vpop.f32.mrf.mxu0
  %v664 = vadd.f32 0.0, %v663
  %v665 = vpop.f32.mrf.mxu0
  %666 = vmatprep.mubr.bf16.mxu0 0
  %667 = vmatmul.mubr.bf16.gmra.mxu0 %v556
  %v668 = vpop.f32.mrf.mxu0
  %v669 = vadd.f32 0.0, %v668
  %v670 = vpop.f32.mrf.mxu0
  %v671 = vpop.f32.mrf.mxu0
  %v672 = vadd.f32 0.0, %v671
  %v673 = vpop.f32.mrf.mxu0
  %674 = vmatprep.mubr.bf16.mxu0 0
  %675 = vmatmul.mubr.bf16.gmra.mxu0 %v557
  %v676 = vpop.f32.mrf.mxu0
  %v677 = vadd.f32 0.0, %v676
  %v678 = vpop.f32.mrf.mxu0
  %v679 = vpop.f32.mrf.mxu0
  %v680 = vadd.f32 0.0, %v679
  %v681 = vpop.f32.mrf.mxu0
  %682 = vmatprep.mubr.bf16.mxu0 0
  %683 = vmatmul.mubr.bf16.gmra.mxu0 %v558
  %v684 = vpop.f32.mrf.mxu0
  %v685 = vadd.f32 0.0, %v684
  %v686 = vpop.f32.mrf.mxu0
  %v687 = vpop.f32.mrf.mxu0
  %v688 = vadd.f32 0.0, %v687
  %v689 = vpop.f32.mrf.mxu0
  %690 = vmatprep.mubr.bf16.mxu0 0
  %691 = vmatmul.mubr.bf16.gmra.mxu0 %v559
  %v692 = vpop.f32.mrf.mxu0
  %v693 = vadd.f32 0.0, %v692
  %v694 = vpop.f32.mrf.mxu0
  %v695 = vpop.f32.mrf.mxu0
  %v696 = vadd.f32 0.0, %v695
  %v697 = vpop.f32.mrf.mxu0
  %698 = vmatprep.mubr.bf16.mxu0 0
  %699 = vmatmul.mubr.bf16.gmra.mxu0 %v560
  %v700 = vpop.f32.mrf.mxu0
  %v701 = vadd.f32 0.0, %v700
  %v702 = vpop.f32.mrf.mxu0
  %v703 = vpop.f32.mrf.mxu0
  %v704 = vadd.f32 0.0, %v703
  %v705 = vpop.f32.mrf.mxu0
  %706 = vmatprep.mubr.bf16.mxu0 0
  %707 = vmatmul.mubr.bf16.gmra.mxu0 %v561
  %v708 = vpop.f32.mrf.mxu0
  %v709 = vadd.f32 0.0, %v708
  %v710 = vpop.f32.mrf.mxu0
  %v711 = vpop.f32.mrf.mxu0
  %v712 = vadd.f32 0.0, %v711
  %v713 = vpop.f32.mrf.mxu0
  %714 = vdwg.mxu0
  %v715 = vadd.f32 %v426, %v653
  %v716 = vadd.f32 %v429, %v656
  %v717 = vadd.f32 %v434, %v661
  %v718 = vadd.f32 %v437, %v664
  %v719 = vadd.f32 %v442, %v669
  %v720 = vadd.f32 %v445, %v672
  %v721 = vadd.f32 %v450, %v677
  %v722 = vadd.f32 %v453, %v680
  %v723 = vadd.f32 %v458, %v685
  %v724 = vadd.f32 %v461, %v688
  %v725 = vadd.f32 %v466, %v693
  %v726 = vadd.f32 %v469, %v696
  %v727 = vadd.f32 %v474, %v701
  %v728 = vadd.f32 %v477, %v704
  %v729 = vadd.f32 %v482, %v709
  %v730 = vadd.f32 %v485, %v712
  %v731 = vld [vmem:[%s2] sm:$0x1]
  %v733 = vlaneseq
  %v734 = vshrl.u32 %v733, 7
  %v735 = vsub.s32 0, %v734
  %v736 = vrot.slane %v731, %v735
  %v738 = vmul.f32 %v715, %v736
  %v739 = vmul.f32 %v716, %v736
  %v740 = vmul.f32 %v717, %v736
  %v741 = vmul.f32 %v718, %v736
  %v742 = vmul.f32 %v719, %v736
  %v743 = vmul.f32 %v720, %v736
  %v744 = vmul.f32 %v721, %v736
  %v745 = vmul.f32 %v722, %v736
  %v746 = vmul.f32 %v723, %v736
  %v747 = vmul.f32 %v724, %v736
  %v748 = vmul.f32 %v725, %v736
  %v749 = vmul.f32 %v726, %v736
  %v750 = vmul.f32 %v727, %v736
  %v751 = vmul.f32 %v728, %v736
  %v752 = vmul.f32 %v729, %v736
  %v753 = vmul.f32 %v730, %v736
  %v754 = vld [vmem:[%s3] sm:$0x1]
  %v756 = vlaneseq
  %v757 = vshrl.u32 %v756, 7
  %v758 = vsub.s32 0, %v757
  %v759 = vrot.slane %v754, %v758
  %v761 = vadd.f32 %v738, %v759
  %v762 = vadd.f32 %v739, %v759
  %v763 = vadd.f32 %v740, %v759
  %v764 = vadd.f32 %v741, %v759
  %v765 = vadd.f32 %v742, %v759
  %v766 = vadd.f32 %v743, %v759
  %v767 = vadd.f32 %v744, %v759
  %v768 = vadd.f32 %v745, %v759
  %v769 = vadd.f32 %v746, %v759
  %v770 = vadd.f32 %v747, %v759
  %v771 = vadd.f32 %v748, %v759
  %v772 = vadd.f32 %v749, %v759
  %v773 = vadd.f32 %v750, %v759
  %v774 = vadd.f32 %v751, %v759
  %v775 = vadd.f32 %v752, %v759
  %v776 = vadd.f32 %v753, %v759
  %v777 = vmax.f32 %v761, 0.0
  %v778 = vmax.f32 %v762, 0.0
  %v779 = vmax.f32 %v763, 0.0
  %v780 = vmax.f32 %v764, 0.0
  %v781 = vmax.f32 %v765, 0.0
  %v782 = vmax.f32 %v766, 0.0
  %v783 = vmax.f32 %v767, 0.0
  %v784 = vmax.f32 %v768, 0.0
  %v785 = vmax.f32 %v769, 0.0
  %v786 = vmax.f32 %v770, 0.0
  %v787 = vmax.f32 %v771, 0.0
  %v788 = vmax.f32 %v772, 0.0
  %v789 = vmax.f32 %v773, 0.0
  %v790 = vmax.f32 %v774, 0.0
  %v791 = vmax.f32 %v775, 0.0
  %v792 = vmax.f32 %v776, 0.0
  %v793 = vpack.c.bf16 0.0, 0.0
  %v794 = vpack.c.bf16 %v778, %v777
  %v795 = vpack.c.bf16 %v780, %v779
  %v796 = vpack.c.bf16 %v782, %v781
  %v797 = vpack.c.bf16 %v784, %v783
  %v798 = vpack.c.bf16 %v786, %v785
  %v799 = vpack.c.bf16 %v788, %v787
  %v800 = vpack.c.bf16 %v790, %v789
  %v801 = vld [vmem:[%s4] sm:$0xf]
  %v802 = vld [vmem:[%s4 + $0x4] sm:$0xf]
  %v803 = vld [vmem:[%s4 + $0x8] sm:$0xf]
  %v804 = vld [vmem:[%s4 + $0xc] sm:$0xf]
  %v805 = vld [vmem:[%s4 + $0x10] sm:$0xf]
  %v806 = vld [vmem:[%s4 + $0x14] sm:$0xf]
  %v807 = vld [vmem:[%s4 + $0x18] sm:$0xf]
  %v808 = vld [vmem:[%s4 + $0x1c] sm:$0xf]
  %v809 = vld [vmem:[%s4 + $0x20] sm:$0xf]
  %v810 = vld [vmem:[%s4 + $0x24] sm:$0xf]
  %v811 = vld [vmem:[%s4 + $0x28] sm:$0xf]
  %v812 = vld [vmem:[%s4 + $0x2c] sm:$0xf]
  %v813 = vld [vmem:[%s4 + $0x30] sm:$0xf]
  %v814 = vld [vmem:[%s4 + $0x34] sm:$0xf]
  %v815 = vld [vmem:[%s4 + $0x38] sm:$0xf]
  %v816 = vld [vmem:[%s4 + $0x3c] sm:$0xf]
  %v817 = vpack.c.bf16 %v792, %v791
  %s818 = scalar_lea.vmem %s4, 64
  %v819 = vld [vmem:[%s818] sm:$0xf]
  %v820 = vld [vmem:[%s818 + $0x4] sm:$0xf]
  %v821 = vld [vmem:[%s818 + $0x8] sm:$0xf]
  %v822 = vld [vmem:[%s818 + $0xc] sm:$0xf]
  %v823 = vld [vmem:[%s818 + $0x10] sm:$0xf]
  %v824 = vld [vmem:[%s818 + $0x14] sm:$0xf]
  %v825 = vld [vmem:[%s818 + $0x18] sm:$0xf]
  %v826 = vld [vmem:[%s818 + $0x1c] sm:$0xf]
  %v827 = vld [vmem:[%s818 + $0x20] sm:$0xf]
  %v828 = vld [vmem:[%s818 + $0x24] sm:$0xf]
  %v829 = vld [vmem:[%s818 + $0x28] sm:$0xf]
  %v830 = vld [vmem:[%s818 + $0x2c] sm:$0xf]
  %v831 = vld [vmem:[%s818 + $0x30] sm:$0xf]
  %v832 = vld [vmem:[%s818 + $0x34] sm:$0xf]
  %v833 = vld [vmem:[%s818 + $0x38] sm:$0xf]
  %v834 = vld [vmem:[%s818 + $0x3c] sm:$0xf]
  %v851 = vunpack.c.l.b16 %v819
  %v852 = vunpack.c.l.b16 %v820
  %v853 = vunpack.c.l.b16 %v821
  %v854 = vunpack.c.l.b16 %v822
  %v855 = vunpack.c.l.b16 %v823
  %v856 = vunpack.c.l.b16 %v824
  %v857 = vunpack.c.l.b16 %v825
  %v858 = vunpack.c.l.b16 %v826
  %v859 = vunpack.c.l.b16 %v827
  %v860 = vunpack.c.l.b16 %v828
  %v861 = vunpack.c.l.b16 %v829
  %v862 = vunpack.c.l.b16 %v830
  %v863 = vunpack.c.l.b16 %v831
  %v864 = vunpack.c.l.b16 %v832
  %v865 = vunpack.c.l.b16 %v833
  %v866 = vunpack.c.l.b16 %v834
  %v867 = vpack.c.b16 %v852, %v851
  %v868 = vpack.c.b16 %v854, %v853
  %v869 = vpack.c.b16 %v856, %v855
  %v870 = vpack.c.b16 %v858, %v857
  %v871 = vpack.c.b16 %v860, %v859
  %v872 = vpack.c.b16 %v862, %v861
  %v873 = vpack.c.b16 %v864, %v863
  %v874 = vpack.c.b16 %v866, %v865
  %883 = vmatprep.subr.bf16.mxu0 0
  %884 = vmatpush1.bf16.msra.mxu0 %v874
  %885 = vmatprep.subr.bf16.mxu0 0
  %886 = vmatpush1.bf16.msra.mxu0 %v873
  %887 = vmatprep.subr.bf16.mxu0 0
  %888 = vmatpush1.bf16.msra.mxu0 %v872
  %889 = vmatprep.subr.bf16.mxu0 0
  %890 = vmatpush1.bf16.msra.mxu0 %v871
  %891 = vmatprep.subr.bf16.mxu0 0
  %892 = vmatpush1.bf16.msra.mxu0 %v870
  %893 = vmatprep.subr.bf16.mxu0 0
  %894 = vmatpush1.bf16.msra.mxu0 %v869
  %895 = vmatprep.subr.bf16.mxu0 0
  %896 = vmatpush1.bf16.msra.mxu0 %v868
  %897 = vmatprep.subr.bf16.mxu0 0
  %898 = vmatpush1.bf16.msra.mxu0 %v867
  %899 = vmatprep.subr.bf16.mxu0 0
  %900 = vmatpush2.bf16.msra.mxu0 0
  %901 = vmatprep.subr.bf16.mxu0 0
  %902 = vmatpush2.bf16.msra.mxu0 0
  %903 = vmatprep.subr.bf16.mxu0 0
  %904 = vmatpush2.bf16.msra.mxu0 0
  %905 = vmatprep.subr.bf16.mxu0 0
  %906 = vmatpush2.bf16.msra.mxu0 0
  %907 = vmatprep.subr.bf16.mxu0 0
  %908 = vmatpush2.bf16.msra.mxu0 0
  %909 = vmatprep.subr.bf16.mxu0 0
  %910 = vmatpush2.bf16.msra.mxu0 0
  %911 = vmatprep.subr.bf16.mxu0 0
  %912 = vmatpush2.bf16.msra.mxu0 0
  %913 = vmatprep.subr.bf16.mxu0 0
  %914 = vmatpush2.bf16.msra.mxu0 0
  %915 = vmatprep.mubr.bf16.mxu0 0
  %916 = vmatmul.mubr.bf16.gmra.mxu0 %v794
  %v917 = vpop.f32.mrf.mxu0
  %v918 = vadd.f32 0.0, %v917
  %v919 = vpop.f32.mrf.mxu0
  %v920 = vpop.f32.mrf.mxu0
  %v921 = vadd.f32 0.0, %v920
  %v922 = vpop.f32.mrf.mxu0
  %923 = vmatprep.mubr.bf16.mxu0 0
  %924 = vmatmul.mubr.bf16.gmra.mxu0 %v795
  %v925 = vpop.f32.mrf.mxu0
  %v926 = vadd.f32 0.0, %v925
  %v927 = vpop.f32.mrf.mxu0
  %v928 = vpop.f32.mrf.mxu0
  %v929 = vadd.f32 0.0, %v928
  %v930 = vpop.f32.mrf.mxu0
  %931 = vmatprep.mubr.bf16.mxu0 0
  %932 = vmatmul.mubr.bf16.gmra.mxu0 %v796
  %v933 = vpop.f32.mrf.mxu0
  %v934 = vadd.f32 0.0, %v933
  %v935 = vpop.f32.mrf.mxu0
  %v936 = vpop.f32.mrf.mxu0
  %v937 = vadd.f32 0.0, %v936
  %v938 = vpop.f32.mrf.mxu0
  %939 = vmatprep.mubr.bf16.mxu0 0
  %940 = vmatmul.mubr.bf16.gmra.mxu0 %v797
  %v941 = vpop.f32.mrf.mxu0
  %v942 = vadd.f32 0.0, %v941
  %v943 = vpop.f32.mrf.mxu0
  %v944 = vpop.f32.mrf.mxu0
  %v945 = vadd.f32 0.0, %v944
  %v946 = vpop.f32.mrf.mxu0
  %947 = vmatprep.mubr.bf16.mxu0 0
  %948 = vmatmul.mubr.bf16.gmra.mxu0 %v798
  %v949 = vpop.f32.mrf.mxu0
  %v950 = vadd.f32 0.0, %v949
  %v951 = vpop.f32.mrf.mxu0
  %v952 = vpop.f32.mrf.mxu0
  %v953 = vadd.f32 0.0, %v952
  %v954 = vpop.f32.mrf.mxu0
  %955 = vmatprep.mubr.bf16.mxu0 0
  %956 = vmatmul.mubr.bf16.gmra.mxu0 %v799
  %v957 = vpop.f32.mrf.mxu0
  %v958 = vadd.f32 0.0, %v957
  %v959 = vpop.f32.mrf.mxu0
  %v960 = vpop.f32.mrf.mxu0
  %v961 = vadd.f32 0.0, %v960
  %v962 = vpop.f32.mrf.mxu0
  %963 = vmatprep.mubr.bf16.mxu0 0
  %964 = vmatmul.mubr.bf16.gmra.mxu0 %v800
  %v965 = vpop.f32.mrf.mxu0
  %v966 = vadd.f32 0.0, %v965
  %v967 = vpop.f32.mrf.mxu0
  %v968 = vpop.f32.mrf.mxu0
  %v969 = vadd.f32 0.0, %v968
  %v970 = vpop.f32.mrf.mxu0
  %971 = vmatprep.mubr.bf16.mxu0 0
  %972 = vmatmul.mubr.bf16.gmra.mxu0 %v817
  %v973 = vpop.f32.mrf.mxu0
  %v974 = vadd.f32 0.0, %v973
  %v975 = vpop.f32.mrf.mxu0
  %v976 = vpop.f32.mrf.mxu0
  %v977 = vadd.f32 0.0, %v976
  %v978 = vpop.f32.mrf.mxu0
  %979 = vdwg.mxu0
  %v996 = vunpack.c.l.b16 %v801
  %v997 = vunpack.c.l.b16 %v802
  %v998 = vunpack.c.l.b16 %v803
  %v999 = vunpack.c.l.b16 %v804
  %v1000 = vunpack.c.l.b16 %v805
  %v1001 = vunpack.c.l.b16 %v806
  %v1002 = vunpack.c.l.b16 %v807
  %v1003 = vunpack.c.l.b16 %v808
  %v1004 = vunpack.c.l.b16 %v809
  %v1005 = vunpack.c.l.b16 %v810
  %v1006 = vunpack.c.l.b16 %v811
  %v1007 = vunpack.c.l.b16 %v812
  %v1008 = vunpack.c.l.b16 %v813
  %v1009 = vunpack.c.l.b16 %v814
  %v1010 = vunpack.c.l.b16 %v815
  %v1011 = vunpack.c.l.b16 %v816
  %v1012 = vpack.c.b16 %v997, %v996
  %v1013 = vpack.c.b16 %v999, %v998
  %v1014 = vpack.c.b16 %v1001, %v1000
  %v1015 = vpack.c.b16 %v1003, %v1002
  %v1016 = vpack.c.b16 %v1005, %v1004
  %v1017 = vpack.c.b16 %v1007, %v1006
  %v1018 = vpack.c.b16 %v1009, %v1008
  %v1019 = vpack.c.b16 %v1011, %v1010
  %1028 = vmatprep.subr.bf16.mxu0 0
  %1029 = vmatpush1.bf16.msra.mxu0 %v1019
  %1030 = vmatprep.subr.bf16.mxu0 0
  %1031 = vmatpush1.bf16.msra.mxu0 %v1018
  %1032 = vmatprep.subr.bf16.mxu0 0
  %1033 = vmatpush1.bf16.msra.mxu0 %v1017
  %1034 = vmatprep.subr.bf16.mxu0 0
  %1035 = vmatpush1.bf16.msra.mxu0 %v1016
  %1036 = vmatprep.subr.bf16.mxu0 0
  %1037 = vmatpush1.bf16.msra.mxu0 %v1015
  %1038 = vmatprep.subr.bf16.mxu0 0
  %1039 = vmatpush1.bf16.msra.mxu0 %v1014
  %1040 = vmatprep.subr.bf16.mxu0 0
  %1041 = vmatpush1.bf16.msra.mxu0 %v1013
  %1042 = vmatprep.subr.bf16.mxu0 0
  %1043 = vmatpush1.bf16.msra.mxu0 %v1012
  %1044 = vmatprep.subr.bf16.mxu0 0
  %1045 = vmatpush2.bf16.msra.mxu0 0
  %1046 = vmatprep.subr.bf16.mxu0 0
  %1047 = vmatpush2.bf16.msra.mxu0 0
  %1048 = vmatprep.subr.bf16.mxu0 0
  %1049 = vmatpush2.bf16.msra.mxu0 0
  %1050 = vmatprep.subr.bf16.mxu0 0
  %1051 = vmatpush2.bf16.msra.mxu0 0
  %1052 = vmatprep.subr.bf16.mxu0 0
  %1053 = vmatpush2.bf16.msra.mxu0 0
  %1054 = vmatprep.subr.bf16.mxu0 0
  %1055 = vmatpush2.bf16.msra.mxu0 0
  %1056 = vmatprep.subr.bf16.mxu0 0
  %1057 = vmatpush2.bf16.msra.mxu0 0
  %1058 = vmatprep.subr.bf16.mxu0 0
  %1059 = vmatpush2.bf16.msra.mxu0 0
  %1060 = vmatprep.mubr.bf16.mxu0 0
  %1061 = vmatmul.mubr.bf16.gmra.mxu0 %v793
  %v1062 = vpop.f32.mrf.mxu0
  %v1063 = vadd.f32 %v918, %v1062
  %v1064 = vpop.f32.mrf.mxu0
  %v1065 = vpop.f32.mrf.mxu0
  %v1066 = vadd.f32 %v921, %v1065
  %v1067 = vpop.f32.mrf.mxu0
  %1068 = vmatprep.mubr.bf16.mxu0 0
  %1069 = vmatmul.mubr.bf16.gmra.mxu0 %v794
  %v1070 = vpop.f32.mrf.mxu0
  %v1071 = vadd.f32 %v926, %v1070
  %v1072 = vpop.f32.mrf.mxu0
  %v1073 = vpop.f32.mrf.mxu0
  %v1074 = vadd.f32 %v929, %v1073
  %v1075 = vpop.f32.mrf.mxu0
  %1076 = vmatprep.mubr.bf16.mxu0 0
  %1077 = vmatmul.mubr.bf16.gmra.mxu0 %v795
  %v1078 = vpop.f32.mrf.mxu0
  %v1079 = vadd.f32 %v934, %v1078
  %v1080 = vpop.f32.mrf.mxu0
  %v1081 = vpop.f32.mrf.mxu0
  %v1082 = vadd.f32 %v937, %v1081
  %v1083 = vpop.f32.mrf.mxu0
  %1084 = vmatprep.mubr.bf16.mxu0 0
  %1085 = vmatmul.mubr.bf16.gmra.mxu0 %v796
  %v1086 = vpop.f32.mrf.mxu0
  %v1087 = vadd.f32 %v942, %v1086
  %v1088 = vpop.f32.mrf.mxu0
  %v1089 = vpop.f32.mrf.mxu0
  %v1090 = vadd.f32 %v945, %v1089
  %v1091 = vpop.f32.mrf.mxu0
  %1092 = vmatprep.mubr.bf16.mxu0 0
  %1093 = vmatmul.mubr.bf16.gmra.mxu0 %v797
  %v1094 = vpop.f32.mrf.mxu0
  %v1095 = vadd.f32 %v950, %v1094
  %v1096 = vpop.f32.mrf.mxu0
  %v1097 = vpop.f32.mrf.mxu0
  %v1098 = vadd.f32 %v953, %v1097
  %v1099 = vpop.f32.mrf.mxu0
  %1100 = vmatprep.mubr.bf16.mxu0 0
  %1101 = vmatmul.mubr.bf16.gmra.mxu0 %v798
  %v1102 = vpop.f32.mrf.mxu0
  %v1103 = vadd.f32 %v958, %v1102
  %v1104 = vpop.f32.mrf.mxu0
  %v1105 = vpop.f32.mrf.mxu0
  %v1106 = vadd.f32 %v961, %v1105
  %v1107 = vpop.f32.mrf.mxu0
  %1108 = vmatprep.mubr.bf16.mxu0 0
  %1109 = vmatmul.mubr.bf16.gmra.mxu0 %v799
  %v1110 = vpop.f32.mrf.mxu0
  %v1111 = vadd.f32 %v966, %v1110
  %v1112 = vpop.f32.mrf.mxu0
  %v1113 = vpop.f32.mrf.mxu0
  %v1114 = vadd.f32 %v969, %v1113
  %v1115 = vpop.f32.mrf.mxu0
  %1116 = vmatprep.mubr.bf16.mxu0 0
  %1117 = vmatmul.mubr.bf16.gmra.mxu0 %v800
  %v1118 = vpop.f32.mrf.mxu0
  %v1119 = vadd.f32 %v974, %v1118
  %v1120 = vpop.f32.mrf.mxu0
  %v1121 = vpop.f32.mrf.mxu0
  %v1122 = vadd.f32 %v977, %v1121
  %v1123 = vpop.f32.mrf.mxu0
  %1124 = vdwg.mxu0
  %s1125 = scalar_lea.vmem %s4, 128
  %v1126 = vld [vmem:[%s1125] sm:$0xf]
  %v1127 = vld [vmem:[%s1125 + $0x4] sm:$0xf]
  %v1128 = vld [vmem:[%s1125 + $0x8] sm:$0xf]
  %v1129 = vld [vmem:[%s1125 + $0xc] sm:$0xf]
  %v1130 = vld [vmem:[%s1125 + $0x10] sm:$0xf]
  %v1131 = vld [vmem:[%s1125 + $0x14] sm:$0xf]
  %v1132 = vld [vmem:[%s1125 + $0x18] sm:$0xf]
  %v1133 = vld [vmem:[%s1125 + $0x1c] sm:$0xf]
  %v1134 = vld [vmem:[%s1125 + $0x20] sm:$0xf]
  %v1135 = vld [vmem:[%s1125 + $0x24] sm:$0xf]
  %v1136 = vld [vmem:[%s1125 + $0x28] sm:$0xf]
  %v1137 = vld [vmem:[%s1125 + $0x2c] sm:$0xf]
  %v1138 = vld [vmem:[%s1125 + $0x30] sm:$0xf]
  %v1139 = vld [vmem:[%s1125 + $0x34] sm:$0xf]
  %v1140 = vld [vmem:[%s1125 + $0x38] sm:$0xf]
  %v1141 = vld [vmem:[%s1125 + $0x3c] sm:$0xf]
  %v1158 = vunpack.c.l.b16 %v1126
  %v1159 = vunpack.c.l.b16 %v1127
  %v1160 = vunpack.c.l.b16 %v1128
  %v1161 = vunpack.c.l.b16 %v1129
  %v1162 = vunpack.c.l.b16 %v1130
  %v1163 = vunpack.c.l.b16 %v1131
  %v1164 = vunpack.c.l.b16 %v1132
  %v1165 = vunpack.c.l.b16 %v1133
  %v1166 = vunpack.c.l.b16 %v1134
  %v1167 = vunpack.c.l.b16 %v1135
  %v1168 = vunpack.c.l.b16 %v1136
  %v1169 = vunpack.c.l.b16 %v1137
  %v1170 = vunpack.c.l.b16 %v1138
  %v1171 = vunpack.c.l.b16 %v1139
  %v1172 = vunpack.c.l.b16 %v1140
  %v1173 = vunpack.c.l.b16 %v1141
  %v1174 = vpack.c.b16 %v1159, %v1158
  %v1175 = vpack.c.b16 %v1161, %v1160
  %v1176 = vpack.c.b16 %v1163, %v1162
  %v1177 = vpack.c.b16 %v1165, %v1164
  %v1178 = vpack.c.b16 %v1167, %v1166
  %v1179 = vpack.c.b16 %v1169, %v1168
  %v1180 = vpack.c.b16 %v1171, %v1170
  %v1181 = vpack.c.b16 %v1173, %v1172
  %1190 = vmatprep.subr.bf16.mxu0 0
  %1191 = vmatpush1.bf16.msra.mxu0 %v1181
  %1192 = vmatprep.subr.bf16.mxu0 0
  %1193 = vmatpush1.bf16.msra.mxu0 %v1180
  %1194 = vmatprep.subr.bf16.mxu0 0
  %1195 = vmatpush1.bf16.msra.mxu0 %v1179
  %1196 = vmatprep.subr.bf16.mxu0 0
  %1197 = vmatpush1.bf16.msra.mxu0 %v1178
  %1198 = vmatprep.subr.bf16.mxu0 0
  %1199 = vmatpush1.bf16.msra.mxu0 %v1177
  %1200 = vmatprep.subr.bf16.mxu0 0
  %1201 = vmatpush1.bf16.msra.mxu0 %v1176
  %1202 = vmatprep.subr.bf16.mxu0 0
  %1203 = vmatpush1.bf16.msra.mxu0 %v1175
  %1204 = vmatprep.subr.bf16.mxu0 0
  %1205 = vmatpush1.bf16.msra.mxu0 %v1174
  %1206 = vmatprep.subr.bf16.mxu0 0
  %1207 = vmatpush2.bf16.msra.mxu0 0
  %1208 = vmatprep.subr.bf16.mxu0 0
  %1209 = vmatpush2.bf16.msra.mxu0 0
  %1210 = vmatprep.subr.bf16.mxu0 0
  %1211 = vmatpush2.bf16.msra.mxu0 0
  %1212 = vmatprep.subr.bf16.mxu0 0
  %1213 = vmatpush2.bf16.msra.mxu0 0
  %1214 = vmatprep.subr.bf16.mxu0 0
  %1215 = vmatpush2.bf16.msra.mxu0 0
  %1216 = vmatprep.subr.bf16.mxu0 0
  %1217 = vmatpush2.bf16.msra.mxu0 0
  %1218 = vmatprep.subr.bf16.mxu0 0
  %1219 = vmatpush2.bf16.msra.mxu0 0
  %1220 = vmatprep.subr.bf16.mxu0 0
  %1221 = vmatpush2.bf16.msra.mxu0 0
  %1222 = vmatprep.mubr.bf16.mxu0 0
  %1223 = vmatmul.mubr.bf16.gmra.mxu0 %v795
  %v1224 = vpop.f32.mrf.mxu0
  %v1225 = vadd.f32 0.0, %v1224
  %v1226 = vpop.f32.mrf.mxu0
  %v1227 = vpop.f32.mrf.mxu0
  %v1228 = vadd.f32 0.0, %v1227
  %v1229 = vpop.f32.mrf.mxu0
  %1230 = vmatprep.mubr.bf16.mxu0 0
  %1231 = vmatmul.mubr.bf16.gmra.mxu0 %v796
  %v1232 = vpop.f32.mrf.mxu0
  %v1233 = vadd.f32 0.0, %v1232
  %v1234 = vpop.f32.mrf.mxu0
  %v1235 = vpop.f32.mrf.mxu0
  %v1236 = vadd.f32 0.0, %v1235
  %v1237 = vpop.f32.mrf.mxu0
  %1238 = vmatprep.mubr.bf16.mxu0 0
  %1239 = vmatmul.mubr.bf16.gmra.mxu0 %v797
  %v1240 = vpop.f32.mrf.mxu0
  %v1241 = vadd.f32 0.0, %v1240
  %v1242 = vpop.f32.mrf.mxu0
  %v1243 = vpop.f32.mrf.mxu0
  %v1244 = vadd.f32 0.0, %v1243
  %v1245 = vpop.f32.mrf.mxu0
  %1246 = vmatprep.mubr.bf16.mxu0 0
  %1247 = vmatmul.mubr.bf16.gmra.mxu0 %v798
  %v1248 = vpop.f32.mrf.mxu0
  %v1249 = vadd.f32 0.0, %v1248
  %v1250 = vpop.f32.mrf.mxu0
  %v1251 = vpop.f32.mrf.mxu0
  %v1252 = vadd.f32 0.0, %v1251
  %v1253 = vpop.f32.mrf.mxu0
  %1254 = vmatprep.mubr.bf16.mxu0 0
  %1255 = vmatmul.mubr.bf16.gmra.mxu0 %v799
  %v1256 = vpop.f32.mrf.mxu0
  %v1257 = vadd.f32 0.0, %v1256
  %v1258 = vpop.f32.mrf.mxu0
  %v1259 = vpop.f32.mrf.mxu0
  %v1260 = vadd.f32 0.0, %v1259
  %v1261 = vpop.f32.mrf.mxu0
  %1262 = vmatprep.mubr.bf16.mxu0 0
  %1263 = vmatmul.mubr.bf16.gmra.mxu0 %v800
  %v1264 = vpop.f32.mrf.mxu0
  %v1265 = vadd.f32 0.0, %v1264
  %v1266 = vpop.f32.mrf.mxu0
  %v1267 = vpop.f32.mrf.mxu0
  %v1268 = vadd.f32 0.0, %v1267
  %v1269 = vpop.f32.mrf.mxu0
  %1270 = vmatprep.mubr.bf16.mxu0 0
  %1271 = vmatmul.mubr.bf16.gmra.mxu0 %v817
  %v1272 = vpop.f32.mrf.mxu0
  %v1273 = vadd.f32 0.0, %v1272
  %v1274 = vpop.f32.mrf.mxu0
  %v1275 = vpop.f32.mrf.mxu0
  %v1276 = vadd.f32 0.0, %v1275
  %v1277 = vpop.f32.mrf.mxu0
  %1278 = vmatprep.mubr.bf16.mxu0 0
  %1279 = vmatmul.mubr.bf16.gmra.mxu0 %v793
  %v1280 = vpop.f32.mrf.mxu0
  %v1281 = vadd.f32 0.0, %v1280
  %v1282 = vpop.f32.mrf.mxu0
  %v1283 = vpop.f32.mrf.mxu0
  %v1284 = vadd.f32 0.0, %v1283
  %v1285 = vpop.f32.mrf.mxu0
  %1286 = vdwg.mxu0
  %v1287 = vadd.f32 %v1063, %v1225
  %v1288 = vadd.f32 %v1066, %v1228
  %v1289 = vadd.f32 %v1071, %v1233
  %v1290 = vadd.f32 %v1074, %v1236
  %v1291 = vadd.f32 %v1079, %v1241
  %v1292 = vadd.f32 %v1082, %v1244
  %v1293 = vadd.f32 %v1087, %v1249
  %v1294 = vadd.f32 %v1090, %v1252
  %v1295 = vadd.f32 %v1095, %v1257
  %v1296 = vadd.f32 %v1098, %v1260
  %v1297 = vadd.f32 %v1103, %v1265
  %v1298 = vadd.f32 %v1106, %v1268
  %v1299 = vadd.f32 %v1111, %v1273
  %v1300 = vadd.f32 %v1114, %v1276
  %v1301 = vadd.f32 %v1119, %v1281
  %v1302 = vadd.f32 %v1122, %v1284
  %v1303 = vld [vmem:[%s5] sm:$0x1]
  %v1305 = vlaneseq
  %v1306 = vshrl.u32 %v1305, 7
  %v1307 = vsub.s32 0, %v1306
  %v1308 = vrot.slane %v1303, %v1307
  %v1310 = vmul.f32 %v1287, %v1308
  %v1311 = vmul.f32 %v1288, %v1308
  %v1312 = vmul.f32 %v1289, %v1308
  %v1313 = vmul.f32 %v1290, %v1308
  %v1314 = vmul.f32 %v1291, %v1308
  %v1315 = vmul.f32 %v1292, %v1308
  %v1316 = vmul.f32 %v1293, %v1308
  %v1317 = vmul.f32 %v1294, %v1308
  %v1318 = vmul.f32 %v1295, %v1308
  %v1319 = vmul.f32 %v1296, %v1308
  %v1320 = vmul.f32 %v1297, %v1308
  %v1321 = vmul.f32 %v1298, %v1308
  %v1322 = vmul.f32 %v1299, %v1308
  %v1323 = vmul.f32 %v1300, %v1308
  %v1324 = vmul.f32 %v1301, %v1308
  %v1325 = vmul.f32 %v1302, %v1308
  %v1326 = vld [vmem:[%s6] sm:$0x1]
  %v1328 = vlaneseq
  %v1329 = vshrl.u32 %v1328, 7
  %v1330 = vsub.s32 0, %v1329
  %v1331 = vrot.slane %v1326, %v1330
  %v1333 = vadd.f32 %v1310, %v1331
  %v1334 = vadd.f32 %v1311, %v1331
  %v1335 = vadd.f32 %v1312, %v1331
  %v1336 = vadd.f32 %v1313, %v1331
  %v1337 = vadd.f32 %v1314, %v1331
  %v1338 = vadd.f32 %v1315, %v1331
  %v1339 = vadd.f32 %v1316, %v1331
  %v1340 = vadd.f32 %v1317, %v1331
  %v1341 = vadd.f32 %v1318, %v1331
  %v1342 = vadd.f32 %v1319, %v1331
  %v1343 = vadd.f32 %v1320, %v1331
  %v1344 = vadd.f32 %v1321, %v1331
  %v1345 = vadd.f32 %v1322, %v1331
  %v1346 = vadd.f32 %v1323, %v1331
  %v1347 = vadd.f32 %v1324, %v1331
  %v1348 = vadd.f32 %v1325, %v1331
  %v1349 = vld [vmem:[%s7] sm:$0xf]
  %v1350 = vld [vmem:[%s7 + $0x4] sm:$0xf]
  %v1351 = vld [vmem:[%s7 + $0x8] sm:$0xf]
  %v1352 = vld [vmem:[%s7 + $0xc] sm:$0xf]
  %v1353 = vld [vmem:[%s7 + $0x10] sm:$0xf]
  %v1354 = vld [vmem:[%s7 + $0x14] sm:$0xf]
  %v1355 = vld [vmem:[%s7 + $0x18] sm:$0xf]
  %v1356 = vld [vmem:[%s7 + $0x1c] sm:$0xf]
  %v1357 = vld [vmem:[%s7 + $0x20] sm:$0xf]
  %v1358 = vld [vmem:[%s7 + $0x24] sm:$0xf]
  %v1359 = vld [vmem:[%s7 + $0x28] sm:$0xf]
  %v1360 = vld [vmem:[%s7 + $0x2c] sm:$0xf]
  %v1361 = vld [vmem:[%s7 + $0x30] sm:$0xf]
  %v1362 = vld [vmem:[%s7 + $0x34] sm:$0xf]
  %v1363 = vld [vmem:[%s7 + $0x38] sm:$0xf]
  %v1364 = vld [vmem:[%s7 + $0x3c] sm:$0xf]
  %v1381 = vunpack.c.l.b16 %v1349
  %v1382 = vunpack.c.l.b16 %v1350
  %v1383 = vunpack.c.l.b16 %v1351
  %v1384 = vunpack.c.l.b16 %v1352
  %v1385 = vunpack.c.l.b16 %v1353
  %v1386 = vunpack.c.l.b16 %v1354
  %v1387 = vunpack.c.l.b16 %v1355
  %v1388 = vunpack.c.l.b16 %v1356
  %v1389 = vunpack.c.l.b16 %v1357
  %v1390 = vunpack.c.l.b16 %v1358
  %v1391 = vunpack.c.l.b16 %v1359
  %v1392 = vunpack.c.l.b16 %v1360
  %v1393 = vunpack.c.l.b16 %v1361
  %v1394 = vunpack.c.l.b16 %v1362
  %v1395 = vunpack.c.l.b16 %v1363
  %v1396 = vunpack.c.l.b16 %v1364
  %v1397 = vpack.c.b16 %v1382, %v1381
  %v1398 = vpack.c.b16 %v1384, %v1383
  %v1399 = vpack.c.b16 %v1386, %v1385
  %v1400 = vpack.c.b16 %v1388, %v1387
  %v1401 = vpack.c.b16 %v1390, %v1389
  %v1402 = vpack.c.b16 %v1392, %v1391
  %v1403 = vpack.c.b16 %v1394, %v1393
  %v1404 = vpack.c.b16 %v1396, %v1395
  %1413 = vmatprep.subr.bf16.mxu0 0
  %1414 = vmatpush1.bf16.msra.mxu0 %v1404
  %1415 = vmatprep.subr.bf16.mxu0 0
  %1416 = vmatpush1.bf16.msra.mxu0 %v1403
  %1417 = vmatprep.subr.bf16.mxu0 0
  %1418 = vmatpush1.bf16.msra.mxu0 %v1402
  %1419 = vmatprep.subr.bf16.mxu0 0
  %1420 = vmatpush1.bf16.msra.mxu0 %v1401
  %1421 = vmatprep.subr.bf16.mxu0 0
  %1422 = vmatpush1.bf16.msra.mxu0 %v1400
  %1423 = vmatprep.subr.bf16.mxu0 0
  %1424 = vmatpush1.bf16.msra.mxu0 %v1399
  %1425 = vmatprep.subr.bf16.mxu0 0
  %1426 = vmatpush1.bf16.msra.mxu0 %v1398
  %1427 = vmatprep.subr.bf16.mxu0 0
  %1428 = vmatpush1.bf16.msra.mxu0 %v1397
  %1429 = vmatprep.subr.bf16.mxu0 0
  %1430 = vmatpush2.bf16.msra.mxu0 0
  %1431 = vmatprep.subr.bf16.mxu0 0
  %1432 = vmatpush2.bf16.msra.mxu0 0
  %1433 = vmatprep.subr.bf16.mxu0 0
  %1434 = vmatpush2.bf16.msra.mxu0 0
  %1435 = vmatprep.subr.bf16.mxu0 0
  %1436 = vmatpush2.bf16.msra.mxu0 0
  %1437 = vmatprep.subr.bf16.mxu0 0
  %1438 = vmatpush2.bf16.msra.mxu0 0
  %1439 = vmatprep.subr.bf16.mxu0 0
  %1440 = vmatpush2.bf16.msra.mxu0 0
  %1441 = vmatprep.subr.bf16.mxu0 0
  %1442 = vmatpush2.bf16.msra.mxu0 0
  %1443 = vmatprep.subr.bf16.mxu0 0
  %1444 = vmatpush2.bf16.msra.mxu0 0
  %1445 = vmatprep.mubr.bf16.mxu0 0
  %1446 = vmatmul.mubr.bf16.gmra.mxu0 %v134
  %v1447 = vpop.f32.mrf.mxu0
  %v1448 = vadd.f32 0.0, %v1447
  %v1449 = vpop.f32.mrf.mxu0
  %v1450 = vpop.f32.mrf.mxu0
  %v1451 = vadd.f32 0.0, %v1450
  %v1452 = vpop.f32.mrf.mxu0
  %1453 = vmatprep.mubr.bf16.mxu0 0
  %1454 = vmatmul.mubr.bf16.gmra.mxu0 %v135
  %v1455 = vpop.f32.mrf.mxu0
  %v1456 = vadd.f32 0.0, %v1455
  %v1457 = vpop.f32.mrf.mxu0
  %v1458 = vpop.f32.mrf.mxu0
  %v1459 = vadd.f32 0.0, %v1458
  %v1460 = vpop.f32.mrf.mxu0
  %1461 = vmatprep.mubr.bf16.mxu0 0
  %1462 = vmatmul.mubr.bf16.gmra.mxu0 %v136
  %v1463 = vpop.f32.mrf.mxu0
  %v1464 = vadd.f32 0.0, %v1463
  %v1465 = vpop.f32.mrf.mxu0
  %v1466 = vpop.f32.mrf.mxu0
  %v1467 = vadd.f32 0.0, %v1466
  %v1468 = vpop.f32.mrf.mxu0
  %1469 = vmatprep.mubr.bf16.mxu0 0
  %1470 = vmatmul.mubr.bf16.gmra.mxu0 %v137
  %v1471 = vpop.f32.mrf.mxu0
  %v1472 = vadd.f32 0.0, %v1471
  %v1473 = vpop.f32.mrf.mxu0
  %v1474 = vpop.f32.mrf.mxu0
  %v1475 = vadd.f32 0.0, %v1474
  %v1476 = vpop.f32.mrf.mxu0
  %1477 = vmatprep.mubr.bf16.mxu0 0
  %1478 = vmatmul.mubr.bf16.gmra.mxu0 %v138
  %v1479 = vpop.f32.mrf.mxu0
  %v1480 = vadd.f32 0.0, %v1479
  %v1481 = vpop.f32.mrf.mxu0
  %v1482 = vpop.f32.mrf.mxu0
  %v1483 = vadd.f32 0.0, %v1482
  %v1484 = vpop.f32.mrf.mxu0
  %1485 = vmatprep.mubr.bf16.mxu0 0
  %1486 = vmatmul.mubr.bf16.gmra.mxu0 %v139
  %v1487 = vpop.f32.mrf.mxu0
  %v1488 = vadd.f32 0.0, %v1487
  %v1489 = vpop.f32.mrf.mxu0
  %v1490 = vpop.f32.mrf.mxu0
  %v1491 = vadd.f32 0.0, %v1490
  %v1492 = vpop.f32.mrf.mxu0
  %1493 = vmatprep.mubr.bf16.mxu0 0
  %1494 = vmatmul.mubr.bf16.gmra.mxu0 %v140
  %v1495 = vpop.f32.mrf.mxu0
  %v1496 = vadd.f32 0.0, %v1495
  %v1497 = vpop.f32.mrf.mxu0
  %v1498 = vpop.f32.mrf.mxu0
  %v1499 = vadd.f32 0.0, %v1498
  %v1500 = vpop.f32.mrf.mxu0
  %1501 = vmatprep.mubr.bf16.mxu0 0
  %1502 = vmatmul.mubr.bf16.gmra.mxu0 %v141
  %v1503 = vpop.f32.mrf.mxu0
  %v1504 = vadd.f32 0.0, %v1503
  %v1505 = vpop.f32.mrf.mxu0
  %v1506 = vpop.f32.mrf.mxu0
  %v1507 = vadd.f32 0.0, %v1506
  %v1508 = vpop.f32.mrf.mxu0
  %1509 = vdwg.mxu0
  %v1510 = vld [vmem:[%s8] sm:$0x1]
  %v1512 = vlaneseq
  %v1513 = vshrl.u32 %v1512, 7
  %v1514 = vsub.s32 0, %v1513
  %v1515 = vrot.slane %v1510, %v1514
  %v1517 = vmul.f32 %v1448, %v1515
  %v1518 = vmul.f32 %v1451, %v1515
  %v1519 = vmul.f32 %v1456, %v1515
  %v1520 = vmul.f32 %v1459, %v1515
  %v1521 = vmul.f32 %v1464, %v1515
  %v1522 = vmul.f32 %v1467, %v1515
  %v1523 = vmul.f32 %v1472, %v1515
  %v1524 = vmul.f32 %v1475, %v1515
  %v1525 = vmul.f32 %v1480, %v1515
  %v1526 = vmul.f32 %v1483, %v1515
  %v1527 = vmul.f32 %v1488, %v1515
  %v1528 = vmul.f32 %v1491, %v1515
  %v1529 = vmul.f32 %v1496, %v1515
  %v1530 = vmul.f32 %v1499, %v1515
  %v1531 = vmul.f32 %v1504, %v1515
  %v1532 = vmul.f32 %v1507, %v1515
  %v1533 = vld [vmem:[%s9] sm:$0x1]
  %v1535 = vlaneseq
  %v1536 = vshrl.u32 %v1535, 7
  %v1537 = vsub.s32 0, %v1536
  %v1538 = vrot.slane %v1533, %v1537
  %v1540 = vadd.f32 %v1517, %v1538
  %v1541 = vadd.f32 %v1518, %v1538
  %v1542 = vadd.f32 %v1519, %v1538
  %v1543 = vadd.f32 %v1520, %v1538
  %v1544 = vadd.f32 %v1521, %v1538
  %v1545 = vadd.f32 %v1522, %v1538
  %v1546 = vadd.f32 %v1523, %v1538
  %v1547 = vadd.f32 %v1524, %v1538
  %v1548 = vadd.f32 %v1525, %v1538
  %v1549 = vadd.f32 %v1526, %v1538
  %v1550 = vadd.f32 %v1527, %v1538
  %v1551 = vadd.f32 %v1528, %v1538
  %v1552 = vadd.f32 %v1529, %v1538
  %v1553 = vadd.f32 %v1530, %v1538
  %v1554 = vadd.f32 %v1531, %v1538
  %v1555 = vadd.f32 %v1532, %v1538
  %v1556 = vadd.f32 %v1333, %v1540
  %v1557 = vadd.f32 %v1334, %v1541
  %v1558 = vadd.f32 %v1335, %v1542
  %v1559 = vadd.f32 %v1336, %v1543
  %v1560 = vadd.f32 %v1337, %v1544
  %v1561 = vadd.f32 %v1338, %v1545
  %v1562 = vadd.f32 %v1339, %v1546
  %v1563 = vadd.f32 %v1340, %v1547
  %v1564 = vadd.f32 %v1341, %v1548
  %v1565 = vadd.f32 %v1342, %v1549
  %v1566 = vadd.f32 %v1343, %v1550
  %v1567 = vadd.f32 %v1344, %v1551
  %v1568 = vadd.f32 %v1345, %v1552
  %v1569 = vadd.f32 %v1346, %v1553
  %v1570 = vadd.f32 %v1347, %v1554
  %v1571 = vadd.f32 %v1348, %v1555
  %v1572 = vmax.f32 %v1556, 0.0
  %v1573 = vmax.f32 %v1557, 0.0
  %v1574 = vmax.f32 %v1558, 0.0
  %v1575 = vmax.f32 %v1559, 0.0
  %v1576 = vmax.f32 %v1560, 0.0
  %v1577 = vmax.f32 %v1561, 0.0
  %v1578 = vmax.f32 %v1562, 0.0
  %v1579 = vmax.f32 %v1563, 0.0
  %v1580 = vmax.f32 %v1564, 0.0
  %v1581 = vmax.f32 %v1565, 0.0
  %v1582 = vmax.f32 %v1566, 0.0
  %v1583 = vmax.f32 %v1567, 0.0
  %v1584 = vmax.f32 %v1568, 0.0
  %v1585 = vmax.f32 %v1569, 0.0
  %v1586 = vmax.f32 %v1570, 0.0
  %v1587 = vmax.f32 %v1571, 0.0
  %v1588 = vpack.c.bf16 %v1573, %v1572
  %v1589 = vpack.c.bf16 %v1575, %v1574
  %v1590 = vpack.c.bf16 %v1577, %v1576
  %v1591 = vpack.c.bf16 %v1579, %v1578
  %v1592 = vpack.c.bf16 %v1581, %v1580
  %v1593 = vpack.c.bf16 %v1583, %v1582
  %v1594 = vpack.c.bf16 %v1585, %v1584
  %v1595 = vpack.c.bf16 %v1587, %v1586
  %v1604 = vunpack.c.l.b16 %v1588
  %v1605 = vunpack.c.h.b16 %v1588
  %v1606 = vunpack.c.l.b16 %v1589
  %v1607 = vunpack.c.h.b16 %v1589
  %v1608 = vunpack.c.l.b16 %v1590
  %v1609 = vunpack.c.h.b16 %v1590
  %v1610 = vunpack.c.l.b16 %v1591
  %v1611 = vunpack.c.h.b16 %v1591
  %v1612 = vunpack.c.l.b16 %v1592
  %v1613 = vunpack.c.h.b16 %v1592
  %v1614 = vunpack.c.l.b16 %v1593
  %v1615 = vunpack.c.h.b16 %v1593
  %v1616 = vunpack.c.l.b16 %v1594
  %v1617 = vunpack.c.h.b16 %v1594
  %v1618 = vunpack.c.l.b16 %v1595
  %v1619 = vunpack.c.h.b16 %v1595
  %v1620 = vpack.c.b16 %v1604, %v1604
  %v1621 = vpack.c.b16 %v1605, %v1605
  %v1622 = vpack.c.b16 %v1606, %v1606
  %v1623 = vpack.c.b16 %v1607, %v1607
  %v1624 = vpack.c.b16 %v1608, %v1608
  %v1625 = vpack.c.b16 %v1609, %v1609
  %v1626 = vpack.c.b16 %v1610, %v1610
  %v1627 = vpack.c.b16 %v1611, %v1611
  %v1628 = vpack.c.b16 %v1612, %v1612
  %v1629 = vpack.c.b16 %v1613, %v1613
  %v1630 = vpack.c.b16 %v1614, %v1614
  %v1631 = vpack.c.b16 %v1615, %v1615
  %v1632 = vpack.c.b16 %v1616, %v1616
  %v1633 = vpack.c.b16 %v1617, %v1617
  %v1634 = vpack.c.b16 %v1618, %v1618
  %v1635 = vpack.c.b16 %v1619, %v1619
  %1652 = vst [vmem:[%s10] sm:$0xf] %v1620
  %1653 = vst [vmem:[%s10 + $0x4] sm:$0xf] %v1621
  %1654 = vst [vmem:[%s10 + $0x8] sm:$0xf] %v1622
  %1655 = vst [vmem:[%s10 + $0xc] sm:$0xf] %v1623
  %1656 = vst [vmem:[%s10 + $0x10] sm:$0xf] %v1624
  %1657 = vst [vmem:[%s10 + $0x14] sm:$0xf] %v1625
  %1658 = vst [vmem:[%s10 + $0x18] sm:$0xf] %v1626
  %1659 = vst [vmem:[%s10 + $0x1c] sm:$0xf] %v1627
  %1660 = vst [vmem:[%s10 + $0x20] sm:$0xf] %v1628
  %1661 = vst [vmem:[%s10 + $0x24] sm:$0xf] %v1629
  %1662 = vst [vmem:[%s10 + $0x28] sm:$0xf] %v1630
  %1663 = vst [vmem:[%s10 + $0x2c] sm:$0xf] %v1631
  %1664 = vst [vmem:[%s10 + $0x30] sm:$0xf] %v1632
  %1665 = vst [vmem:[%s10 + $0x34] sm:$0xf] %v1633
  %1666 = vst [vmem:[%s10 + $0x38] sm:$0xf] %v1634
  %1667 = vst [vmem:[%s10 + $0x3c] sm:$0xf] %v1635
  // Predicated region
  $region42: #{resnet1d_forward.11} parent=0 // pred_check
    _
  $region43: #{resnet1d_forward.11} parent=0 // pred_check_branch
    %1669 = sbr.rel (0) target = $region45
  $region44: #{resnet1d_forward.11} parent=0 // pred_region
    _
  $region45: #{resnet1d_forward.11} parent=0 // pred_fallthru
    _
  // Predicated region
  $region46: #{resnet1d_forward.11} parent=0 // pred_check
    _
  $region47: #{resnet1d_forward.11} parent=0 // pred_check_branch
    %1671 = sbr.rel (0) target = $region49
  $region48: #{resnet1d_forward.11} parent=0 // pred_region
    _
  $region49: #{resnet1d_forward.11} parent=0 // pred_fallthru
    _

// kernel: resnet1d_forward.12
$region0: #{resnet1d_forward.12}
  #allocation0 [shape = 'u32[]', space=smem, size = 0x4, offset = 0x4, fixed_abs, tag = 'smem constant byte address 0x4 - core index']
  #allocation1 [shape = 'u32[144,128]{1,0:T(1,128)}', space=vmem, size = 0x12000, scoped, tag = 'internal scratch']
  %s0 = inlined_call_operand.vmem [shape: bf16[10,16,128], index: 0, kind: input, shape index: {}]
  %s1 = inlined_call_operand.vmem [shape: bf16[3,128,128], index: 1, kind: input, shape index: {}]
  %s2 = inlined_call_operand.vmem [shape: f32[1,128], index: 2, kind: input, shape index: {}, may-alias: {2,5}]
  %s3 = inlined_call_operand.vmem [shape: f32[1,128], index: 3, kind: input, shape index: {}, may-alias: {3,6}]
  %s4 = inlined_call_operand.vmem [shape: bf16[3,128,128], index: 4, kind: input, shape index: {}]
  %s5 = inlined_call_operand.vmem [shape: f32[1,128], index: 5, kind: input, shape index: {}, may-alias: {2,5}]
  %s6 = inlined_call_operand.vmem [shape: f32[1,128], index: 6, kind: input, shape index: {}, may-alias: {3,6}]
  %s7 = inlined_call_operand.vmem [shape: bf16[8,16,128], index: 7, kind: output, shape index: {}]
  %s8 = sld [smem:[#allocation0]]
  $region38: #{resnet1d_forward.12} parent=0
    _
  %s10 = ssub.s32 1, %s8
  %s11 = scalar_select 0, %s10, %s8
  // Predicated region
  $region2: #{resnet1d_forward.12} parent=0 // pred_check
    _
  $region3: #{resnet1d_forward.12} parent=0 // pred_check_branch
    %13 = sbr.rel (0) target = $region5
  $region4: #{resnet1d_forward.12} parent=0 // pred_region
    _
  $region5: #{resnet1d_forward.12} parent=0 // pred_fallthru
    _
  // Predicated region
  $region6: #{resnet1d_forward.12} parent=0 // pred_check
    _
  $region7: #{resnet1d_forward.12} parent=0 // pred_check_branch
    %15 = sbr.rel (0) target = $region9
  $region8: #{resnet1d_forward.12} parent=0 // pred_region
    _
  $region9: #{resnet1d_forward.12} parent=0 // pred_fallthru
    _
  // Predicated region
  $region10: #{resnet1d_forward.12} parent=0 // pred_check
    _
  $region11: #{resnet1d_forward.12} parent=0 // pred_check_branch
    %17 = sbr.rel (0) target = $region13
  $region12: #{resnet1d_forward.12} parent=0 // pred_region
    _
  $region13: #{resnet1d_forward.12} parent=0 // pred_fallthru
    _
  // Predicated region
  $region14: #{resnet1d_forward.12} parent=0 // pred_check
    _
  $region15: #{resnet1d_forward.12} parent=0 // pred_check_branch
    %19 = sbr.rel (0) target = $region17
  $region16: #{resnet1d_forward.12} parent=0 // pred_region
    _
  $region17: #{resnet1d_forward.12} parent=0 // pred_fallthru
    _
  // Predicated region
  $region18: #{resnet1d_forward.12} parent=0 // pred_check
    _
  $region19: #{resnet1d_forward.12} parent=0 // pred_check_branch
    %21 = sbr.rel (0) target = $region21
  $region20: #{resnet1d_forward.12} parent=0 // pred_region
    _
  $region21: #{resnet1d_forward.12} parent=0 // pred_fallthru
    _
  // Predicated region
  $region22: #{resnet1d_forward.12} parent=0 // pred_check
    _
  $region23: #{resnet1d_forward.12} parent=0 // pred_check_branch
    %23 = sbr.rel (0) target = $region25
  $region24: #{resnet1d_forward.12} parent=0 // pred_region
    _
  $region25: #{resnet1d_forward.12} parent=0 // pred_fallthru
    _
  // Predicated region
  $region26: #{resnet1d_forward.12} parent=0 // pred_check
    _
  $region27: #{resnet1d_forward.12} parent=0 // pred_check_branch
    %25 = sbr.rel (0) target = $region29
  $region28: #{resnet1d_forward.12} parent=0 // pred_region
    _
  $region29: #{resnet1d_forward.12} parent=0 // pred_fallthru
    _
  %s27 = scalar_lea.vmem %s0, 8
  %v28 = vld [vmem:[%s27] sm:$0xf]
  %v29 = vld [vmem:[%s27 + $0x4] sm:$0xf]
  %v30 = vld [vmem:[%s27 + $0x8] sm:$0xf]
  %v31 = vld [vmem:[%s27 + $0xc] sm:$0xf]
  %v32 = vld [vmem:[%s27 + $0x10] sm:$0xf]
  %v33 = vld [vmem:[%s27 + $0x14] sm:$0xf]
  %v34 = vld [vmem:[%s27 + $0x18] sm:$0xf]
  %v35 = vld [vmem:[%s27 + $0x1c] sm:$0xf]
  %v36 = vld [vmem:[%s27 + $0x20] sm:$0xf]
  %v37 = vld [vmem:[%s27 + $0x24] sm:$0xf]
  %v38 = vld [vmem:[%s27 + $0x28] sm:$0xf]
  %v39 = vld [vmem:[%s27 + $0x2c] sm:$0xf]
  %v40 = vld [vmem:[%s27 + $0x30] sm:$0xf]
  %v41 = vld [vmem:[%s27 + $0x34] sm:$0xf]
  %v42 = vld [vmem:[%s27 + $0x38] sm:$0xf]
  %v43 = vld [vmem:[%s27 + $0x3c] sm:$0xf]
  %v44 = vld [vmem:[%s0] sm:$0xf]
  %v45 = vld [vmem:[%s0 + $0x4] sm:$0xf]
  %v46 = vld [vmem:[%s0 + $0x8] sm:$0xf]
  %v47 = vld [vmem:[%s0 + $0xc] sm:$0xf]
  %v48 = vld [vmem:[%s0 + $0x10] sm:$0xf]
  %v49 = vld [vmem:[%s0 + $0x14] sm:$0xf]
  %v50 = vld [vmem:[%s0 + $0x18] sm:$0xf]
  %v51 = vld [vmem:[%s0 + $0x1c] sm:$0xf]
  %v52 = vld [vmem:[%s0 + $0x20] sm:$0xf]
  %v53 = vld [vmem:[%s0 + $0x24] sm:$0xf]
  %v54 = vld [vmem:[%s0 + $0x28] sm:$0xf]
  %v55 = vld [vmem:[%s0 + $0x2c] sm:$0xf]
  %v56 = vld [vmem:[%s0 + $0x30] sm:$0xf]
  %v57 = vld [vmem:[%s0 + $0x34] sm:$0xf]
  %v58 = vld [vmem:[%s0 + $0x38] sm:$0xf]
  %v59 = vld [vmem:[%s0 + $0x3c] sm:$0xf]
  %v60 = vld [vmem:[%s1] sm:$0xf]
  %v61 = vld [vmem:[%s1 + $0x4] sm:$0xf]
  %v62 = vld [vmem:[%s1 + $0x8] sm:$0xf]
  %v63 = vld [vmem:[%s1 + $0xc] sm:$0xf]
  %v64 = vld [vmem:[%s1 + $0x10] sm:$0xf]
  %v65 = vld [vmem:[%s1 + $0x14] sm:$0xf]
  %v66 = vld [vmem:[%s1 + $0x18] sm:$0xf]
  %v67 = vld [vmem:[%s1 + $0x1c] sm:$0xf]
  %v68 = vld [vmem:[%s1 + $0x20] sm:$0xf]
  %v69 = vld [vmem:[%s1 + $0x24] sm:$0xf]
  %v70 = vld [vmem:[%s1 + $0x28] sm:$0xf]
  %v71 = vld [vmem:[%s1 + $0x2c] sm:$0xf]
  %v72 = vld [vmem:[%s1 + $0x30] sm:$0xf]
  %v73 = vld [vmem:[%s1 + $0x34] sm:$0xf]
  %v74 = vld [vmem:[%s1 + $0x38] sm:$0xf]
  %v75 = vld [vmem:[%s1 + $0x3c] sm:$0xf]
  %s76 = scalar_lea.vmem %s1, 64
  %v77 = vld [vmem:[%s76] sm:$0xf]
  %v78 = vld [vmem:[%s76 + $0x4] sm:$0xf]
  %v79 = vld [vmem:[%s76 + $0x8] sm:$0xf]
  %v80 = vld [vmem:[%s76 + $0xc] sm:$0xf]
  %v81 = vld [vmem:[%s76 + $0x10] sm:$0xf]
  %v82 = vld [vmem:[%s76 + $0x14] sm:$0xf]
  %v83 = vld [vmem:[%s76 + $0x18] sm:$0xf]
  %v84 = vld [vmem:[%s76 + $0x1c] sm:$0xf]
  %v85 = vld [vmem:[%s76 + $0x20] sm:$0xf]
  %v86 = vld [vmem:[%s76 + $0x24] sm:$0xf]
  %v87 = vld [vmem:[%s76 + $0x28] sm:$0xf]
  %v88 = vld [vmem:[%s76 + $0x2c] sm:$0xf]
  %v89 = vld [vmem:[%s76 + $0x30] sm:$0xf]
  %v90 = vld [vmem:[%s76 + $0x34] sm:$0xf]
  %v91 = vld [vmem:[%s76 + $0x38] sm:$0xf]
  %v92 = vld [vmem:[%s76 + $0x3c] sm:$0xf]
  %v109 = vunpack.c.l.b16 %v28
  %v110 = vunpack.c.l.b16 %v29
  %v111 = vunpack.c.l.b16 %v30
  %v112 = vunpack.c.l.b16 %v31
  %v113 = vunpack.c.l.b16 %v32
  %v114 = vunpack.c.l.b16 %v33
  %v115 = vunpack.c.l.b16 %v34
  %v116 = vunpack.c.l.b16 %v35
  %v117 = vunpack.c.l.b16 %v36
  %v118 = vunpack.c.l.b16 %v37
  %v119 = vunpack.c.l.b16 %v38
  %v120 = vunpack.c.l.b16 %v39
  %v121 = vunpack.c.l.b16 %v40
  %v122 = vunpack.c.l.b16 %v41
  %v123 = vunpack.c.l.b16 %v42
  %v124 = vunpack.c.l.b16 %v43
  %v125 = vpack.c.b16 %v110, %v109
  %v126 = vpack.c.b16 %v112, %v111
  %v127 = vpack.c.b16 %v114, %v113
  %v128 = vpack.c.b16 %v116, %v115
  %v129 = vpack.c.b16 %v118, %v117
  %v130 = vpack.c.b16 %v120, %v119
  %v131 = vpack.c.b16 %v122, %v121
  %v132 = vpack.c.b16 %v124, %v123
  %v157 = vunpack.c.l.b16 %v77
  %v158 = vunpack.c.l.b16 %v78
  %v159 = vunpack.c.l.b16 %v79
  %v160 = vunpack.c.l.b16 %v80
  %v161 = vunpack.c.l.b16 %v81
  %v162 = vunpack.c.l.b16 %v82
  %v163 = vunpack.c.l.b16 %v83
  %v164 = vunpack.c.l.b16 %v84
  %v165 = vunpack.c.l.b16 %v85
  %v166 = vunpack.c.l.b16 %v86
  %v167 = vunpack.c.l.b16 %v87
  %v168 = vunpack.c.l.b16 %v88
  %v169 = vunpack.c.l.b16 %v89
  %v170 = vunpack.c.l.b16 %v90
  %v171 = vunpack.c.l.b16 %v91
  %v172 = vunpack.c.l.b16 %v92
  %v173 = vpack.c.b16 %v158, %v157
  %v174 = vpack.c.b16 %v160, %v159
  %v175 = vpack.c.b16 %v162, %v161
  %v176 = vpack.c.b16 %v164, %v163
  %v177 = vpack.c.b16 %v166, %v165
  %v178 = vpack.c.b16 %v168, %v167
  %v179 = vpack.c.b16 %v170, %v169
  %v180 = vpack.c.b16 %v172, %v171
  %189 = vmatprep.subr.bf16.mxu0 0
  %190 = vmatpush1.bf16.msra.mxu0 %v180
  %191 = vmatprep.subr.bf16.mxu0 0
  %192 = vmatpush1.bf16.msra.mxu0 %v179
  %193 = vmatprep.subr.bf16.mxu0 0
  %194 = vmatpush1.bf16.msra.mxu0 %v178
  %195 = vmatprep.subr.bf16.mxu0 0
  %196 = vmatpush1.bf16.msra.mxu0 %v177
  %197 = vmatprep.subr.bf16.mxu0 0
  %198 = vmatpush1.bf16.msra.mxu0 %v176
  %199 = vmatprep.subr.bf16.mxu0 0
  %200 = vmatpush1.bf16.msra.mxu0 %v175
  %201 = vmatprep.subr.bf16.mxu0 0
  %202 = vmatpush1.bf16.msra.mxu0 %v174
  %203 = vmatprep.subr.bf16.mxu0 0
  %204 = vmatpush1.bf16.msra.mxu0 %v173
  %205 = vmatprep.subr.bf16.mxu0 0
  %206 = vmatpush2.bf16.msra.mxu0 0
  %207 = vmatprep.subr.bf16.mxu0 0
  %208 = vmatpush2.bf16.msra.mxu0 0
  %209 = vmatprep.subr.bf16.mxu0 0
  %210 = vmatpush2.bf16.msra.mxu0 0
  %211 = vmatprep.subr.bf16.mxu0 0
  %212 = vmatpush2.bf16.msra.mxu0 0
  %213 = vmatprep.subr.bf16.mxu0 0
  %214 = vmatpush2.bf16.msra.mxu0 0
  %215 = vmatprep.subr.bf16.mxu0 0
  %216 = vmatpush2.bf16.msra.mxu0 0
  %217 = vmatprep.subr.bf16.mxu0 0
  %218 = vmatpush2.bf16.msra.mxu0 0
  %219 = vmatprep.subr.bf16.mxu0 0
  %220 = vmatpush2.bf16.msra.mxu0 0
  %221 = vmatprep.mubr.bf16.mxu0 0
  %222 = vmatmul.mubr.bf16.gmra.mxu0 %v125
  %v223 = vpop.f32.mrf.mxu0
  %v224 = vadd.f32 0.0, %v223
  %v225 = vpop.f32.mrf.mxu0
  %v226 = vpop.f32.mrf.mxu0
  %v227 = vadd.f32 0.0, %v226
  %v228 = vpop.f32.mrf.mxu0
  %229 = vmatprep.mubr.bf16.mxu0 0
  %230 = vmatmul.mubr.bf16.gmra.mxu0 %v126
  %v231 = vpop.f32.mrf.mxu0
  %v232 = vadd.f32 0.0, %v231
  %v233 = vpop.f32.mrf.mxu0
  %v234 = vpop.f32.mrf.mxu0
  %v235 = vadd.f32 0.0, %v234
  %v236 = vpop.f32.mrf.mxu0
  %237 = vmatprep.mubr.bf16.mxu0 0
  %238 = vmatmul.mubr.bf16.gmra.mxu0 %v127
  %v239 = vpop.f32.mrf.mxu0
  %v240 = vadd.f32 0.0, %v239
  %v241 = vpop.f32.mrf.mxu0
  %v242 = vpop.f32.mrf.mxu0
  %v243 = vadd.f32 0.0, %v242
  %v244 = vpop.f32.mrf.mxu0
  %245 = vmatprep.mubr.bf16.mxu0 0
  %246 = vmatmul.mubr.bf16.gmra.mxu0 %v128
  %v247 = vpop.f32.mrf.mxu0
  %v248 = vadd.f32 0.0, %v247
  %v249 = vpop.f32.mrf.mxu0
  %v250 = vpop.f32.mrf.mxu0
  %v251 = vadd.f32 0.0, %v250
  %v252 = vpop.f32.mrf.mxu0
  %253 = vmatprep.mubr.bf16.mxu0 0
  %254 = vmatmul.mubr.bf16.gmra.mxu0 %v129
  %v255 = vpop.f32.mrf.mxu0
  %v256 = vadd.f32 0.0, %v255
  %v257 = vpop.f32.mrf.mxu0
  %v258 = vpop.f32.mrf.mxu0
  %v259 = vadd.f32 0.0, %v258
  %v260 = vpop.f32.mrf.mxu0
  %261 = vmatprep.mubr.bf16.mxu0 0
  %262 = vmatmul.mubr.bf16.gmra.mxu0 %v130
  %v263 = vpop.f32.mrf.mxu0
  %v264 = vadd.f32 0.0, %v263
  %v265 = vpop.f32.mrf.mxu0
  %v266 = vpop.f32.mrf.mxu0
  %v267 = vadd.f32 0.0, %v266
  %v268 = vpop.f32.mrf.mxu0
  %269 = vmatprep.mubr.bf16.mxu0 0
  %270 = vmatmul.mubr.bf16.gmra.mxu0 %v131
  %v271 = vpop.f32.mrf.mxu0
  %v272 = vadd.f32 0.0, %v271
  %v273 = vpop.f32.mrf.mxu0
  %v274 = vpop.f32.mrf.mxu0
  %v275 = vadd.f32 0.0, %v274
  %v276 = vpop.f32.mrf.mxu0
  %277 = vmatprep.mubr.bf16.mxu0 0
  %278 = vmatmul.mubr.bf16.gmra.mxu0 %v132
  %v279 = vpop.f32.mrf.mxu0
  %v280 = vadd.f32 0.0, %v279
  %v281 = vpop.f32.mrf.mxu0
  %v282 = vpop.f32.mrf.mxu0
  %v283 = vadd.f32 0.0, %v282
  %v284 = vpop.f32.mrf.mxu0
  %285 = vdwg.mxu0
  %v302 = vunpack.c.l.b16 %v44
  %v303 = vunpack.c.l.b16 %v45
  %v304 = vunpack.c.l.b16 %v46
  %v305 = vunpack.c.l.b16 %v47
  %v306 = vunpack.c.l.b16 %v48
  %v307 = vunpack.c.l.b16 %v49
  %v308 = vunpack.c.l.b16 %v50
  %v309 = vunpack.c.l.b16 %v51
  %v310 = vunpack.c.l.b16 %v52
  %v311 = vunpack.c.l.b16 %v53
  %v312 = vunpack.c.l.b16 %v54
  %v313 = vunpack.c.l.b16 %v55
  %v314 = vunpack.c.l.b16 %v56
  %v315 = vunpack.c.l.b16 %v57
  %v316 = vunpack.c.l.b16 %v58
  %v317 = vunpack.c.l.b16 %v59
  %v318 = vpack.c.b16 %v303, %v302
  %v319 = vpack.c.b16 %v305, %v304
  %v320 = vpack.c.b16 %v307, %v306
  %v321 = vpack.c.b16 %v309, %v308
  %v322 = vpack.c.b16 %v311, %v310
  %v323 = vpack.c.b16 %v313, %v312
  %v324 = vpack.c.b16 %v315, %v314
  %v325 = vpack.c.b16 %v317, %v316
  %v350 = vunpack.c.l.b16 %v60
  %v351 = vunpack.c.l.b16 %v61
  %v352 = vunpack.c.l.b16 %v62
  %v353 = vunpack.c.l.b16 %v63
  %v354 = vunpack.c.l.b16 %v64
  %v355 = vunpack.c.l.b16 %v65
  %v356 = vunpack.c.l.b16 %v66
  %v357 = vunpack.c.l.b16 %v67
  %v358 = vunpack.c.l.b16 %v68
  %v359 = vunpack.c.l.b16 %v69
  %v360 = vunpack.c.l.b16 %v70
  %v361 = vunpack.c.l.b16 %v71
  %v362 = vunpack.c.l.b16 %v72
  %v363 = vunpack.c.l.b16 %v73
  %v364 = vunpack.c.l.b16 %v74
  %v365 = vunpack.c.l.b16 %v75
  %v366 = vpack.c.b16 %v351, %v350
  %v367 = vpack.c.b16 %v353, %v352
  %v368 = vpack.c.b16 %v355, %v354
  %v369 = vpack.c.b16 %v357, %v356
  %v370 = vpack.c.b16 %v359, %v358
  %v371 = vpack.c.b16 %v361, %v360
  %v372 = vpack.c.b16 %v363, %v362
  %v373 = vpack.c.b16 %v365, %v364
  %382 = vmatprep.subr.bf16.mxu0 0
  %383 = vmatpush1.bf16.msra.mxu0 %v373
  %384 = vmatprep.subr.bf16.mxu0 0
  %385 = vmatpush1.bf16.msra.mxu0 %v372
  %386 = vmatprep.subr.bf16.mxu0 0
  %387 = vmatpush1.bf16.msra.mxu0 %v371
  %388 = vmatprep.subr.bf16.mxu0 0
  %389 = vmatpush1.bf16.msra.mxu0 %v370
  %390 = vmatprep.subr.bf16.mxu0 0
  %391 = vmatpush1.bf16.msra.mxu0 %v369
  %392 = vmatprep.subr.bf16.mxu0 0
  %393 = vmatpush1.bf16.msra.mxu0 %v368
  %394 = vmatprep.subr.bf16.mxu0 0
  %395 = vmatpush1.bf16.msra.mxu0 %v367
  %396 = vmatprep.subr.bf16.mxu0 0
  %397 = vmatpush1.bf16.msra.mxu0 %v366
  %398 = vmatprep.subr.bf16.mxu0 0
  %399 = vmatpush2.bf16.msra.mxu0 0
  %400 = vmatprep.subr.bf16.mxu0 0
  %401 = vmatpush2.bf16.msra.mxu0 0
  %402 = vmatprep.subr.bf16.mxu0 0
  %403 = vmatpush2.bf16.msra.mxu0 0
  %404 = vmatprep.subr.bf16.mxu0 0
  %405 = vmatpush2.bf16.msra.mxu0 0
  %406 = vmatprep.subr.bf16.mxu0 0
  %407 = vmatpush2.bf16.msra.mxu0 0
  %408 = vmatprep.subr.bf16.mxu0 0
  %409 = vmatpush2.bf16.msra.mxu0 0
  %410 = vmatprep.subr.bf16.mxu0 0
  %411 = vmatpush2.bf16.msra.mxu0 0
  %412 = vmatprep.subr.bf16.mxu0 0
  %413 = vmatpush2.bf16.msra.mxu0 0
  %414 = vmatprep.mubr.bf16.mxu0 0
  %415 = vmatmul.mubr.bf16.gmra.mxu0 %v318
  %v416 = vpop.f32.mrf.mxu0
  %v417 = vadd.f32 %v224, %v416
  %v418 = vpop.f32.mrf.mxu0
  %v419 = vpop.f32.mrf.mxu0
  %v420 = vadd.f32 %v227, %v419
  %v421 = vpop.f32.mrf.mxu0
  %422 = vmatprep.mubr.bf16.mxu0 0
  %423 = vmatmul.mubr.bf16.gmra.mxu0 %v319
  %v424 = vpop.f32.mrf.mxu0
  %v425 = vadd.f32 %v232, %v424
  %v426 = vpop.f32.mrf.mxu0
  %v427 = vpop.f32.mrf.mxu0
  %v428 = vadd.f32 %v235, %v427
  %v429 = vpop.f32.mrf.mxu0
  %430 = vmatprep.mubr.bf16.mxu0 0
  %431 = vmatmul.mubr.bf16.gmra.mxu0 %v320
  %v432 = vpop.f32.mrf.mxu0
  %v433 = vadd.f32 %v240, %v432
  %v434 = vpop.f32.mrf.mxu0
  %v435 = vpop.f32.mrf.mxu0
  %v436 = vadd.f32 %v243, %v435
  %v437 = vpop.f32.mrf.mxu0
  %438 = vmatprep.mubr.bf16.mxu0 0
  %439 = vmatmul.mubr.bf16.gmra.mxu0 %v321
  %v440 = vpop.f32.mrf.mxu0
  %v441 = vadd.f32 %v248, %v440
  %v442 = vpop.f32.mrf.mxu0
  %v443 = vpop.f32.mrf.mxu0
  %v444 = vadd.f32 %v251, %v443
  %v445 = vpop.f32.mrf.mxu0
  %446 = vmatprep.mubr.bf16.mxu0 0
  %447 = vmatmul.mubr.bf16.gmra.mxu0 %v322
  %v448 = vpop.f32.mrf.mxu0
  %v449 = vadd.f32 %v256, %v448
  %v450 = vpop.f32.mrf.mxu0
  %v451 = vpop.f32.mrf.mxu0
  %v452 = vadd.f32 %v259, %v451
  %v453 = vpop.f32.mrf.mxu0
  %454 = vmatprep.mubr.bf16.mxu0 0
  %455 = vmatmul.mubr.bf16.gmra.mxu0 %v323
  %v456 = vpop.f32.mrf.mxu0
  %v457 = vadd.f32 %v264, %v456
  %v458 = vpop.f32.mrf.mxu0
  %v459 = vpop.f32.mrf.mxu0
  %v460 = vadd.f32 %v267, %v459
  %v461 = vpop.f32.mrf.mxu0
  %462 = vmatprep.mubr.bf16.mxu0 0
  %463 = vmatmul.mubr.bf16.gmra.mxu0 %v324
  %v464 = vpop.f32.mrf.mxu0
  %v465 = vadd.f32 %v272, %v464
  %v466 = vpop.f32.mrf.mxu0
  %v467 = vpop.f32.mrf.mxu0
  %v468 = vadd.f32 %v275, %v467
  %v469 = vpop.f32.mrf.mxu0
  %470 = vmatprep.mubr.bf16.mxu0 0
  %471 = vmatmul.mubr.bf16.gmra.mxu0 %v325
  %v472 = vpop.f32.mrf.mxu0
  %v473 = vadd.f32 %v280, %v472
  %v474 = vpop.f32.mrf.mxu0
  %v475 = vpop.f32.mrf.mxu0
  %v476 = vadd.f32 %v283, %v475
  %v477 = vpop.f32.mrf.mxu0
  %478 = vdwg.mxu0
  %s479 = scalar_lea.vmem %s0, 16
  %v480 = vld [vmem:[%s479] sm:$0xf]
  %v481 = vld [vmem:[%s479 + $0x4] sm:$0xf]
  %v482 = vld [vmem:[%s479 + $0x8] sm:$0xf]
  %v483 = vld [vmem:[%s479 + $0xc] sm:$0xf]
  %v484 = vld [vmem:[%s479 + $0x10] sm:$0xf]
  %v485 = vld [vmem:[%s479 + $0x14] sm:$0xf]
  %v486 = vld [vmem:[%s479 + $0x18] sm:$0xf]
  %v487 = vld [vmem:[%s479 + $0x1c] sm:$0xf]
  %v488 = vld [vmem:[%s479 + $0x20] sm:$0xf]
  %v489 = vld [vmem:[%s479 + $0x24] sm:$0xf]
  %v490 = vld [vmem:[%s479 + $0x28] sm:$0xf]
  %v491 = vld [vmem:[%s479 + $0x2c] sm:$0xf]
  %v492 = vld [vmem:[%s479 + $0x30] sm:$0xf]
  %v493 = vld [vmem:[%s479 + $0x34] sm:$0xf]
  %v494 = vld [vmem:[%s479 + $0x38] sm:$0xf]
  %v495 = vld [vmem:[%s479 + $0x3c] sm:$0xf]
  %s496 = scalar_lea.vmem %s1, 128
  %v497 = vld [vmem:[%s496] sm:$0xf]
  %v498 = vld [vmem:[%s496 + $0x4] sm:$0xf]
  %v499 = vld [vmem:[%s496 + $0x8] sm:$0xf]
  %v500 = vld [vmem:[%s496 + $0xc] sm:$0xf]
  %v501 = vld [vmem:[%s496 + $0x10] sm:$0xf]
  %v502 = vld [vmem:[%s496 + $0x14] sm:$0xf]
  %v503 = vld [vmem:[%s496 + $0x18] sm:$0xf]
  %v504 = vld [vmem:[%s496 + $0x1c] sm:$0xf]
  %v505 = vld [vmem:[%s496 + $0x20] sm:$0xf]
  %v506 = vld [vmem:[%s496 + $0x24] sm:$0xf]
  %v507 = vld [vmem:[%s496 + $0x28] sm:$0xf]
  %v508 = vld [vmem:[%s496 + $0x2c] sm:$0xf]
  %v509 = vld [vmem:[%s496 + $0x30] sm:$0xf]
  %v510 = vld [vmem:[%s496 + $0x34] sm:$0xf]
  %v511 = vld [vmem:[%s496 + $0x38] sm:$0xf]
  %v512 = vld [vmem:[%s496 + $0x3c] sm:$0xf]
  %v529 = vunpack.c.l.b16 %v480
  %v530 = vunpack.c.l.b16 %v481
  %v531 = vunpack.c.l.b16 %v482
  %v532 = vunpack.c.l.b16 %v483
  %v533 = vunpack.c.l.b16 %v484
  %v534 = vunpack.c.l.b16 %v485
  %v535 = vunpack.c.l.b16 %v486
  %v536 = vunpack.c.l.b16 %v487
  %v537 = vunpack.c.l.b16 %v488
  %v538 = vunpack.c.l.b16 %v489
  %v539 = vunpack.c.l.b16 %v490
  %v540 = vunpack.c.l.b16 %v491
  %v541 = vunpack.c.l.b16 %v492
  %v542 = vunpack.c.l.b16 %v493
  %v543 = vunpack.c.l.b16 %v494
  %v544 = vunpack.c.l.b16 %v495
  %v545 = vpack.c.b16 %v530, %v529
  %v546 = vpack.c.b16 %v532, %v531
  %v547 = vpack.c.b16 %v534, %v533
  %v548 = vpack.c.b16 %v536, %v535
  %v549 = vpack.c.b16 %v538, %v537
  %v550 = vpack.c.b16 %v540, %v539
  %v551 = vpack.c.b16 %v542, %v541
  %v552 = vpack.c.b16 %v544, %v543
  %v577 = vunpack.c.l.b16 %v497
  %v578 = vunpack.c.l.b16 %v498
  %v579 = vunpack.c.l.b16 %v499
  %v580 = vunpack.c.l.b16 %v500
  %v581 = vunpack.c.l.b16 %v501
  %v582 = vunpack.c.l.b16 %v502
  %v583 = vunpack.c.l.b16 %v503
  %v584 = vunpack.c.l.b16 %v504
  %v585 = vunpack.c.l.b16 %v505
  %v586 = vunpack.c.l.b16 %v506
  %v587 = vunpack.c.l.b16 %v507
  %v588 = vunpack.c.l.b16 %v508
  %v589 = vunpack.c.l.b16 %v509
  %v590 = vunpack.c.l.b16 %v510
  %v591 = vunpack.c.l.b16 %v511
  %v592 = vunpack.c.l.b16 %v512
  %v593 = vpack.c.b16 %v578, %v577
  %v594 = vpack.c.b16 %v580, %v579
  %v595 = vpack.c.b16 %v582, %v581
  %v596 = vpack.c.b16 %v584, %v583
  %v597 = vpack.c.b16 %v586, %v585
  %v598 = vpack.c.b16 %v588, %v587
  %v599 = vpack.c.b16 %v590, %v589
  %v600 = vpack.c.b16 %v592, %v591
  %609 = vmatprep.subr.bf16.mxu0 0
  %610 = vmatpush1.bf16.msra.mxu0 %v600
  %611 = vmatprep.subr.bf16.mxu0 0
  %612 = vmatpush1.bf16.msra.mxu0 %v599
  %613 = vmatprep.subr.bf16.mxu0 0
  %614 = vmatpush1.bf16.msra.mxu0 %v598
  %615 = vmatprep.subr.bf16.mxu0 0
  %616 = vmatpush1.bf16.msra.mxu0 %v597
  %617 = vmatprep.subr.bf16.mxu0 0
  %618 = vmatpush1.bf16.msra.mxu0 %v596
  %619 = vmatprep.subr.bf16.mxu0 0
  %620 = vmatpush1.bf16.msra.mxu0 %v595
  %621 = vmatprep.subr.bf16.mxu0 0
  %622 = vmatpush1.bf16.msra.mxu0 %v594
  %623 = vmatprep.subr.bf16.mxu0 0
  %624 = vmatpush1.bf16.msra.mxu0 %v593
  %625 = vmatprep.subr.bf16.mxu0 0
  %626 = vmatpush2.bf16.msra.mxu0 0
  %627 = vmatprep.subr.bf16.mxu0 0
  %628 = vmatpush2.bf16.msra.mxu0 0
  %629 = vmatprep.subr.bf16.mxu0 0
  %630 = vmatpush2.bf16.msra.mxu0 0
  %631 = vmatprep.subr.bf16.mxu0 0
  %632 = vmatpush2.bf16.msra.mxu0 0
  %633 = vmatprep.subr.bf16.mxu0 0
  %634 = vmatpush2.bf16.msra.mxu0 0
  %635 = vmatprep.subr.bf16.mxu0 0
  %636 = vmatpush2.bf16.msra.mxu0 0
  %637 = vmatprep.subr.bf16.mxu0 0
  %638 = vmatpush2.bf16.msra.mxu0 0
  %639 = vmatprep.subr.bf16.mxu0 0
  %640 = vmatpush2.bf16.msra.mxu0 0
  %641 = vmatprep.mubr.bf16.mxu0 0
  %642 = vmatmul.mubr.bf16.gmra.mxu0 %v545
  %v643 = vpop.f32.mrf.mxu0
  %v644 = vadd.f32 0.0, %v643
  %v645 = vpop.f32.mrf.mxu0
  %v646 = vpop.f32.mrf.mxu0
  %v647 = vadd.f32 0.0, %v646
  %v648 = vpop.f32.mrf.mxu0
  %649 = vmatprep.mubr.bf16.mxu0 0
  %650 = vmatmul.mubr.bf16.gmra.mxu0 %v546
  %v651 = vpop.f32.mrf.mxu0
  %v652 = vadd.f32 0.0, %v651
  %v653 = vpop.f32.mrf.mxu0
  %v654 = vpop.f32.mrf.mxu0
  %v655 = vadd.f32 0.0, %v654
  %v656 = vpop.f32.mrf.mxu0
  %657 = vmatprep.mubr.bf16.mxu0 0
  %658 = vmatmul.mubr.bf16.gmra.mxu0 %v547
  %v659 = vpop.f32.mrf.mxu0
  %v660 = vadd.f32 0.0, %v659
  %v661 = vpop.f32.mrf.mxu0
  %v662 = vpop.f32.mrf.mxu0
  %v663 = vadd.f32 0.0, %v662
  %v664 = vpop.f32.mrf.mxu0
  %665 = vmatprep.mubr.bf16.mxu0 0
  %666 = vmatmul.mubr.bf16.gmra.mxu0 %v548
  %v667 = vpop.f32.mrf.mxu0
  %v668 = vadd.f32 0.0, %v667
  %v669 = vpop.f32.mrf.mxu0
  %v670 = vpop.f32.mrf.mxu0
  %v671 = vadd.f32 0.0, %v670
  %v672 = vpop.f32.mrf.mxu0
  %673 = vmatprep.mubr.bf16.mxu0 0
  %674 = vmatmul.mubr.bf16.gmra.mxu0 %v549
  %v675 = vpop.f32.mrf.mxu0
  %v676 = vadd.f32 0.0, %v675
  %v677 = vpop.f32.mrf.mxu0
  %v678 = vpop.f32.mrf.mxu0
  %v679 = vadd.f32 0.0, %v678
  %v680 = vpop.f32.mrf.mxu0
  %681 = vmatprep.mubr.bf16.mxu0 0
  %682 = vmatmul.mubr.bf16.gmra.mxu0 %v550
  %v683 = vpop.f32.mrf.mxu0
  %v684 = vadd.f32 0.0, %v683
  %v685 = vpop.f32.mrf.mxu0
  %v686 = vpop.f32.mrf.mxu0
  %v687 = vadd.f32 0.0, %v686
  %v688 = vpop.f32.mrf.mxu0
  %689 = vmatprep.mubr.bf16.mxu0 0
  %690 = vmatmul.mubr.bf16.gmra.mxu0 %v551
  %v691 = vpop.f32.mrf.mxu0
  %v692 = vadd.f32 0.0, %v691
  %v693 = vpop.f32.mrf.mxu0
  %v694 = vpop.f32.mrf.mxu0
  %v695 = vadd.f32 0.0, %v694
  %v696 = vpop.f32.mrf.mxu0
  %697 = vmatprep.mubr.bf16.mxu0 0
  %698 = vmatmul.mubr.bf16.gmra.mxu0 %v552
  %v699 = vpop.f32.mrf.mxu0
  %v700 = vadd.f32 0.0, %v699
  %v701 = vpop.f32.mrf.mxu0
  %v702 = vpop.f32.mrf.mxu0
  %v703 = vadd.f32 0.0, %v702
  %v704 = vpop.f32.mrf.mxu0
  %705 = vdwg.mxu0
  %v706 = vadd.f32 %v417, %v644
  %v707 = vadd.f32 %v420, %v647
  %v708 = vadd.f32 %v425, %v652
  %v709 = vadd.f32 %v428, %v655
  %v710 = vadd.f32 %v433, %v660
  %v711 = vadd.f32 %v436, %v663
  %v712 = vadd.f32 %v441, %v668
  %v713 = vadd.f32 %v444, %v671
  %v714 = vadd.f32 %v449, %v676
  %v715 = vadd.f32 %v452, %v679
  %v716 = vadd.f32 %v457, %v684
  %v717 = vadd.f32 %v460, %v687
  %v718 = vadd.f32 %v465, %v692
  %v719 = vadd.f32 %v468, %v695
  %v720 = vadd.f32 %v473, %v700
  %v721 = vadd.f32 %v476, %v703
  %v722 = vld [vmem:[%s2] sm:$0x1]
  %v724 = vlaneseq
  %v725 = vshrl.u32 %v724, 7
  %v726 = vsub.s32 0, %v725
  %v727 = vrot.slane %v722, %v726
  %v729 = vmul.f32 %v706, %v727
  %v730 = vmul.f32 %v707, %v727
  %v731 = vmul.f32 %v708, %v727
  %v732 = vmul.f32 %v709, %v727
  %v733 = vmul.f32 %v710, %v727
  %v734 = vmul.f32 %v711, %v727
  %v735 = vmul.f32 %v712, %v727
  %v736 = vmul.f32 %v713, %v727
  %v737 = vmul.f32 %v714, %v727
  %v738 = vmul.f32 %v715, %v727
  %v739 = vmul.f32 %v716, %v727
  %v740 = vmul.f32 %v717, %v727
  %v741 = vmul.f32 %v718, %v727
  %v742 = vmul.f32 %v719, %v727
  %v743 = vmul.f32 %v720, %v727
  %v744 = vmul.f32 %v721, %v727
  %v745 = vld [vmem:[%s3] sm:$0x1]
  %v747 = vlaneseq
  %v748 = vshrl.u32 %v747, 7
  %v749 = vsub.s32 0, %v748
  %v750 = vrot.slane %v745, %v749
  %v752 = vadd.f32 %v729, %v750
  %v753 = vadd.f32 %v730, %v750
  %v754 = vadd.f32 %v731, %v750
  %v755 = vadd.f32 %v732, %v750
  %v756 = vadd.f32 %v733, %v750
  %v757 = vadd.f32 %v734, %v750
  %v758 = vadd.f32 %v735, %v750
  %v759 = vadd.f32 %v736, %v750
  %v760 = vadd.f32 %v737, %v750
  %v761 = vadd.f32 %v738, %v750
  %v762 = vadd.f32 %v739, %v750
  %v763 = vadd.f32 %v740, %v750
  %v764 = vadd.f32 %v741, %v750
  %v765 = vadd.f32 %v742, %v750
  %v766 = vadd.f32 %v743, %v750
  %v767 = vadd.f32 %v744, %v750
  %v768 = vmax.f32 %v752, 0.0
  %v769 = vmax.f32 %v753, 0.0
  %v770 = vmax.f32 %v754, 0.0
  %v771 = vmax.f32 %v755, 0.0
  %v772 = vmax.f32 %v756, 0.0
  %v773 = vmax.f32 %v757, 0.0
  %v774 = vmax.f32 %v758, 0.0
  %v775 = vmax.f32 %v759, 0.0
  %v776 = vmax.f32 %v760, 0.0
  %v777 = vmax.f32 %v761, 0.0
  %v778 = vmax.f32 %v762, 0.0
  %v779 = vmax.f32 %v763, 0.0
  %v780 = vmax.f32 %v764, 0.0
  %v781 = vmax.f32 %v765, 0.0
  %v782 = vmax.f32 %v766, 0.0
  %v783 = vmax.f32 %v767, 0.0
  %v784 = vpack.c.bf16 0.0, 0.0
  %v785 = vpack.c.bf16 %v769, %v768
  %v786 = vpack.c.bf16 %v771, %v770
  %v787 = vpack.c.bf16 %v773, %v772
  %v788 = vpack.c.bf16 %v775, %v774
  %v789 = vpack.c.bf16 %v777, %v776
  %v790 = vpack.c.bf16 %v779, %v778
  %v791 = vpack.c.bf16 %v781, %v780
  %v792 = vld [vmem:[%s4] sm:$0xf]
  %v793 = vld [vmem:[%s4 + $0x4] sm:$0xf]
  %v794 = vld [vmem:[%s4 + $0x8] sm:$0xf]
  %v795 = vld [vmem:[%s4 + $0xc] sm:$0xf]
  %v796 = vld [vmem:[%s4 + $0x10] sm:$0xf]
  %v797 = vld [vmem:[%s4 + $0x14] sm:$0xf]
  %v798 = vld [vmem:[%s4 + $0x18] sm:$0xf]
  %v799 = vld [vmem:[%s4 + $0x1c] sm:$0xf]
  %v800 = vld [vmem:[%s4 + $0x20] sm:$0xf]
  %v801 = vld [vmem:[%s4 + $0x24] sm:$0xf]
  %v802 = vld [vmem:[%s4 + $0x28] sm:$0xf]
  %v803 = vld [vmem:[%s4 + $0x2c] sm:$0xf]
  %v804 = vld [vmem:[%s4 + $0x30] sm:$0xf]
  %v805 = vld [vmem:[%s4 + $0x34] sm:$0xf]
  %v806 = vld [vmem:[%s4 + $0x38] sm:$0xf]
  %v807 = vld [vmem:[%s4 + $0x3c] sm:$0xf]
  %v808 = vpack.c.bf16 %v783, %v782
  %s809 = scalar_lea.vmem %s4, 64
  %v810 = vld [vmem:[%s809] sm:$0xf]
  %v811 = vld [vmem:[%s809 + $0x4] sm:$0xf]
  %v812 = vld [vmem:[%s809 + $0x8] sm:$0xf]
  %v813 = vld [vmem:[%s809 + $0xc] sm:$0xf]
  %v814 = vld [vmem:[%s809 + $0x10] sm:$0xf]
  %v815 = vld [vmem:[%s809 + $0x14] sm:$0xf]
  %v816 = vld [vmem:[%s809 + $0x18] sm:$0xf]
  %v817 = vld [vmem:[%s809 + $0x1c] sm:$0xf]
  %v818 = vld [vmem:[%s809 + $0x20] sm:$0xf]
  %v819 = vld [vmem:[%s809 + $0x24] sm:$0xf]
  %v820 = vld [vmem:[%s809 + $0x28] sm:$0xf]
  %v821 = vld [vmem:[%s809 + $0x2c] sm:$0xf]
  %v822 = vld [vmem:[%s809 + $0x30] sm:$0xf]
  %v823 = vld [vmem:[%s809 + $0x34] sm:$0xf]
  %v824 = vld [vmem:[%s809 + $0x38] sm:$0xf]
  %v825 = vld [vmem:[%s809 + $0x3c] sm:$0xf]
  %v842 = vunpack.c.l.b16 %v810
  %v843 = vunpack.c.l.b16 %v811
  %v844 = vunpack.c.l.b16 %v812
  %v845 = vunpack.c.l.b16 %v813
  %v846 = vunpack.c.l.b16 %v814
  %v847 = vunpack.c.l.b16 %v815
  %v848 = vunpack.c.l.b16 %v816
  %v849 = vunpack.c.l.b16 %v817
  %v850 = vunpack.c.l.b16 %v818
  %v851 = vunpack.c.l.b16 %v819
  %v852 = vunpack.c.l.b16 %v820
  %v853 = vunpack.c.l.b16 %v821
  %v854 = vunpack.c.l.b16 %v822
  %v855 = vunpack.c.l.b16 %v823
  %v856 = vunpack.c.l.b16 %v824
  %v857 = vunpack.c.l.b16 %v825
  %v858 = vpack.c.b16 %v843, %v842
  %v859 = vpack.c.b16 %v845, %v844
  %v860 = vpack.c.b16 %v847, %v846
  %v861 = vpack.c.b16 %v849, %v848
  %v862 = vpack.c.b16 %v851, %v850
  %v863 = vpack.c.b16 %v853, %v852
  %v864 = vpack.c.b16 %v855, %v854
  %v865 = vpack.c.b16 %v857, %v856
  %874 = vmatprep.subr.bf16.mxu0 0
  %875 = vmatpush1.bf16.msra.mxu0 %v865
  %876 = vmatprep.subr.bf16.mxu0 0
  %877 = vmatpush1.bf16.msra.mxu0 %v864
  %878 = vmatprep.subr.bf16.mxu0 0
  %879 = vmatpush1.bf16.msra.mxu0 %v863
  %880 = vmatprep.subr.bf16.mxu0 0
  %881 = vmatpush1.bf16.msra.mxu0 %v862
  %882 = vmatprep.subr.bf16.mxu0 0
  %883 = vmatpush1.bf16.msra.mxu0 %v861
  %884 = vmatprep.subr.bf16.mxu0 0
  %885 = vmatpush1.bf16.msra.mxu0 %v860
  %886 = vmatprep.subr.bf16.mxu0 0
  %887 = vmatpush1.bf16.msra.mxu0 %v859
  %888 = vmatprep.subr.bf16.mxu0 0
  %889 = vmatpush1.bf16.msra.mxu0 %v858
  %890 = vmatprep.subr.bf16.mxu0 0
  %891 = vmatpush2.bf16.msra.mxu0 0
  %892 = vmatprep.subr.bf16.mxu0 0
  %893 = vmatpush2.bf16.msra.mxu0 0
  %894 = vmatprep.subr.bf16.mxu0 0
  %895 = vmatpush2.bf16.msra.mxu0 0
  %896 = vmatprep.subr.bf16.mxu0 0
  %897 = vmatpush2.bf16.msra.mxu0 0
  %898 = vmatprep.subr.bf16.mxu0 0
  %899 = vmatpush2.bf16.msra.mxu0 0
  %900 = vmatprep.subr.bf16.mxu0 0
  %901 = vmatpush2.bf16.msra.mxu0 0
  %902 = vmatprep.subr.bf16.mxu0 0
  %903 = vmatpush2.bf16.msra.mxu0 0
  %904 = vmatprep.subr.bf16.mxu0 0
  %905 = vmatpush2.bf16.msra.mxu0 0
  %906 = vmatprep.mubr.bf16.mxu0 0
  %907 = vmatmul.mubr.bf16.gmra.mxu0 %v785
  %v908 = vpop.f32.mrf.mxu0
  %v909 = vadd.f32 0.0, %v908
  %v910 = vpop.f32.mrf.mxu0
  %v911 = vpop.f32.mrf.mxu0
  %v912 = vadd.f32 0.0, %v911
  %v913 = vpop.f32.mrf.mxu0
  %914 = vmatprep.mubr.bf16.mxu0 0
  %915 = vmatmul.mubr.bf16.gmra.mxu0 %v786
  %v916 = vpop.f32.mrf.mxu0
  %v917 = vadd.f32 0.0, %v916
  %v918 = vpop.f32.mrf.mxu0
  %v919 = vpop.f32.mrf.mxu0
  %v920 = vadd.f32 0.0, %v919
  %v921 = vpop.f32.mrf.mxu0
  %922 = vmatprep.mubr.bf16.mxu0 0
  %923 = vmatmul.mubr.bf16.gmra.mxu0 %v787
  %v924 = vpop.f32.mrf.mxu0
  %v925 = vadd.f32 0.0, %v924
  %v926 = vpop.f32.mrf.mxu0
  %v927 = vpop.f32.mrf.mxu0
  %v928 = vadd.f32 0.0, %v927
  %v929 = vpop.f32.mrf.mxu0
  %930 = vmatprep.mubr.bf16.mxu0 0
  %931 = vmatmul.mubr.bf16.gmra.mxu0 %v788
  %v932 = vpop.f32.mrf.mxu0
  %v933 = vadd.f32 0.0, %v932
  %v934 = vpop.f32.mrf.mxu0
  %v935 = vpop.f32.mrf.mxu0
  %v936 = vadd.f32 0.0, %v935
  %v937 = vpop.f32.mrf.mxu0
  %938 = vmatprep.mubr.bf16.mxu0 0
  %939 = vmatmul.mubr.bf16.gmra.mxu0 %v789
  %v940 = vpop.f32.mrf.mxu0
  %v941 = vadd.f32 0.0, %v940
  %v942 = vpop.f32.mrf.mxu0
  %v943 = vpop.f32.mrf.mxu0
  %v944 = vadd.f32 0.0, %v943
  %v945 = vpop.f32.mrf.mxu0
  %946 = vmatprep.mubr.bf16.mxu0 0
  %947 = vmatmul.mubr.bf16.gmra.mxu0 %v790
  %v948 = vpop.f32.mrf.mxu0
  %v949 = vadd.f32 0.0, %v948
  %v950 = vpop.f32.mrf.mxu0
  %v951 = vpop.f32.mrf.mxu0
  %v952 = vadd.f32 0.0, %v951
  %v953 = vpop.f32.mrf.mxu0
  %954 = vmatprep.mubr.bf16.mxu0 0
  %955 = vmatmul.mubr.bf16.gmra.mxu0 %v791
  %v956 = vpop.f32.mrf.mxu0
  %v957 = vadd.f32 0.0, %v956
  %v958 = vpop.f32.mrf.mxu0
  %v959 = vpop.f32.mrf.mxu0
  %v960 = vadd.f32 0.0, %v959
  %v961 = vpop.f32.mrf.mxu0
  %962 = vmatprep.mubr.bf16.mxu0 0
  %963 = vmatmul.mubr.bf16.gmra.mxu0 %v808
  %v964 = vpop.f32.mrf.mxu0
  %v965 = vadd.f32 0.0, %v964
  %v966 = vpop.f32.mrf.mxu0
  %v967 = vpop.f32.mrf.mxu0
  %v968 = vadd.f32 0.0, %v967
  %v969 = vpop.f32.mrf.mxu0
  %970 = vdwg.mxu0
  %v987 = vunpack.c.l.b16 %v792
  %v988 = vunpack.c.l.b16 %v793
  %v989 = vunpack.c.l.b16 %v794
  %v990 = vunpack.c.l.b16 %v795
  %v991 = vunpack.c.l.b16 %v796
  %v992 = vunpack.c.l.b16 %v797
  %v993 = vunpack.c.l.b16 %v798
  %v994 = vunpack.c.l.b16 %v799
  %v995 = vunpack.c.l.b16 %v800
  %v996 = vunpack.c.l.b16 %v801
  %v997 = vunpack.c.l.b16 %v802
  %v998 = vunpack.c.l.b16 %v803
  %v999 = vunpack.c.l.b16 %v804
  %v1000 = vunpack.c.l.b16 %v805
  %v1001 = vunpack.c.l.b16 %v806
  %v1002 = vunpack.c.l.b16 %v807
  %v1003 = vpack.c.b16 %v988, %v987
  %v1004 = vpack.c.b16 %v990, %v989
  %v1005 = vpack.c.b16 %v992, %v991
  %v1006 = vpack.c.b16 %v994, %v993
  %v1007 = vpack.c.b16 %v996, %v995
  %v1008 = vpack.c.b16 %v998, %v997
  %v1009 = vpack.c.b16 %v1000, %v999
  %v1010 = vpack.c.b16 %v1002, %v1001
  %1019 = vmatprep.subr.bf16.mxu0 0
  %1020 = vmatpush1.bf16.msra.mxu0 %v1010
  %1021 = vmatprep.subr.bf16.mxu0 0
  %1022 = vmatpush1.bf16.msra.mxu0 %v1009
  %1023 = vmatprep.subr.bf16.mxu0 0
  %1024 = vmatpush1.bf16.msra.mxu0 %v1008
  %1025 = vmatprep.subr.bf16.mxu0 0
  %1026 = vmatpush1.bf16.msra.mxu0 %v1007
  %1027 = vmatprep.subr.bf16.mxu0 0
  %1028 = vmatpush1.bf16.msra.mxu0 %v1006
  %1029 = vmatprep.subr.bf16.mxu0 0
  %1030 = vmatpush1.bf16.msra.mxu0 %v1005
  %1031 = vmatprep.subr.bf16.mxu0 0
  %1032 = vmatpush1.bf16.msra.mxu0 %v1004
  %1033 = vmatprep.subr.bf16.mxu0 0
  %1034 = vmatpush1.bf16.msra.mxu0 %v1003
  %1035 = vmatprep.subr.bf16.mxu0 0
  %1036 = vmatpush2.bf16.msra.mxu0 0
  %1037 = vmatprep.subr.bf16.mxu0 0
  %1038 = vmatpush2.bf16.msra.mxu0 0
  %1039 = vmatprep.subr.bf16.mxu0 0
  %1040 = vmatpush2.bf16.msra.mxu0 0
  %1041 = vmatprep.subr.bf16.mxu0 0
  %1042 = vmatpush2.bf16.msra.mxu0 0
  %1043 = vmatprep.subr.bf16.mxu0 0
  %1044 = vmatpush2.bf16.msra.mxu0 0
  %1045 = vmatprep.subr.bf16.mxu0 0
  %1046 = vmatpush2.bf16.msra.mxu0 0
  %1047 = vmatprep.subr.bf16.mxu0 0
  %1048 = vmatpush2.bf16.msra.mxu0 0
  %1049 = vmatprep.subr.bf16.mxu0 0
  %1050 = vmatpush2.bf16.msra.mxu0 0
  %1051 = vmatprep.mubr.bf16.mxu0 0
  %1052 = vmatmul.mubr.bf16.gmra.mxu0 %v784
  %v1053 = vpop.f32.mrf.mxu0
  %v1054 = vadd.f32 %v909, %v1053
  %v1055 = vpop.f32.mrf.mxu0
  %v1056 = vpop.f32.mrf.mxu0
  %v1057 = vadd.f32 %v912, %v1056
  %v1058 = vpop.f32.mrf.mxu0
  %1059 = vmatprep.mubr.bf16.mxu0 0
  %1060 = vmatmul.mubr.bf16.gmra.mxu0 %v785
  %v1061 = vpop.f32.mrf.mxu0
  %v1062 = vadd.f32 %v917, %v1061
  %v1063 = vpop.f32.mrf.mxu0
  %v1064 = vpop.f32.mrf.mxu0
  %v1065 = vadd.f32 %v920, %v1064
  %v1066 = vpop.f32.mrf.mxu0
  %1067 = vmatprep.mubr.bf16.mxu0 0
  %1068 = vmatmul.mubr.bf16.gmra.mxu0 %v786
  %v1069 = vpop.f32.mrf.mxu0
  %v1070 = vadd.f32 %v925, %v1069
  %v1071 = vpop.f32.mrf.mxu0
  %v1072 = vpop.f32.mrf.mxu0
  %v1073 = vadd.f32 %v928, %v1072
  %v1074 = vpop.f32.mrf.mxu0
  %1075 = vmatprep.mubr.bf16.mxu0 0
  %1076 = vmatmul.mubr.bf16.gmra.mxu0 %v787
  %v1077 = vpop.f32.mrf.mxu0
  %v1078 = vadd.f32 %v933, %v1077
  %v1079 = vpop.f32.mrf.mxu0
  %v1080 = vpop.f32.mrf.mxu0
  %v1081 = vadd.f32 %v936, %v1080
  %v1082 = vpop.f32.mrf.mxu0
  %1083 = vmatprep.mubr.bf16.mxu0 0
  %1084 = vmatmul.mubr.bf16.gmra.mxu0 %v788
  %v1085 = vpop.f32.mrf.mxu0
  %v1086 = vadd.f32 %v941, %v1085
  %v1087 = vpop.f32.mrf.mxu0
  %v1088 = vpop.f32.mrf.mxu0
  %v1089 = vadd.f32 %v944, %v1088
  %v1090 = vpop.f32.mrf.mxu0
  %1091 = vmatprep.mubr.bf16.mxu0 0
  %1092 = vmatmul.mubr.bf16.gmra.mxu0 %v789
  %v1093 = vpop.f32.mrf.mxu0
  %v1094 = vadd.f32 %v949, %v1093
  %v1095 = vpop.f32.mrf.mxu0
  %v1096 = vpop.f32.mrf.mxu0
  %v1097 = vadd.f32 %v952, %v1096
  %v1098 = vpop.f32.mrf.mxu0
  %1099 = vmatprep.mubr.bf16.mxu0 0
  %1100 = vmatmul.mubr.bf16.gmra.mxu0 %v790
  %v1101 = vpop.f32.mrf.mxu0
  %v1102 = vadd.f32 %v957, %v1101
  %v1103 = vpop.f32.mrf.mxu0
  %v1104 = vpop.f32.mrf.mxu0
  %v1105 = vadd.f32 %v960, %v1104
  %v1106 = vpop.f32.mrf.mxu0
  %1107 = vmatprep.mubr.bf16.mxu0 0
  %1108 = vmatmul.mubr.bf16.gmra.mxu0 %v791
  %v1109 = vpop.f32.mrf.mxu0
  %v1110 = vadd.f32 %v965, %v1109
  %v1111 = vpop.f32.mrf.mxu0
  %v1112 = vpop.f32.mrf.mxu0
  %v1113 = vadd.f32 %v968, %v1112
  %v1114 = vpop.f32.mrf.mxu0
  %1115 = vdwg.mxu0
  %s1116 = scalar_lea.vmem %s4, 128
  %v1117 = vld [vmem:[%s1116] sm:$0xf]
  %v1118 = vld [vmem:[%s1116 + $0x4] sm:$0xf]
  %v1119 = vld [vmem:[%s1116 + $0x8] sm:$0xf]
  %v1120 = vld [vmem:[%s1116 + $0xc] sm:$0xf]
  %v1121 = vld [vmem:[%s1116 + $0x10] sm:$0xf]
  %v1122 = vld [vmem:[%s1116 + $0x14] sm:$0xf]
  %v1123 = vld [vmem:[%s1116 + $0x18] sm:$0xf]
  %v1124 = vld [vmem:[%s1116 + $0x1c] sm:$0xf]
  %v1125 = vld [vmem:[%s1116 + $0x20] sm:$0xf]
  %v1126 = vld [vmem:[%s1116 + $0x24] sm:$0xf]
  %v1127 = vld [vmem:[%s1116 + $0x28] sm:$0xf]
  %v1128 = vld [vmem:[%s1116 + $0x2c] sm:$0xf]
  %v1129 = vld [vmem:[%s1116 + $0x30] sm:$0xf]
  %v1130 = vld [vmem:[%s1116 + $0x34] sm:$0xf]
  %v1131 = vld [vmem:[%s1116 + $0x38] sm:$0xf]
  %v1132 = vld [vmem:[%s1116 + $0x3c] sm:$0xf]
  %v1149 = vunpack.c.l.b16 %v1117
  %v1150 = vunpack.c.l.b16 %v1118
  %v1151 = vunpack.c.l.b16 %v1119
  %v1152 = vunpack.c.l.b16 %v1120
  %v1153 = vunpack.c.l.b16 %v1121
  %v1154 = vunpack.c.l.b16 %v1122
  %v1155 = vunpack.c.l.b16 %v1123
  %v1156 = vunpack.c.l.b16 %v1124
  %v1157 = vunpack.c.l.b16 %v1125
  %v1158 = vunpack.c.l.b16 %v1126
  %v1159 = vunpack.c.l.b16 %v1127
  %v1160 = vunpack.c.l.b16 %v1128
  %v1161 = vunpack.c.l.b16 %v1129
  %v1162 = vunpack.c.l.b16 %v1130
  %v1163 = vunpack.c.l.b16 %v1131
  %v1164 = vunpack.c.l.b16 %v1132
  %v1165 = vpack.c.b16 %v1150, %v1149
  %v1166 = vpack.c.b16 %v1152, %v1151
  %v1167 = vpack.c.b16 %v1154, %v1153
  %v1168 = vpack.c.b16 %v1156, %v1155
  %v1169 = vpack.c.b16 %v1158, %v1157
  %v1170 = vpack.c.b16 %v1160, %v1159
  %v1171 = vpack.c.b16 %v1162, %v1161
  %v1172 = vpack.c.b16 %v1164, %v1163
  %1181 = vmatprep.subr.bf16.mxu0 0
  %1182 = vmatpush1.bf16.msra.mxu0 %v1172
  %1183 = vmatprep.subr.bf16.mxu0 0
  %1184 = vmatpush1.bf16.msra.mxu0 %v1171
  %1185 = vmatprep.subr.bf16.mxu0 0
  %1186 = vmatpush1.bf16.msra.mxu0 %v1170
  %1187 = vmatprep.subr.bf16.mxu0 0
  %1188 = vmatpush1.bf16.msra.mxu0 %v1169
  %1189 = vmatprep.subr.bf16.mxu0 0
  %1190 = vmatpush1.bf16.msra.mxu0 %v1168
  %1191 = vmatprep.subr.bf16.mxu0 0
  %1192 = vmatpush1.bf16.msra.mxu0 %v1167
  %1193 = vmatprep.subr.bf16.mxu0 0
  %1194 = vmatpush1.bf16.msra.mxu0 %v1166
  %1195 = vmatprep.subr.bf16.mxu0 0
  %1196 = vmatpush1.bf16.msra.mxu0 %v1165
  %1197 = vmatprep.subr.bf16.mxu0 0
  %1198 = vmatpush2.bf16.msra.mxu0 0
  %1199 = vmatprep.subr.bf16.mxu0 0
  %1200 = vmatpush2.bf16.msra.mxu0 0
  %1201 = vmatprep.subr.bf16.mxu0 0
  %1202 = vmatpush2.bf16.msra.mxu0 0
  %1203 = vmatprep.subr.bf16.mxu0 0
  %1204 = vmatpush2.bf16.msra.mxu0 0
  %1205 = vmatprep.subr.bf16.mxu0 0
  %1206 = vmatpush2.bf16.msra.mxu0 0
  %1207 = vmatprep.subr.bf16.mxu0 0
  %1208 = vmatpush2.bf16.msra.mxu0 0
  %1209 = vmatprep.subr.bf16.mxu0 0
  %1210 = vmatpush2.bf16.msra.mxu0 0
  %1211 = vmatprep.subr.bf16.mxu0 0
  %1212 = vmatpush2.bf16.msra.mxu0 0
  %1213 = vmatprep.mubr.bf16.mxu0 0
  %1214 = vmatmul.mubr.bf16.gmra.mxu0 %v786
  %v1215 = vpop.f32.mrf.mxu0
  %v1216 = vadd.f32 0.0, %v1215
  %v1217 = vpop.f32.mrf.mxu0
  %v1218 = vpop.f32.mrf.mxu0
  %v1219 = vadd.f32 0.0, %v1218
  %v1220 = vpop.f32.mrf.mxu0
  %1221 = vmatprep.mubr.bf16.mxu0 0
  %1222 = vmatmul.mubr.bf16.gmra.mxu0 %v787
  %v1223 = vpop.f32.mrf.mxu0
  %v1224 = vadd.f32 0.0, %v1223
  %v1225 = vpop.f32.mrf.mxu0
  %v1226 = vpop.f32.mrf.mxu0
  %v1227 = vadd.f32 0.0, %v1226
  %v1228 = vpop.f32.mrf.mxu0
  %1229 = vmatprep.mubr.bf16.mxu0 0
  %1230 = vmatmul.mubr.bf16.gmra.mxu0 %v788
  %v1231 = vpop.f32.mrf.mxu0
  %v1232 = vadd.f32 0.0, %v1231
  %v1233 = vpop.f32.mrf.mxu0
  %v1234 = vpop.f32.mrf.mxu0
  %v1235 = vadd.f32 0.0, %v1234
  %v1236 = vpop.f32.mrf.mxu0
  %1237 = vmatprep.mubr.bf16.mxu0 0
  %1238 = vmatmul.mubr.bf16.gmra.mxu0 %v789
  %v1239 = vpop.f32.mrf.mxu0
  %v1240 = vadd.f32 0.0, %v1239
  %v1241 = vpop.f32.mrf.mxu0
  %v1242 = vpop.f32.mrf.mxu0
  %v1243 = vadd.f32 0.0, %v1242
  %v1244 = vpop.f32.mrf.mxu0
  %1245 = vmatprep.mubr.bf16.mxu0 0
  %1246 = vmatmul.mubr.bf16.gmra.mxu0 %v790
  %v1247 = vpop.f32.mrf.mxu0
  %v1248 = vadd.f32 0.0, %v1247
  %v1249 = vpop.f32.mrf.mxu0
  %v1250 = vpop.f32.mrf.mxu0
  %v1251 = vadd.f32 0.0, %v1250
  %v1252 = vpop.f32.mrf.mxu0
  %1253 = vmatprep.mubr.bf16.mxu0 0
  %1254 = vmatmul.mubr.bf16.gmra.mxu0 %v791
  %v1255 = vpop.f32.mrf.mxu0
  %v1256 = vadd.f32 0.0, %v1255
  %v1257 = vpop.f32.mrf.mxu0
  %v1258 = vpop.f32.mrf.mxu0
  %v1259 = vadd.f32 0.0, %v1258
  %v1260 = vpop.f32.mrf.mxu0
  %1261 = vmatprep.mubr.bf16.mxu0 0
  %1262 = vmatmul.mubr.bf16.gmra.mxu0 %v808
  %v1263 = vpop.f32.mrf.mxu0
  %v1264 = vadd.f32 0.0, %v1263
  %v1265 = vpop.f32.mrf.mxu0
  %v1266 = vpop.f32.mrf.mxu0
  %v1267 = vadd.f32 0.0, %v1266
  %v1268 = vpop.f32.mrf.mxu0
  %1269 = vmatprep.mubr.bf16.mxu0 0
  %1270 = vmatmul.mubr.bf16.gmra.mxu0 %v784
  %v1271 = vpop.f32.mrf.mxu0
  %v1272 = vadd.f32 0.0, %v1271
  %v1273 = vpop.f32.mrf.mxu0
  %v1274 = vpop.f32.mrf.mxu0
  %v1275 = vadd.f32 0.0, %v1274
  %v1276 = vpop.f32.mrf.mxu0
  %1277 = vdwg.mxu0
  %v1278 = vadd.f32 %v1054, %v1216
  %v1279 = vadd.f32 %v1057, %v1219
  %v1280 = vadd.f32 %v1062, %v1224
  %v1281 = vadd.f32 %v1065, %v1227
  %v1282 = vadd.f32 %v1070, %v1232
  %v1283 = vadd.f32 %v1073, %v1235
  %v1284 = vadd.f32 %v1078, %v1240
  %v1285 = vadd.f32 %v1081, %v1243
  %v1286 = vadd.f32 %v1086, %v1248
  %v1287 = vadd.f32 %v1089, %v1251
  %v1288 = vadd.f32 %v1094, %v1256
  %v1289 = vadd.f32 %v1097, %v1259
  %v1290 = vadd.f32 %v1102, %v1264
  %v1291 = vadd.f32 %v1105, %v1267
  %v1292 = vadd.f32 %v1110, %v1272
  %v1293 = vadd.f32 %v1113, %v1275
  %v1294 = vld [vmem:[%s5] sm:$0x1]
  %v1296 = vlaneseq
  %v1297 = vshrl.u32 %v1296, 7
  %v1298 = vsub.s32 0, %v1297
  %v1299 = vrot.slane %v1294, %v1298
  %v1301 = vmul.f32 %v1278, %v1299
  %v1302 = vmul.f32 %v1279, %v1299
  %v1303 = vmul.f32 %v1280, %v1299
  %v1304 = vmul.f32 %v1281, %v1299
  %v1305 = vmul.f32 %v1282, %v1299
  %v1306 = vmul.f32 %v1283, %v1299
  %v1307 = vmul.f32 %v1284, %v1299
  %v1308 = vmul.f32 %v1285, %v1299
  %v1309 = vmul.f32 %v1286, %v1299
  %v1310 = vmul.f32 %v1287, %v1299
  %v1311 = vmul.f32 %v1288, %v1299
  %v1312 = vmul.f32 %v1289, %v1299
  %v1313 = vmul.f32 %v1290, %v1299
  %v1314 = vmul.f32 %v1291, %v1299
  %v1315 = vmul.f32 %v1292, %v1299
  %v1316 = vmul.f32 %v1293, %v1299
  %v1317 = vld [vmem:[%s6] sm:$0x1]
  %v1319 = vlaneseq
  %v1320 = vshrl.u32 %v1319, 7
  %v1321 = vsub.s32 0, %v1320
  %v1322 = vrot.slane %v1317, %v1321
  %v1324 = vadd.f32 %v1301, %v1322
  %v1325 = vadd.f32 %v1302, %v1322
  %v1326 = vadd.f32 %v1303, %v1322
  %v1327 = vadd.f32 %v1304, %v1322
  %v1328 = vadd.f32 %v1305, %v1322
  %v1329 = vadd.f32 %v1306, %v1322
  %v1330 = vadd.f32 %v1307, %v1322
  %v1331 = vadd.f32 %v1308, %v1322
  %v1332 = vadd.f32 %v1309, %v1322
  %v1333 = vadd.f32 %v1310, %v1322
  %v1334 = vadd.f32 %v1311, %v1322
  %v1335 = vadd.f32 %v1312, %v1322
  %v1336 = vadd.f32 %v1313, %v1322
  %v1337 = vadd.f32 %v1314, %v1322
  %v1338 = vadd.f32 %v1315, %v1322
  %v1339 = vadd.f32 %v1316, %v1322
  %v1340 = vunpack.c.l.bf16 %v28
  %v1341 = vunpack.c.l.bf16 %v29
  %v1342 = vunpack.c.l.bf16 %v30
  %v1343 = vunpack.c.l.bf16 %v31
  %v1344 = vunpack.c.l.bf16 %v32
  %v1345 = vunpack.c.l.bf16 %v33
  %v1346 = vunpack.c.l.bf16 %v34
  %v1347 = vunpack.c.l.bf16 %v35
  %v1348 = vunpack.c.l.bf16 %v36
  %v1349 = vunpack.c.l.bf16 %v37
  %v1350 = vunpack.c.l.bf16 %v38
  %v1351 = vunpack.c.l.bf16 %v39
  %v1352 = vunpack.c.l.bf16 %v40
  %v1353 = vunpack.c.l.bf16 %v41
  %v1354 = vunpack.c.l.bf16 %v42
  %v1355 = vunpack.c.l.bf16 %v43
  %v1356 = vadd.f32 %v1324, %v1340
  %v1357 = vadd.f32 %v1325, %v1341
  %v1358 = vadd.f32 %v1326, %v1342
  %v1359 = vadd.f32 %v1327, %v1343
  %v1360 = vadd.f32 %v1328, %v1344
  %v1361 = vadd.f32 %v1329, %v1345
  %v1362 = vadd.f32 %v1330, %v1346
  %v1363 = vadd.f32 %v1331, %v1347
  %v1364 = vadd.f32 %v1332, %v1348
  %v1365 = vadd.f32 %v1333, %v1349
  %v1366 = vadd.f32 %v1334, %v1350
  %v1367 = vadd.f32 %v1335, %v1351
  %v1368 = vadd.f32 %v1336, %v1352
  %v1369 = vadd.f32 %v1337, %v1353
  %v1370 = vadd.f32 %v1338, %v1354
  %v1371 = vadd.f32 %v1339, %v1355
  %v1372 = vmax.f32 %v1356, 0.0
  %v1373 = vmax.f32 %v1357, 0.0
  %v1374 = vmax.f32 %v1358, 0.0
  %v1375 = vmax.f32 %v1359, 0.0
  %v1376 = vmax.f32 %v1360, 0.0
  %v1377 = vmax.f32 %v1361, 0.0
  %v1378 = vmax.f32 %v1362, 0.0
  %v1379 = vmax.f32 %v1363, 0.0
  %v1380 = vmax.f32 %v1364, 0.0
  %v1381 = vmax.f32 %v1365, 0.0
  %v1382 = vmax.f32 %v1366, 0.0
  %v1383 = vmax.f32 %v1367, 0.0
  %v1384 = vmax.f32 %v1368, 0.0
  %v1385 = vmax.f32 %v1369, 0.0
  %v1386 = vmax.f32 %v1370, 0.0
  %v1387 = vmax.f32 %v1371, 0.0
  %v1388 = vpack.c.bf16 %v1373, %v1372
  %v1389 = vpack.c.bf16 %v1375, %v1374
  %v1390 = vpack.c.bf16 %v1377, %v1376
  %v1391 = vpack.c.bf16 %v1379, %v1378
  %v1392 = vpack.c.bf16 %v1381, %v1380
  %v1393 = vpack.c.bf16 %v1383, %v1382
  %v1394 = vpack.c.bf16 %v1385, %v1384
  %v1395 = vpack.c.bf16 %v1387, %v1386
  %v1404 = vunpack.c.l.b16 %v1388
  %v1405 = vunpack.c.h.b16 %v1388
  %v1406 = vunpack.c.l.b16 %v1389
  %v1407 = vunpack.c.h.b16 %v1389
  %v1408 = vunpack.c.l.b16 %v1390
  %v1409 = vunpack.c.h.b16 %v1390
  %v1410 = vunpack.c.l.b16 %v1391
  %v1411 = vunpack.c.h.b16 %v1391
  %v1412 = vunpack.c.l.b16 %v1392
  %v1413 = vunpack.c.h.b16 %v1392
  %v1414 = vunpack.c.l.b16 %v1393
  %v1415 = vunpack.c.h.b16 %v1393
  %v1416 = vunpack.c.l.b16 %v1394
  %v1417 = vunpack.c.h.b16 %v1394
  %v1418 = vunpack.c.l.b16 %v1395
  %v1419 = vunpack.c.h.b16 %v1395
  %v1420 = vpack.c.b16 %v1404, %v1404
  %v1421 = vpack.c.b16 %v1405, %v1405
  %v1422 = vpack.c.b16 %v1406, %v1406
  %v1423 = vpack.c.b16 %v1407, %v1407
  %v1424 = vpack.c.b16 %v1408, %v1408
  %v1425 = vpack.c.b16 %v1409, %v1409
  %v1426 = vpack.c.b16 %v1410, %v1410
  %v1427 = vpack.c.b16 %v1411, %v1411
  %v1428 = vpack.c.b16 %v1412, %v1412
  %v1429 = vpack.c.b16 %v1413, %v1413
  %v1430 = vpack.c.b16 %v1414, %v1414
  %v1431 = vpack.c.b16 %v1415, %v1415
  %v1432 = vpack.c.b16 %v1416, %v1416
  %v1433 = vpack.c.b16 %v1417, %v1417
  %v1434 = vpack.c.b16 %v1418, %v1418
  %v1435 = vpack.c.b16 %v1419, %v1419
  %1452 = vst [vmem:[%s7] sm:$0xf] %v1420
  %1453 = vst [vmem:[%s7 + $0x4] sm:$0xf] %v1421
  %1454 = vst [vmem:[%s7 + $0x8] sm:$0xf] %v1422
  %1455 = vst [vmem:[%s7 + $0xc] sm:$0xf] %v1423
  %1456 = vst [vmem:[%s7 + $0x10] sm:$0xf] %v1424
  %1457 = vst [vmem:[%s7 + $0x14] sm:$0xf] %v1425
  %1458 = vst [vmem:[%s7 + $0x18] sm:$0xf] %v1426
  %1459 = vst [vmem:[%s7 + $0x1c] sm:$0xf] %v1427
  %1460 = vst [vmem:[%s7 + $0x20] sm:$0xf] %v1428
  %1461 = vst [vmem:[%s7 + $0x24] sm:$0xf] %v1429
  %1462 = vst [vmem:[%s7 + $0x28] sm:$0xf] %v1430
  %1463 = vst [vmem:[%s7 + $0x2c] sm:$0xf] %v1431
  %1464 = vst [vmem:[%s7 + $0x30] sm:$0xf] %v1432
  %1465 = vst [vmem:[%s7 + $0x34] sm:$0xf] %v1433
  %1466 = vst [vmem:[%s7 + $0x38] sm:$0xf] %v1434
  %1467 = vst [vmem:[%s7 + $0x3c] sm:$0xf] %v1435
  // Predicated region
  $region30: #{resnet1d_forward.12} parent=0 // pred_check
    _
  $region31: #{resnet1d_forward.12} parent=0 // pred_check_branch
    %1469 = sbr.rel (0) target = $region33
  $region32: #{resnet1d_forward.12} parent=0 // pred_region
    _
  $region33: #{resnet1d_forward.12} parent=0 // pred_fallthru
    _
  // Predicated region
  $region34: #{resnet1d_forward.12} parent=0 // pred_check
    _
  $region35: #{resnet1d_forward.12} parent=0 // pred_check_branch
    %1471 = sbr.rel (0) target = $region37
  $region36: #{resnet1d_forward.12} parent=0 // pred_region
    _
  $region37: #{resnet1d_forward.12} parent=0 // pred_fallthru
    _

// kernel: resnet1d_forward.13
$region0: #{resnet1d_forward.13}
  #allocation0 [shape = 'u32[]', space=smem, size = 0x4, offset = 0x4, fixed_abs, tag = 'smem constant byte address 0x4 - core index']
  #allocation1 [shape = 'u32[144,128]{1,0:T(1,128)}', space=vmem, size = 0x12000, scoped, tag = 'internal scratch']
  %s0 = inlined_call_operand.vmem [shape: bf16[10,16,128], index: 0, kind: input, shape index: {}]
  %s1 = inlined_call_operand.vmem [shape: bf16[3,128,128], index: 1, kind: input, shape index: {}]
  %s2 = inlined_call_operand.vmem [shape: f32[1,128], index: 2, kind: input, shape index: {}, may-alias: {2,5,8}]
  %s3 = inlined_call_operand.vmem [shape: f32[1,128], index: 3, kind: input, shape index: {}, may-alias: {3,6,9}]
  %s4 = inlined_call_operand.vmem [shape: bf16[3,128,128], index: 4, kind: input, shape index: {}]
  %s5 = inlined_call_operand.vmem [shape: f32[1,128], index: 5, kind: input, shape index: {}, may-alias: {2,5,8}]
  %s6 = inlined_call_operand.vmem [shape: f32[1,128], index: 6, kind: input, shape index: {}, may-alias: {3,6,9}]
  %s7 = inlined_call_operand.vmem [shape: bf16[1,128,128], index: 7, kind: input, shape index: {}]
  %s8 = inlined_call_operand.vmem [shape: f32[1,128], index: 8, kind: input, shape index: {}, may-alias: {2,5,8}]
  %s9 = inlined_call_operand.vmem [shape: f32[1,128], index: 9, kind: input, shape index: {}, may-alias: {3,6,9}]
  %s10 = inlined_call_operand.vmem [shape: bf16[4,16,128], index: 10, kind: output, shape index: {}]
  %s11 = sld [smem:[#allocation0]]
  $region50: #{resnet1d_forward.13} parent=0
    _
  %s13 = ssub.s32 1, %s11
  %s14 = scalar_select 0, %s13, %s11
  // Predicated region
  $region2: #{resnet1d_forward.13} parent=0 // pred_check
    _
  $region3: #{resnet1d_forward.13} parent=0 // pred_check_branch
    %16 = sbr.rel (0) target = $region5
  $region4: #{resnet1d_forward.13} parent=0 // pred_region
    _
  $region5: #{resnet1d_forward.13} parent=0 // pred_fallthru
    _
  // Predicated region
  $region6: #{resnet1d_forward.13} parent=0 // pred_check
    _
  $region7: #{resnet1d_forward.13} parent=0 // pred_check_branch
    %18 = sbr.rel (0) target = $region9
  $region8: #{resnet1d_forward.13} parent=0 // pred_region
    _
  $region9: #{resnet1d_forward.13} parent=0 // pred_fallthru
    _
  // Predicated region
  $region10: #{resnet1d_forward.13} parent=0 // pred_check
    _
  $region11: #{resnet1d_forward.13} parent=0 // pred_check_branch
    %20 = sbr.rel (0) target = $region13
  $region12: #{resnet1d_forward.13} parent=0 // pred_region
    _
  $region13: #{resnet1d_forward.13} parent=0 // pred_fallthru
    _
  // Predicated region
  $region14: #{resnet1d_forward.13} parent=0 // pred_check
    _
  $region15: #{resnet1d_forward.13} parent=0 // pred_check_branch
    %22 = sbr.rel (0) target = $region17
  $region16: #{resnet1d_forward.13} parent=0 // pred_region
    _
  $region17: #{resnet1d_forward.13} parent=0 // pred_fallthru
    _
  // Predicated region
  $region18: #{resnet1d_forward.13} parent=0 // pred_check
    _
  $region19: #{resnet1d_forward.13} parent=0 // pred_check_branch
    %24 = sbr.rel (0) target = $region21
  $region20: #{resnet1d_forward.13} parent=0 // pred_region
    _
  $region21: #{resnet1d_forward.13} parent=0 // pred_fallthru
    _
  // Predicated region
  $region22: #{resnet1d_forward.13} parent=0 // pred_check
    _
  $region23: #{resnet1d_forward.13} parent=0 // pred_check_branch
    %26 = sbr.rel (0) target = $region25
  $region24: #{resnet1d_forward.13} parent=0 // pred_region
    _
  $region25: #{resnet1d_forward.13} parent=0 // pred_fallthru
    _
  // Predicated region
  $region26: #{resnet1d_forward.13} parent=0 // pred_check
    _
  $region27: #{resnet1d_forward.13} parent=0 // pred_check_branch
    %28 = sbr.rel (0) target = $region29
  $region28: #{resnet1d_forward.13} parent=0 // pred_region
    _
  $region29: #{resnet1d_forward.13} parent=0 // pred_fallthru
    _
  // Predicated region
  $region30: #{resnet1d_forward.13} parent=0 // pred_check
    _
  $region31: #{resnet1d_forward.13} parent=0 // pred_check_branch
    %30 = sbr.rel (0) target = $region33
  $region32: #{resnet1d_forward.13} parent=0 // pred_region
    _
  $region33: #{resnet1d_forward.13} parent=0 // pred_fallthru
    _
  // Predicated region
  $region34: #{resnet1d_forward.13} parent=0 // pred_check
    _
  $region35: #{resnet1d_forward.13} parent=0 // pred_check_branch
    %32 = sbr.rel (0) target = $region37
  $region36: #{resnet1d_forward.13} parent=0 // pred_region
    _
  $region37: #{resnet1d_forward.13} parent=0 // pred_fallthru
    _
  // Predicated region
  $region38: #{resnet1d_forward.13} parent=0 // pred_check
    _
  $region39: #{resnet1d_forward.13} parent=0 // pred_check_branch
    %34 = sbr.rel (0) target = $region41
  $region40: #{resnet1d_forward.13} parent=0 // pred_region
    _
  $region41: #{resnet1d_forward.13} parent=0 // pred_fallthru
    _
  %s36 = scalar_lea.vmem %s0, 8
  %v37 = vld [vmem:[%s36] sm:$0xf]
  %v38 = vld [vmem:[%s36 + $0x4] sm:$0xf]
  %s39 = scalar_lea.vmem %s0, 24
  %v40 = vld [vmem:[%s39] sm:$0xf]
  %v41 = vld [vmem:[%s39 + $0x4] sm:$0xf]
  %s42 = scalar_lea.vmem %s0, 40
  %v43 = vld [vmem:[%s42] sm:$0xf]
  %v44 = vld [vmem:[%s42 + $0x4] sm:$0xf]
  %s45 = scalar_lea.vmem %s0, 56
  %v46 = vld [vmem:[%s45] sm:$0xf]
  %v47 = vld [vmem:[%s45 + $0x4] sm:$0xf]
  %v50 = vunpack.c.l.b16 %v37
  %v51 = vunpack.c.l.b16 %v38
  %v52 = vpack.c.b16 %v51, %v50
  %v56 = vunpack.c.l.b16 %v40
  %v57 = vunpack.c.l.b16 %v41
  %v58 = vpack.c.b16 %v57, %v56
  %v62 = vunpack.c.l.b16 %v43
  %v63 = vunpack.c.l.b16 %v44
  %v64 = vpack.c.b16 %v63, %v62
  %v68 = vunpack.c.l.b16 %v46
  %v69 = vunpack.c.l.b16 %v47
  %v70 = vpack.c.b16 %v69, %v68
  %v72 = vld [vmem:[%s0] sm:$0xf]
  %v73 = vld [vmem:[%s0 + $0x4] sm:$0xf]
  %s74 = scalar_lea.vmem %s0, 16
  %v75 = vld [vmem:[%s74] sm:$0xf]
  %v76 = vld [vmem:[%s74 + $0x4] sm:$0xf]
  %s77 = scalar_lea.vmem %s0, 32
  %v78 = vld [vmem:[%s77] sm:$0xf]
  %v79 = vld [vmem:[%s77 + $0x4] sm:$0xf]
  %s80 = scalar_lea.vmem %s0, 48
  %v81 = vld [vmem:[%s80] sm:$0xf]
  %v82 = vld [vmem:[%s80 + $0x4] sm:$0xf]
  %v85 = vunpack.c.l.b16 %v72
  %v86 = vunpack.c.l.b16 %v73
  %v87 = vpack.c.b16 %v86, %v85
  %v91 = vunpack.c.l.b16 %v75
  %v92 = vunpack.c.l.b16 %v76
  %v93 = vpack.c.b16 %v92, %v91
  %v97 = vunpack.c.l.b16 %v78
  %v98 = vunpack.c.l.b16 %v79
  %v99 = vpack.c.b16 %v98, %v97
  %v103 = vunpack.c.l.b16 %v81
  %v104 = vunpack.c.l.b16 %v82
  %v105 = vpack.c.b16 %v104, %v103
  %v107 = vld [vmem:[%s1] sm:$0xf]
  %v108 = vld [vmem:[%s1 + $0x4] sm:$0xf]
  %v109 = vld [vmem:[%s1 + $0x8] sm:$0xf]
  %v110 = vld [vmem:[%s1 + $0xc] sm:$0xf]
  %v111 = vld [vmem:[%s1 + $0x10] sm:$0xf]
  %v112 = vld [vmem:[%s1 + $0x14] sm:$0xf]
  %v113 = vld [vmem:[%s1 + $0x18] sm:$0xf]
  %v114 = vld [vmem:[%s1 + $0x1c] sm:$0xf]
  %v115 = vld [vmem:[%s1 + $0x20] sm:$0xf]
  %v116 = vld [vmem:[%s1 + $0x24] sm:$0xf]
  %v117 = vld [vmem:[%s1 + $0x28] sm:$0xf]
  %v118 = vld [vmem:[%s1 + $0x2c] sm:$0xf]
  %v119 = vld [vmem:[%s1 + $0x30] sm:$0xf]
  %v120 = vld [vmem:[%s1 + $0x34] sm:$0xf]
  %v121 = vld [vmem:[%s1 + $0x38] sm:$0xf]
  %v122 = vld [vmem:[%s1 + $0x3c] sm:$0xf]
  %s123 = scalar_lea.vmem %s1, 64
  %v124 = vld [vmem:[%s123] sm:$0xf]
  %v125 = vld [vmem:[%s123 + $0x4] sm:$0xf]
  %v126 = vld [vmem:[%s123 + $0x8] sm:$0xf]
  %v127 = vld [vmem:[%s123 + $0xc] sm:$0xf]
  %v128 = vld [vmem:[%s123 + $0x10] sm:$0xf]
  %v129 = vld [vmem:[%s123 + $0x14] sm:$0xf]
  %v130 = vld [vmem:[%s123 + $0x18] sm:$0xf]
  %v131 = vld [vmem:[%s123 + $0x1c] sm:$0xf]
  %v132 = vld [vmem:[%s123 + $0x20] sm:$0xf]
  %v133 = vld [vmem:[%s123 + $0x24] sm:$0xf]
  %v134 = vld [vmem:[%s123 + $0x28] sm:$0xf]
  %v135 = vld [vmem:[%s123 + $0x2c] sm:$0xf]
  %v136 = vld [vmem:[%s123 + $0x30] sm:$0xf]
  %v137 = vld [vmem:[%s123 + $0x34] sm:$0xf]
  %v138 = vld [vmem:[%s123 + $0x38] sm:$0xf]
  %v139 = vld [vmem:[%s123 + $0x3c] sm:$0xf]
  %v156 = vunpack.c.l.b16 %v124
  %v157 = vunpack.c.l.b16 %v125
  %v158 = vunpack.c.l.b16 %v126
  %v159 = vunpack.c.l.b16 %v127
  %v160 = vunpack.c.l.b16 %v128
  %v161 = vunpack.c.l.b16 %v129
  %v162 = vunpack.c.l.b16 %v130
  %v163 = vunpack.c.l.b16 %v131
  %v164 = vunpack.c.l.b16 %v132
  %v165 = vunpack.c.l.b16 %v133
  %v166 = vunpack.c.l.b16 %v134
  %v167 = vunpack.c.l.b16 %v135
  %v168 = vunpack.c.l.b16 %v136
  %v169 = vunpack.c.l.b16 %v137
  %v170 = vunpack.c.l.b16 %v138
  %v171 = vunpack.c.l.b16 %v139
  %v172 = vpack.c.b16 %v157, %v156
  %v173 = vpack.c.b16 %v159, %v158
  %v174 = vpack.c.b16 %v161, %v160
  %v175 = vpack.c.b16 %v163, %v162
  %v176 = vpack.c.b16 %v165, %v164
  %v177 = vpack.c.b16 %v167, %v166
  %v178 = vpack.c.b16 %v169, %v168
  %v179 = vpack.c.b16 %v171, %v170
  %188 = vmatprep.subr.bf16.mxu0 0
  %189 = vmatpush1.bf16.msra.mxu0 %v179
  %190 = vmatprep.subr.bf16.mxu0 0
  %191 = vmatpush1.bf16.msra.mxu0 %v178
  %192 = vmatprep.subr.bf16.mxu0 0
  %193 = vmatpush1.bf16.msra.mxu0 %v177
  %194 = vmatprep.subr.bf16.mxu0 0
  %195 = vmatpush1.bf16.msra.mxu0 %v176
  %196 = vmatprep.subr.bf16.mxu0 0
  %197 = vmatpush1.bf16.msra.mxu0 %v175
  %198 = vmatprep.subr.bf16.mxu0 0
  %199 = vmatpush1.bf16.msra.mxu0 %v174
  %200 = vmatprep.subr.bf16.mxu0 0
  %201 = vmatpush1.bf16.msra.mxu0 %v173
  %202 = vmatprep.subr.bf16.mxu0 0
  %203 = vmatpush1.bf16.msra.mxu0 %v172
  %204 = vmatprep.subr.bf16.mxu0 0
  %205 = vmatpush2.bf16.msra.mxu0 0
  %206 = vmatprep.subr.bf16.mxu0 0
  %207 = vmatpush2.bf16.msra.mxu0 0
  %208 = vmatprep.subr.bf16.mxu0 0
  %209 = vmatpush2.bf16.msra.mxu0 0
  %210 = vmatprep.subr.bf16.mxu0 0
  %211 = vmatpush2.bf16.msra.mxu0 0
  %212 = vmatprep.subr.bf16.mxu0 0
  %213 = vmatpush2.bf16.msra.mxu0 0
  %214 = vmatprep.subr.bf16.mxu0 0
  %215 = vmatpush2.bf16.msra.mxu0 0
  %216 = vmatprep.subr.bf16.mxu0 0
  %217 = vmatpush2.bf16.msra.mxu0 0
  %218 = vmatprep.subr.bf16.mxu0 0
  %219 = vmatpush2.bf16.msra.mxu0 0
  %220 = vmatprep.mubr.bf16.mxu0 0
  %221 = vmatmul.mubr.bf16.gmra.mxu0 %v52
  %v222 = vpop.f32.mrf.mxu0
  %v223 = vadd.f32 0.0, %v222
  %v224 = vpop.f32.mrf.mxu0
  %v225 = vpop.f32.mrf.mxu0
  %v226 = vadd.f32 0.0, %v225
  %v227 = vpop.f32.mrf.mxu0
  %228 = vmatprep.mubr.bf16.mxu0 0
  %229 = vmatmul.mubr.bf16.gmra.mxu0 %v58
  %v230 = vpop.f32.mrf.mxu0
  %v231 = vadd.f32 0.0, %v230
  %v232 = vpop.f32.mrf.mxu0
  %v233 = vpop.f32.mrf.mxu0
  %v234 = vadd.f32 0.0, %v233
  %v235 = vpop.f32.mrf.mxu0
  %236 = vmatprep.mubr.bf16.mxu0 0
  %237 = vmatmul.mubr.bf16.gmra.mxu0 %v64
  %v238 = vpop.f32.mrf.mxu0
  %v239 = vadd.f32 0.0, %v238
  %v240 = vpop.f32.mrf.mxu0
  %v241 = vpop.f32.mrf.mxu0
  %v242 = vadd.f32 0.0, %v241
  %v243 = vpop.f32.mrf.mxu0
  %244 = vmatprep.mubr.bf16.mxu0 0
  %245 = vmatmul.mubr.bf16.gmra.mxu0 %v70
  %v246 = vpop.f32.mrf.mxu0
  %v247 = vadd.f32 0.0, %v246
  %v248 = vpop.f32.mrf.mxu0
  %v249 = vpop.f32.mrf.mxu0
  %v250 = vadd.f32 0.0, %v249
  %v251 = vpop.f32.mrf.mxu0
  %252 = vdwg.mxu0
  %v269 = vunpack.c.l.b16 %v107
  %v270 = vunpack.c.l.b16 %v108
  %v271 = vunpack.c.l.b16 %v109
  %v272 = vunpack.c.l.b16 %v110
  %v273 = vunpack.c.l.b16 %v111
  %v274 = vunpack.c.l.b16 %v112
  %v275 = vunpack.c.l.b16 %v113
  %v276 = vunpack.c.l.b16 %v114
  %v277 = vunpack.c.l.b16 %v115
  %v278 = vunpack.c.l.b16 %v116
  %v279 = vunpack.c.l.b16 %v117
  %v280 = vunpack.c.l.b16 %v118
  %v281 = vunpack.c.l.b16 %v119
  %v282 = vunpack.c.l.b16 %v120
  %v283 = vunpack.c.l.b16 %v121
  %v284 = vunpack.c.l.b16 %v122
  %v285 = vpack.c.b16 %v270, %v269
  %v286 = vpack.c.b16 %v272, %v271
  %v287 = vpack.c.b16 %v274, %v273
  %v288 = vpack.c.b16 %v276, %v275
  %v289 = vpack.c.b16 %v278, %v277
  %v290 = vpack.c.b16 %v280, %v279
  %v291 = vpack.c.b16 %v282, %v281
  %v292 = vpack.c.b16 %v284, %v283
  %301 = vmatprep.subr.bf16.mxu0 0
  %302 = vmatpush1.bf16.msra.mxu0 %v292
  %303 = vmatprep.subr.bf16.mxu0 0
  %304 = vmatpush1.bf16.msra.mxu0 %v291
  %305 = vmatprep.subr.bf16.mxu0 0
  %306 = vmatpush1.bf16.msra.mxu0 %v290
  %307 = vmatprep.subr.bf16.mxu0 0
  %308 = vmatpush1.bf16.msra.mxu0 %v289
  %309 = vmatprep.subr.bf16.mxu0 0
  %310 = vmatpush1.bf16.msra.mxu0 %v288
  %311 = vmatprep.subr.bf16.mxu0 0
  %312 = vmatpush1.bf16.msra.mxu0 %v287
  %313 = vmatprep.subr.bf16.mxu0 0
  %314 = vmatpush1.bf16.msra.mxu0 %v286
  %315 = vmatprep.subr.bf16.mxu0 0
  %316 = vmatpush1.bf16.msra.mxu0 %v285
  %317 = vmatprep.subr.bf16.mxu0 0
  %318 = vmatpush2.bf16.msra.mxu0 0
  %319 = vmatprep.subr.bf16.mxu0 0
  %320 = vmatpush2.bf16.msra.mxu0 0
  %321 = vmatprep.subr.bf16.mxu0 0
  %322 = vmatpush2.bf16.msra.mxu0 0
  %323 = vmatprep.subr.bf16.mxu0 0
  %324 = vmatpush2.bf16.msra.mxu0 0
  %325 = vmatprep.subr.bf16.mxu0 0
  %326 = vmatpush2.bf16.msra.mxu0 0
  %327 = vmatprep.subr.bf16.mxu0 0
  %328 = vmatpush2.bf16.msra.mxu0 0
  %329 = vmatprep.subr.bf16.mxu0 0
  %330 = vmatpush2.bf16.msra.mxu0 0
  %331 = vmatprep.subr.bf16.mxu0 0
  %332 = vmatpush2.bf16.msra.mxu0 0
  %333 = vmatprep.mubr.bf16.mxu0 0
  %334 = vmatmul.mubr.bf16.gmra.mxu0 %v87
  %v335 = vpop.f32.mrf.mxu0
  %v336 = vadd.f32 %v223, %v335
  %v337 = vpop.f32.mrf.mxu0
  %v338 = vpop.f32.mrf.mxu0
  %v339 = vadd.f32 %v226, %v338
  %v340 = vpop.f32.mrf.mxu0
  %341 = vmatprep.mubr.bf16.mxu0 0
  %342 = vmatmul.mubr.bf16.gmra.mxu0 %v93
  %v343 = vpop.f32.mrf.mxu0
  %v344 = vadd.f32 %v231, %v343
  %v345 = vpop.f32.mrf.mxu0
  %v346 = vpop.f32.mrf.mxu0
  %v347 = vadd.f32 %v234, %v346
  %v348 = vpop.f32.mrf.mxu0
  %349 = vmatprep.mubr.bf16.mxu0 0
  %350 = vmatmul.mubr.bf16.gmra.mxu0 %v99
  %v351 = vpop.f32.mrf.mxu0
  %v352 = vadd.f32 %v239, %v351
  %v353 = vpop.f32.mrf.mxu0
  %v354 = vpop.f32.mrf.mxu0
  %v355 = vadd.f32 %v242, %v354
  %v356 = vpop.f32.mrf.mxu0
  %357 = vmatprep.mubr.bf16.mxu0 0
  %358 = vmatmul.mubr.bf16.gmra.mxu0 %v105
  %v359 = vpop.f32.mrf.mxu0
  %v360 = vadd.f32 %v247, %v359
  %v361 = vpop.f32.mrf.mxu0
  %v362 = vpop.f32.mrf.mxu0
  %v363 = vadd.f32 %v250, %v362
  %v364 = vpop.f32.mrf.mxu0
  %365 = vdwg.mxu0
  %s366 = scalar_lea.vmem %s0, 64
  %v367 = vld [vmem:[%s366] sm:$0xf]
  %v368 = vld [vmem:[%s366 + $0x4] sm:$0xf]
  %v371 = vunpack.c.l.b16 %v367
  %v372 = vunpack.c.l.b16 %v368
  %v373 = vpack.c.b16 %v372, %v371
  %s375 = scalar_lea.vmem %s1, 128
  %v376 = vld [vmem:[%s375] sm:$0xf]
  %v377 = vld [vmem:[%s375 + $0x4] sm:$0xf]
  %v378 = vld [vmem:[%s375 + $0x8] sm:$0xf]
  %v379 = vld [vmem:[%s375 + $0xc] sm:$0xf]
  %v380 = vld [vmem:[%s375 + $0x10] sm:$0xf]
  %v381 = vld [vmem:[%s375 + $0x14] sm:$0xf]
  %v382 = vld [vmem:[%s375 + $0x18] sm:$0xf]
  %v383 = vld [vmem:[%s375 + $0x1c] sm:$0xf]
  %v384 = vld [vmem:[%s375 + $0x20] sm:$0xf]
  %v385 = vld [vmem:[%s375 + $0x24] sm:$0xf]
  %v386 = vld [vmem:[%s375 + $0x28] sm:$0xf]
  %v387 = vld [vmem:[%s375 + $0x2c] sm:$0xf]
  %v388 = vld [vmem:[%s375 + $0x30] sm:$0xf]
  %v389 = vld [vmem:[%s375 + $0x34] sm:$0xf]
  %v390 = vld [vmem:[%s375 + $0x38] sm:$0xf]
  %v391 = vld [vmem:[%s375 + $0x3c] sm:$0xf]
  %v408 = vunpack.c.l.b16 %v376
  %v409 = vunpack.c.l.b16 %v377
  %v410 = vunpack.c.l.b16 %v378
  %v411 = vunpack.c.l.b16 %v379
  %v412 = vunpack.c.l.b16 %v380
  %v413 = vunpack.c.l.b16 %v381
  %v414 = vunpack.c.l.b16 %v382
  %v415 = vunpack.c.l.b16 %v383
  %v416 = vunpack.c.l.b16 %v384
  %v417 = vunpack.c.l.b16 %v385
  %v418 = vunpack.c.l.b16 %v386
  %v419 = vunpack.c.l.b16 %v387
  %v420 = vunpack.c.l.b16 %v388
  %v421 = vunpack.c.l.b16 %v389
  %v422 = vunpack.c.l.b16 %v390
  %v423 = vunpack.c.l.b16 %v391
  %v424 = vpack.c.b16 %v409, %v408
  %v425 = vpack.c.b16 %v411, %v410
  %v426 = vpack.c.b16 %v413, %v412
  %v427 = vpack.c.b16 %v415, %v414
  %v428 = vpack.c.b16 %v417, %v416
  %v429 = vpack.c.b16 %v419, %v418
  %v430 = vpack.c.b16 %v421, %v420
  %v431 = vpack.c.b16 %v423, %v422
  %440 = vmatprep.subr.bf16.mxu0 0
  %441 = vmatpush1.bf16.msra.mxu0 %v431
  %442 = vmatprep.subr.bf16.mxu0 0
  %443 = vmatpush1.bf16.msra.mxu0 %v430
  %444 = vmatprep.subr.bf16.mxu0 0
  %445 = vmatpush1.bf16.msra.mxu0 %v429
  %446 = vmatprep.subr.bf16.mxu0 0
  %447 = vmatpush1.bf16.msra.mxu0 %v428
  %448 = vmatprep.subr.bf16.mxu0 0
  %449 = vmatpush1.bf16.msra.mxu0 %v427
  %450 = vmatprep.subr.bf16.mxu0 0
  %451 = vmatpush1.bf16.msra.mxu0 %v426
  %452 = vmatprep.subr.bf16.mxu0 0
  %453 = vmatpush1.bf16.msra.mxu0 %v425
  %454 = vmatprep.subr.bf16.mxu0 0
  %455 = vmatpush1.bf16.msra.mxu0 %v424
  %456 = vmatprep.subr.bf16.mxu0 0
  %457 = vmatpush2.bf16.msra.mxu0 0
  %458 = vmatprep.subr.bf16.mxu0 0
  %459 = vmatpush2.bf16.msra.mxu0 0
  %460 = vmatprep.subr.bf16.mxu0 0
  %461 = vmatpush2.bf16.msra.mxu0 0
  %462 = vmatprep.subr.bf16.mxu0 0
  %463 = vmatpush2.bf16.msra.mxu0 0
  %464 = vmatprep.subr.bf16.mxu0 0
  %465 = vmatpush2.bf16.msra.mxu0 0
  %466 = vmatprep.subr.bf16.mxu0 0
  %467 = vmatpush2.bf16.msra.mxu0 0
  %468 = vmatprep.subr.bf16.mxu0 0
  %469 = vmatpush2.bf16.msra.mxu0 0
  %470 = vmatprep.subr.bf16.mxu0 0
  %471 = vmatpush2.bf16.msra.mxu0 0
  %472 = vmatprep.mubr.bf16.mxu0 0
  %473 = vmatmul.mubr.bf16.gmra.mxu0 %v93
  %v474 = vpop.f32.mrf.mxu0
  %v475 = vadd.f32 0.0, %v474
  %v476 = vpop.f32.mrf.mxu0
  %v477 = vpop.f32.mrf.mxu0
  %v478 = vadd.f32 0.0, %v477
  %v479 = vpop.f32.mrf.mxu0
  %480 = vmatprep.mubr.bf16.mxu0 0
  %481 = vmatmul.mubr.bf16.gmra.mxu0 %v99
  %v482 = vpop.f32.mrf.mxu0
  %v483 = vadd.f32 0.0, %v482
  %v484 = vpop.f32.mrf.mxu0
  %v485 = vpop.f32.mrf.mxu0
  %v486 = vadd.f32 0.0, %v485
  %v487 = vpop.f32.mrf.mxu0
  %488 = vmatprep.mubr.bf16.mxu0 0
  %489 = vmatmul.mubr.bf16.gmra.mxu0 %v105
  %v490 = vpop.f32.mrf.mxu0
  %v491 = vadd.f32 0.0, %v490
  %v492 = vpop.f32.mrf.mxu0
  %v493 = vpop.f32.mrf.mxu0
  %v494 = vadd.f32 0.0, %v493
  %v495 = vpop.f32.mrf.mxu0
  %496 = vmatprep.mubr.bf16.mxu0 0
  %497 = vmatmul.mubr.bf16.gmra.mxu0 %v373
  %v498 = vpop.f32.mrf.mxu0
  %v499 = vadd.f32 0.0, %v498
  %v500 = vpop.f32.mrf.mxu0
  %v501 = vpop.f32.mrf.mxu0
  %v502 = vadd.f32 0.0, %v501
  %v503 = vpop.f32.mrf.mxu0
  %504 = vdwg.mxu0
  %v505 = vadd.f32 %v336, %v475
  %v506 = vadd.f32 %v339, %v478
  %v507 = vadd.f32 %v344, %v483
  %v508 = vadd.f32 %v347, %v486
  %v509 = vadd.f32 %v352, %v491
  %v510 = vadd.f32 %v355, %v494
  %v511 = vadd.f32 %v360, %v499
  %v512 = vadd.f32 %v363, %v502
  %v513 = vld [vmem:[%s2] sm:$0x1]
  %v515 = vlaneseq
  %v516 = vshrl.u32 %v515, 7
  %v517 = vsub.s32 0, %v516
  %v518 = vrot.slane %v513, %v517
  %v520 = vmul.f32 %v505, %v518
  %v521 = vmul.f32 %v506, %v518
  %v522 = vmul.f32 %v507, %v518
  %v523 = vmul.f32 %v508, %v518
  %v524 = vmul.f32 %v509, %v518
  %v525 = vmul.f32 %v510, %v518
  %v526 = vmul.f32 %v511, %v518
  %v527 = vmul.f32 %v512, %v518
  %v528 = vld [vmem:[%s3] sm:$0x1]
  %v530 = vlaneseq
  %v531 = vshrl.u32 %v530, 7
  %v532 = vsub.s32 0, %v531
  %v533 = vrot.slane %v528, %v532
  %v535 = vadd.f32 %v520, %v533
  %v536 = vadd.f32 %v521, %v533
  %v537 = vadd.f32 %v522, %v533
  %v538 = vadd.f32 %v523, %v533
  %v539 = vadd.f32 %v524, %v533
  %v540 = vadd.f32 %v525, %v533
  %v541 = vadd.f32 %v526, %v533
  %v542 = vadd.f32 %v527, %v533
  %v543 = vmax.f32 %v535, 0.0
  %v544 = vmax.f32 %v536, 0.0
  %v545 = vmax.f32 %v537, 0.0
  %v546 = vmax.f32 %v538, 0.0
  %v547 = vmax.f32 %v539, 0.0
  %v548 = vmax.f32 %v540, 0.0
  %v549 = vmax.f32 %v541, 0.0
  %v550 = vmax.f32 %v542, 0.0
  %v551 = vpack.c.bf16 0.0, 0.0
  %v552 = vpack.c.bf16 %v544, %v543
  %v553 = vpack.c.bf16 %v546, %v545
  %v554 = vpack.c.bf16 %v548, %v547
  %v555 = vld [vmem:[%s4] sm:$0xf]
  %v556 = vld [vmem:[%s4 + $0x4] sm:$0xf]
  %v557 = vld [vmem:[%s4 + $0x8] sm:$0xf]
  %v558 = vld [vmem:[%s4 + $0xc] sm:$0xf]
  %v559 = vld [vmem:[%s4 + $0x10] sm:$0xf]
  %v560 = vld [vmem:[%s4 + $0x14] sm:$0xf]
  %v561 = vld [vmem:[%s4 + $0x18] sm:$0xf]
  %v562 = vld [vmem:[%s4 + $0x1c] sm:$0xf]
  %v563 = vld [vmem:[%s4 + $0x20] sm:$0xf]
  %v564 = vld [vmem:[%s4 + $0x24] sm:$0xf]
  %v565 = vld [vmem:[%s4 + $0x28] sm:$0xf]
  %v566 = vld [vmem:[%s4 + $0x2c] sm:$0xf]
  %v567 = vld [vmem:[%s4 + $0x30] sm:$0xf]
  %v568 = vld [vmem:[%s4 + $0x34] sm:$0xf]
  %v569 = vld [vmem:[%s4 + $0x38] sm:$0xf]
  %v570 = vld [vmem:[%s4 + $0x3c] sm:$0xf]
  %v571 = vpack.c.bf16 %v550, %v549
  %s572 = scalar_lea.vmem %s4, 64
  %v573 = vld [vmem:[%s572] sm:$0xf]
  %v574 = vld [vmem:[%s572 + $0x4] sm:$0xf]
  %v575 = vld [vmem:[%s572 + $0x8] sm:$0xf]
  %v576 = vld [vmem:[%s572 + $0xc] sm:$0xf]
  %v577 = vld [vmem:[%s572 + $0x10] sm:$0xf]
  %v578 = vld [vmem:[%s572 + $0x14] sm:$0xf]
  %v579 = vld [vmem:[%s572 + $0x18] sm:$0xf]
  %v580 = vld [vmem:[%s572 + $0x1c] sm:$0xf]
  %v581 = vld [vmem:[%s572 + $0x20] sm:$0xf]
  %v582 = vld [vmem:[%s572 + $0x24] sm:$0xf]
  %v583 = vld [vmem:[%s572 + $0x28] sm:$0xf]
  %v584 = vld [vmem:[%s572 + $0x2c] sm:$0xf]
  %v585 = vld [vmem:[%s572 + $0x30] sm:$0xf]
  %v586 = vld [vmem:[%s572 + $0x34] sm:$0xf]
  %v587 = vld [vmem:[%s572 + $0x38] sm:$0xf]
  %v588 = vld [vmem:[%s572 + $0x3c] sm:$0xf]
  %v605 = vunpack.c.l.b16 %v573
  %v606 = vunpack.c.l.b16 %v574
  %v607 = vunpack.c.l.b16 %v575
  %v608 = vunpack.c.l.b16 %v576
  %v609 = vunpack.c.l.b16 %v577
  %v610 = vunpack.c.l.b16 %v578
  %v611 = vunpack.c.l.b16 %v579
  %v612 = vunpack.c.l.b16 %v580
  %v613 = vunpack.c.l.b16 %v581
  %v614 = vunpack.c.l.b16 %v582
  %v615 = vunpack.c.l.b16 %v583
  %v616 = vunpack.c.l.b16 %v584
  %v617 = vunpack.c.l.b16 %v585
  %v618 = vunpack.c.l.b16 %v586
  %v619 = vunpack.c.l.b16 %v587
  %v620 = vunpack.c.l.b16 %v588
  %v621 = vpack.c.b16 %v606, %v605
  %v622 = vpack.c.b16 %v608, %v607
  %v623 = vpack.c.b16 %v610, %v609
  %v624 = vpack.c.b16 %v612, %v611
  %v625 = vpack.c.b16 %v614, %v613
  %v626 = vpack.c.b16 %v616, %v615
  %v627 = vpack.c.b16 %v618, %v617
  %v628 = vpack.c.b16 %v620, %v619
  %637 = vmatprep.subr.bf16.mxu0 0
  %638 = vmatpush1.bf16.msra.mxu0 %v628
  %639 = vmatprep.subr.bf16.mxu0 0
  %640 = vmatpush1.bf16.msra.mxu0 %v627
  %641 = vmatprep.subr.bf16.mxu0 0
  %642 = vmatpush1.bf16.msra.mxu0 %v626
  %643 = vmatprep.subr.bf16.mxu0 0
  %644 = vmatpush1.bf16.msra.mxu0 %v625
  %645 = vmatprep.subr.bf16.mxu0 0
  %646 = vmatpush1.bf16.msra.mxu0 %v624
  %647 = vmatprep.subr.bf16.mxu0 0
  %648 = vmatpush1.bf16.msra.mxu0 %v623
  %649 = vmatprep.subr.bf16.mxu0 0
  %650 = vmatpush1.bf16.msra.mxu0 %v622
  %651 = vmatprep.subr.bf16.mxu0 0
  %652 = vmatpush1.bf16.msra.mxu0 %v621
  %653 = vmatprep.subr.bf16.mxu0 0
  %654 = vmatpush2.bf16.msra.mxu0 0
  %655 = vmatprep.subr.bf16.mxu0 0
  %656 = vmatpush2.bf16.msra.mxu0 0
  %657 = vmatprep.subr.bf16.mxu0 0
  %658 = vmatpush2.bf16.msra.mxu0 0
  %659 = vmatprep.subr.bf16.mxu0 0
  %660 = vmatpush2.bf16.msra.mxu0 0
  %661 = vmatprep.subr.bf16.mxu0 0
  %662 = vmatpush2.bf16.msra.mxu0 0
  %663 = vmatprep.subr.bf16.mxu0 0
  %664 = vmatpush2.bf16.msra.mxu0 0
  %665 = vmatprep.subr.bf16.mxu0 0
  %666 = vmatpush2.bf16.msra.mxu0 0
  %667 = vmatprep.subr.bf16.mxu0 0
  %668 = vmatpush2.bf16.msra.mxu0 0
  %669 = vmatprep.mubr.bf16.mxu0 0
  %670 = vmatmul.mubr.bf16.gmra.mxu0 %v552
  %v671 = vpop.f32.mrf.mxu0
  %v672 = vadd.f32 0.0, %v671
  %v673 = vpop.f32.mrf.mxu0
  %v674 = vpop.f32.mrf.mxu0
  %v675 = vadd.f32 0.0, %v674
  %v676 = vpop.f32.mrf.mxu0
  %677 = vmatprep.mubr.bf16.mxu0 0
  %678 = vmatmul.mubr.bf16.gmra.mxu0 %v553
  %v679 = vpop.f32.mrf.mxu0
  %v680 = vadd.f32 0.0, %v679
  %v681 = vpop.f32.mrf.mxu0
  %v682 = vpop.f32.mrf.mxu0
  %v683 = vadd.f32 0.0, %v682
  %v684 = vpop.f32.mrf.mxu0
  %685 = vmatprep.mubr.bf16.mxu0 0
  %686 = vmatmul.mubr.bf16.gmra.mxu0 %v554
  %v687 = vpop.f32.mrf.mxu0
  %v688 = vadd.f32 0.0, %v687
  %v689 = vpop.f32.mrf.mxu0
  %v690 = vpop.f32.mrf.mxu0
  %v691 = vadd.f32 0.0, %v690
  %v692 = vpop.f32.mrf.mxu0
  %693 = vmatprep.mubr.bf16.mxu0 0
  %694 = vmatmul.mubr.bf16.gmra.mxu0 %v571
  %v695 = vpop.f32.mrf.mxu0
  %v696 = vadd.f32 0.0, %v695
  %v697 = vpop.f32.mrf.mxu0
  %v698 = vpop.f32.mrf.mxu0
  %v699 = vadd.f32 0.0, %v698
  %v700 = vpop.f32.mrf.mxu0
  %701 = vdwg.mxu0
  %v718 = vunpack.c.l.b16 %v555
  %v719 = vunpack.c.l.b16 %v556
  %v720 = vunpack.c.l.b16 %v557
  %v721 = vunpack.c.l.b16 %v558
  %v722 = vunpack.c.l.b16 %v559
  %v723 = vunpack.c.l.b16 %v560
  %v724 = vunpack.c.l.b16 %v561
  %v725 = vunpack.c.l.b16 %v562
  %v726 = vunpack.c.l.b16 %v563
  %v727 = vunpack.c.l.b16 %v564
  %v728 = vunpack.c.l.b16 %v565
  %v729 = vunpack.c.l.b16 %v566
  %v730 = vunpack.c.l.b16 %v567
  %v731 = vunpack.c.l.b16 %v568
  %v732 = vunpack.c.l.b16 %v569
  %v733 = vunpack.c.l.b16 %v570
  %v734 = vpack.c.b16 %v719, %v718
  %v735 = vpack.c.b16 %v721, %v720
  %v736 = vpack.c.b16 %v723, %v722
  %v737 = vpack.c.b16 %v725, %v724
  %v738 = vpack.c.b16 %v727, %v726
  %v739 = vpack.c.b16 %v729, %v728
  %v740 = vpack.c.b16 %v731, %v730
  %v741 = vpack.c.b16 %v733, %v732
  %750 = vmatprep.subr.bf16.mxu0 0
  %751 = vmatpush1.bf16.msra.mxu0 %v741
  %752 = vmatprep.subr.bf16.mxu0 0
  %753 = vmatpush1.bf16.msra.mxu0 %v740
  %754 = vmatprep.subr.bf16.mxu0 0
  %755 = vmatpush1.bf16.msra.mxu0 %v739
  %756 = vmatprep.subr.bf16.mxu0 0
  %757 = vmatpush1.bf16.msra.mxu0 %v738
  %758 = vmatprep.subr.bf16.mxu0 0
  %759 = vmatpush1.bf16.msra.mxu0 %v737
  %760 = vmatprep.subr.bf16.mxu0 0
  %761 = vmatpush1.bf16.msra.mxu0 %v736
  %762 = vmatprep.subr.bf16.mxu0 0
  %763 = vmatpush1.bf16.msra.mxu0 %v735
  %764 = vmatprep.subr.bf16.mxu0 0
  %765 = vmatpush1.bf16.msra.mxu0 %v734
  %766 = vmatprep.subr.bf16.mxu0 0
  %767 = vmatpush2.bf16.msra.mxu0 0
  %768 = vmatprep.subr.bf16.mxu0 0
  %769 = vmatpush2.bf16.msra.mxu0 0
  %770 = vmatprep.subr.bf16.mxu0 0
  %771 = vmatpush2.bf16.msra.mxu0 0
  %772 = vmatprep.subr.bf16.mxu0 0
  %773 = vmatpush2.bf16.msra.mxu0 0
  %774 = vmatprep.subr.bf16.mxu0 0
  %775 = vmatpush2.bf16.msra.mxu0 0
  %776 = vmatprep.subr.bf16.mxu0 0
  %777 = vmatpush2.bf16.msra.mxu0 0
  %778 = vmatprep.subr.bf16.mxu0 0
  %779 = vmatpush2.bf16.msra.mxu0 0
  %780 = vmatprep.subr.bf16.mxu0 0
  %781 = vmatpush2.bf16.msra.mxu0 0
  %782 = vmatprep.mubr.bf16.mxu0 0
  %783 = vmatmul.mubr.bf16.gmra.mxu0 %v551
  %v784 = vpop.f32.mrf.mxu0
  %v785 = vadd.f32 %v672, %v784
  %v786 = vpop.f32.mrf.mxu0
  %v787 = vpop.f32.mrf.mxu0
  %v788 = vadd.f32 %v675, %v787
  %v789 = vpop.f32.mrf.mxu0
  %790 = vmatprep.mubr.bf16.mxu0 0
  %791 = vmatmul.mubr.bf16.gmra.mxu0 %v552
  %v792 = vpop.f32.mrf.mxu0
  %v793 = vadd.f32 %v680, %v792
  %v794 = vpop.f32.mrf.mxu0
  %v795 = vpop.f32.mrf.mxu0
  %v796 = vadd.f32 %v683, %v795
  %v797 = vpop.f32.mrf.mxu0
  %798 = vmatprep.mubr.bf16.mxu0 0
  %799 = vmatmul.mubr.bf16.gmra.mxu0 %v553
  %v800 = vpop.f32.mrf.mxu0
  %v801 = vadd.f32 %v688, %v800
  %v802 = vpop.f32.mrf.mxu0
  %v803 = vpop.f32.mrf.mxu0
  %v804 = vadd.f32 %v691, %v803
  %v805 = vpop.f32.mrf.mxu0
  %806 = vmatprep.mubr.bf16.mxu0 0
  %807 = vmatmul.mubr.bf16.gmra.mxu0 %v554
  %v808 = vpop.f32.mrf.mxu0
  %v809 = vadd.f32 %v696, %v808
  %v810 = vpop.f32.mrf.mxu0
  %v811 = vpop.f32.mrf.mxu0
  %v812 = vadd.f32 %v699, %v811
  %v813 = vpop.f32.mrf.mxu0
  %814 = vdwg.mxu0
  %s815 = scalar_lea.vmem %s4, 128
  %v816 = vld [vmem:[%s815] sm:$0xf]
  %v817 = vld [vmem:[%s815 + $0x4] sm:$0xf]
  %v818 = vld [vmem:[%s815 + $0x8] sm:$0xf]
  %v819 = vld [vmem:[%s815 + $0xc] sm:$0xf]
  %v820 = vld [vmem:[%s815 + $0x10] sm:$0xf]
  %v821 = vld [vmem:[%s815 + $0x14] sm:$0xf]
  %v822 = vld [vmem:[%s815 + $0x18] sm:$0xf]
  %v823 = vld [vmem:[%s815 + $0x1c] sm:$0xf]
  %v824 = vld [vmem:[%s815 + $0x20] sm:$0xf]
  %v825 = vld [vmem:[%s815 + $0x24] sm:$0xf]
  %v826 = vld [vmem:[%s815 + $0x28] sm:$0xf]
  %v827 = vld [vmem:[%s815 + $0x2c] sm:$0xf]
  %v828 = vld [vmem:[%s815 + $0x30] sm:$0xf]
  %v829 = vld [vmem:[%s815 + $0x34] sm:$0xf]
  %v830 = vld [vmem:[%s815 + $0x38] sm:$0xf]
  %v831 = vld [vmem:[%s815 + $0x3c] sm:$0xf]
  %v848 = vunpack.c.l.b16 %v816
  %v849 = vunpack.c.l.b16 %v817
  %v850 = vunpack.c.l.b16 %v818
  %v851 = vunpack.c.l.b16 %v819
  %v852 = vunpack.c.l.b16 %v820
  %v853 = vunpack.c.l.b16 %v821
  %v854 = vunpack.c.l.b16 %v822
  %v855 = vunpack.c.l.b16 %v823
  %v856 = vunpack.c.l.b16 %v824
  %v857 = vunpack.c.l.b16 %v825
  %v858 = vunpack.c.l.b16 %v826
  %v859 = vunpack.c.l.b16 %v827
  %v860 = vunpack.c.l.b16 %v828
  %v861 = vunpack.c.l.b16 %v829
  %v862 = vunpack.c.l.b16 %v830
  %v863 = vunpack.c.l.b16 %v831
  %v864 = vpack.c.b16 %v849, %v848
  %v865 = vpack.c.b16 %v851, %v850
  %v866 = vpack.c.b16 %v853, %v852
  %v867 = vpack.c.b16 %v855, %v854
  %v868 = vpack.c.b16 %v857, %v856
  %v869 = vpack.c.b16 %v859, %v858
  %v870 = vpack.c.b16 %v861, %v860
  %v871 = vpack.c.b16 %v863, %v862
  %880 = vmatprep.subr.bf16.mxu0 0
  %881 = vmatpush1.bf16.msra.mxu0 %v871
  %882 = vmatprep.subr.bf16.mxu0 0
  %883 = vmatpush1.bf16.msra.mxu0 %v870
  %884 = vmatprep.subr.bf16.mxu0 0
  %885 = vmatpush1.bf16.msra.mxu0 %v869
  %886 = vmatprep.subr.bf16.mxu0 0
  %887 = vmatpush1.bf16.msra.mxu0 %v868
  %888 = vmatprep.subr.bf16.mxu0 0
  %889 = vmatpush1.bf16.msra.mxu0 %v867
  %890 = vmatprep.subr.bf16.mxu0 0
  %891 = vmatpush1.bf16.msra.mxu0 %v866
  %892 = vmatprep.subr.bf16.mxu0 0
  %893 = vmatpush1.bf16.msra.mxu0 %v865
  %894 = vmatprep.subr.bf16.mxu0 0
  %895 = vmatpush1.bf16.msra.mxu0 %v864
  %896 = vmatprep.subr.bf16.mxu0 0
  %897 = vmatpush2.bf16.msra.mxu0 0
  %898 = vmatprep.subr.bf16.mxu0 0
  %899 = vmatpush2.bf16.msra.mxu0 0
  %900 = vmatprep.subr.bf16.mxu0 0
  %901 = vmatpush2.bf16.msra.mxu0 0
  %902 = vmatprep.subr.bf16.mxu0 0
  %903 = vmatpush2.bf16.msra.mxu0 0
  %904 = vmatprep.subr.bf16.mxu0 0
  %905 = vmatpush2.bf16.msra.mxu0 0
  %906 = vmatprep.subr.bf16.mxu0 0
  %907 = vmatpush2.bf16.msra.mxu0 0
  %908 = vmatprep.subr.bf16.mxu0 0
  %909 = vmatpush2.bf16.msra.mxu0 0
  %910 = vmatprep.subr.bf16.mxu0 0
  %911 = vmatpush2.bf16.msra.mxu0 0
  %912 = vmatprep.mubr.bf16.mxu0 0
  %913 = vmatmul.mubr.bf16.gmra.mxu0 %v553
  %v914 = vpop.f32.mrf.mxu0
  %v915 = vadd.f32 0.0, %v914
  %v916 = vpop.f32.mrf.mxu0
  %v917 = vpop.f32.mrf.mxu0
  %v918 = vadd.f32 0.0, %v917
  %v919 = vpop.f32.mrf.mxu0
  %920 = vmatprep.mubr.bf16.mxu0 0
  %921 = vmatmul.mubr.bf16.gmra.mxu0 %v554
  %v922 = vpop.f32.mrf.mxu0
  %v923 = vadd.f32 0.0, %v922
  %v924 = vpop.f32.mrf.mxu0
  %v925 = vpop.f32.mrf.mxu0
  %v926 = vadd.f32 0.0, %v925
  %v927 = vpop.f32.mrf.mxu0
  %928 = vmatprep.mubr.bf16.mxu0 0
  %929 = vmatmul.mubr.bf16.gmra.mxu0 %v571
  %v930 = vpop.f32.mrf.mxu0
  %v931 = vadd.f32 0.0, %v930
  %v932 = vpop.f32.mrf.mxu0
  %v933 = vpop.f32.mrf.mxu0
  %v934 = vadd.f32 0.0, %v933
  %v935 = vpop.f32.mrf.mxu0
  %936 = vmatprep.mubr.bf16.mxu0 0
  %937 = vmatmul.mubr.bf16.gmra.mxu0 %v551
  %v938 = vpop.f32.mrf.mxu0
  %v939 = vadd.f32 0.0, %v938
  %v940 = vpop.f32.mrf.mxu0
  %v941 = vpop.f32.mrf.mxu0
  %v942 = vadd.f32 0.0, %v941
  %v943 = vpop.f32.mrf.mxu0
  %944 = vdwg.mxu0
  %v945 = vadd.f32 %v785, %v915
  %v946 = vadd.f32 %v788, %v918
  %v947 = vadd.f32 %v793, %v923
  %v948 = vadd.f32 %v796, %v926
  %v949 = vadd.f32 %v801, %v931
  %v950 = vadd.f32 %v804, %v934
  %v951 = vadd.f32 %v809, %v939
  %v952 = vadd.f32 %v812, %v942
  %v953 = vld [vmem:[%s5] sm:$0x1]
  %v955 = vlaneseq
  %v956 = vshrl.u32 %v955, 7
  %v957 = vsub.s32 0, %v956
  %v958 = vrot.slane %v953, %v957
  %v960 = vmul.f32 %v945, %v958
  %v961 = vmul.f32 %v946, %v958
  %v962 = vmul.f32 %v947, %v958
  %v963 = vmul.f32 %v948, %v958
  %v964 = vmul.f32 %v949, %v958
  %v965 = vmul.f32 %v950, %v958
  %v966 = vmul.f32 %v951, %v958
  %v967 = vmul.f32 %v952, %v958
  %v968 = vld [vmem:[%s6] sm:$0x1]
  %v970 = vlaneseq
  %v971 = vshrl.u32 %v970, 7
  %v972 = vsub.s32 0, %v971
  %v973 = vrot.slane %v968, %v972
  %v975 = vadd.f32 %v960, %v973
  %v976 = vadd.f32 %v961, %v973
  %v977 = vadd.f32 %v962, %v973
  %v978 = vadd.f32 %v963, %v973
  %v979 = vadd.f32 %v964, %v973
  %v980 = vadd.f32 %v965, %v973
  %v981 = vadd.f32 %v966, %v973
  %v982 = vadd.f32 %v967, %v973
  %v983 = vld [vmem:[%s7] sm:$0xf]
  %v984 = vld [vmem:[%s7 + $0x4] sm:$0xf]
  %v985 = vld [vmem:[%s7 + $0x8] sm:$0xf]
  %v986 = vld [vmem:[%s7 + $0xc] sm:$0xf]
  %v987 = vld [vmem:[%s7 + $0x10] sm:$0xf]
  %v988 = vld [vmem:[%s7 + $0x14] sm:$0xf]
  %v989 = vld [vmem:[%s7 + $0x18] sm:$0xf]
  %v990 = vld [vmem:[%s7 + $0x1c] sm:$0xf]
  %v991 = vld [vmem:[%s7 + $0x20] sm:$0xf]
  %v992 = vld [vmem:[%s7 + $0x24] sm:$0xf]
  %v993 = vld [vmem:[%s7 + $0x28] sm:$0xf]
  %v994 = vld [vmem:[%s7 + $0x2c] sm:$0xf]
  %v995 = vld [vmem:[%s7 + $0x30] sm:$0xf]
  %v996 = vld [vmem:[%s7 + $0x34] sm:$0xf]
  %v997 = vld [vmem:[%s7 + $0x38] sm:$0xf]
  %v998 = vld [vmem:[%s7 + $0x3c] sm:$0xf]
  %v1015 = vunpack.c.l.b16 %v983
  %v1016 = vunpack.c.l.b16 %v984
  %v1017 = vunpack.c.l.b16 %v985
  %v1018 = vunpack.c.l.b16 %v986
  %v1019 = vunpack.c.l.b16 %v987
  %v1020 = vunpack.c.l.b16 %v988
  %v1021 = vunpack.c.l.b16 %v989
  %v1022 = vunpack.c.l.b16 %v990
  %v1023 = vunpack.c.l.b16 %v991
  %v1024 = vunpack.c.l.b16 %v992
  %v1025 = vunpack.c.l.b16 %v993
  %v1026 = vunpack.c.l.b16 %v994
  %v1027 = vunpack.c.l.b16 %v995
  %v1028 = vunpack.c.l.b16 %v996
  %v1029 = vunpack.c.l.b16 %v997
  %v1030 = vunpack.c.l.b16 %v998
  %v1031 = vpack.c.b16 %v1016, %v1015
  %v1032 = vpack.c.b16 %v1018, %v1017
  %v1033 = vpack.c.b16 %v1020, %v1019
  %v1034 = vpack.c.b16 %v1022, %v1021
  %v1035 = vpack.c.b16 %v1024, %v1023
  %v1036 = vpack.c.b16 %v1026, %v1025
  %v1037 = vpack.c.b16 %v1028, %v1027
  %v1038 = vpack.c.b16 %v1030, %v1029
  %1047 = vmatprep.subr.bf16.mxu0 0
  %1048 = vmatpush1.bf16.msra.mxu0 %v1038
  %1049 = vmatprep.subr.bf16.mxu0 0
  %1050 = vmatpush1.bf16.msra.mxu0 %v1037
  %1051 = vmatprep.subr.bf16.mxu0 0
  %1052 = vmatpush1.bf16.msra.mxu0 %v1036
  %1053 = vmatprep.subr.bf16.mxu0 0
  %1054 = vmatpush1.bf16.msra.mxu0 %v1035
  %1055 = vmatprep.subr.bf16.mxu0 0
  %1056 = vmatpush1.bf16.msra.mxu0 %v1034
  %1057 = vmatprep.subr.bf16.mxu0 0
  %1058 = vmatpush1.bf16.msra.mxu0 %v1033
  %1059 = vmatprep.subr.bf16.mxu0 0
  %1060 = vmatpush1.bf16.msra.mxu0 %v1032
  %1061 = vmatprep.subr.bf16.mxu0 0
  %1062 = vmatpush1.bf16.msra.mxu0 %v1031
  %1063 = vmatprep.subr.bf16.mxu0 0
  %1064 = vmatpush2.bf16.msra.mxu0 0
  %1065 = vmatprep.subr.bf16.mxu0 0
  %1066 = vmatpush2.bf16.msra.mxu0 0
  %1067 = vmatprep.subr.bf16.mxu0 0
  %1068 = vmatpush2.bf16.msra.mxu0 0
  %1069 = vmatprep.subr.bf16.mxu0 0
  %1070 = vmatpush2.bf16.msra.mxu0 0
  %1071 = vmatprep.subr.bf16.mxu0 0
  %1072 = vmatpush2.bf16.msra.mxu0 0
  %1073 = vmatprep.subr.bf16.mxu0 0
  %1074 = vmatpush2.bf16.msra.mxu0 0
  %1075 = vmatprep.subr.bf16.mxu0 0
  %1076 = vmatpush2.bf16.msra.mxu0 0
  %1077 = vmatprep.subr.bf16.mxu0 0
  %1078 = vmatpush2.bf16.msra.mxu0 0
  %1079 = vmatprep.mubr.bf16.mxu0 0
  %1080 = vmatmul.mubr.bf16.gmra.mxu0 %v52
  %v1081 = vpop.f32.mrf.mxu0
  %v1082 = vadd.f32 0.0, %v1081
  %v1083 = vpop.f32.mrf.mxu0
  %v1084 = vpop.f32.mrf.mxu0
  %v1085 = vadd.f32 0.0, %v1084
  %v1086 = vpop.f32.mrf.mxu0
  %1087 = vmatprep.mubr.bf16.mxu0 0
  %1088 = vmatmul.mubr.bf16.gmra.mxu0 %v58
  %v1089 = vpop.f32.mrf.mxu0
  %v1090 = vadd.f32 0.0, %v1089
  %v1091 = vpop.f32.mrf.mxu0
  %v1092 = vpop.f32.mrf.mxu0
  %v1093 = vadd.f32 0.0, %v1092
  %v1094 = vpop.f32.mrf.mxu0
  %1095 = vmatprep.mubr.bf16.mxu0 0
  %1096 = vmatmul.mubr.bf16.gmra.mxu0 %v64
  %v1097 = vpop.f32.mrf.mxu0
  %v1098 = vadd.f32 0.0, %v1097
  %v1099 = vpop.f32.mrf.mxu0
  %v1100 = vpop.f32.mrf.mxu0
  %v1101 = vadd.f32 0.0, %v1100
  %v1102 = vpop.f32.mrf.mxu0
  %1103 = vmatprep.mubr.bf16.mxu0 0
  %1104 = vmatmul.mubr.bf16.gmra.mxu0 %v70
  %v1105 = vpop.f32.mrf.mxu0
  %v1106 = vadd.f32 0.0, %v1105
  %v1107 = vpop.f32.mrf.mxu0
  %v1108 = vpop.f32.mrf.mxu0
  %v1109 = vadd.f32 0.0, %v1108
  %v1110 = vpop.f32.mrf.mxu0
  %1111 = vdwg.mxu0
  %v1112 = vld [vmem:[%s8] sm:$0x1]
  %v1114 = vlaneseq
  %v1115 = vshrl.u32 %v1114, 7
  %v1116 = vsub.s32 0, %v1115
  %v1117 = vrot.slane %v1112, %v1116
  %v1119 = vmul.f32 %v1082, %v1117
  %v1120 = vmul.f32 %v1085, %v1117
  %v1121 = vmul.f32 %v1090, %v1117
  %v1122 = vmul.f32 %v1093, %v1117
  %v1123 = vmul.f32 %v1098, %v1117
  %v1124 = vmul.f32 %v1101, %v1117
  %v1125 = vmul.f32 %v1106, %v1117
  %v1126 = vmul.f32 %v1109, %v1117
  %v1127 = vld [vmem:[%s9] sm:$0x1]
  %v1129 = vlaneseq
  %v1130 = vshrl.u32 %v1129, 7
  %v1131 = vsub.s32 0, %v1130
  %v1132 = vrot.slane %v1127, %v1131
  %v1134 = vadd.f32 %v1119, %v1132
  %v1135 = vadd.f32 %v1120, %v1132
  %v1136 = vadd.f32 %v1121, %v1132
  %v1137 = vadd.f32 %v1122, %v1132
  %v1138 = vadd.f32 %v1123, %v1132
  %v1139 = vadd.f32 %v1124, %v1132
  %v1140 = vadd.f32 %v1125, %v1132
  %v1141 = vadd.f32 %v1126, %v1132
  %v1142 = vadd.f32 %v975, %v1134
  %v1143 = vadd.f32 %v976, %v1135
  %v1144 = vadd.f32 %v977, %v1136
  %v1145 = vadd.f32 %v978, %v1137
  %v1146 = vadd.f32 %v979, %v1138
  %v1147 = vadd.f32 %v980, %v1139
  %v1148 = vadd.f32 %v981, %v1140
  %v1149 = vadd.f32 %v982, %v1141
  %v1150 = vmax.f32 %v1142, 0.0
  %v1151 = vmax.f32 %v1143, 0.0
  %v1152 = vmax.f32 %v1144, 0.0
  %v1153 = vmax.f32 %v1145, 0.0
  %v1154 = vmax.f32 %v1146, 0.0
  %v1155 = vmax.f32 %v1147, 0.0
  %v1156 = vmax.f32 %v1148, 0.0
  %v1157 = vmax.f32 %v1149, 0.0
  %v1158 = vpack.c.bf16 %v1151, %v1150
  %v1159 = vpack.c.bf16 %v1153, %v1152
  %v1160 = vpack.c.bf16 %v1155, %v1154
  %v1161 = vpack.c.bf16 %v1157, %v1156
  %v1166 = vunpack.c.l.b16 %v1158
  %v1167 = vunpack.c.h.b16 %v1158
  %v1168 = vunpack.c.l.b16 %v1159
  %v1169 = vunpack.c.h.b16 %v1159
  %v1170 = vunpack.c.l.b16 %v1160
  %v1171 = vunpack.c.h.b16 %v1160
  %v1172 = vunpack.c.l.b16 %v1161
  %v1173 = vunpack.c.h.b16 %v1161
  %v1174 = vpack.c.b16 %v1166, %v1166
  %v1175 = vpack.c.b16 %v1167, %v1167
  %v1176 = vpack.c.b16 %v1168, %v1168
  %v1177 = vpack.c.b16 %v1169, %v1169
  %v1178 = vpack.c.b16 %v1170, %v1170
  %v1179 = vpack.c.b16 %v1171, %v1171
  %v1180 = vpack.c.b16 %v1172, %v1172
  %v1181 = vpack.c.b16 %v1173, %v1173
  %1190 = vst [vmem:[%s10] sm:$0xf] %v1174
  %1191 = vst [vmem:[%s10 + $0x4] sm:$0xf] %v1175
  %1192 = vst [vmem:[%s10 + $0x8] sm:$0xf] %v1176
  %1193 = vst [vmem:[%s10 + $0xc] sm:$0xf] %v1177
  %1194 = vst [vmem:[%s10 + $0x10] sm:$0xf] %v1178
  %1195 = vst [vmem:[%s10 + $0x14] sm:$0xf] %v1179
  %1196 = vst [vmem:[%s10 + $0x18] sm:$0xf] %v1180
  %1197 = vst [vmem:[%s10 + $0x1c] sm:$0xf] %v1181
  // Predicated region
  $region42: #{resnet1d_forward.13} parent=0 // pred_check
    _
  $region43: #{resnet1d_forward.13} parent=0 // pred_check_branch
    %1199 = sbr.rel (0) target = $region45
  $region44: #{resnet1d_forward.13} parent=0 // pred_region
    _
  $region45: #{resnet1d_forward.13} parent=0 // pred_fallthru
    _
  // Predicated region
  $region46: #{resnet1d_forward.13} parent=0 // pred_check
    _
  $region47: #{resnet1d_forward.13} parent=0 // pred_check_branch
    %1201 = sbr.rel (0) target = $region49
  $region48: #{resnet1d_forward.13} parent=0 // pred_region
    _
  $region49: #{resnet1d_forward.13} parent=0 // pred_fallthru
    _

// kernel: resnet1d_forward.14
$region0: #{resnet1d_forward.14}
  #allocation0 [shape = 'u32[]', space=smem, size = 0x4, offset = 0x4, fixed_abs, tag = 'smem constant byte address 0x4 - core index']
  #allocation1 [shape = 'u32[144,128]{1,0:T(1,128)}', space=vmem, size = 0x12000, scoped, tag = 'internal scratch']
  %s0 = inlined_call_operand.vmem [shape: bf16[6,16,128], index: 0, kind: input, shape index: {}]
  %s1 = inlined_call_operand.vmem [shape: bf16[3,128,128], index: 1, kind: input, shape index: {}]
  %s2 = inlined_call_operand.vmem [shape: f32[1,128], index: 2, kind: input, shape index: {}, may-alias: {2,5}]
  %s3 = inlined_call_operand.vmem [shape: f32[1,128], index: 3, kind: input, shape index: {}, may-alias: {3,6}]
  %s4 = inlined_call_operand.vmem [shape: bf16[3,128,128], index: 4, kind: input, shape index: {}]
  %s5 = inlined_call_operand.vmem [shape: f32[1,128], index: 5, kind: input, shape index: {}, may-alias: {2,5}]
  %s6 = inlined_call_operand.vmem [shape: f32[1,128], index: 6, kind: input, shape index: {}, may-alias: {3,6}]
  %s7 = inlined_call_operand.vmem [shape: bf16[4,16,128], index: 7, kind: output, shape index: {}]
  %s8 = sld [smem:[#allocation0]]
  $region38: #{resnet1d_forward.14} parent=0
    _
  %s10 = ssub.s32 1, %s8
  %s11 = scalar_select 0, %s10, %s8
  // Predicated region
  $region2: #{resnet1d_forward.14} parent=0 // pred_check
    _
  $region3: #{resnet1d_forward.14} parent=0 // pred_check_branch
    %13 = sbr.rel (0) target = $region5
  $region4: #{resnet1d_forward.14} parent=0 // pred_region
    _
  $region5: #{resnet1d_forward.14} parent=0 // pred_fallthru
    _
  // Predicated region
  $region6: #{resnet1d_forward.14} parent=0 // pred_check
    _
  $region7: #{resnet1d_forward.14} parent=0 // pred_check_branch
    %15 = sbr.rel (0) target = $region9
  $region8: #{resnet1d_forward.14} parent=0 // pred_region
    _
  $region9: #{resnet1d_forward.14} parent=0 // pred_fallthru
    _
  // Predicated region
  $region10: #{resnet1d_forward.14} parent=0 // pred_check
    _
  $region11: #{resnet1d_forward.14} parent=0 // pred_check_branch
    %17 = sbr.rel (0) target = $region13
  $region12: #{resnet1d_forward.14} parent=0 // pred_region
    _
  $region13: #{resnet1d_forward.14} parent=0 // pred_fallthru
    _
  // Predicated region
  $region14: #{resnet1d_forward.14} parent=0 // pred_check
    _
  $region15: #{resnet1d_forward.14} parent=0 // pred_check_branch
    %19 = sbr.rel (0) target = $region17
  $region16: #{resnet1d_forward.14} parent=0 // pred_region
    _
  $region17: #{resnet1d_forward.14} parent=0 // pred_fallthru
    _
  // Predicated region
  $region18: #{resnet1d_forward.14} parent=0 // pred_check
    _
  $region19: #{resnet1d_forward.14} parent=0 // pred_check_branch
    %21 = sbr.rel (0) target = $region21
  $region20: #{resnet1d_forward.14} parent=0 // pred_region
    _
  $region21: #{resnet1d_forward.14} parent=0 // pred_fallthru
    _
  // Predicated region
  $region22: #{resnet1d_forward.14} parent=0 // pred_check
    _
  $region23: #{resnet1d_forward.14} parent=0 // pred_check_branch
    %23 = sbr.rel (0) target = $region25
  $region24: #{resnet1d_forward.14} parent=0 // pred_region
    _
  $region25: #{resnet1d_forward.14} parent=0 // pred_fallthru
    _
  // Predicated region
  $region26: #{resnet1d_forward.14} parent=0 // pred_check
    _
  $region27: #{resnet1d_forward.14} parent=0 // pred_check_branch
    %25 = sbr.rel (0) target = $region29
  $region28: #{resnet1d_forward.14} parent=0 // pred_region
    _
  $region29: #{resnet1d_forward.14} parent=0 // pred_fallthru
    _
  %s27 = scalar_lea.vmem %s0, 8
  %v28 = vld [vmem:[%s27] sm:$0xf]
  %v29 = vld [vmem:[%s27 + $0x4] sm:$0xf]
  %v30 = vld [vmem:[%s27 + $0x8] sm:$0xf]
  %v31 = vld [vmem:[%s27 + $0xc] sm:$0xf]
  %v32 = vld [vmem:[%s27 + $0x10] sm:$0xf]
  %v33 = vld [vmem:[%s27 + $0x14] sm:$0xf]
  %v34 = vld [vmem:[%s27 + $0x18] sm:$0xf]
  %v35 = vld [vmem:[%s27 + $0x1c] sm:$0xf]
  %v36 = vld [vmem:[%s0] sm:$0xf]
  %v37 = vld [vmem:[%s0 + $0x4] sm:$0xf]
  %v38 = vld [vmem:[%s0 + $0x8] sm:$0xf]
  %v39 = vld [vmem:[%s0 + $0xc] sm:$0xf]
  %v40 = vld [vmem:[%s0 + $0x10] sm:$0xf]
  %v41 = vld [vmem:[%s0 + $0x14] sm:$0xf]
  %v42 = vld [vmem:[%s0 + $0x18] sm:$0xf]
  %v43 = vld [vmem:[%s0 + $0x1c] sm:$0xf]
  %v44 = vld [vmem:[%s1] sm:$0xf]
  %v45 = vld [vmem:[%s1 + $0x4] sm:$0xf]
  %v46 = vld [vmem:[%s1 + $0x8] sm:$0xf]
  %v47 = vld [vmem:[%s1 + $0xc] sm:$0xf]
  %v48 = vld [vmem:[%s1 + $0x10] sm:$0xf]
  %v49 = vld [vmem:[%s1 + $0x14] sm:$0xf]
  %v50 = vld [vmem:[%s1 + $0x18] sm:$0xf]
  %v51 = vld [vmem:[%s1 + $0x1c] sm:$0xf]
  %v52 = vld [vmem:[%s1 + $0x20] sm:$0xf]
  %v53 = vld [vmem:[%s1 + $0x24] sm:$0xf]
  %v54 = vld [vmem:[%s1 + $0x28] sm:$0xf]
  %v55 = vld [vmem:[%s1 + $0x2c] sm:$0xf]
  %v56 = vld [vmem:[%s1 + $0x30] sm:$0xf]
  %v57 = vld [vmem:[%s1 + $0x34] sm:$0xf]
  %v58 = vld [vmem:[%s1 + $0x38] sm:$0xf]
  %v59 = vld [vmem:[%s1 + $0x3c] sm:$0xf]
  %s60 = scalar_lea.vmem %s1, 64
  %v61 = vld [vmem:[%s60] sm:$0xf]
  %v62 = vld [vmem:[%s60 + $0x4] sm:$0xf]
  %v63 = vld [vmem:[%s60 + $0x8] sm:$0xf]
  %v64 = vld [vmem:[%s60 + $0xc] sm:$0xf]
  %v65 = vld [vmem:[%s60 + $0x10] sm:$0xf]
  %v66 = vld [vmem:[%s60 + $0x14] sm:$0xf]
  %v67 = vld [vmem:[%s60 + $0x18] sm:$0xf]
  %v68 = vld [vmem:[%s60 + $0x1c] sm:$0xf]
  %v69 = vld [vmem:[%s60 + $0x20] sm:$0xf]
  %v70 = vld [vmem:[%s60 + $0x24] sm:$0xf]
  %v71 = vld [vmem:[%s60 + $0x28] sm:$0xf]
  %v72 = vld [vmem:[%s60 + $0x2c] sm:$0xf]
  %v73 = vld [vmem:[%s60 + $0x30] sm:$0xf]
  %v74 = vld [vmem:[%s60 + $0x34] sm:$0xf]
  %v75 = vld [vmem:[%s60 + $0x38] sm:$0xf]
  %v76 = vld [vmem:[%s60 + $0x3c] sm:$0xf]
  %v85 = vunpack.c.l.b16 %v28
  %v86 = vunpack.c.l.b16 %v29
  %v87 = vunpack.c.l.b16 %v30
  %v88 = vunpack.c.l.b16 %v31
  %v89 = vunpack.c.l.b16 %v32
  %v90 = vunpack.c.l.b16 %v33
  %v91 = vunpack.c.l.b16 %v34
  %v92 = vunpack.c.l.b16 %v35
  %v93 = vpack.c.b16 %v86, %v85
  %v94 = vpack.c.b16 %v88, %v87
  %v95 = vpack.c.b16 %v90, %v89
  %v96 = vpack.c.b16 %v92, %v91
  %v117 = vunpack.c.l.b16 %v61
  %v118 = vunpack.c.l.b16 %v62
  %v119 = vunpack.c.l.b16 %v63
  %v120 = vunpack.c.l.b16 %v64
  %v121 = vunpack.c.l.b16 %v65
  %v122 = vunpack.c.l.b16 %v66
  %v123 = vunpack.c.l.b16 %v67
  %v124 = vunpack.c.l.b16 %v68
  %v125 = vunpack.c.l.b16 %v69
  %v126 = vunpack.c.l.b16 %v70
  %v127 = vunpack.c.l.b16 %v71
  %v128 = vunpack.c.l.b16 %v72
  %v129 = vunpack.c.l.b16 %v73
  %v130 = vunpack.c.l.b16 %v74
  %v131 = vunpack.c.l.b16 %v75
  %v132 = vunpack.c.l.b16 %v76
  %v133 = vpack.c.b16 %v118, %v117
  %v134 = vpack.c.b16 %v120, %v119
  %v135 = vpack.c.b16 %v122, %v121
  %v136 = vpack.c.b16 %v124, %v123
  %v137 = vpack.c.b16 %v126, %v125
  %v138 = vpack.c.b16 %v128, %v127
  %v139 = vpack.c.b16 %v130, %v129
  %v140 = vpack.c.b16 %v132, %v131
  %149 = vmatprep.subr.bf16.mxu0 0
  %150 = vmatpush1.bf16.msra.mxu0 %v140
  %151 = vmatprep.subr.bf16.mxu0 0
  %152 = vmatpush1.bf16.msra.mxu0 %v139
  %153 = vmatprep.subr.bf16.mxu0 0
  %154 = vmatpush1.bf16.msra.mxu0 %v138
  %155 = vmatprep.subr.bf16.mxu0 0
  %156 = vmatpush1.bf16.msra.mxu0 %v137
  %157 = vmatprep.subr.bf16.mxu0 0
  %158 = vmatpush1.bf16.msra.mxu0 %v136
  %159 = vmatprep.subr.bf16.mxu0 0
  %160 = vmatpush1.bf16.msra.mxu0 %v135
  %161 = vmatprep.subr.bf16.mxu0 0
  %162 = vmatpush1.bf16.msra.mxu0 %v134
  %163 = vmatprep.subr.bf16.mxu0 0
  %164 = vmatpush1.bf16.msra.mxu0 %v133
  %165 = vmatprep.subr.bf16.mxu0 0
  %166 = vmatpush2.bf16.msra.mxu0 0
  %167 = vmatprep.subr.bf16.mxu0 0
  %168 = vmatpush2.bf16.msra.mxu0 0
  %169 = vmatprep.subr.bf16.mxu0 0
  %170 = vmatpush2.bf16.msra.mxu0 0
  %171 = vmatprep.subr.bf16.mxu0 0
  %172 = vmatpush2.bf16.msra.mxu0 0
  %173 = vmatprep.subr.bf16.mxu0 0
  %174 = vmatpush2.bf16.msra.mxu0 0
  %175 = vmatprep.subr.bf16.mxu0 0
  %176 = vmatpush2.bf16.msra.mxu0 0
  %177 = vmatprep.subr.bf16.mxu0 0
  %178 = vmatpush2.bf16.msra.mxu0 0
  %179 = vmatprep.subr.bf16.mxu0 0
  %180 = vmatpush2.bf16.msra.mxu0 0
  %181 = vmatprep.mubr.bf16.mxu0 0
  %182 = vmatmul.mubr.bf16.gmra.mxu0 %v93
  %v183 = vpop.f32.mrf.mxu0
  %v184 = vadd.f32 0.0, %v183
  %v185 = vpop.f32.mrf.mxu0
  %v186 = vpop.f32.mrf.mxu0
  %v187 = vadd.f32 0.0, %v186
  %v188 = vpop.f32.mrf.mxu0
  %189 = vmatprep.mubr.bf16.mxu0 0
  %190 = vmatmul.mubr.bf16.gmra.mxu0 %v94
  %v191 = vpop.f32.mrf.mxu0
  %v192 = vadd.f32 0.0, %v191
  %v193 = vpop.f32.mrf.mxu0
  %v194 = vpop.f32.mrf.mxu0
  %v195 = vadd.f32 0.0, %v194
  %v196 = vpop.f32.mrf.mxu0
  %197 = vmatprep.mubr.bf16.mxu0 0
  %198 = vmatmul.mubr.bf16.gmra.mxu0 %v95
  %v199 = vpop.f32.mrf.mxu0
  %v200 = vadd.f32 0.0, %v199
  %v201 = vpop.f32.mrf.mxu0
  %v202 = vpop.f32.mrf.mxu0
  %v203 = vadd.f32 0.0, %v202
  %v204 = vpop.f32.mrf.mxu0
  %205 = vmatprep.mubr.bf16.mxu0 0
  %206 = vmatmul.mubr.bf16.gmra.mxu0 %v96
  %v207 = vpop.f32.mrf.mxu0
  %v208 = vadd.f32 0.0, %v207
  %v209 = vpop.f32.mrf.mxu0
  %v210 = vpop.f32.mrf.mxu0
  %v211 = vadd.f32 0.0, %v210
  %v212 = vpop.f32.mrf.mxu0
  %213 = vdwg.mxu0
  %v222 = vunpack.c.l.b16 %v36
  %v223 = vunpack.c.l.b16 %v37
  %v224 = vunpack.c.l.b16 %v38
  %v225 = vunpack.c.l.b16 %v39
  %v226 = vunpack.c.l.b16 %v40
  %v227 = vunpack.c.l.b16 %v41
  %v228 = vunpack.c.l.b16 %v42
  %v229 = vunpack.c.l.b16 %v43
  %v230 = vpack.c.b16 %v223, %v222
  %v231 = vpack.c.b16 %v225, %v224
  %v232 = vpack.c.b16 %v227, %v226
  %v233 = vpack.c.b16 %v229, %v228
  %v254 = vunpack.c.l.b16 %v44
  %v255 = vunpack.c.l.b16 %v45
  %v256 = vunpack.c.l.b16 %v46
  %v257 = vunpack.c.l.b16 %v47
  %v258 = vunpack.c.l.b16 %v48
  %v259 = vunpack.c.l.b16 %v49
  %v260 = vunpack.c.l.b16 %v50
  %v261 = vunpack.c.l.b16 %v51
  %v262 = vunpack.c.l.b16 %v52
  %v263 = vunpack.c.l.b16 %v53
  %v264 = vunpack.c.l.b16 %v54
  %v265 = vunpack.c.l.b16 %v55
  %v266 = vunpack.c.l.b16 %v56
  %v267 = vunpack.c.l.b16 %v57
  %v268 = vunpack.c.l.b16 %v58
  %v269 = vunpack.c.l.b16 %v59
  %v270 = vpack.c.b16 %v255, %v254
  %v271 = vpack.c.b16 %v257, %v256
  %v272 = vpack.c.b16 %v259, %v258
  %v273 = vpack.c.b16 %v261, %v260
  %v274 = vpack.c.b16 %v263, %v262
  %v275 = vpack.c.b16 %v265, %v264
  %v276 = vpack.c.b16 %v267, %v266
  %v277 = vpack.c.b16 %v269, %v268
  %286 = vmatprep.subr.bf16.mxu0 0
  %287 = vmatpush1.bf16.msra.mxu0 %v277
  %288 = vmatprep.subr.bf16.mxu0 0
  %289 = vmatpush1.bf16.msra.mxu0 %v276
  %290 = vmatprep.subr.bf16.mxu0 0
  %291 = vmatpush1.bf16.msra.mxu0 %v275
  %292 = vmatprep.subr.bf16.mxu0 0
  %293 = vmatpush1.bf16.msra.mxu0 %v274
  %294 = vmatprep.subr.bf16.mxu0 0
  %295 = vmatpush1.bf16.msra.mxu0 %v273
  %296 = vmatprep.subr.bf16.mxu0 0
  %297 = vmatpush1.bf16.msra.mxu0 %v272
  %298 = vmatprep.subr.bf16.mxu0 0
  %299 = vmatpush1.bf16.msra.mxu0 %v271
  %300 = vmatprep.subr.bf16.mxu0 0
  %301 = vmatpush1.bf16.msra.mxu0 %v270
  %302 = vmatprep.subr.bf16.mxu0 0
  %303 = vmatpush2.bf16.msra.mxu0 0
  %304 = vmatprep.subr.bf16.mxu0 0
  %305 = vmatpush2.bf16.msra.mxu0 0
  %306 = vmatprep.subr.bf16.mxu0 0
  %307 = vmatpush2.bf16.msra.mxu0 0
  %308 = vmatprep.subr.bf16.mxu0 0
  %309 = vmatpush2.bf16.msra.mxu0 0
  %310 = vmatprep.subr.bf16.mxu0 0
  %311 = vmatpush2.bf16.msra.mxu0 0
  %312 = vmatprep.subr.bf16.mxu0 0
  %313 = vmatpush2.bf16.msra.mxu0 0
  %314 = vmatprep.subr.bf16.mxu0 0
  %315 = vmatpush2.bf16.msra.mxu0 0
  %316 = vmatprep.subr.bf16.mxu0 0
  %317 = vmatpush2.bf16.msra.mxu0 0
  %318 = vmatprep.mubr.bf16.mxu0 0
  %319 = vmatmul.mubr.bf16.gmra.mxu0 %v230
  %v320 = vpop.f32.mrf.mxu0
  %v321 = vadd.f32 %v184, %v320
  %v322 = vpop.f32.mrf.mxu0
  %v323 = vpop.f32.mrf.mxu0
  %v324 = vadd.f32 %v187, %v323
  %v325 = vpop.f32.mrf.mxu0
  %326 = vmatprep.mubr.bf16.mxu0 0
  %327 = vmatmul.mubr.bf16.gmra.mxu0 %v231
  %v328 = vpop.f32.mrf.mxu0
  %v329 = vadd.f32 %v192, %v328
  %v330 = vpop.f32.mrf.mxu0
  %v331 = vpop.f32.mrf.mxu0
  %v332 = vadd.f32 %v195, %v331
  %v333 = vpop.f32.mrf.mxu0
  %334 = vmatprep.mubr.bf16.mxu0 0
  %335 = vmatmul.mubr.bf16.gmra.mxu0 %v232
  %v336 = vpop.f32.mrf.mxu0
  %v337 = vadd.f32 %v200, %v336
  %v338 = vpop.f32.mrf.mxu0
  %v339 = vpop.f32.mrf.mxu0
  %v340 = vadd.f32 %v203, %v339
  %v341 = vpop.f32.mrf.mxu0
  %342 = vmatprep.mubr.bf16.mxu0 0
  %343 = vmatmul.mubr.bf16.gmra.mxu0 %v233
  %v344 = vpop.f32.mrf.mxu0
  %v345 = vadd.f32 %v208, %v344
  %v346 = vpop.f32.mrf.mxu0
  %v347 = vpop.f32.mrf.mxu0
  %v348 = vadd.f32 %v211, %v347
  %v349 = vpop.f32.mrf.mxu0
  %350 = vdwg.mxu0
  %s351 = scalar_lea.vmem %s0, 16
  %v352 = vld [vmem:[%s351] sm:$0xf]
  %v353 = vld [vmem:[%s351 + $0x4] sm:$0xf]
  %v354 = vld [vmem:[%s351 + $0x8] sm:$0xf]
  %v355 = vld [vmem:[%s351 + $0xc] sm:$0xf]
  %v356 = vld [vmem:[%s351 + $0x10] sm:$0xf]
  %v357 = vld [vmem:[%s351 + $0x14] sm:$0xf]
  %v358 = vld [vmem:[%s351 + $0x18] sm:$0xf]
  %v359 = vld [vmem:[%s351 + $0x1c] sm:$0xf]
  %s360 = scalar_lea.vmem %s1, 128
  %v361 = vld [vmem:[%s360] sm:$0xf]
  %v362 = vld [vmem:[%s360 + $0x4] sm:$0xf]
  %v363 = vld [vmem:[%s360 + $0x8] sm:$0xf]
  %v364 = vld [vmem:[%s360 + $0xc] sm:$0xf]
  %v365 = vld [vmem:[%s360 + $0x10] sm:$0xf]
  %v366 = vld [vmem:[%s360 + $0x14] sm:$0xf]
  %v367 = vld [vmem:[%s360 + $0x18] sm:$0xf]
  %v368 = vld [vmem:[%s360 + $0x1c] sm:$0xf]
  %v369 = vld [vmem:[%s360 + $0x20] sm:$0xf]
  %v370 = vld [vmem:[%s360 + $0x24] sm:$0xf]
  %v371 = vld [vmem:[%s360 + $0x28] sm:$0xf]
  %v372 = vld [vmem:[%s360 + $0x2c] sm:$0xf]
  %v373 = vld [vmem:[%s360 + $0x30] sm:$0xf]
  %v374 = vld [vmem:[%s360 + $0x34] sm:$0xf]
  %v375 = vld [vmem:[%s360 + $0x38] sm:$0xf]
  %v376 = vld [vmem:[%s360 + $0x3c] sm:$0xf]
  %v385 = vunpack.c.l.b16 %v352
  %v386 = vunpack.c.l.b16 %v353
  %v387 = vunpack.c.l.b16 %v354
  %v388 = vunpack.c.l.b16 %v355
  %v389 = vunpack.c.l.b16 %v356
  %v390 = vunpack.c.l.b16 %v357
  %v391 = vunpack.c.l.b16 %v358
  %v392 = vunpack.c.l.b16 %v359
  %v393 = vpack.c.b16 %v386, %v385
  %v394 = vpack.c.b16 %v388, %v387
  %v395 = vpack.c.b16 %v390, %v389
  %v396 = vpack.c.b16 %v392, %v391
  %v417 = vunpack.c.l.b16 %v361
  %v418 = vunpack.c.l.b16 %v362
  %v419 = vunpack.c.l.b16 %v363
  %v420 = vunpack.c.l.b16 %v364
  %v421 = vunpack.c.l.b16 %v365
  %v422 = vunpack.c.l.b16 %v366
  %v423 = vunpack.c.l.b16 %v367
  %v424 = vunpack.c.l.b16 %v368
  %v425 = vunpack.c.l.b16 %v369
  %v426 = vunpack.c.l.b16 %v370
  %v427 = vunpack.c.l.b16 %v371
  %v428 = vunpack.c.l.b16 %v372
  %v429 = vunpack.c.l.b16 %v373
  %v430 = vunpack.c.l.b16 %v374
  %v431 = vunpack.c.l.b16 %v375
  %v432 = vunpack.c.l.b16 %v376
  %v433 = vpack.c.b16 %v418, %v417
  %v434 = vpack.c.b16 %v420, %v419
  %v435 = vpack.c.b16 %v422, %v421
  %v436 = vpack.c.b16 %v424, %v423
  %v437 = vpack.c.b16 %v426, %v425
  %v438 = vpack.c.b16 %v428, %v427
  %v439 = vpack.c.b16 %v430, %v429
  %v440 = vpack.c.b16 %v432, %v431
  %449 = vmatprep.subr.bf16.mxu0 0
  %450 = vmatpush1.bf16.msra.mxu0 %v440
  %451 = vmatprep.subr.bf16.mxu0 0
  %452 = vmatpush1.bf16.msra.mxu0 %v439
  %453 = vmatprep.subr.bf16.mxu0 0
  %454 = vmatpush1.bf16.msra.mxu0 %v438
  %455 = vmatprep.subr.bf16.mxu0 0
  %456 = vmatpush1.bf16.msra.mxu0 %v437
  %457 = vmatprep.subr.bf16.mxu0 0
  %458 = vmatpush1.bf16.msra.mxu0 %v436
  %459 = vmatprep.subr.bf16.mxu0 0
  %460 = vmatpush1.bf16.msra.mxu0 %v435
  %461 = vmatprep.subr.bf16.mxu0 0
  %462 = vmatpush1.bf16.msra.mxu0 %v434
  %463 = vmatprep.subr.bf16.mxu0 0
  %464 = vmatpush1.bf16.msra.mxu0 %v433
  %465 = vmatprep.subr.bf16.mxu0 0
  %466 = vmatpush2.bf16.msra.mxu0 0
  %467 = vmatprep.subr.bf16.mxu0 0
  %468 = vmatpush2.bf16.msra.mxu0 0
  %469 = vmatprep.subr.bf16.mxu0 0
  %470 = vmatpush2.bf16.msra.mxu0 0
  %471 = vmatprep.subr.bf16.mxu0 0
  %472 = vmatpush2.bf16.msra.mxu0 0
  %473 = vmatprep.subr.bf16.mxu0 0
  %474 = vmatpush2.bf16.msra.mxu0 0
  %475 = vmatprep.subr.bf16.mxu0 0
  %476 = vmatpush2.bf16.msra.mxu0 0
  %477 = vmatprep.subr.bf16.mxu0 0
  %478 = vmatpush2.bf16.msra.mxu0 0
  %479 = vmatprep.subr.bf16.mxu0 0
  %480 = vmatpush2.bf16.msra.mxu0 0
  %481 = vmatprep.mubr.bf16.mxu0 0
  %482 = vmatmul.mubr.bf16.gmra.mxu0 %v393
  %v483 = vpop.f32.mrf.mxu0
  %v484 = vadd.f32 0.0, %v483
  %v485 = vpop.f32.mrf.mxu0
  %v486 = vpop.f32.mrf.mxu0
  %v487 = vadd.f32 0.0, %v486
  %v488 = vpop.f32.mrf.mxu0
  %489 = vmatprep.mubr.bf16.mxu0 0
  %490 = vmatmul.mubr.bf16.gmra.mxu0 %v394
  %v491 = vpop.f32.mrf.mxu0
  %v492 = vadd.f32 0.0, %v491
  %v493 = vpop.f32.mrf.mxu0
  %v494 = vpop.f32.mrf.mxu0
  %v495 = vadd.f32 0.0, %v494
  %v496 = vpop.f32.mrf.mxu0
  %497 = vmatprep.mubr.bf16.mxu0 0
  %498 = vmatmul.mubr.bf16.gmra.mxu0 %v395
  %v499 = vpop.f32.mrf.mxu0
  %v500 = vadd.f32 0.0, %v499
  %v501 = vpop.f32.mrf.mxu0
  %v502 = vpop.f32.mrf.mxu0
  %v503 = vadd.f32 0.0, %v502
  %v504 = vpop.f32.mrf.mxu0
  %505 = vmatprep.mubr.bf16.mxu0 0
  %506 = vmatmul.mubr.bf16.gmra.mxu0 %v396
  %v507 = vpop.f32.mrf.mxu0
  %v508 = vadd.f32 0.0, %v507
  %v509 = vpop.f32.mrf.mxu0
  %v510 = vpop.f32.mrf.mxu0
  %v511 = vadd.f32 0.0, %v510
  %v512 = vpop.f32.mrf.mxu0
  %513 = vdwg.mxu0
  %v514 = vadd.f32 %v321, %v484
  %v515 = vadd.f32 %v324, %v487
  %v516 = vadd.f32 %v329, %v492
  %v517 = vadd.f32 %v332, %v495
  %v518 = vadd.f32 %v337, %v500
  %v519 = vadd.f32 %v340, %v503
  %v520 = vadd.f32 %v345, %v508
  %v521 = vadd.f32 %v348, %v511
  %v522 = vld [vmem:[%s2] sm:$0x1]
  %v524 = vlaneseq
  %v525 = vshrl.u32 %v524, 7
  %v526 = vsub.s32 0, %v525
  %v527 = vrot.slane %v522, %v526
  %v529 = vmul.f32 %v514, %v527
  %v530 = vmul.f32 %v515, %v527
  %v531 = vmul.f32 %v516, %v527
  %v532 = vmul.f32 %v517, %v527
  %v533 = vmul.f32 %v518, %v527
  %v534 = vmul.f32 %v519, %v527
  %v535 = vmul.f32 %v520, %v527
  %v536 = vmul.f32 %v521, %v527
  %v537 = vld [vmem:[%s3] sm:$0x1]
  %v539 = vlaneseq
  %v540 = vshrl.u32 %v539, 7
  %v541 = vsub.s32 0, %v540
  %v542 = vrot.slane %v537, %v541
  %v544 = vadd.f32 %v529, %v542
  %v545 = vadd.f32 %v530, %v542
  %v546 = vadd.f32 %v531, %v542
  %v547 = vadd.f32 %v532, %v542
  %v548 = vadd.f32 %v533, %v542
  %v549 = vadd.f32 %v534, %v542
  %v550 = vadd.f32 %v535, %v542
  %v551 = vadd.f32 %v536, %v542
  %v552 = vmax.f32 %v544, 0.0
  %v553 = vmax.f32 %v545, 0.0
  %v554 = vmax.f32 %v546, 0.0
  %v555 = vmax.f32 %v547, 0.0
  %v556 = vmax.f32 %v548, 0.0
  %v557 = vmax.f32 %v549, 0.0
  %v558 = vmax.f32 %v550, 0.0
  %v559 = vmax.f32 %v551, 0.0
  %v560 = vpack.c.bf16 0.0, 0.0
  %v561 = vpack.c.bf16 %v553, %v552
  %v562 = vpack.c.bf16 %v555, %v554
  %v563 = vpack.c.bf16 %v557, %v556
  %v564 = vld [vmem:[%s4] sm:$0xf]
  %v565 = vld [vmem:[%s4 + $0x4] sm:$0xf]
  %v566 = vld [vmem:[%s4 + $0x8] sm:$0xf]
  %v567 = vld [vmem:[%s4 + $0xc] sm:$0xf]
  %v568 = vld [vmem:[%s4 + $0x10] sm:$0xf]
  %v569 = vld [vmem:[%s4 + $0x14] sm:$0xf]
  %v570 = vld [vmem:[%s4 + $0x18] sm:$0xf]
  %v571 = vld [vmem:[%s4 + $0x1c] sm:$0xf]
  %v572 = vld [vmem:[%s4 + $0x20] sm:$0xf]
  %v573 = vld [vmem:[%s4 + $0x24] sm:$0xf]
  %v574 = vld [vmem:[%s4 + $0x28] sm:$0xf]
  %v575 = vld [vmem:[%s4 + $0x2c] sm:$0xf]
  %v576 = vld [vmem:[%s4 + $0x30] sm:$0xf]
  %v577 = vld [vmem:[%s4 + $0x34] sm:$0xf]
  %v578 = vld [vmem:[%s4 + $0x38] sm:$0xf]
  %v579 = vld [vmem:[%s4 + $0x3c] sm:$0xf]
  %v580 = vpack.c.bf16 %v559, %v558
  %s581 = scalar_lea.vmem %s4, 64
  %v582 = vld [vmem:[%s581] sm:$0xf]
  %v583 = vld [vmem:[%s581 + $0x4] sm:$0xf]
  %v584 = vld [vmem:[%s581 + $0x8] sm:$0xf]
  %v585 = vld [vmem:[%s581 + $0xc] sm:$0xf]
  %v586 = vld [vmem:[%s581 + $0x10] sm:$0xf]
  %v587 = vld [vmem:[%s581 + $0x14] sm:$0xf]
  %v588 = vld [vmem:[%s581 + $0x18] sm:$0xf]
  %v589 = vld [vmem:[%s581 + $0x1c] sm:$0xf]
  %v590 = vld [vmem:[%s581 + $0x20] sm:$0xf]
  %v591 = vld [vmem:[%s581 + $0x24] sm:$0xf]
  %v592 = vld [vmem:[%s581 + $0x28] sm:$0xf]
  %v593 = vld [vmem:[%s581 + $0x2c] sm:$0xf]
  %v594 = vld [vmem:[%s581 + $0x30] sm:$0xf]
  %v595 = vld [vmem:[%s581 + $0x34] sm:$0xf]
  %v596 = vld [vmem:[%s581 + $0x38] sm:$0xf]
  %v597 = vld [vmem:[%s581 + $0x3c] sm:$0xf]
  %v614 = vunpack.c.l.b16 %v582
  %v615 = vunpack.c.l.b16 %v583
  %v616 = vunpack.c.l.b16 %v584
  %v617 = vunpack.c.l.b16 %v585
  %v618 = vunpack.c.l.b16 %v586
  %v619 = vunpack.c.l.b16 %v587
  %v620 = vunpack.c.l.b16 %v588
  %v621 = vunpack.c.l.b16 %v589
  %v622 = vunpack.c.l.b16 %v590
  %v623 = vunpack.c.l.b16 %v591
  %v624 = vunpack.c.l.b16 %v592
  %v625 = vunpack.c.l.b16 %v593
  %v626 = vunpack.c.l.b16 %v594
  %v627 = vunpack.c.l.b16 %v595
  %v628 = vunpack.c.l.b16 %v596
  %v629 = vunpack.c.l.b16 %v597
  %v630 = vpack.c.b16 %v615, %v614
  %v631 = vpack.c.b16 %v617, %v616
  %v632 = vpack.c.b16 %v619, %v618
  %v633 = vpack.c.b16 %v621, %v620
  %v634 = vpack.c.b16 %v623, %v622
  %v635 = vpack.c.b16 %v625, %v624
  %v636 = vpack.c.b16 %v627, %v626
  %v637 = vpack.c.b16 %v629, %v628
  %646 = vmatprep.subr.bf16.mxu0 0
  %647 = vmatpush1.bf16.msra.mxu0 %v637
  %648 = vmatprep.subr.bf16.mxu0 0
  %649 = vmatpush1.bf16.msra.mxu0 %v636
  %650 = vmatprep.subr.bf16.mxu0 0
  %651 = vmatpush1.bf16.msra.mxu0 %v635
  %652 = vmatprep.subr.bf16.mxu0 0
  %653 = vmatpush1.bf16.msra.mxu0 %v634
  %654 = vmatprep.subr.bf16.mxu0 0
  %655 = vmatpush1.bf16.msra.mxu0 %v633
  %656 = vmatprep.subr.bf16.mxu0 0
  %657 = vmatpush1.bf16.msra.mxu0 %v632
  %658 = vmatprep.subr.bf16.mxu0 0
  %659 = vmatpush1.bf16.msra.mxu0 %v631
  %660 = vmatprep.subr.bf16.mxu0 0
  %661 = vmatpush1.bf16.msra.mxu0 %v630
  %662 = vmatprep.subr.bf16.mxu0 0
  %663 = vmatpush2.bf16.msra.mxu0 0
  %664 = vmatprep.subr.bf16.mxu0 0
  %665 = vmatpush2.bf16.msra.mxu0 0
  %666 = vmatprep.subr.bf16.mxu0 0
  %667 = vmatpush2.bf16.msra.mxu0 0
  %668 = vmatprep.subr.bf16.mxu0 0
  %669 = vmatpush2.bf16.msra.mxu0 0
  %670 = vmatprep.subr.bf16.mxu0 0
  %671 = vmatpush2.bf16.msra.mxu0 0
  %672 = vmatprep.subr.bf16.mxu0 0
  %673 = vmatpush2.bf16.msra.mxu0 0
  %674 = vmatprep.subr.bf16.mxu0 0
  %675 = vmatpush2.bf16.msra.mxu0 0
  %676 = vmatprep.subr.bf16.mxu0 0
  %677 = vmatpush2.bf16.msra.mxu0 0
  %678 = vmatprep.mubr.bf16.mxu0 0
  %679 = vmatmul.mubr.bf16.gmra.mxu0 %v561
  %v680 = vpop.f32.mrf.mxu0
  %v681 = vadd.f32 0.0, %v680
  %v682 = vpop.f32.mrf.mxu0
  %v683 = vpop.f32.mrf.mxu0
  %v684 = vadd.f32 0.0, %v683
  %v685 = vpop.f32.mrf.mxu0
  %686 = vmatprep.mubr.bf16.mxu0 0
  %687 = vmatmul.mubr.bf16.gmra.mxu0 %v562
  %v688 = vpop.f32.mrf.mxu0
  %v689 = vadd.f32 0.0, %v688
  %v690 = vpop.f32.mrf.mxu0
  %v691 = vpop.f32.mrf.mxu0
  %v692 = vadd.f32 0.0, %v691
  %v693 = vpop.f32.mrf.mxu0
  %694 = vmatprep.mubr.bf16.mxu0 0
  %695 = vmatmul.mubr.bf16.gmra.mxu0 %v563
  %v696 = vpop.f32.mrf.mxu0
  %v697 = vadd.f32 0.0, %v696
  %v698 = vpop.f32.mrf.mxu0
  %v699 = vpop.f32.mrf.mxu0
  %v700 = vadd.f32 0.0, %v699
  %v701 = vpop.f32.mrf.mxu0
  %702 = vmatprep.mubr.bf16.mxu0 0
  %703 = vmatmul.mubr.bf16.gmra.mxu0 %v580
  %v704 = vpop.f32.mrf.mxu0
  %v705 = vadd.f32 0.0, %v704
  %v706 = vpop.f32.mrf.mxu0
  %v707 = vpop.f32.mrf.mxu0
  %v708 = vadd.f32 0.0, %v707
  %v709 = vpop.f32.mrf.mxu0
  %710 = vdwg.mxu0
  %v727 = vunpack.c.l.b16 %v564
  %v728 = vunpack.c.l.b16 %v565
  %v729 = vunpack.c.l.b16 %v566
  %v730 = vunpack.c.l.b16 %v567
  %v731 = vunpack.c.l.b16 %v568
  %v732 = vunpack.c.l.b16 %v569
  %v733 = vunpack.c.l.b16 %v570
  %v734 = vunpack.c.l.b16 %v571
  %v735 = vunpack.c.l.b16 %v572
  %v736 = vunpack.c.l.b16 %v573
  %v737 = vunpack.c.l.b16 %v574
  %v738 = vunpack.c.l.b16 %v575
  %v739 = vunpack.c.l.b16 %v576
  %v740 = vunpack.c.l.b16 %v577
  %v741 = vunpack.c.l.b16 %v578
  %v742 = vunpack.c.l.b16 %v579
  %v743 = vpack.c.b16 %v728, %v727
  %v744 = vpack.c.b16 %v730, %v729
  %v745 = vpack.c.b16 %v732, %v731
  %v746 = vpack.c.b16 %v734, %v733
  %v747 = vpack.c.b16 %v736, %v735
  %v748 = vpack.c.b16 %v738, %v737
  %v749 = vpack.c.b16 %v740, %v739
  %v750 = vpack.c.b16 %v742, %v741
  %759 = vmatprep.subr.bf16.mxu0 0
  %760 = vmatpush1.bf16.msra.mxu0 %v750
  %761 = vmatprep.subr.bf16.mxu0 0
  %762 = vmatpush1.bf16.msra.mxu0 %v749
  %763 = vmatprep.subr.bf16.mxu0 0
  %764 = vmatpush1.bf16.msra.mxu0 %v748
  %765 = vmatprep.subr.bf16.mxu0 0
  %766 = vmatpush1.bf16.msra.mxu0 %v747
  %767 = vmatprep.subr.bf16.mxu0 0
  %768 = vmatpush1.bf16.msra.mxu0 %v746
  %769 = vmatprep.subr.bf16.mxu0 0
  %770 = vmatpush1.bf16.msra.mxu0 %v745
  %771 = vmatprep.subr.bf16.mxu0 0
  %772 = vmatpush1.bf16.msra.mxu0 %v744
  %773 = vmatprep.subr.bf16.mxu0 0
  %774 = vmatpush1.bf16.msra.mxu0 %v743
  %775 = vmatprep.subr.bf16.mxu0 0
  %776 = vmatpush2.bf16.msra.mxu0 0
  %777 = vmatprep.subr.bf16.mxu0 0
  %778 = vmatpush2.bf16.msra.mxu0 0
  %779 = vmatprep.subr.bf16.mxu0 0
  %780 = vmatpush2.bf16.msra.mxu0 0
  %781 = vmatprep.subr.bf16.mxu0 0
  %782 = vmatpush2.bf16.msra.mxu0 0
  %783 = vmatprep.subr.bf16.mxu0 0
  %784 = vmatpush2.bf16.msra.mxu0 0
  %785 = vmatprep.subr.bf16.mxu0 0
  %786 = vmatpush2.bf16.msra.mxu0 0
  %787 = vmatprep.subr.bf16.mxu0 0
  %788 = vmatpush2.bf16.msra.mxu0 0
  %789 = vmatprep.subr.bf16.mxu0 0
  %790 = vmatpush2.bf16.msra.mxu0 0
  %791 = vmatprep.mubr.bf16.mxu0 0
  %792 = vmatmul.mubr.bf16.gmra.mxu0 %v560
  %v793 = vpop.f32.mrf.mxu0
  %v794 = vadd.f32 %v681, %v793
  %v795 = vpop.f32.mrf.mxu0
  %v796 = vpop.f32.mrf.mxu0
  %v797 = vadd.f32 %v684, %v796
  %v798 = vpop.f32.mrf.mxu0
  %799 = vmatprep.mubr.bf16.mxu0 0
  %800 = vmatmul.mubr.bf16.gmra.mxu0 %v561
  %v801 = vpop.f32.mrf.mxu0
  %v802 = vadd.f32 %v689, %v801
  %v803 = vpop.f32.mrf.mxu0
  %v804 = vpop.f32.mrf.mxu0
  %v805 = vadd.f32 %v692, %v804
  %v806 = vpop.f32.mrf.mxu0
  %807 = vmatprep.mubr.bf16.mxu0 0
  %808 = vmatmul.mubr.bf16.gmra.mxu0 %v562
  %v809 = vpop.f32.mrf.mxu0
  %v810 = vadd.f32 %v697, %v809
  %v811 = vpop.f32.mrf.mxu0
  %v812 = vpop.f32.mrf.mxu0
  %v813 = vadd.f32 %v700, %v812
  %v814 = vpop.f32.mrf.mxu0
  %815 = vmatprep.mubr.bf16.mxu0 0
  %816 = vmatmul.mubr.bf16.gmra.mxu0 %v563
  %v817 = vpop.f32.mrf.mxu0
  %v818 = vadd.f32 %v705, %v817
  %v819 = vpop.f32.mrf.mxu0
  %v820 = vpop.f32.mrf.mxu0
  %v821 = vadd.f32 %v708, %v820
  %v822 = vpop.f32.mrf.mxu0
  %823 = vdwg.mxu0
  %s824 = scalar_lea.vmem %s4, 128
  %v825 = vld [vmem:[%s824] sm:$0xf]
  %v826 = vld [vmem:[%s824 + $0x4] sm:$0xf]
  %v827 = vld [vmem:[%s824 + $0x8] sm:$0xf]
  %v828 = vld [vmem:[%s824 + $0xc] sm:$0xf]
  %v829 = vld [vmem:[%s824 + $0x10] sm:$0xf]
  %v830 = vld [vmem:[%s824 + $0x14] sm:$0xf]
  %v831 = vld [vmem:[%s824 + $0x18] sm:$0xf]
  %v832 = vld [vmem:[%s824 + $0x1c] sm:$0xf]
  %v833 = vld [vmem:[%s824 + $0x20] sm:$0xf]
  %v834 = vld [vmem:[%s824 + $0x24] sm:$0xf]
  %v835 = vld [vmem:[%s824 + $0x28] sm:$0xf]
  %v836 = vld [vmem:[%s824 + $0x2c] sm:$0xf]
  %v837 = vld [vmem:[%s824 + $0x30] sm:$0xf]
  %v838 = vld [vmem:[%s824 + $0x34] sm:$0xf]
  %v839 = vld [vmem:[%s824 + $0x38] sm:$0xf]
  %v840 = vld [vmem:[%s824 + $0x3c] sm:$0xf]
  %v857 = vunpack.c.l.b16 %v825
  %v858 = vunpack.c.l.b16 %v826
  %v859 = vunpack.c.l.b16 %v827
  %v860 = vunpack.c.l.b16 %v828
  %v861 = vunpack.c.l.b16 %v829
  %v862 = vunpack.c.l.b16 %v830
  %v863 = vunpack.c.l.b16 %v831
  %v864 = vunpack.c.l.b16 %v832
  %v865 = vunpack.c.l.b16 %v833
  %v866 = vunpack.c.l.b16 %v834
  %v867 = vunpack.c.l.b16 %v835
  %v868 = vunpack.c.l.b16 %v836
  %v869 = vunpack.c.l.b16 %v837
  %v870 = vunpack.c.l.b16 %v838
  %v871 = vunpack.c.l.b16 %v839
  %v872 = vunpack.c.l.b16 %v840
  %v873 = vpack.c.b16 %v858, %v857
  %v874 = vpack.c.b16 %v860, %v859
  %v875 = vpack.c.b16 %v862, %v861
  %v876 = vpack.c.b16 %v864, %v863
  %v877 = vpack.c.b16 %v866, %v865
  %v878 = vpack.c.b16 %v868, %v867
  %v879 = vpack.c.b16 %v870, %v869
  %v880 = vpack.c.b16 %v872, %v871
  %889 = vmatprep.subr.bf16.mxu0 0
  %890 = vmatpush1.bf16.msra.mxu0 %v880
  %891 = vmatprep.subr.bf16.mxu0 0
  %892 = vmatpush1.bf16.msra.mxu0 %v879
  %893 = vmatprep.subr.bf16.mxu0 0
  %894 = vmatpush1.bf16.msra.mxu0 %v878
  %895 = vmatprep.subr.bf16.mxu0 0
  %896 = vmatpush1.bf16.msra.mxu0 %v877
  %897 = vmatprep.subr.bf16.mxu0 0
  %898 = vmatpush1.bf16.msra.mxu0 %v876
  %899 = vmatprep.subr.bf16.mxu0 0
  %900 = vmatpush1.bf16.msra.mxu0 %v875
  %901 = vmatprep.subr.bf16.mxu0 0
  %902 = vmatpush1.bf16.msra.mxu0 %v874
  %903 = vmatprep.subr.bf16.mxu0 0
  %904 = vmatpush1.bf16.msra.mxu0 %v873
  %905 = vmatprep.subr.bf16.mxu0 0
  %906 = vmatpush2.bf16.msra.mxu0 0
  %907 = vmatprep.subr.bf16.mxu0 0
  %908 = vmatpush2.bf16.msra.mxu0 0
  %909 = vmatprep.subr.bf16.mxu0 0
  %910 = vmatpush2.bf16.msra.mxu0 0
  %911 = vmatprep.subr.bf16.mxu0 0
  %912 = vmatpush2.bf16.msra.mxu0 0
  %913 = vmatprep.subr.bf16.mxu0 0
  %914 = vmatpush2.bf16.msra.mxu0 0
  %915 = vmatprep.subr.bf16.mxu0 0
  %916 = vmatpush2.bf16.msra.mxu0 0
  %917 = vmatprep.subr.bf16.mxu0 0
  %918 = vmatpush2.bf16.msra.mxu0 0
  %919 = vmatprep.subr.bf16.mxu0 0
  %920 = vmatpush2.bf16.msra.mxu0 0
  %921 = vmatprep.mubr.bf16.mxu0 0
  %922 = vmatmul.mubr.bf16.gmra.mxu0 %v562
  %v923 = vpop.f32.mrf.mxu0
  %v924 = vadd.f32 0.0, %v923
  %v925 = vpop.f32.mrf.mxu0
  %v926 = vpop.f32.mrf.mxu0
  %v927 = vadd.f32 0.0, %v926
  %v928 = vpop.f32.mrf.mxu0
  %929 = vmatprep.mubr.bf16.mxu0 0
  %930 = vmatmul.mubr.bf16.gmra.mxu0 %v563
  %v931 = vpop.f32.mrf.mxu0
  %v932 = vadd.f32 0.0, %v931
  %v933 = vpop.f32.mrf.mxu0
  %v934 = vpop.f32.mrf.mxu0
  %v935 = vadd.f32 0.0, %v934
  %v936 = vpop.f32.mrf.mxu0
  %937 = vmatprep.mubr.bf16.mxu0 0
  %938 = vmatmul.mubr.bf16.gmra.mxu0 %v580
  %v939 = vpop.f32.mrf.mxu0
  %v940 = vadd.f32 0.0, %v939
  %v941 = vpop.f32.mrf.mxu0
  %v942 = vpop.f32.mrf.mxu0
  %v943 = vadd.f32 0.0, %v942
  %v944 = vpop.f32.mrf.mxu0
  %945 = vmatprep.mubr.bf16.mxu0 0
  %946 = vmatmul.mubr.bf16.gmra.mxu0 %v560
  %v947 = vpop.f32.mrf.mxu0
  %v948 = vadd.f32 0.0, %v947
  %v949 = vpop.f32.mrf.mxu0
  %v950 = vpop.f32.mrf.mxu0
  %v951 = vadd.f32 0.0, %v950
  %v952 = vpop.f32.mrf.mxu0
  %953 = vdwg.mxu0
  %v954 = vadd.f32 %v794, %v924
  %v955 = vadd.f32 %v797, %v927
  %v956 = vadd.f32 %v802, %v932
  %v957 = vadd.f32 %v805, %v935
  %v958 = vadd.f32 %v810, %v940
  %v959 = vadd.f32 %v813, %v943
  %v960 = vadd.f32 %v818, %v948
  %v961 = vadd.f32 %v821, %v951
  %v962 = vld [vmem:[%s5] sm:$0x1]
  %v964 = vlaneseq
  %v965 = vshrl.u32 %v964, 7
  %v966 = vsub.s32 0, %v965
  %v967 = vrot.slane %v962, %v966
  %v969 = vmul.f32 %v954, %v967
  %v970 = vmul.f32 %v955, %v967
  %v971 = vmul.f32 %v956, %v967
  %v972 = vmul.f32 %v957, %v967
  %v973 = vmul.f32 %v958, %v967
  %v974 = vmul.f32 %v959, %v967
  %v975 = vmul.f32 %v960, %v967
  %v976 = vmul.f32 %v961, %v967
  %v977 = vld [vmem:[%s6] sm:$0x1]
  %v979 = vlaneseq
  %v980 = vshrl.u32 %v979, 7
  %v981 = vsub.s32 0, %v980
  %v982 = vrot.slane %v977, %v981
  %v984 = vadd.f32 %v969, %v982
  %v985 = vadd.f32 %v970, %v982
  %v986 = vadd.f32 %v971, %v982
  %v987 = vadd.f32 %v972, %v982
  %v988 = vadd.f32 %v973, %v982
  %v989 = vadd.f32 %v974, %v982
  %v990 = vadd.f32 %v975, %v982
  %v991 = vadd.f32 %v976, %v982
  %v992 = vunpack.c.l.bf16 %v28
  %v993 = vunpack.c.l.bf16 %v29
  %v994 = vunpack.c.l.bf16 %v30
  %v995 = vunpack.c.l.bf16 %v31
  %v996 = vunpack.c.l.bf16 %v32
  %v997 = vunpack.c.l.bf16 %v33
  %v998 = vunpack.c.l.bf16 %v34
  %v999 = vunpack.c.l.bf16 %v35
  %v1000 = vadd.f32 %v984, %v992
  %v1001 = vadd.f32 %v985, %v993
  %v1002 = vadd.f32 %v986, %v994
  %v1003 = vadd.f32 %v987, %v995
  %v1004 = vadd.f32 %v988, %v996
  %v1005 = vadd.f32 %v989, %v997
  %v1006 = vadd.f32 %v990, %v998
  %v1007 = vadd.f32 %v991, %v999
  %v1008 = vmax.f32 %v1000, 0.0
  %v1009 = vmax.f32 %v1001, 0.0
  %v1010 = vmax.f32 %v1002, 0.0
  %v1011 = vmax.f32 %v1003, 0.0
  %v1012 = vmax.f32 %v1004, 0.0
  %v1013 = vmax.f32 %v1005, 0.0
  %v1014 = vmax.f32 %v1006, 0.0
  %v1015 = vmax.f32 %v1007, 0.0
  %v1016 = vpack.c.bf16 %v1009, %v1008
  %v1017 = vpack.c.bf16 %v1011, %v1010
  %v1018 = vpack.c.bf16 %v1013, %v1012
  %v1019 = vpack.c.bf16 %v1015, %v1014
  %v1024 = vunpack.c.l.b16 %v1016
  %v1025 = vunpack.c.h.b16 %v1016
  %v1026 = vunpack.c.l.b16 %v1017
  %v1027 = vunpack.c.h.b16 %v1017
  %v1028 = vunpack.c.l.b16 %v1018
  %v1029 = vunpack.c.h.b16 %v1018
  %v1030 = vunpack.c.l.b16 %v1019
  %v1031 = vunpack.c.h.b16 %v1019
  %v1032 = vpack.c.b16 %v1024, %v1024
  %v1033 = vpack.c.b16 %v1025, %v1025
  %v1034 = vpack.c.b16 %v1026, %v1026
  %v1035 = vpack.c.b16 %v1027, %v1027
  %v1036 = vpack.c.b16 %v1028, %v1028
  %v1037 = vpack.c.b16 %v1029, %v1029
  %v1038 = vpack.c.b16 %v1030, %v1030
  %v1039 = vpack.c.b16 %v1031, %v1031
  %1048 = vst [vmem:[%s7] sm:$0xf] %v1032
  %1049 = vst [vmem:[%s7 + $0x4] sm:$0xf] %v1033
  %1050 = vst [vmem:[%s7 + $0x8] sm:$0xf] %v1034
  %1051 = vst [vmem:[%s7 + $0xc] sm:$0xf] %v1035
  %1052 = vst [vmem:[%s7 + $0x10] sm:$0xf] %v1036
  %1053 = vst [vmem:[%s7 + $0x14] sm:$0xf] %v1037
  %1054 = vst [vmem:[%s7 + $0x18] sm:$0xf] %v1038
  %1055 = vst [vmem:[%s7 + $0x1c] sm:$0xf] %v1039
  // Predicated region
  $region30: #{resnet1d_forward.14} parent=0 // pred_check
    _
  $region31: #{resnet1d_forward.14} parent=0 // pred_check_branch
    %1057 = sbr.rel (0) target = $region33
  $region32: #{resnet1d_forward.14} parent=0 // pred_region
    _
  $region33: #{resnet1d_forward.14} parent=0 // pred_fallthru
    _
  // Predicated region
  $region34: #{resnet1d_forward.14} parent=0 // pred_check
    _
  $region35: #{resnet1d_forward.14} parent=0 // pred_check_branch
    %1059 = sbr.rel (0) target = $region37
  $region36: #{resnet1d_forward.14} parent=0 // pred_region
    _
  $region37: #{resnet1d_forward.14} parent=0 // pred_fallthru
    _

// kernel: resnet1d_forward.15
$region0: #{resnet1d_forward.15}
  #allocation0 [shape = 'u32[]', space=smem, size = 0x4, offset = 0x4, fixed_abs, tag = 'smem constant byte address 0x4 - core index']
  #allocation1 [shape = 'u32[144,128]{1,0:T(1,128)}', space=vmem, size = 0x12000, scoped, tag = 'internal scratch']
  %s0 = inlined_call_operand.vmem [shape: bf16[6,16,128], index: 0, kind: input, shape index: {}]
  %s1 = inlined_call_operand.vmem [shape: bf16[3,128,256], index: 1, kind: input, shape index: {}]
  %s2 = inlined_call_operand.vmem [shape: f32[1,256], index: 2, kind: input, shape index: {}, may-alias: {2,5,8}]
  %s3 = inlined_call_operand.vmem [shape: f32[1,256], index: 3, kind: input, shape index: {}, may-alias: {3,6,9}]
  %s4 = inlined_call_operand.vmem [shape: bf16[3,256,256], index: 4, kind: input, shape index: {}]
  %s5 = inlined_call_operand.vmem [shape: f32[1,256], index: 5, kind: input, shape index: {}, may-alias: {2,5,8}]
  %s6 = inlined_call_operand.vmem [shape: f32[1,256], index: 6, kind: input, shape index: {}, may-alias: {3,6,9}]
  %s7 = inlined_call_operand.vmem [shape: bf16[1,128,256], index: 7, kind: input, shape index: {}]
  %s8 = inlined_call_operand.vmem [shape: f32[1,256], index: 8, kind: input, shape index: {}, may-alias: {2,5,8}]
  %s9 = inlined_call_operand.vmem [shape: f32[1,256], index: 9, kind: input, shape index: {}, may-alias: {3,6,9}]
  %s10 = inlined_call_operand.vmem [shape: bf16[2,16,256], index: 10, kind: output, shape index: {}]
  %s11 = sld [smem:[#allocation0]]
  $region50: #{resnet1d_forward.15} parent=0
    _
  %s13 = ssub.s32 1, %s11
  %s14 = scalar_select 0, %s13, %s11
  // Predicated region
  $region2: #{resnet1d_forward.15} parent=0 // pred_check
    _
  $region3: #{resnet1d_forward.15} parent=0 // pred_check_branch
    %16 = sbr.rel (0) target = $region5
  $region4: #{resnet1d_forward.15} parent=0 // pred_region
    _
  $region5: #{resnet1d_forward.15} parent=0 // pred_fallthru
    _
  // Predicated region
  $region6: #{resnet1d_forward.15} parent=0 // pred_check
    _
  $region7: #{resnet1d_forward.15} parent=0 // pred_check_branch
    %18 = sbr.rel (0) target = $region9
  $region8: #{resnet1d_forward.15} parent=0 // pred_region
    _
  $region9: #{resnet1d_forward.15} parent=0 // pred_fallthru
    _
  // Predicated region
  $region10: #{resnet1d_forward.15} parent=0 // pred_check
    _
  $region11: #{resnet1d_forward.15} parent=0 // pred_check_branch
    %20 = sbr.rel (0) target = $region13
  $region12: #{resnet1d_forward.15} parent=0 // pred_region
    _
  $region13: #{resnet1d_forward.15} parent=0 // pred_fallthru
    _
  // Predicated region
  $region14: #{resnet1d_forward.15} parent=0 // pred_check
    _
  $region15: #{resnet1d_forward.15} parent=0 // pred_check_branch
    %22 = sbr.rel (0) target = $region17
  $region16: #{resnet1d_forward.15} parent=0 // pred_region
    _
  $region17: #{resnet1d_forward.15} parent=0 // pred_fallthru
    _
  // Predicated region
  $region18: #{resnet1d_forward.15} parent=0 // pred_check
    _
  $region19: #{resnet1d_forward.15} parent=0 // pred_check_branch
    %24 = sbr.rel (0) target = $region21
  $region20: #{resnet1d_forward.15} parent=0 // pred_region
    _
  $region21: #{resnet1d_forward.15} parent=0 // pred_fallthru
    _
  // Predicated region
  $region22: #{resnet1d_forward.15} parent=0 // pred_check
    _
  $region23: #{resnet1d_forward.15} parent=0 // pred_check_branch
    %26 = sbr.rel (0) target = $region25
  $region24: #{resnet1d_forward.15} parent=0 // pred_region
    _
  $region25: #{resnet1d_forward.15} parent=0 // pred_fallthru
    _
  // Predicated region
  $region26: #{resnet1d_forward.15} parent=0 // pred_check
    _
  $region27: #{resnet1d_forward.15} parent=0 // pred_check_branch
    %28 = sbr.rel (0) target = $region29
  $region28: #{resnet1d_forward.15} parent=0 // pred_region
    _
  $region29: #{resnet1d_forward.15} parent=0 // pred_fallthru
    _
  // Predicated region
  $region30: #{resnet1d_forward.15} parent=0 // pred_check
    _
  $region31: #{resnet1d_forward.15} parent=0 // pred_check_branch
    %30 = sbr.rel (0) target = $region33
  $region32: #{resnet1d_forward.15} parent=0 // pred_region
    _
  $region33: #{resnet1d_forward.15} parent=0 // pred_fallthru
    _
  // Predicated region
  $region34: #{resnet1d_forward.15} parent=0 // pred_check
    _
  $region35: #{resnet1d_forward.15} parent=0 // pred_check_branch
    %32 = sbr.rel (0) target = $region37
  $region36: #{resnet1d_forward.15} parent=0 // pred_region
    _
  $region37: #{resnet1d_forward.15} parent=0 // pred_fallthru
    _
  // Predicated region
  $region38: #{resnet1d_forward.15} parent=0 // pred_check
    _
  $region39: #{resnet1d_forward.15} parent=0 // pred_check_branch
    %34 = sbr.rel (0) target = $region41
  $region40: #{resnet1d_forward.15} parent=0 // pred_region
    _
  $region41: #{resnet1d_forward.15} parent=0 // pred_fallthru
    _
  %s36 = scalar_lea.vmem %s0, 8
  %v37 = vld [vmem:[%s36] sm:$0xf]
  %v38 = vld [vmem:[%s36 + $0x4] sm:$0xf]
  %s39 = scalar_lea.vmem %s0, 24
  %v40 = vld [vmem:[%s39] sm:$0xf]
  %v41 = vld [vmem:[%s39 + $0x4] sm:$0xf]
  %v44 = vunpack.c.l.b16 %v37
  %v45 = vunpack.c.l.b16 %v38
  %v46 = vpack.c.b16 %v45, %v44
  %v50 = vunpack.c.l.b16 %v40
  %v51 = vunpack.c.l.b16 %v41
  %v52 = vpack.c.b16 %v51, %v50
  %v54 = vld [vmem:[%s0] sm:$0xf]
  %v55 = vld [vmem:[%s0 + $0x4] sm:$0xf]
  %s56 = scalar_lea.vmem %s0, 16
  %v57 = vld [vmem:[%s56] sm:$0xf]
  %v58 = vld [vmem:[%s56 + $0x4] sm:$0xf]
  %v61 = vunpack.c.l.b16 %v54
  %v62 = vunpack.c.l.b16 %v55
  %v63 = vpack.c.b16 %v62, %v61
  %v67 = vunpack.c.l.b16 %v57
  %v68 = vunpack.c.l.b16 %v58
  %v69 = vpack.c.b16 %v68, %v67
  %v71 = vld [vmem:[%s1] sm:$0xff]
  %v72 = vld [vmem:[%s1 + $0x8] sm:$0xff]
  %v73 = vld [vmem:[%s1 + $0x10] sm:$0xff]
  %v74 = vld [vmem:[%s1 + $0x18] sm:$0xff]
  %v75 = vld [vmem:[%s1 + $0x20] sm:$0xff]
  %v76 = vld [vmem:[%s1 + $0x28] sm:$0xff]
  %v77 = vld [vmem:[%s1 + $0x30] sm:$0xff]
  %v78 = vld [vmem:[%s1 + $0x38] sm:$0xff]
  %v79 = vld [vmem:[%s1 + $0x40] sm:$0xff]
  %v80 = vld [vmem:[%s1 + $0x48] sm:$0xff]
  %v81 = vld [vmem:[%s1 + $0x50] sm:$0xff]
  %v82 = vld [vmem:[%s1 + $0x58] sm:$0xff]
  %v83 = vld [vmem:[%s1 + $0x60] sm:$0xff]
  %v84 = vld [vmem:[%s1 + $0x68] sm:$0xff]
  %v85 = vld [vmem:[%s1 + $0x70] sm:$0xff]
  %v86 = vld [vmem:[%s1 + $0x78] sm:$0xff]
  %s87 = scalar_lea.vmem %s1, 128
  %v88 = vld [vmem:[%s87] sm:$0xff]
  %v89 = vld [vmem:[%s87 + $0x8] sm:$0xff]
  %v90 = vld [vmem:[%s87 + $0x10] sm:$0xff]
  %v91 = vld [vmem:[%s87 + $0x18] sm:$0xff]
  %v92 = vld [vmem:[%s87 + $0x20] sm:$0xff]
  %v93 = vld [vmem:[%s87 + $0x28] sm:$0xff]
  %v94 = vld [vmem:[%s87 + $0x30] sm:$0xff]
  %v95 = vld [vmem:[%s87 + $0x38] sm:$0xff]
  %v96 = vld [vmem:[%s87 + $0x40] sm:$0xff]
  %v97 = vld [vmem:[%s87 + $0x48] sm:$0xff]
  %v98 = vld [vmem:[%s87 + $0x50] sm:$0xff]
  %v99 = vld [vmem:[%s87 + $0x58] sm:$0xff]
  %v100 = vld [vmem:[%s87 + $0x60] sm:$0xff]
  %v101 = vld [vmem:[%s87 + $0x68] sm:$0xff]
  %v102 = vld [vmem:[%s87 + $0x70] sm:$0xff]
  %v103 = vld [vmem:[%s87 + $0x78] sm:$0xff]
  %v120 = vunpack.c.l.b16 %v88
  %v121 = vunpack.c.h.b16 %v88
  %v122 = vunpack.c.l.b16 %v89
  %v123 = vunpack.c.h.b16 %v89
  %v124 = vunpack.c.l.b16 %v90
  %v125 = vunpack.c.h.b16 %v90
  %v126 = vunpack.c.l.b16 %v91
  %v127 = vunpack.c.h.b16 %v91
  %v128 = vunpack.c.l.b16 %v92
  %v129 = vunpack.c.h.b16 %v92
  %v130 = vunpack.c.l.b16 %v93
  %v131 = vunpack.c.h.b16 %v93
  %v132 = vunpack.c.l.b16 %v94
  %v133 = vunpack.c.h.b16 %v94
  %v134 = vunpack.c.l.b16 %v95
  %v135 = vunpack.c.h.b16 %v95
  %v136 = vunpack.c.l.b16 %v96
  %v137 = vunpack.c.h.b16 %v96
  %v138 = vunpack.c.l.b16 %v97
  %v139 = vunpack.c.h.b16 %v97
  %v140 = vunpack.c.l.b16 %v98
  %v141 = vunpack.c.h.b16 %v98
  %v142 = vunpack.c.l.b16 %v99
  %v143 = vunpack.c.h.b16 %v99
  %v144 = vunpack.c.l.b16 %v100
  %v145 = vunpack.c.h.b16 %v100
  %v146 = vunpack.c.l.b16 %v101
  %v147 = vunpack.c.h.b16 %v101
  %v148 = vunpack.c.l.b16 %v102
  %v149 = vunpack.c.h.b16 %v102
  %v150 = vunpack.c.l.b16 %v103
  %v151 = vunpack.c.h.b16 %v103
  %v152 = vpack.c.b16 %v122, %v120
  %v153 = vpack.c.b16 %v123, %v121
  %v154 = vpack.c.b16 %v126, %v124
  %v155 = vpack.c.b16 %v127, %v125
  %v156 = vpack.c.b16 %v130, %v128
  %v157 = vpack.c.b16 %v131, %v129
  %v158 = vpack.c.b16 %v134, %v132
  %v159 = vpack.c.b16 %v135, %v133
  %v160 = vpack.c.b16 %v138, %v136
  %v161 = vpack.c.b16 %v139, %v137
  %v162 = vpack.c.b16 %v142, %v140
  %v163 = vpack.c.b16 %v143, %v141
  %v164 = vpack.c.b16 %v146, %v144
  %v165 = vpack.c.b16 %v147, %v145
  %v166 = vpack.c.b16 %v150, %v148
  %v167 = vpack.c.b16 %v151, %v149
  %184 = vmatprep.subr.bf16.mxu0 %v167
  %185 = vmatpush1.bf16.msra.mxu0 %v166
  %186 = vmatprep.subr.bf16.mxu0 %v165
  %187 = vmatpush1.bf16.msra.mxu0 %v164
  %188 = vmatprep.subr.bf16.mxu0 %v163
  %189 = vmatpush1.bf16.msra.mxu0 %v162
  %190 = vmatprep.subr.bf16.mxu0 %v161
  %191 = vmatpush1.bf16.msra.mxu0 %v160
  %192 = vmatprep.subr.bf16.mxu0 %v159
  %193 = vmatpush1.bf16.msra.mxu0 %v158
  %194 = vmatprep.subr.bf16.mxu0 %v157
  %195 = vmatpush1.bf16.msra.mxu0 %v156
  %196 = vmatprep.subr.bf16.mxu0 %v155
  %197 = vmatpush1.bf16.msra.mxu0 %v154
  %198 = vmatprep.subr.bf16.mxu0 %v153
  %199 = vmatpush1.bf16.msra.mxu0 %v152
  %200 = vmatprep.subr.bf16.mxu0 0
  %201 = vmatpush2.bf16.msra.mxu0 0
  %202 = vmatprep.subr.bf16.mxu0 0
  %203 = vmatpush2.bf16.msra.mxu0 0
  %204 = vmatprep.subr.bf16.mxu0 0
  %205 = vmatpush2.bf16.msra.mxu0 0
  %206 = vmatprep.subr.bf16.mxu0 0
  %207 = vmatpush2.bf16.msra.mxu0 0
  %208 = vmatprep.subr.bf16.mxu0 0
  %209 = vmatpush2.bf16.msra.mxu0 0
  %210 = vmatprep.subr.bf16.mxu0 0
  %211 = vmatpush2.bf16.msra.mxu0 0
  %212 = vmatprep.subr.bf16.mxu0 0
  %213 = vmatpush2.bf16.msra.mxu0 0
  %214 = vmatprep.subr.bf16.mxu0 0
  %215 = vmatpush2.bf16.msra.mxu0 0
  %216 = vmatprep.mubr.bf16.mxu0 0
  %217 = vmatmul.mubr.bf16.gmra.mxu0 %v46
  %v218 = vpop.f32.mrf.mxu0
  %v219 = vadd.f32 0.0, %v218
  %v220 = vpop.f32.mrf.mxu0
  %v221 = vadd.f32 0.0, %v220
  %v222 = vpop.f32.mrf.mxu0
  %v223 = vadd.f32 0.0, %v222
  %v224 = vpop.f32.mrf.mxu0
  %v225 = vadd.f32 0.0, %v224
  %226 = vmatprep.mubr.bf16.mxu0 0
  %227 = vmatmul.mubr.bf16.gmra.mxu0 %v52
  %v228 = vpop.f32.mrf.mxu0
  %v229 = vadd.f32 0.0, %v228
  %v230 = vpop.f32.mrf.mxu0
  %v231 = vadd.f32 0.0, %v230
  %v232 = vpop.f32.mrf.mxu0
  %v233 = vadd.f32 0.0, %v232
  %v234 = vpop.f32.mrf.mxu0
  %v235 = vadd.f32 0.0, %v234
  %236 = vdwg.mxu0
  %v253 = vunpack.c.l.b16 %v71
  %v254 = vunpack.c.h.b16 %v71
  %v255 = vunpack.c.l.b16 %v72
  %v256 = vunpack.c.h.b16 %v72
  %v257 = vunpack.c.l.b16 %v73
  %v258 = vunpack.c.h.b16 %v73
  %v259 = vunpack.c.l.b16 %v74
  %v260 = vunpack.c.h.b16 %v74
  %v261 = vunpack.c.l.b16 %v75
  %v262 = vunpack.c.h.b16 %v75
  %v263 = vunpack.c.l.b16 %v76
  %v264 = vunpack.c.h.b16 %v76
  %v265 = vunpack.c.l.b16 %v77
  %v266 = vunpack.c.h.b16 %v77
  %v267 = vunpack.c.l.b16 %v78
  %v268 = vunpack.c.h.b16 %v78
  %v269 = vunpack.c.l.b16 %v79
  %v270 = vunpack.c.h.b16 %v79
  %v271 = vunpack.c.l.b16 %v80
  %v272 = vunpack.c.h.b16 %v80
  %v273 = vunpack.c.l.b16 %v81
  %v274 = vunpack.c.h.b16 %v81
  %v275 = vunpack.c.l.b16 %v82
  %v276 = vunpack.c.h.b16 %v82
  %v277 = vunpack.c.l.b16 %v83
  %v278 = vunpack.c.h.b16 %v83
  %v279 = vunpack.c.l.b16 %v84
  %v280 = vunpack.c.h.b16 %v84
  %v281 = vunpack.c.l.b16 %v85
  %v282 = vunpack.c.h.b16 %v85
  %v283 = vunpack.c.l.b16 %v86
  %v284 = vunpack.c.h.b16 %v86
  %v285 = vpack.c.b16 %v255, %v253
  %v286 = vpack.c.b16 %v256, %v254
  %v287 = vpack.c.b16 %v259, %v257
  %v288 = vpack.c.b16 %v260, %v258
  %v289 = vpack.c.b16 %v263, %v261
  %v290 = vpack.c.b16 %v264, %v262
  %v291 = vpack.c.b16 %v267, %v265
  %v292 = vpack.c.b16 %v268, %v266
  %v293 = vpack.c.b16 %v271, %v269
  %v294 = vpack.c.b16 %v272, %v270
  %v295 = vpack.c.b16 %v275, %v273
  %v296 = vpack.c.b16 %v276, %v274
  %v297 = vpack.c.b16 %v279, %v277
  %v298 = vpack.c.b16 %v280, %v278
  %v299 = vpack.c.b16 %v283, %v281
  %v300 = vpack.c.b16 %v284, %v282
  %317 = vmatprep.subr.bf16.mxu0 %v300
  %318 = vmatpush1.bf16.msra.mxu0 %v299
  %319 = vmatprep.subr.bf16.mxu0 %v298
  %320 = vmatpush1.bf16.msra.mxu0 %v297
  %321 = vmatprep.subr.bf16.mxu0 %v296
  %322 = vmatpush1.bf16.msra.mxu0 %v295
  %323 = vmatprep.subr.bf16.mxu0 %v294
  %324 = vmatpush1.bf16.msra.mxu0 %v293
  %325 = vmatprep.subr.bf16.mxu0 %v292
  %326 = vmatpush1.bf16.msra.mxu0 %v291
  %327 = vmatprep.subr.bf16.mxu0 %v290
  %328 = vmatpush1.bf16.msra.mxu0 %v289
  %329 = vmatprep.subr.bf16.mxu0 %v288
  %330 = vmatpush1.bf16.msra.mxu0 %v287
  %331 = vmatprep.subr.bf16.mxu0 %v286
  %332 = vmatpush1.bf16.msra.mxu0 %v285
  %333 = vmatprep.subr.bf16.mxu0 0
  %334 = vmatpush2.bf16.msra.mxu0 0
  %335 = vmatprep.subr.bf16.mxu0 0
  %336 = vmatpush2.bf16.msra.mxu0 0
  %337 = vmatprep.subr.bf16.mxu0 0
  %338 = vmatpush2.bf16.msra.mxu0 0
  %339 = vmatprep.subr.bf16.mxu0 0
  %340 = vmatpush2.bf16.msra.mxu0 0
  %341 = vmatprep.subr.bf16.mxu0 0
  %342 = vmatpush2.bf16.msra.mxu0 0
  %343 = vmatprep.subr.bf16.mxu0 0
  %344 = vmatpush2.bf16.msra.mxu0 0
  %345 = vmatprep.subr.bf16.mxu0 0
  %346 = vmatpush2.bf16.msra.mxu0 0
  %347 = vmatprep.subr.bf16.mxu0 0
  %348 = vmatpush2.bf16.msra.mxu0 0
  %349 = vmatprep.mubr.bf16.mxu0 0
  %350 = vmatmul.mubr.bf16.gmra.mxu0 %v63
  %v351 = vpop.f32.mrf.mxu0
  %v352 = vadd.f32 %v219, %v351
  %v353 = vpop.f32.mrf.mxu0
  %v354 = vadd.f32 %v221, %v353
  %v355 = vpop.f32.mrf.mxu0
  %v356 = vadd.f32 %v223, %v355
  %v357 = vpop.f32.mrf.mxu0
  %v358 = vadd.f32 %v225, %v357
  %359 = vmatprep.mubr.bf16.mxu0 0
  %360 = vmatmul.mubr.bf16.gmra.mxu0 %v69
  %v361 = vpop.f32.mrf.mxu0
  %v362 = vadd.f32 %v229, %v361
  %v363 = vpop.f32.mrf.mxu0
  %v364 = vadd.f32 %v231, %v363
  %v365 = vpop.f32.mrf.mxu0
  %v366 = vadd.f32 %v233, %v365
  %v367 = vpop.f32.mrf.mxu0
  %v368 = vadd.f32 %v235, %v367
  %369 = vdwg.mxu0
  %s370 = scalar_lea.vmem %s0, 32
  %v371 = vld [vmem:[%s370] sm:$0xf]
  %v372 = vld [vmem:[%s370 + $0x4] sm:$0xf]
  %v375 = vunpack.c.l.b16 %v371
  %v376 = vunpack.c.l.b16 %v372
  %v377 = vpack.c.b16 %v376, %v375
  %s379 = scalar_lea.vmem %s1, 256
  %v380 = vld [vmem:[%s379] sm:$0xff]
  %v381 = vld [vmem:[%s379 + $0x8] sm:$0xff]
  %v382 = vld [vmem:[%s379 + $0x10] sm:$0xff]
  %v383 = vld [vmem:[%s379 + $0x18] sm:$0xff]
  %v384 = vld [vmem:[%s379 + $0x20] sm:$0xff]
  %v385 = vld [vmem:[%s379 + $0x28] sm:$0xff]
  %v386 = vld [vmem:[%s379 + $0x30] sm:$0xff]
  %v387 = vld [vmem:[%s379 + $0x38] sm:$0xff]
  %v388 = vld [vmem:[%s379 + $0x40] sm:$0xff]
  %v389 = vld [vmem:[%s379 + $0x48] sm:$0xff]
  %v390 = vld [vmem:[%s379 + $0x50] sm:$0xff]
  %v391 = vld [vmem:[%s379 + $0x58] sm:$0xff]
  %v392 = vld [vmem:[%s379 + $0x60] sm:$0xff]
  %v393 = vld [vmem:[%s379 + $0x68] sm:$0xff]
  %v394 = vld [vmem:[%s379 + $0x70] sm:$0xff]
  %v395 = vld [vmem:[%s379 + $0x78] sm:$0xff]
  %v412 = vunpack.c.l.b16 %v380
  %v413 = vunpack.c.h.b16 %v380
  %v414 = vunpack.c.l.b16 %v381
  %v415 = vunpack.c.h.b16 %v381
  %v416 = vunpack.c.l.b16 %v382
  %v417 = vunpack.c.h.b16 %v382
  %v418 = vunpack.c.l.b16 %v383
  %v419 = vunpack.c.h.b16 %v383
  %v420 = vunpack.c.l.b16 %v384
  %v421 = vunpack.c.h.b16 %v384
  %v422 = vunpack.c.l.b16 %v385
  %v423 = vunpack.c.h.b16 %v385
  %v424 = vunpack.c.l.b16 %v386
  %v425 = vunpack.c.h.b16 %v386
  %v426 = vunpack.c.l.b16 %v387
  %v427 = vunpack.c.h.b16 %v387
  %v428 = vunpack.c.l.b16 %v388
  %v429 = vunpack.c.h.b16 %v388
  %v430 = vunpack.c.l.b16 %v389
  %v431 = vunpack.c.h.b16 %v389
  %v432 = vunpack.c.l.b16 %v390
  %v433 = vunpack.c.h.b16 %v390
  %v434 = vunpack.c.l.b16 %v391
  %v435 = vunpack.c.h.b16 %v391
  %v436 = vunpack.c.l.b16 %v392
  %v437 = vunpack.c.h.b16 %v392
  %v438 = vunpack.c.l.b16 %v393
  %v439 = vunpack.c.h.b16 %v393
  %v440 = vunpack.c.l.b16 %v394
  %v441 = vunpack.c.h.b16 %v394
  %v442 = vunpack.c.l.b16 %v395
  %v443 = vunpack.c.h.b16 %v395
  %v444 = vpack.c.b16 %v414, %v412
  %v445 = vpack.c.b16 %v415, %v413
  %v446 = vpack.c.b16 %v418, %v416
  %v447 = vpack.c.b16 %v419, %v417
  %v448 = vpack.c.b16 %v422, %v420
  %v449 = vpack.c.b16 %v423, %v421
  %v450 = vpack.c.b16 %v426, %v424
  %v451 = vpack.c.b16 %v427, %v425
  %v452 = vpack.c.b16 %v430, %v428
  %v453 = vpack.c.b16 %v431, %v429
  %v454 = vpack.c.b16 %v434, %v432
  %v455 = vpack.c.b16 %v435, %v433
  %v456 = vpack.c.b16 %v438, %v436
  %v457 = vpack.c.b16 %v439, %v437
  %v458 = vpack.c.b16 %v442, %v440
  %v459 = vpack.c.b16 %v443, %v441
  %476 = vmatprep.subr.bf16.mxu0 %v459
  %477 = vmatpush1.bf16.msra.mxu0 %v458
  %478 = vmatprep.subr.bf16.mxu0 %v457
  %479 = vmatpush1.bf16.msra.mxu0 %v456
  %480 = vmatprep.subr.bf16.mxu0 %v455
  %481 = vmatpush1.bf16.msra.mxu0 %v454
  %482 = vmatprep.subr.bf16.mxu0 %v453
  %483 = vmatpush1.bf16.msra.mxu0 %v452
  %484 = vmatprep.subr.bf16.mxu0 %v451
  %485 = vmatpush1.bf16.msra.mxu0 %v450
  %486 = vmatprep.subr.bf16.mxu0 %v449
  %487 = vmatpush1.bf16.msra.mxu0 %v448
  %488 = vmatprep.subr.bf16.mxu0 %v447
  %489 = vmatpush1.bf16.msra.mxu0 %v446
  %490 = vmatprep.subr.bf16.mxu0 %v445
  %491 = vmatpush1.bf16.msra.mxu0 %v444
  %492 = vmatprep.subr.bf16.mxu0 0
  %493 = vmatpush2.bf16.msra.mxu0 0
  %494 = vmatprep.subr.bf16.mxu0 0
  %495 = vmatpush2.bf16.msra.mxu0 0
  %496 = vmatprep.subr.bf16.mxu0 0
  %497 = vmatpush2.bf16.msra.mxu0 0
  %498 = vmatprep.subr.bf16.mxu0 0
  %499 = vmatpush2.bf16.msra.mxu0 0
  %500 = vmatprep.subr.bf16.mxu0 0
  %501 = vmatpush2.bf16.msra.mxu0 0
  %502 = vmatprep.subr.bf16.mxu0 0
  %503 = vmatpush2.bf16.msra.mxu0 0
  %504 = vmatprep.subr.bf16.mxu0 0
  %505 = vmatpush2.bf16.msra.mxu0 0
  %506 = vmatprep.subr.bf16.mxu0 0
  %507 = vmatpush2.bf16.msra.mxu0 0
  %508 = vmatprep.mubr.bf16.mxu0 0
  %509 = vmatmul.mubr.bf16.gmra.mxu0 %v69
  %v510 = vpop.f32.mrf.mxu0
  %v511 = vadd.f32 0.0, %v510
  %v512 = vpop.f32.mrf.mxu0
  %v513 = vadd.f32 0.0, %v512
  %v514 = vpop.f32.mrf.mxu0
  %v515 = vadd.f32 0.0, %v514
  %v516 = vpop.f32.mrf.mxu0
  %v517 = vadd.f32 0.0, %v516
  %518 = vmatprep.mubr.bf16.mxu0 0
  %519 = vmatmul.mubr.bf16.gmra.mxu0 %v377
  %v520 = vpop.f32.mrf.mxu0
  %v521 = vadd.f32 0.0, %v520
  %v522 = vpop.f32.mrf.mxu0
  %v523 = vadd.f32 0.0, %v522
  %v524 = vpop.f32.mrf.mxu0
  %v525 = vadd.f32 0.0, %v524
  %v526 = vpop.f32.mrf.mxu0
  %v527 = vadd.f32 0.0, %v526
  %528 = vdwg.mxu0
  %v529 = vadd.f32 %v352, %v511
  %v530 = vadd.f32 %v354, %v513
  %v531 = vadd.f32 %v356, %v515
  %v532 = vadd.f32 %v358, %v517
  %v533 = vadd.f32 %v362, %v521
  %v534 = vadd.f32 %v364, %v523
  %v535 = vadd.f32 %v366, %v525
  %v536 = vadd.f32 %v368, %v527
  %v537 = vld [vmem:[%s2] sm:$0x3]
  %v539 = vlaneseq
  %v540 = vshrl.u32 %v539, 7
  %v541 = vsub.s32 0, %v540
  %v542 = vrot.slane %v537, %v541
  %v543 = vlaneseq
  %v544 = vshrl.u32 %v543, 7
  %v545 = vsub.s32 1, %v544
  %v546 = vrot.slane %v537, %v545
  %v549 = vmul.f32 %v529, %v542
  %v550 = vmul.f32 %v530, %v546
  %v551 = vmul.f32 %v531, %v542
  %v552 = vmul.f32 %v532, %v546
  %v553 = vmul.f32 %v533, %v542
  %v554 = vmul.f32 %v534, %v546
  %v555 = vmul.f32 %v535, %v542
  %v556 = vmul.f32 %v536, %v546
  %v557 = vld [vmem:[%s3] sm:$0x3]
  %v559 = vlaneseq
  %v560 = vshrl.u32 %v559, 7
  %v561 = vsub.s32 0, %v560
  %v562 = vrot.slane %v557, %v561
  %v563 = vlaneseq
  %v564 = vshrl.u32 %v563, 7
  %v565 = vsub.s32 1, %v564
  %v566 = vrot.slane %v557, %v565
  %v569 = vadd.f32 %v549, %v562
  %v570 = vadd.f32 %v550, %v566
  %v571 = vadd.f32 %v551, %v562
  %v572 = vadd.f32 %v552, %v566
  %v573 = vadd.f32 %v553, %v562
  %v574 = vadd.f32 %v554, %v566
  %v575 = vadd.f32 %v555, %v562
  %v576 = vadd.f32 %v556, %v566
  %v577 = vmax.f32 %v569, 0.0
  %v578 = vmax.f32 %v570, 0.0
  %v579 = vmax.f32 %v571, 0.0
  %v580 = vmax.f32 %v572, 0.0
  %v581 = vmax.f32 %v573, 0.0
  %v582 = vmax.f32 %v574, 0.0
  %v583 = vmax.f32 %v575, 0.0
  %v584 = vmax.f32 %v576, 0.0
  %v585 = vpack.c.bf16 0.0, 0.0
  %v586 = vpack.c.bf16 %v579, %v577
  %v587 = vpack.c.bf16 %v580, %v578
  %v588 = vld [vmem:[%s4] sm:$0xff]
  %v589 = vld [vmem:[%s4 + $0x8] sm:$0xff]
  %v590 = vld [vmem:[%s4 + $0x10] sm:$0xff]
  %v591 = vld [vmem:[%s4 + $0x18] sm:$0xff]
  %v592 = vld [vmem:[%s4 + $0x20] sm:$0xff]
  %v593 = vld [vmem:[%s4 + $0x28] sm:$0xff]
  %v594 = vld [vmem:[%s4 + $0x30] sm:$0xff]
  %v595 = vld [vmem:[%s4 + $0x38] sm:$0xff]
  %v596 = vld [vmem:[%s4 + $0x40] sm:$0xff]
  %v597 = vld [vmem:[%s4 + $0x48] sm:$0xff]
  %v598 = vld [vmem:[%s4 + $0x50] sm:$0xff]
  %v599 = vld [vmem:[%s4 + $0x58] sm:$0xff]
  %v600 = vld [vmem:[%s4 + $0x60] sm:$0xff]
  %v601 = vld [vmem:[%s4 + $0x68] sm:$0xff]
  %v602 = vld [vmem:[%s4 + $0x70] sm:$0xff]
  %v603 = vld [vmem:[%s4 + $0x78] sm:$0xff]
  %v604 = vld [vmem:[%s4 + $0x80] sm:$0xff]
  %v605 = vld [vmem:[%s4 + $0x88] sm:$0xff]
  %v606 = vld [vmem:[%s4 + $0x90] sm:$0xff]
  %v607 = vld [vmem:[%s4 + $0x98] sm:$0xff]
  %v608 = vld [vmem:[%s4 + $0xa0] sm:$0xff]
  %v609 = vld [vmem:[%s4 + $0xa8] sm:$0xff]
  %v610 = vld [vmem:[%s4 + $0xb0] sm:$0xff]
  %v611 = vld [vmem:[%s4 + $0xb8] sm:$0xff]
  %v612 = vld [vmem:[%s4 + $0xc0] sm:$0xff]
  %v613 = vld [vmem:[%s4 + $0xc8] sm:$0xff]
  %v614 = vld [vmem:[%s4 + $0xd0] sm:$0xff]
  %v615 = vld [vmem:[%s4 + $0xd8] sm:$0xff]
  %v616 = vld [vmem:[%s4 + $0xe0] sm:$0xff]
  %v617 = vld [vmem:[%s4 + $0xe8] sm:$0xff]
  %v618 = vld [vmem:[%s4 + $0xf0] sm:$0xff]
  %v619 = vld [vmem:[%s4 + $0xf8] sm:$0xff]
  %v620 = vpack.c.bf16 %v583, %v581
  %v621 = vpack.c.bf16 %v584, %v582
  %s622 = scalar_lea.vmem %s4, 256
  %v623 = vld [vmem:[%s622] sm:$0xff]
  %v624 = vld [vmem:[%s622 + $0x8] sm:$0xff]
  %v625 = vld [vmem:[%s622 + $0x10] sm:$0xff]
  %v626 = vld [vmem:[%s622 + $0x18] sm:$0xff]
  %v627 = vld [vmem:[%s622 + $0x20] sm:$0xff]
  %v628 = vld [vmem:[%s622 + $0x28] sm:$0xff]
  %v629 = vld [vmem:[%s622 + $0x30] sm:$0xff]
  %v630 = vld [vmem:[%s622 + $0x38] sm:$0xff]
  %v631 = vld [vmem:[%s622 + $0x40] sm:$0xff]
  %v632 = vld [vmem:[%s622 + $0x48] sm:$0xff]
  %v633 = vld [vmem:[%s622 + $0x50] sm:$0xff]
  %v634 = vld [vmem:[%s622 + $0x58] sm:$0xff]
  %v635 = vld [vmem:[%s622 + $0x60] sm:$0xff]
  %v636 = vld [vmem:[%s622 + $0x68] sm:$0xff]
  %v637 = vld [vmem:[%s622 + $0x70] sm:$0xff]
  %v638 = vld [vmem:[%s622 + $0x78] sm:$0xff]
  %v639 = vld [vmem:[%s622 + $0x80] sm:$0xff]
  %v640 = vld [vmem:[%s622 + $0x88] sm:$0xff]
  %v641 = vld [vmem:[%s622 + $0x90] sm:$0xff]
  %v642 = vld [vmem:[%s622 + $0x98] sm:$0xff]
  %v643 = vld [vmem:[%s622 + $0xa0] sm:$0xff]
  %v644 = vld [vmem:[%s622 + $0xa8] sm:$0xff]
  %v645 = vld [vmem:[%s622 + $0xb0] sm:$0xff]
  %v646 = vld [vmem:[%s622 + $0xb8] sm:$0xff]
  %v647 = vld [vmem:[%s622 + $0xc0] sm:$0xff]
  %v648 = vld [vmem:[%s622 + $0xc8] sm:$0xff]
  %v649 = vld [vmem:[%s622 + $0xd0] sm:$0xff]
  %v650 = vld [vmem:[%s622 + $0xd8] sm:$0xff]
  %v651 = vld [vmem:[%s622 + $0xe0] sm:$0xff]
  %v652 = vld [vmem:[%s622 + $0xe8] sm:$0xff]
  %v653 = vld [vmem:[%s622 + $0xf0] sm:$0xff]
  %v654 = vld [vmem:[%s622 + $0xf8] sm:$0xff]
  %v687 = vunpack.c.l.b16 %v623
  %v688 = vunpack.c.h.b16 %v623
  %v689 = vunpack.c.l.b16 %v624
  %v690 = vunpack.c.h.b16 %v624
  %v691 = vunpack.c.l.b16 %v625
  %v692 = vunpack.c.h.b16 %v625
  %v693 = vunpack.c.l.b16 %v626
  %v694 = vunpack.c.h.b16 %v626
  %v695 = vunpack.c.l.b16 %v627
  %v696 = vunpack.c.h.b16 %v627
  %v697 = vunpack.c.l.b16 %v628
  %v698 = vunpack.c.h.b16 %v628
  %v699 = vunpack.c.l.b16 %v629
  %v700 = vunpack.c.h.b16 %v629
  %v701 = vunpack.c.l.b16 %v630
  %v702 = vunpack.c.h.b16 %v630
  %v703 = vunpack.c.l.b16 %v631
  %v704 = vunpack.c.h.b16 %v631
  %v705 = vunpack.c.l.b16 %v632
  %v706 = vunpack.c.h.b16 %v632
  %v707 = vunpack.c.l.b16 %v633
  %v708 = vunpack.c.h.b16 %v633
  %v709 = vunpack.c.l.b16 %v634
  %v710 = vunpack.c.h.b16 %v634
  %v711 = vunpack.c.l.b16 %v635
  %v712 = vunpack.c.h.b16 %v635
  %v713 = vunpack.c.l.b16 %v636
  %v714 = vunpack.c.h.b16 %v636
  %v715 = vunpack.c.l.b16 %v637
  %v716 = vunpack.c.h.b16 %v637
  %v717 = vunpack.c.l.b16 %v638
  %v718 = vunpack.c.h.b16 %v638
  %v719 = vunpack.c.l.b16 %v639
  %v720 = vunpack.c.h.b16 %v639
  %v721 = vunpack.c.l.b16 %v640
  %v722 = vunpack.c.h.b16 %v640
  %v723 = vunpack.c.l.b16 %v641
  %v724 = vunpack.c.h.b16 %v641
  %v725 = vunpack.c.l.b16 %v642
  %v726 = vunpack.c.h.b16 %v642
  %v727 = vunpack.c.l.b16 %v643
  %v728 = vunpack.c.h.b16 %v643
  %v729 = vunpack.c.l.b16 %v644
  %v730 = vunpack.c.h.b16 %v644
  %v731 = vunpack.c.l.b16 %v645
  %v732 = vunpack.c.h.b16 %v645
  %v733 = vunpack.c.l.b16 %v646
  %v734 = vunpack.c.h.b16 %v646
  %v735 = vunpack.c.l.b16 %v647
  %v736 = vunpack.c.h.b16 %v647
  %v737 = vunpack.c.l.b16 %v648
  %v738 = vunpack.c.h.b16 %v648
  %v739 = vunpack.c.l.b16 %v649
  %v740 = vunpack.c.h.b16 %v649
  %v741 = vunpack.c.l.b16 %v650
  %v742 = vunpack.c.h.b16 %v650
  %v743 = vunpack.c.l.b16 %v651
  %v744 = vunpack.c.h.b16 %v651
  %v745 = vunpack.c.l.b16 %v652
  %v746 = vunpack.c.h.b16 %v652
  %v747 = vunpack.c.l.b16 %v653
  %v748 = vunpack.c.h.b16 %v653
  %v749 = vunpack.c.l.b16 %v654
  %v750 = vunpack.c.h.b16 %v654
  %v751 = vpack.c.b16 %v689, %v687
  %v752 = vpack.c.b16 %v690, %v688
  %v753 = vpack.c.b16 %v693, %v691
  %v754 = vpack.c.b16 %v694, %v692
  %v755 = vpack.c.b16 %v697, %v695
  %v756 = vpack.c.b16 %v698, %v696
  %v757 = vpack.c.b16 %v701, %v699
  %v758 = vpack.c.b16 %v702, %v700
  %v759 = vpack.c.b16 %v705, %v703
  %v760 = vpack.c.b16 %v706, %v704
  %v761 = vpack.c.b16 %v709, %v707
  %v762 = vpack.c.b16 %v710, %v708
  %v763 = vpack.c.b16 %v713, %v711
  %v764 = vpack.c.b16 %v714, %v712
  %v765 = vpack.c.b16 %v717, %v715
  %v766 = vpack.c.b16 %v718, %v716
  %v767 = vpack.c.b16 %v721, %v719
  %v768 = vpack.c.b16 %v722, %v720
  %v769 = vpack.c.b16 %v725, %v723
  %v770 = vpack.c.b16 %v726, %v724
  %v771 = vpack.c.b16 %v729, %v727
  %v772 = vpack.c.b16 %v730, %v728
  %v773 = vpack.c.b16 %v733, %v731
  %v774 = vpack.c.b16 %v734, %v732
  %v775 = vpack.c.b16 %v737, %v735
  %v776 = vpack.c.b16 %v738, %v736
  %v777 = vpack.c.b16 %v741, %v739
  %v778 = vpack.c.b16 %v742, %v740
  %v779 = vpack.c.b16 %v745, %v743
  %v780 = vpack.c.b16 %v746, %v744
  %v781 = vpack.c.b16 %v749, %v747
  %v782 = vpack.c.b16 %v750, %v748
  %815 = vmatprep.subr.bf16.mxu0 %v766
  %816 = vmatpush1.bf16.msra.mxu0 %v765
  %817 = vmatprep.subr.bf16.mxu0 %v764
  %818 = vmatpush1.bf16.msra.mxu0 %v763
  %819 = vmatprep.subr.bf16.mxu0 %v762
  %820 = vmatpush1.bf16.msra.mxu0 %v761
  %821 = vmatprep.subr.bf16.mxu0 %v760
  %822 = vmatpush1.bf16.msra.mxu0 %v759
  %823 = vmatprep.subr.bf16.mxu0 %v758
  %824 = vmatpush1.bf16.msra.mxu0 %v757
  %825 = vmatprep.subr.bf16.mxu0 %v756
  %826 = vmatpush1.bf16.msra.mxu0 %v755
  %827 = vmatprep.subr.bf16.mxu0 %v754
  %828 = vmatpush1.bf16.msra.mxu0 %v753
  %829 = vmatprep.subr.bf16.mxu0 %v752
  %830 = vmatpush1.bf16.msra.mxu0 %v751
  %831 = vmatprep.subr.bf16.mxu0 %v782
  %832 = vmatpush2.bf16.msra.mxu0 %v781
  %833 = vmatprep.subr.bf16.mxu0 %v780
  %834 = vmatpush2.bf16.msra.mxu0 %v779
  %835 = vmatprep.subr.bf16.mxu0 %v778
  %836 = vmatpush2.bf16.msra.mxu0 %v777
  %837 = vmatprep.subr.bf16.mxu0 %v776
  %838 = vmatpush2.bf16.msra.mxu0 %v775
  %839 = vmatprep.subr.bf16.mxu0 %v774
  %840 = vmatpush2.bf16.msra.mxu0 %v773
  %841 = vmatprep.subr.bf16.mxu0 %v772
  %842 = vmatpush2.bf16.msra.mxu0 %v771
  %843 = vmatprep.subr.bf16.mxu0 %v770
  %844 = vmatpush2.bf16.msra.mxu0 %v769
  %845 = vmatprep.subr.bf16.mxu0 %v768
  %846 = vmatpush2.bf16.msra.mxu0 %v767
  %847 = vmatprep.mubr.bf16.mxu0 %v587
  %848 = vmatmul.mubr.bf16.gmra.mxu0 %v586
  %v849 = vpop.f32.mrf.mxu0
  %v850 = vadd.f32 0.0, %v849
  %v851 = vpop.f32.mrf.mxu0
  %v852 = vadd.f32 0.0, %v851
  %v853 = vpop.f32.mrf.mxu0
  %v854 = vadd.f32 0.0, %v853
  %v855 = vpop.f32.mrf.mxu0
  %v856 = vadd.f32 0.0, %v855
  %857 = vmatprep.mubr.bf16.mxu0 %v621
  %858 = vmatmul.mubr.bf16.gmra.mxu0 %v620
  %v859 = vpop.f32.mrf.mxu0
  %v860 = vadd.f32 0.0, %v859
  %v861 = vpop.f32.mrf.mxu0
  %v862 = vadd.f32 0.0, %v861
  %v863 = vpop.f32.mrf.mxu0
  %v864 = vadd.f32 0.0, %v863
  %v865 = vpop.f32.mrf.mxu0
  %v866 = vadd.f32 0.0, %v865
  %867 = vdwg.mxu0
  %v900 = vunpack.c.l.b16 %v588
  %v901 = vunpack.c.h.b16 %v588
  %v902 = vunpack.c.l.b16 %v589
  %v903 = vunpack.c.h.b16 %v589
  %v904 = vunpack.c.l.b16 %v590
  %v905 = vunpack.c.h.b16 %v590
  %v906 = vunpack.c.l.b16 %v591
  %v907 = vunpack.c.h.b16 %v591
  %v908 = vunpack.c.l.b16 %v592
  %v909 = vunpack.c.h.b16 %v592
  %v910 = vunpack.c.l.b16 %v593
  %v911 = vunpack.c.h.b16 %v593
  %v912 = vunpack.c.l.b16 %v594
  %v913 = vunpack.c.h.b16 %v594
  %v914 = vunpack.c.l.b16 %v595
  %v915 = vunpack.c.h.b16 %v595
  %v916 = vunpack.c.l.b16 %v596
  %v917 = vunpack.c.h.b16 %v596
  %v918 = vunpack.c.l.b16 %v597
  %v919 = vunpack.c.h.b16 %v597
  %v920 = vunpack.c.l.b16 %v598
  %v921 = vunpack.c.h.b16 %v598
  %v922 = vunpack.c.l.b16 %v599
  %v923 = vunpack.c.h.b16 %v599
  %v924 = vunpack.c.l.b16 %v600
  %v925 = vunpack.c.h.b16 %v600
  %v926 = vunpack.c.l.b16 %v601
  %v927 = vunpack.c.h.b16 %v601
  %v928 = vunpack.c.l.b16 %v602
  %v929 = vunpack.c.h.b16 %v602
  %v930 = vunpack.c.l.b16 %v603
  %v931 = vunpack.c.h.b16 %v603
  %v932 = vunpack.c.l.b16 %v604
  %v933 = vunpack.c.h.b16 %v604
  %v934 = vunpack.c.l.b16 %v605
  %v935 = vunpack.c.h.b16 %v605
  %v936 = vunpack.c.l.b16 %v606
  %v937 = vunpack.c.h.b16 %v606
  %v938 = vunpack.c.l.b16 %v607
  %v939 = vunpack.c.h.b16 %v607
  %v940 = vunpack.c.l.b16 %v608
  %v941 = vunpack.c.h.b16 %v608
  %v942 = vunpack.c.l.b16 %v609
  %v943 = vunpack.c.h.b16 %v609
  %v944 = vunpack.c.l.b16 %v610
  %v945 = vunpack.c.h.b16 %v610
  %v946 = vunpack.c.l.b16 %v611
  %v947 = vunpack.c.h.b16 %v611
  %v948 = vunpack.c.l.b16 %v612
  %v949 = vunpack.c.h.b16 %v612
  %v950 = vunpack.c.l.b16 %v613
  %v951 = vunpack.c.h.b16 %v613
  %v952 = vunpack.c.l.b16 %v614
  %v953 = vunpack.c.h.b16 %v614
  %v954 = vunpack.c.l.b16 %v615
  %v955 = vunpack.c.h.b16 %v615
  %v956 = vunpack.c.l.b16 %v616
  %v957 = vunpack.c.h.b16 %v616
  %v958 = vunpack.c.l.b16 %v617
  %v959 = vunpack.c.h.b16 %v617
  %v960 = vunpack.c.l.b16 %v618
  %v961 = vunpack.c.h.b16 %v618
  %v962 = vunpack.c.l.b16 %v619
  %v963 = vunpack.c.h.b16 %v619
  %v964 = vpack.c.b16 %v902, %v900
  %v965 = vpack.c.b16 %v903, %v901
  %v966 = vpack.c.b16 %v906, %v904
  %v967 = vpack.c.b16 %v907, %v905
  %v968 = vpack.c.b16 %v910, %v908
  %v969 = vpack.c.b16 %v911, %v909
  %v970 = vpack.c.b16 %v914, %v912
  %v971 = vpack.c.b16 %v915, %v913
  %v972 = vpack.c.b16 %v918, %v916
  %v973 = vpack.c.b16 %v919, %v917
  %v974 = vpack.c.b16 %v922, %v920
  %v975 = vpack.c.b16 %v923, %v921
  %v976 = vpack.c.b16 %v926, %v924
  %v977 = vpack.c.b16 %v927, %v925
  %v978 = vpack.c.b16 %v930, %v928
  %v979 = vpack.c.b16 %v931, %v929
  %v980 = vpack.c.b16 %v934, %v932
  %v981 = vpack.c.b16 %v935, %v933
  %v982 = vpack.c.b16 %v938, %v936
  %v983 = vpack.c.b16 %v939, %v937
  %v984 = vpack.c.b16 %v942, %v940
  %v985 = vpack.c.b16 %v943, %v941
  %v986 = vpack.c.b16 %v946, %v944
  %v987 = vpack.c.b16 %v947, %v945
  %v988 = vpack.c.b16 %v950, %v948
  %v989 = vpack.c.b16 %v951, %v949
  %v990 = vpack.c.b16 %v954, %v952
  %v991 = vpack.c.b16 %v955, %v953
  %v992 = vpack.c.b16 %v958, %v956
  %v993 = vpack.c.b16 %v959, %v957
  %v994 = vpack.c.b16 %v962, %v960
  %v995 = vpack.c.b16 %v963, %v961
  %1028 = vmatprep.subr.bf16.mxu0 %v979
  %1029 = vmatpush1.bf16.msra.mxu0 %v978
  %1030 = vmatprep.subr.bf16.mxu0 %v977
  %1031 = vmatpush1.bf16.msra.mxu0 %v976
  %1032 = vmatprep.subr.bf16.mxu0 %v975
  %1033 = vmatpush1.bf16.msra.mxu0 %v974
  %1034 = vmatprep.subr.bf16.mxu0 %v973
  %1035 = vmatpush1.bf16.msra.mxu0 %v972
  %1036 = vmatprep.subr.bf16.mxu0 %v971
  %1037 = vmatpush1.bf16.msra.mxu0 %v970
  %1038 = vmatprep.subr.bf16.mxu0 %v969
  %1039 = vmatpush1.bf16.msra.mxu0 %v968
  %1040 = vmatprep.subr.bf16.mxu0 %v967
  %1041 = vmatpush1.bf16.msra.mxu0 %v966
  %1042 = vmatprep.subr.bf16.mxu0 %v965
  %1043 = vmatpush1.bf16.msra.mxu0 %v964
  %1044 = vmatprep.subr.bf16.mxu0 %v995
  %1045 = vmatpush2.bf16.msra.mxu0 %v994
  %1046 = vmatprep.subr.bf16.mxu0 %v993
  %1047 = vmatpush2.bf16.msra.mxu0 %v992
  %1048 = vmatprep.subr.bf16.mxu0 %v991
  %1049 = vmatpush2.bf16.msra.mxu0 %v990
  %1050 = vmatprep.subr.bf16.mxu0 %v989
  %1051 = vmatpush2.bf16.msra.mxu0 %v988
  %1052 = vmatprep.subr.bf16.mxu0 %v987
  %1053 = vmatpush2.bf16.msra.mxu0 %v986
  %1054 = vmatprep.subr.bf16.mxu0 %v985
  %1055 = vmatpush2.bf16.msra.mxu0 %v984
  %1056 = vmatprep.subr.bf16.mxu0 %v983
  %1057 = vmatpush2.bf16.msra.mxu0 %v982
  %1058 = vmatprep.subr.bf16.mxu0 %v981
  %1059 = vmatpush2.bf16.msra.mxu0 %v980
  %1060 = vmatprep.mubr.bf16.mxu0 %v585
  %1061 = vmatmul.mubr.bf16.gmra.mxu0 %v585
  %v1062 = vpop.f32.mrf.mxu0
  %v1063 = vadd.f32 %v850, %v1062
  %v1064 = vpop.f32.mrf.mxu0
  %v1065 = vadd.f32 %v852, %v1064
  %v1066 = vpop.f32.mrf.mxu0
  %v1067 = vadd.f32 %v854, %v1066
  %v1068 = vpop.f32.mrf.mxu0
  %v1069 = vadd.f32 %v856, %v1068
  %1070 = vmatprep.mubr.bf16.mxu0 %v587
  %1071 = vmatmul.mubr.bf16.gmra.mxu0 %v586
  %v1072 = vpop.f32.mrf.mxu0
  %v1073 = vadd.f32 %v860, %v1072
  %v1074 = vpop.f32.mrf.mxu0
  %v1075 = vadd.f32 %v862, %v1074
  %v1076 = vpop.f32.mrf.mxu0
  %v1077 = vadd.f32 %v864, %v1076
  %v1078 = vpop.f32.mrf.mxu0
  %v1079 = vadd.f32 %v866, %v1078
  %1080 = vdwg.mxu0
  %s1081 = scalar_lea.vmem %s4, 512
  %v1082 = vld [vmem:[%s1081] sm:$0xff]
  %v1083 = vld [vmem:[%s1081 + $0x8] sm:$0xff]
  %v1084 = vld [vmem:[%s1081 + $0x10] sm:$0xff]
  %v1085 = vld [vmem:[%s1081 + $0x18] sm:$0xff]
  %v1086 = vld [vmem:[%s1081 + $0x20] sm:$0xff]
  %v1087 = vld [vmem:[%s1081 + $0x28] sm:$0xff]
  %v1088 = vld [vmem:[%s1081 + $0x30] sm:$0xff]
  %v1089 = vld [vmem:[%s1081 + $0x38] sm:$0xff]
  %v1090 = vld [vmem:[%s1081 + $0x40] sm:$0xff]
  %v1091 = vld [vmem:[%s1081 + $0x48] sm:$0xff]
  %v1092 = vld [vmem:[%s1081 + $0x50] sm:$0xff]
  %v1093 = vld [vmem:[%s1081 + $0x58] sm:$0xff]
  %v1094 = vld [vmem:[%s1081 + $0x60] sm:$0xff]
  %v1095 = vld [vmem:[%s1081 + $0x68] sm:$0xff]
  %v1096 = vld [vmem:[%s1081 + $0x70] sm:$0xff]
  %v1097 = vld [vmem:[%s1081 + $0x78] sm:$0xff]
  %v1098 = vld [vmem:[%s1081 + $0x80] sm:$0xff]
  %v1099 = vld [vmem:[%s1081 + $0x88] sm:$0xff]
  %v1100 = vld [vmem:[%s1081 + $0x90] sm:$0xff]
  %v1101 = vld [vmem:[%s1081 + $0x98] sm:$0xff]
  %v1102 = vld [vmem:[%s1081 + $0xa0] sm:$0xff]
  %v1103 = vld [vmem:[%s1081 + $0xa8] sm:$0xff]
  %v1104 = vld [vmem:[%s1081 + $0xb0] sm:$0xff]
  %v1105 = vld [vmem:[%s1081 + $0xb8] sm:$0xff]
  %v1106 = vld [vmem:[%s1081 + $0xc0] sm:$0xff]
  %v1107 = vld [vmem:[%s1081 + $0xc8] sm:$0xff]
  %v1108 = vld [vmem:[%s1081 + $0xd0] sm:$0xff]
  %v1109 = vld [vmem:[%s1081 + $0xd8] sm:$0xff]
  %v1110 = vld [vmem:[%s1081 + $0xe0] sm:$0xff]
  %v1111 = vld [vmem:[%s1081 + $0xe8] sm:$0xff]
  %v1112 = vld [vmem:[%s1081 + $0xf0] sm:$0xff]
  %v1113 = vld [vmem:[%s1081 + $0xf8] sm:$0xff]
  %v1146 = vunpack.c.l.b16 %v1082
  %v1147 = vunpack.c.h.b16 %v1082
  %v1148 = vunpack.c.l.b16 %v1083
  %v1149 = vunpack.c.h.b16 %v1083
  %v1150 = vunpack.c.l.b16 %v1084
  %v1151 = vunpack.c.h.b16 %v1084
  %v1152 = vunpack.c.l.b16 %v1085
  %v1153 = vunpack.c.h.b16 %v1085
  %v1154 = vunpack.c.l.b16 %v1086
  %v1155 = vunpack.c.h.b16 %v1086
  %v1156 = vunpack.c.l.b16 %v1087
  %v1157 = vunpack.c.h.b16 %v1087
  %v1158 = vunpack.c.l.b16 %v1088
  %v1159 = vunpack.c.h.b16 %v1088
  %v1160 = vunpack.c.l.b16 %v1089
  %v1161 = vunpack.c.h.b16 %v1089
  %v1162 = vunpack.c.l.b16 %v1090
  %v1163 = vunpack.c.h.b16 %v1090
  %v1164 = vunpack.c.l.b16 %v1091
  %v1165 = vunpack.c.h.b16 %v1091
  %v1166 = vunpack.c.l.b16 %v1092
  %v1167 = vunpack.c.h.b16 %v1092
  %v1168 = vunpack.c.l.b16 %v1093
  %v1169 = vunpack.c.h.b16 %v1093
  %v1170 = vunpack.c.l.b16 %v1094
  %v1171 = vunpack.c.h.b16 %v1094
  %v1172 = vunpack.c.l.b16 %v1095
  %v1173 = vunpack.c.h.b16 %v1095
  %v1174 = vunpack.c.l.b16 %v1096
  %v1175 = vunpack.c.h.b16 %v1096
  %v1176 = vunpack.c.l.b16 %v1097
  %v1177 = vunpack.c.h.b16 %v1097
  %v1178 = vunpack.c.l.b16 %v1098
  %v1179 = vunpack.c.h.b16 %v1098
  %v1180 = vunpack.c.l.b16 %v1099
  %v1181 = vunpack.c.h.b16 %v1099
  %v1182 = vunpack.c.l.b16 %v1100
  %v1183 = vunpack.c.h.b16 %v1100
  %v1184 = vunpack.c.l.b16 %v1101
  %v1185 = vunpack.c.h.b16 %v1101
  %v1186 = vunpack.c.l.b16 %v1102
  %v1187 = vunpack.c.h.b16 %v1102
  %v1188 = vunpack.c.l.b16 %v1103
  %v1189 = vunpack.c.h.b16 %v1103
  %v1190 = vunpack.c.l.b16 %v1104
  %v1191 = vunpack.c.h.b16 %v1104
  %v1192 = vunpack.c.l.b16 %v1105
  %v1193 = vunpack.c.h.b16 %v1105
  %v1194 = vunpack.c.l.b16 %v1106
  %v1195 = vunpack.c.h.b16 %v1106
  %v1196 = vunpack.c.l.b16 %v1107
  %v1197 = vunpack.c.h.b16 %v1107
  %v1198 = vunpack.c.l.b16 %v1108
  %v1199 = vunpack.c.h.b16 %v1108
  %v1200 = vunpack.c.l.b16 %v1109
  %v1201 = vunpack.c.h.b16 %v1109
  %v1202 = vunpack.c.l.b16 %v1110
  %v1203 = vunpack.c.h.b16 %v1110
  %v1204 = vunpack.c.l.b16 %v1111
  %v1205 = vunpack.c.h.b16 %v1111
  %v1206 = vunpack.c.l.b16 %v1112
  %v1207 = vunpack.c.h.b16 %v1112
  %v1208 = vunpack.c.l.b16 %v1113
  %v1209 = vunpack.c.h.b16 %v1113
  %v1210 = vpack.c.b16 %v1148, %v1146
  %v1211 = vpack.c.b16 %v1149, %v1147
  %v1212 = vpack.c.b16 %v1152, %v1150
  %v1213 = vpack.c.b16 %v1153, %v1151
  %v1214 = vpack.c.b16 %v1156, %v1154
  %v1215 = vpack.c.b16 %v1157, %v1155
  %v1216 = vpack.c.b16 %v1160, %v1158
  %v1217 = vpack.c.b16 %v1161, %v1159
  %v1218 = vpack.c.b16 %v1164, %v1162
  %v1219 = vpack.c.b16 %v1165, %v1163
  %v1220 = vpack.c.b16 %v1168, %v1166
  %v1221 = vpack.c.b16 %v1169, %v1167
  %v1222 = vpack.c.b16 %v1172, %v1170
  %v1223 = vpack.c.b16 %v1173, %v1171
  %v1224 = vpack.c.b16 %v1176, %v1174
  %v1225 = vpack.c.b16 %v1177, %v1175
  %v1226 = vpack.c.b16 %v1180, %v1178
  %v1227 = vpack.c.b16 %v1181, %v1179
  %v1228 = vpack.c.b16 %v1184, %v1182
  %v1229 = vpack.c.b16 %v1185, %v1183
  %v1230 = vpack.c.b16 %v1188, %v1186
  %v1231 = vpack.c.b16 %v1189, %v1187
  %v1232 = vpack.c.b16 %v1192, %v1190
  %v1233 = vpack.c.b16 %v1193, %v1191
  %v1234 = vpack.c.b16 %v1196, %v1194
  %v1235 = vpack.c.b16 %v1197, %v1195
  %v1236 = vpack.c.b16 %v1200, %v1198
  %v1237 = vpack.c.b16 %v1201, %v1199
  %v1238 = vpack.c.b16 %v1204, %v1202
  %v1239 = vpack.c.b16 %v1205, %v1203
  %v1240 = vpack.c.b16 %v1208, %v1206
  %v1241 = vpack.c.b16 %v1209, %v1207
  %1274 = vmatprep.subr.bf16.mxu0 %v1225
  %1275 = vmatpush1.bf16.msra.mxu0 %v1224
  %1276 = vmatprep.subr.bf16.mxu0 %v1223
  %1277 = vmatpush1.bf16.msra.mxu0 %v1222
  %1278 = vmatprep.subr.bf16.mxu0 %v1221
  %1279 = vmatpush1.bf16.msra.mxu0 %v1220
  %1280 = vmatprep.subr.bf16.mxu0 %v1219
  %1281 = vmatpush1.bf16.msra.mxu0 %v1218
  %1282 = vmatprep.subr.bf16.mxu0 %v1217
  %1283 = vmatpush1.bf16.msra.mxu0 %v1216
  %1284 = vmatprep.subr.bf16.mxu0 %v1215
  %1285 = vmatpush1.bf16.msra.mxu0 %v1214
  %1286 = vmatprep.subr.bf16.mxu0 %v1213
  %1287 = vmatpush1.bf16.msra.mxu0 %v1212
  %1288 = vmatprep.subr.bf16.mxu0 %v1211
  %1289 = vmatpush1.bf16.msra.mxu0 %v1210
  %1290 = vmatprep.subr.bf16.mxu0 %v1241
  %1291 = vmatpush2.bf16.msra.mxu0 %v1240
  %1292 = vmatprep.subr.bf16.mxu0 %v1239
  %1293 = vmatpush2.bf16.msra.mxu0 %v1238
  %1294 = vmatprep.subr.bf16.mxu0 %v1237
  %1295 = vmatpush2.bf16.msra.mxu0 %v1236
  %1296 = vmatprep.subr.bf16.mxu0 %v1235
  %1297 = vmatpush2.bf16.msra.mxu0 %v1234
  %1298 = vmatprep.subr.bf16.mxu0 %v1233
  %1299 = vmatpush2.bf16.msra.mxu0 %v1232
  %1300 = vmatprep.subr.bf16.mxu0 %v1231
  %1301 = vmatpush2.bf16.msra.mxu0 %v1230
  %1302 = vmatprep.subr.bf16.mxu0 %v1229
  %1303 = vmatpush2.bf16.msra.mxu0 %v1228
  %1304 = vmatprep.subr.bf16.mxu0 %v1227
  %1305 = vmatpush2.bf16.msra.mxu0 %v1226
  %1306 = vmatprep.mubr.bf16.mxu0 %v621
  %1307 = vmatmul.mubr.bf16.gmra.mxu0 %v620
  %v1308 = vpop.f32.mrf.mxu0
  %v1309 = vadd.f32 0.0, %v1308
  %v1310 = vpop.f32.mrf.mxu0
  %v1311 = vadd.f32 0.0, %v1310
  %v1312 = vpop.f32.mrf.mxu0
  %v1313 = vadd.f32 0.0, %v1312
  %v1314 = vpop.f32.mrf.mxu0
  %v1315 = vadd.f32 0.0, %v1314
  %1316 = vmatprep.mubr.bf16.mxu0 %v585
  %1317 = vmatmul.mubr.bf16.gmra.mxu0 %v585
  %v1318 = vpop.f32.mrf.mxu0
  %v1319 = vadd.f32 0.0, %v1318
  %v1320 = vpop.f32.mrf.mxu0
  %v1321 = vadd.f32 0.0, %v1320
  %v1322 = vpop.f32.mrf.mxu0
  %v1323 = vadd.f32 0.0, %v1322
  %v1324 = vpop.f32.mrf.mxu0
  %v1325 = vadd.f32 0.0, %v1324
  %1326 = vdwg.mxu0
  %v1327 = vadd.f32 %v1063, %v1309
  %v1328 = vadd.f32 %v1065, %v1311
  %v1329 = vadd.f32 %v1067, %v1313
  %v1330 = vadd.f32 %v1069, %v1315
  %v1331 = vadd.f32 %v1073, %v1319
  %v1332 = vadd.f32 %v1075, %v1321
  %v1333 = vadd.f32 %v1077, %v1323
  %v1334 = vadd.f32 %v1079, %v1325
  %v1335 = vld [vmem:[%s5] sm:$0x3]
  %v1337 = vlaneseq
  %v1338 = vshrl.u32 %v1337, 7
  %v1339 = vsub.s32 0, %v1338
  %v1340 = vrot.slane %v1335, %v1339
  %v1341 = vlaneseq
  %v1342 = vshrl.u32 %v1341, 7
  %v1343 = vsub.s32 1, %v1342
  %v1344 = vrot.slane %v1335, %v1343
  %v1347 = vmul.f32 %v1327, %v1340
  %v1348 = vmul.f32 %v1328, %v1344
  %v1349 = vmul.f32 %v1329, %v1340
  %v1350 = vmul.f32 %v1330, %v1344
  %v1351 = vmul.f32 %v1331, %v1340
  %v1352 = vmul.f32 %v1332, %v1344
  %v1353 = vmul.f32 %v1333, %v1340
  %v1354 = vmul.f32 %v1334, %v1344
  %v1355 = vld [vmem:[%s6] sm:$0x3]
  %v1357 = vlaneseq
  %v1358 = vshrl.u32 %v1357, 7
  %v1359 = vsub.s32 0, %v1358
  %v1360 = vrot.slane %v1355, %v1359
  %v1361 = vlaneseq
  %v1362 = vshrl.u32 %v1361, 7
  %v1363 = vsub.s32 1, %v1362
  %v1364 = vrot.slane %v1355, %v1363
  %v1367 = vadd.f32 %v1347, %v1360
  %v1368 = vadd.f32 %v1348, %v1364
  %v1369 = vadd.f32 %v1349, %v1360
  %v1370 = vadd.f32 %v1350, %v1364
  %v1371 = vadd.f32 %v1351, %v1360
  %v1372 = vadd.f32 %v1352, %v1364
  %v1373 = vadd.f32 %v1353, %v1360
  %v1374 = vadd.f32 %v1354, %v1364
  %v1375 = vld [vmem:[%s7] sm:$0xff]
  %v1376 = vld [vmem:[%s7 + $0x8] sm:$0xff]
  %v1377 = vld [vmem:[%s7 + $0x10] sm:$0xff]
  %v1378 = vld [vmem:[%s7 + $0x18] sm:$0xff]
  %v1379 = vld [vmem:[%s7 + $0x20] sm:$0xff]
  %v1380 = vld [vmem:[%s7 + $0x28] sm:$0xff]
  %v1381 = vld [vmem:[%s7 + $0x30] sm:$0xff]
  %v1382 = vld [vmem:[%s7 + $0x38] sm:$0xff]
  %v1383 = vld [vmem:[%s7 + $0x40] sm:$0xff]
  %v1384 = vld [vmem:[%s7 + $0x48] sm:$0xff]
  %v1385 = vld [vmem:[%s7 + $0x50] sm:$0xff]
  %v1386 = vld [vmem:[%s7 + $0x58] sm:$0xff]
  %v1387 = vld [vmem:[%s7 + $0x60] sm:$0xff]
  %v1388 = vld [vmem:[%s7 + $0x68] sm:$0xff]
  %v1389 = vld [vmem:[%s7 + $0x70] sm:$0xff]
  %v1390 = vld [vmem:[%s7 + $0x78] sm:$0xff]
  %v1407 = vunpack.c.l.b16 %v1375
  %v1408 = vunpack.c.h.b16 %v1375
  %v1409 = vunpack.c.l.b16 %v1376
  %v1410 = vunpack.c.h.b16 %v1376
  %v1411 = vunpack.c.l.b16 %v1377
  %v1412 = vunpack.c.h.b16 %v1377
  %v1413 = vunpack.c.l.b16 %v1378
  %v1414 = vunpack.c.h.b16 %v1378
  %v1415 = vunpack.c.l.b16 %v1379
  %v1416 = vunpack.c.h.b16 %v1379
  %v1417 = vunpack.c.l.b16 %v1380
  %v1418 = vunpack.c.h.b16 %v1380
  %v1419 = vunpack.c.l.b16 %v1381
  %v1420 = vunpack.c.h.b16 %v1381
  %v1421 = vunpack.c.l.b16 %v1382
  %v1422 = vunpack.c.h.b16 %v1382
  %v1423 = vunpack.c.l.b16 %v1383
  %v1424 = vunpack.c.h.b16 %v1383
  %v1425 = vunpack.c.l.b16 %v1384
  %v1426 = vunpack.c.h.b16 %v1384
  %v1427 = vunpack.c.l.b16 %v1385
  %v1428 = vunpack.c.h.b16 %v1385
  %v1429 = vunpack.c.l.b16 %v1386
  %v1430 = vunpack.c.h.b16 %v1386
  %v1431 = vunpack.c.l.b16 %v1387
  %v1432 = vunpack.c.h.b16 %v1387
  %v1433 = vunpack.c.l.b16 %v1388
  %v1434 = vunpack.c.h.b16 %v1388
  %v1435 = vunpack.c.l.b16 %v1389
  %v1436 = vunpack.c.h.b16 %v1389
  %v1437 = vunpack.c.l.b16 %v1390
  %v1438 = vunpack.c.h.b16 %v1390
  %v1439 = vpack.c.b16 %v1409, %v1407
  %v1440 = vpack.c.b16 %v1410, %v1408
  %v1441 = vpack.c.b16 %v1413, %v1411
  %v1442 = vpack.c.b16 %v1414, %v1412
  %v1443 = vpack.c.b16 %v1417, %v1415
  %v1444 = vpack.c.b16 %v1418, %v1416
  %v1445 = vpack.c.b16 %v1421, %v1419
  %v1446 = vpack.c.b16 %v1422, %v1420
  %v1447 = vpack.c.b16 %v1425, %v1423
  %v1448 = vpack.c.b16 %v1426, %v1424
  %v1449 = vpack.c.b16 %v1429, %v1427
  %v1450 = vpack.c.b16 %v1430, %v1428
  %v1451 = vpack.c.b16 %v1433, %v1431
  %v1452 = vpack.c.b16 %v1434, %v1432
  %v1453 = vpack.c.b16 %v1437, %v1435
  %v1454 = vpack.c.b16 %v1438, %v1436
  %1471 = vmatprep.subr.bf16.mxu0 %v1454
  %1472 = vmatpush1.bf16.msra.mxu0 %v1453
  %1473 = vmatprep.subr.bf16.mxu0 %v1452
  %1474 = vmatpush1.bf16.msra.mxu0 %v1451
  %1475 = vmatprep.subr.bf16.mxu0 %v1450
  %1476 = vmatpush1.bf16.msra.mxu0 %v1449
  %1477 = vmatprep.subr.bf16.mxu0 %v1448
  %1478 = vmatpush1.bf16.msra.mxu0 %v1447
  %1479 = vmatprep.subr.bf16.mxu0 %v1446
  %1480 = vmatpush1.bf16.msra.mxu0 %v1445
  %1481 = vmatprep.subr.bf16.mxu0 %v1444
  %1482 = vmatpush1.bf16.msra.mxu0 %v1443
  %1483 = vmatprep.subr.bf16.mxu0 %v1442
  %1484 = vmatpush1.bf16.msra.mxu0 %v1441
  %1485 = vmatprep.subr.bf16.mxu0 %v1440
  %1486 = vmatpush1.bf16.msra.mxu0 %v1439
  %1487 = vmatprep.subr.bf16.mxu0 0
  %1488 = vmatpush2.bf16.msra.mxu0 0
  %1489 = vmatprep.subr.bf16.mxu0 0
  %1490 = vmatpush2.bf16.msra.mxu0 0
  %1491 = vmatprep.subr.bf16.mxu0 0
  %1492 = vmatpush2.bf16.msra.mxu0 0
  %1493 = vmatprep.subr.bf16.mxu0 0
  %1494 = vmatpush2.bf16.msra.mxu0 0
  %1495 = vmatprep.subr.bf16.mxu0 0
  %1496 = vmatpush2.bf16.msra.mxu0 0
  %1497 = vmatprep.subr.bf16.mxu0 0
  %1498 = vmatpush2.bf16.msra.mxu0 0
  %1499 = vmatprep.subr.bf16.mxu0 0
  %1500 = vmatpush2.bf16.msra.mxu0 0
  %1501 = vmatprep.subr.bf16.mxu0 0
  %1502 = vmatpush2.bf16.msra.mxu0 0
  %1503 = vmatprep.mubr.bf16.mxu0 0
  %1504 = vmatmul.mubr.bf16.gmra.mxu0 %v46
  %v1505 = vpop.f32.mrf.mxu0
  %v1506 = vadd.f32 0.0, %v1505
  %v1507 = vpop.f32.mrf.mxu0
  %v1508 = vadd.f32 0.0, %v1507
  %v1509 = vpop.f32.mrf.mxu0
  %v1510 = vadd.f32 0.0, %v1509
  %v1511 = vpop.f32.mrf.mxu0
  %v1512 = vadd.f32 0.0, %v1511
  %1513 = vmatprep.mubr.bf16.mxu0 0
  %1514 = vmatmul.mubr.bf16.gmra.mxu0 %v52
  %v1515 = vpop.f32.mrf.mxu0
  %v1516 = vadd.f32 0.0, %v1515
  %v1517 = vpop.f32.mrf.mxu0
  %v1518 = vadd.f32 0.0, %v1517
  %v1519 = vpop.f32.mrf.mxu0
  %v1520 = vadd.f32 0.0, %v1519
  %v1521 = vpop.f32.mrf.mxu0
  %v1522 = vadd.f32 0.0, %v1521
  %1523 = vdwg.mxu0
  %v1524 = vld [vmem:[%s8] sm:$0x3]
  %v1526 = vlaneseq
  %v1527 = vshrl.u32 %v1526, 7
  %v1528 = vsub.s32 0, %v1527
  %v1529 = vrot.slane %v1524, %v1528
  %v1530 = vlaneseq
  %v1531 = vshrl.u32 %v1530, 7
  %v1532 = vsub.s32 1, %v1531
  %v1533 = vrot.slane %v1524, %v1532
  %v1536 = vmul.f32 %v1506, %v1529
  %v1537 = vmul.f32 %v1508, %v1533
  %v1538 = vmul.f32 %v1510, %v1529
  %v1539 = vmul.f32 %v1512, %v1533
  %v1540 = vmul.f32 %v1516, %v1529
  %v1541 = vmul.f32 %v1518, %v1533
  %v1542 = vmul.f32 %v1520, %v1529
  %v1543 = vmul.f32 %v1522, %v1533
  %v1544 = vld [vmem:[%s9] sm:$0x3]
  %v1546 = vlaneseq
  %v1547 = vshrl.u32 %v1546, 7
  %v1548 = vsub.s32 0, %v1547
  %v1549 = vrot.slane %v1544, %v1548
  %v1550 = vlaneseq
  %v1551 = vshrl.u32 %v1550, 7
  %v1552 = vsub.s32 1, %v1551
  %v1553 = vrot.slane %v1544, %v1552
  %v1556 = vadd.f32 %v1536, %v1549
  %v1557 = vadd.f32 %v1537, %v1553
  %v1558 = vadd.f32 %v1538, %v1549
  %v1559 = vadd.f32 %v1539, %v1553
  %v1560 = vadd.f32 %v1540, %v1549
  %v1561 = vadd.f32 %v1541, %v1553
  %v1562 = vadd.f32 %v1542, %v1549
  %v1563 = vadd.f32 %v1543, %v1553
  %v1564 = vadd.f32 %v1367, %v1556
  %v1565 = vadd.f32 %v1368, %v1557
  %v1566 = vadd.f32 %v1369, %v1558
  %v1567 = vadd.f32 %v1370, %v1559
  %v1568 = vadd.f32 %v1371, %v1560
  %v1569 = vadd.f32 %v1372, %v1561
  %v1570 = vadd.f32 %v1373, %v1562
  %v1571 = vadd.f32 %v1374, %v1563
  %v1572 = vmax.f32 %v1564, 0.0
  %v1573 = vmax.f32 %v1565, 0.0
  %v1574 = vmax.f32 %v1566, 0.0
  %v1575 = vmax.f32 %v1567, 0.0
  %v1576 = vmax.f32 %v1568, 0.0
  %v1577 = vmax.f32 %v1569, 0.0
  %v1578 = vmax.f32 %v1570, 0.0
  %v1579 = vmax.f32 %v1571, 0.0
  %v1580 = vpack.c.bf16 %v1574, %v1572
  %v1581 = vpack.c.bf16 %v1575, %v1573
  %v1582 = vpack.c.bf16 %v1578, %v1576
  %v1583 = vpack.c.bf16 %v1579, %v1577
  %v1588 = vunpack.c.l.b16 %v1580
  %v1589 = vunpack.c.l.b16 %v1581
  %v1590 = vunpack.c.h.b16 %v1580
  %v1591 = vunpack.c.h.b16 %v1581
  %v1592 = vunpack.c.l.b16 %v1582
  %v1593 = vunpack.c.l.b16 %v1583
  %v1594 = vunpack.c.h.b16 %v1582
  %v1595 = vunpack.c.h.b16 %v1583
  %v1596 = vpack.c.b16 %v1589, %v1588
  %v1597 = vpack.c.b16 %v1591, %v1590
  %v1598 = vpack.c.b16 %v1593, %v1592
  %v1599 = vpack.c.b16 %v1595, %v1594
  %1604 = vst [vmem:[%s10] sm:$0xff] %v1596
  %1605 = vst [vmem:[%s10 + $0x8] sm:$0xff] %v1597
  %1606 = vst [vmem:[%s10 + $0x10] sm:$0xff] %v1598
  %1607 = vst [vmem:[%s10 + $0x18] sm:$0xff] %v1599
  // Predicated region
  $region42: #{resnet1d_forward.15} parent=0 // pred_check
    _
  $region43: #{resnet1d_forward.15} parent=0 // pred_check_branch
    %1609 = sbr.rel (0) target = $region45
  $region44: #{resnet1d_forward.15} parent=0 // pred_region
    _
  $region45: #{resnet1d_forward.15} parent=0 // pred_fallthru
    _
  // Predicated region
  $region46: #{resnet1d_forward.15} parent=0 // pred_check
    _
  $region47: #{resnet1d_forward.15} parent=0 // pred_check_branch
    %1611 = sbr.rel (0) target = $region49
  $region48: #{resnet1d_forward.15} parent=0 // pred_region
    _
  $region49: #{resnet1d_forward.15} parent=0 // pred_fallthru
    _

// kernel: resnet1d_forward.16
$region0: #{resnet1d_forward.16}
  #allocation0 [shape = 'u32[]', space=smem, size = 0x4, offset = 0x4, fixed_abs, tag = 'smem constant byte address 0x4 - core index']
  #allocation1 [shape = 'u32[144,128]{1,0:T(1,128)}', space=vmem, size = 0x12000, scoped, tag = 'internal scratch']
  %s0 = inlined_call_operand.vmem [shape: bf16[4,16,256], index: 0, kind: input, shape index: {}]
  %s1 = inlined_call_operand.vmem [shape: bf16[3,256,256], index: 1, kind: input, shape index: {}]
  %s2 = inlined_call_operand.vmem [shape: f32[1,256], index: 2, kind: input, shape index: {}, may-alias: {2,5}]
  %s3 = inlined_call_operand.vmem [shape: f32[1,256], index: 3, kind: input, shape index: {}, may-alias: {3,6}]
  %s4 = inlined_call_operand.vmem [shape: bf16[3,256,256], index: 4, kind: input, shape index: {}]
  %s5 = inlined_call_operand.vmem [shape: f32[1,256], index: 5, kind: input, shape index: {}, may-alias: {2,5}]
  %s6 = inlined_call_operand.vmem [shape: f32[1,256], index: 6, kind: input, shape index: {}, may-alias: {3,6}]
  %s7 = inlined_call_operand.vmem [shape: bf16[2,16,256], index: 7, kind: output, shape index: {}]
  %s8 = sld [smem:[#allocation0]]
  $region38: #{resnet1d_forward.16} parent=0
    _
  %s10 = ssub.s32 1, %s8
  %s11 = scalar_select 0, %s10, %s8
  // Predicated region
  $region2: #{resnet1d_forward.16} parent=0 // pred_check
    _
  $region3: #{resnet1d_forward.16} parent=0 // pred_check_branch
    %13 = sbr.rel (0) target = $region5
  $region4: #{resnet1d_forward.16} parent=0 // pred_region
    _
  $region5: #{resnet1d_forward.16} parent=0 // pred_fallthru
    _
  // Predicated region
  $region6: #{resnet1d_forward.16} parent=0 // pred_check
    _
  $region7: #{resnet1d_forward.16} parent=0 // pred_check_branch
    %15 = sbr.rel (0) target = $region9
  $region8: #{resnet1d_forward.16} parent=0 // pred_region
    _
  $region9: #{resnet1d_forward.16} parent=0 // pred_fallthru
    _
  // Predicated region
  $region10: #{resnet1d_forward.16} parent=0 // pred_check
    _
  $region11: #{resnet1d_forward.16} parent=0 // pred_check_branch
    %17 = sbr.rel (0) target = $region13
  $region12: #{resnet1d_forward.16} parent=0 // pred_region
    _
  $region13: #{resnet1d_forward.16} parent=0 // pred_fallthru
    _
  // Predicated region
  $region14: #{resnet1d_forward.16} parent=0 // pred_check
    _
  $region15: #{resnet1d_forward.16} parent=0 // pred_check_branch
    %19 = sbr.rel (0) target = $region17
  $region16: #{resnet1d_forward.16} parent=0 // pred_region
    _
  $region17: #{resnet1d_forward.16} parent=0 // pred_fallthru
    _
  // Predicated region
  $region18: #{resnet1d_forward.16} parent=0 // pred_check
    _
  $region19: #{resnet1d_forward.16} parent=0 // pred_check_branch
    %21 = sbr.rel (0) target = $region21
  $region20: #{resnet1d_forward.16} parent=0 // pred_region
    _
  $region21: #{resnet1d_forward.16} parent=0 // pred_fallthru
    _
  // Predicated region
  $region22: #{resnet1d_forward.16} parent=0 // pred_check
    _
  $region23: #{resnet1d_forward.16} parent=0 // pred_check_branch
    %23 = sbr.rel (0) target = $region25
  $region24: #{resnet1d_forward.16} parent=0 // pred_region
    _
  $region25: #{resnet1d_forward.16} parent=0 // pred_fallthru
    _
  // Predicated region
  $region26: #{resnet1d_forward.16} parent=0 // pred_check
    _
  $region27: #{resnet1d_forward.16} parent=0 // pred_check_branch
    %25 = sbr.rel (0) target = $region29
  $region28: #{resnet1d_forward.16} parent=0 // pred_region
    _
  $region29: #{resnet1d_forward.16} parent=0 // pred_fallthru
    _
  %s26 = scalar_lea.vmem %s0, 16
  %v27 = vld [vmem:[%s26] sm:$0xff]
  %v28 = vld [vmem:[%s26 + $0x8] sm:$0xff]
  %v29 = vld [vmem:[%s26 + $0x10] sm:$0xff]
  %v30 = vld [vmem:[%s26 + $0x18] sm:$0xff]
  %v31 = vld [vmem:[%s0] sm:$0xff]
  %v32 = vld [vmem:[%s0 + $0x8] sm:$0xff]
  %v33 = vld [vmem:[%s0 + $0x10] sm:$0xff]
  %v34 = vld [vmem:[%s0 + $0x18] sm:$0xff]
  %v35 = vld [vmem:[%s1] sm:$0xff]
  %v36 = vld [vmem:[%s1 + $0x8] sm:$0xff]
  %v37 = vld [vmem:[%s1 + $0x10] sm:$0xff]
  %v38 = vld [vmem:[%s1 + $0x18] sm:$0xff]
  %v39 = vld [vmem:[%s1 + $0x20] sm:$0xff]
  %v40 = vld [vmem:[%s1 + $0x28] sm:$0xff]
  %v41 = vld [vmem:[%s1 + $0x30] sm:$0xff]
  %v42 = vld [vmem:[%s1 + $0x38] sm:$0xff]
  %v43 = vld [vmem:[%s1 + $0x40] sm:$0xff]
  %v44 = vld [vmem:[%s1 + $0x48] sm:$0xff]
  %v45 = vld [vmem:[%s1 + $0x50] sm:$0xff]
  %v46 = vld [vmem:[%s1 + $0x58] sm:$0xff]
  %v47 = vld [vmem:[%s1 + $0x60] sm:$0xff]
  %v48 = vld [vmem:[%s1 + $0x68] sm:$0xff]
  %v49 = vld [vmem:[%s1 + $0x70] sm:$0xff]
  %v50 = vld [vmem:[%s1 + $0x78] sm:$0xff]
  %v51 = vld [vmem:[%s1 + $0x80] sm:$0xff]
  %v52 = vld [vmem:[%s1 + $0x88] sm:$0xff]
  %v53 = vld [vmem:[%s1 + $0x90] sm:$0xff]
  %v54 = vld [vmem:[%s1 + $0x98] sm:$0xff]
  %v55 = vld [vmem:[%s1 + $0xa0] sm:$0xff]
  %v56 = vld [vmem:[%s1 + $0xa8] sm:$0xff]
  %v57 = vld [vmem:[%s1 + $0xb0] sm:$0xff]
  %v58 = vld [vmem:[%s1 + $0xb8] sm:$0xff]
  %v59 = vld [vmem:[%s1 + $0xc0] sm:$0xff]
  %v60 = vld [vmem:[%s1 + $0xc8] sm:$0xff]
  %v61 = vld [vmem:[%s1 + $0xd0] sm:$0xff]
  %v62 = vld [vmem:[%s1 + $0xd8] sm:$0xff]
  %v63 = vld [vmem:[%s1 + $0xe0] sm:$0xff]
  %v64 = vld [vmem:[%s1 + $0xe8] sm:$0xff]
  %v65 = vld [vmem:[%s1 + $0xf0] sm:$0xff]
  %v66 = vld [vmem:[%s1 + $0xf8] sm:$0xff]
  %s67 = scalar_lea.vmem %s1, 256
  %v68 = vld [vmem:[%s67] sm:$0xff]
  %v69 = vld [vmem:[%s67 + $0x8] sm:$0xff]
  %v70 = vld [vmem:[%s67 + $0x10] sm:$0xff]
  %v71 = vld [vmem:[%s67 + $0x18] sm:$0xff]
  %v72 = vld [vmem:[%s67 + $0x20] sm:$0xff]
  %v73 = vld [vmem:[%s67 + $0x28] sm:$0xff]
  %v74 = vld [vmem:[%s67 + $0x30] sm:$0xff]
  %v75 = vld [vmem:[%s67 + $0x38] sm:$0xff]
  %v76 = vld [vmem:[%s67 + $0x40] sm:$0xff]
  %v77 = vld [vmem:[%s67 + $0x48] sm:$0xff]
  %v78 = vld [vmem:[%s67 + $0x50] sm:$0xff]
  %v79 = vld [vmem:[%s67 + $0x58] sm:$0xff]
  %v80 = vld [vmem:[%s67 + $0x60] sm:$0xff]
  %v81 = vld [vmem:[%s67 + $0x68] sm:$0xff]
  %v82 = vld [vmem:[%s67 + $0x70] sm:$0xff]
  %v83 = vld [vmem:[%s67 + $0x78] sm:$0xff]
  %v84 = vld [vmem:[%s67 + $0x80] sm:$0xff]
  %v85 = vld [vmem:[%s67 + $0x88] sm:$0xff]
  %v86 = vld [vmem:[%s67 + $0x90] sm:$0xff]
  %v87 = vld [vmem:[%s67 + $0x98] sm:$0xff]
  %v88 = vld [vmem:[%s67 + $0xa0] sm:$0xff]
  %v89 = vld [vmem:[%s67 + $0xa8] sm:$0xff]
  %v90 = vld [vmem:[%s67 + $0xb0] sm:$0xff]
  %v91 = vld [vmem:[%s67 + $0xb8] sm:$0xff]
  %v92 = vld [vmem:[%s67 + $0xc0] sm:$0xff]
  %v93 = vld [vmem:[%s67 + $0xc8] sm:$0xff]
  %v94 = vld [vmem:[%s67 + $0xd0] sm:$0xff]
  %v95 = vld [vmem:[%s67 + $0xd8] sm:$0xff]
  %v96 = vld [vmem:[%s67 + $0xe0] sm:$0xff]
  %v97 = vld [vmem:[%s67 + $0xe8] sm:$0xff]
  %v98 = vld [vmem:[%s67 + $0xf0] sm:$0xff]
  %v99 = vld [vmem:[%s67 + $0xf8] sm:$0xff]
  %v104 = vunpack.c.l.b16 %v27
  %v105 = vunpack.c.h.b16 %v27
  %v106 = vunpack.c.l.b16 %v28
  %v107 = vunpack.c.h.b16 %v28
  %v108 = vunpack.c.l.b16 %v29
  %v109 = vunpack.c.h.b16 %v29
  %v110 = vunpack.c.l.b16 %v30
  %v111 = vunpack.c.h.b16 %v30
  %v112 = vpack.c.b16 %v106, %v104
  %v113 = vpack.c.b16 %v107, %v105
  %v114 = vpack.c.b16 %v110, %v108
  %v115 = vpack.c.b16 %v111, %v109
  %v152 = vunpack.c.l.b16 %v68
  %v153 = vunpack.c.h.b16 %v68
  %v154 = vunpack.c.l.b16 %v69
  %v155 = vunpack.c.h.b16 %v69
  %v156 = vunpack.c.l.b16 %v70
  %v157 = vunpack.c.h.b16 %v70
  %v158 = vunpack.c.l.b16 %v71
  %v159 = vunpack.c.h.b16 %v71
  %v160 = vunpack.c.l.b16 %v72
  %v161 = vunpack.c.h.b16 %v72
  %v162 = vunpack.c.l.b16 %v73
  %v163 = vunpack.c.h.b16 %v73
  %v164 = vunpack.c.l.b16 %v74
  %v165 = vunpack.c.h.b16 %v74
  %v166 = vunpack.c.l.b16 %v75
  %v167 = vunpack.c.h.b16 %v75
  %v168 = vunpack.c.l.b16 %v76
  %v169 = vunpack.c.h.b16 %v76
  %v170 = vunpack.c.l.b16 %v77
  %v171 = vunpack.c.h.b16 %v77
  %v172 = vunpack.c.l.b16 %v78
  %v173 = vunpack.c.h.b16 %v78
  %v174 = vunpack.c.l.b16 %v79
  %v175 = vunpack.c.h.b16 %v79
  %v176 = vunpack.c.l.b16 %v80
  %v177 = vunpack.c.h.b16 %v80
  %v178 = vunpack.c.l.b16 %v81
  %v179 = vunpack.c.h.b16 %v81
  %v180 = vunpack.c.l.b16 %v82
  %v181 = vunpack.c.h.b16 %v82
  %v182 = vunpack.c.l.b16 %v83
  %v183 = vunpack.c.h.b16 %v83
  %v184 = vunpack.c.l.b16 %v84
  %v185 = vunpack.c.h.b16 %v84
  %v186 = vunpack.c.l.b16 %v85
  %v187 = vunpack.c.h.b16 %v85
  %v188 = vunpack.c.l.b16 %v86
  %v189 = vunpack.c.h.b16 %v86
  %v190 = vunpack.c.l.b16 %v87
  %v191 = vunpack.c.h.b16 %v87
  %v192 = vunpack.c.l.b16 %v88
  %v193 = vunpack.c.h.b16 %v88
  %v194 = vunpack.c.l.b16 %v89
  %v195 = vunpack.c.h.b16 %v89
  %v196 = vunpack.c.l.b16 %v90
  %v197 = vunpack.c.h.b16 %v90
  %v198 = vunpack.c.l.b16 %v91
  %v199 = vunpack.c.h.b16 %v91
  %v200 = vunpack.c.l.b16 %v92
  %v201 = vunpack.c.h.b16 %v92
  %v202 = vunpack.c.l.b16 %v93
  %v203 = vunpack.c.h.b16 %v93
  %v204 = vunpack.c.l.b16 %v94
  %v205 = vunpack.c.h.b16 %v94
  %v206 = vunpack.c.l.b16 %v95
  %v207 = vunpack.c.h.b16 %v95
  %v208 = vunpack.c.l.b16 %v96
  %v209 = vunpack.c.h.b16 %v96
  %v210 = vunpack.c.l.b16 %v97
  %v211 = vunpack.c.h.b16 %v97
  %v212 = vunpack.c.l.b16 %v98
  %v213 = vunpack.c.h.b16 %v98
  %v214 = vunpack.c.l.b16 %v99
  %v215 = vunpack.c.h.b16 %v99
  %v216 = vpack.c.b16 %v154, %v152
  %v217 = vpack.c.b16 %v155, %v153
  %v218 = vpack.c.b16 %v158, %v156
  %v219 = vpack.c.b16 %v159, %v157
  %v220 = vpack.c.b16 %v162, %v160
  %v221 = vpack.c.b16 %v163, %v161
  %v222 = vpack.c.b16 %v166, %v164
  %v223 = vpack.c.b16 %v167, %v165
  %v224 = vpack.c.b16 %v170, %v168
  %v225 = vpack.c.b16 %v171, %v169
  %v226 = vpack.c.b16 %v174, %v172
  %v227 = vpack.c.b16 %v175, %v173
  %v228 = vpack.c.b16 %v178, %v176
  %v229 = vpack.c.b16 %v179, %v177
  %v230 = vpack.c.b16 %v182, %v180
  %v231 = vpack.c.b16 %v183, %v181
  %v232 = vpack.c.b16 %v186, %v184
  %v233 = vpack.c.b16 %v187, %v185
  %v234 = vpack.c.b16 %v190, %v188
  %v235 = vpack.c.b16 %v191, %v189
  %v236 = vpack.c.b16 %v194, %v192
  %v237 = vpack.c.b16 %v195, %v193
  %v238 = vpack.c.b16 %v198, %v196
  %v239 = vpack.c.b16 %v199, %v197
  %v240 = vpack.c.b16 %v202, %v200
  %v241 = vpack.c.b16 %v203, %v201
  %v242 = vpack.c.b16 %v206, %v204
  %v243 = vpack.c.b16 %v207, %v205
  %v244 = vpack.c.b16 %v210, %v208
  %v245 = vpack.c.b16 %v211, %v209
  %v246 = vpack.c.b16 %v214, %v212
  %v247 = vpack.c.b16 %v215, %v213
  %280 = vmatprep.subr.bf16.mxu0 %v231
  %281 = vmatpush1.bf16.msra.mxu0 %v230
  %282 = vmatprep.subr.bf16.mxu0 %v229
  %283 = vmatpush1.bf16.msra.mxu0 %v228
  %284 = vmatprep.subr.bf16.mxu0 %v227
  %285 = vmatpush1.bf16.msra.mxu0 %v226
  %286 = vmatprep.subr.bf16.mxu0 %v225
  %287 = vmatpush1.bf16.msra.mxu0 %v224
  %288 = vmatprep.subr.bf16.mxu0 %v223
  %289 = vmatpush1.bf16.msra.mxu0 %v222
  %290 = vmatprep.subr.bf16.mxu0 %v221
  %291 = vmatpush1.bf16.msra.mxu0 %v220
  %292 = vmatprep.subr.bf16.mxu0 %v219
  %293 = vmatpush1.bf16.msra.mxu0 %v218
  %294 = vmatprep.subr.bf16.mxu0 %v217
  %295 = vmatpush1.bf16.msra.mxu0 %v216
  %296 = vmatprep.subr.bf16.mxu0 %v247
  %297 = vmatpush2.bf16.msra.mxu0 %v246
  %298 = vmatprep.subr.bf16.mxu0 %v245
  %299 = vmatpush2.bf16.msra.mxu0 %v244
  %300 = vmatprep.subr.bf16.mxu0 %v243
  %301 = vmatpush2.bf16.msra.mxu0 %v242
  %302 = vmatprep.subr.bf16.mxu0 %v241
  %303 = vmatpush2.bf16.msra.mxu0 %v240
  %304 = vmatprep.subr.bf16.mxu0 %v239
  %305 = vmatpush2.bf16.msra.mxu0 %v238
  %306 = vmatprep.subr.bf16.mxu0 %v237
  %307 = vmatpush2.bf16.msra.mxu0 %v236
  %308 = vmatprep.subr.bf16.mxu0 %v235
  %309 = vmatpush2.bf16.msra.mxu0 %v234
  %310 = vmatprep.subr.bf16.mxu0 %v233
  %311 = vmatpush2.bf16.msra.mxu0 %v232
  %312 = vmatprep.mubr.bf16.mxu0 %v113
  %313 = vmatmul.mubr.bf16.gmra.mxu0 %v112
  %v314 = vpop.f32.mrf.mxu0
  %v315 = vadd.f32 0.0, %v314
  %v316 = vpop.f32.mrf.mxu0
  %v317 = vadd.f32 0.0, %v316
  %v318 = vpop.f32.mrf.mxu0
  %v319 = vadd.f32 0.0, %v318
  %v320 = vpop.f32.mrf.mxu0
  %v321 = vadd.f32 0.0, %v320
  %322 = vmatprep.mubr.bf16.mxu0 %v115
  %323 = vmatmul.mubr.bf16.gmra.mxu0 %v114
  %v324 = vpop.f32.mrf.mxu0
  %v325 = vadd.f32 0.0, %v324
  %v326 = vpop.f32.mrf.mxu0
  %v327 = vadd.f32 0.0, %v326
  %v328 = vpop.f32.mrf.mxu0
  %v329 = vadd.f32 0.0, %v328
  %v330 = vpop.f32.mrf.mxu0
  %v331 = vadd.f32 0.0, %v330
  %332 = vdwg.mxu0
  %v337 = vunpack.c.l.b16 %v31
  %v338 = vunpack.c.h.b16 %v31
  %v339 = vunpack.c.l.b16 %v32
  %v340 = vunpack.c.h.b16 %v32
  %v341 = vunpack.c.l.b16 %v33
  %v342 = vunpack.c.h.b16 %v33
  %v343 = vunpack.c.l.b16 %v34
  %v344 = vunpack.c.h.b16 %v34
  %v345 = vpack.c.b16 %v339, %v337
  %v346 = vpack.c.b16 %v340, %v338
  %v347 = vpack.c.b16 %v343, %v341
  %v348 = vpack.c.b16 %v344, %v342
  %v385 = vunpack.c.l.b16 %v35
  %v386 = vunpack.c.h.b16 %v35
  %v387 = vunpack.c.l.b16 %v36
  %v388 = vunpack.c.h.b16 %v36
  %v389 = vunpack.c.l.b16 %v37
  %v390 = vunpack.c.h.b16 %v37
  %v391 = vunpack.c.l.b16 %v38
  %v392 = vunpack.c.h.b16 %v38
  %v393 = vunpack.c.l.b16 %v39
  %v394 = vunpack.c.h.b16 %v39
  %v395 = vunpack.c.l.b16 %v40
  %v396 = vunpack.c.h.b16 %v40
  %v397 = vunpack.c.l.b16 %v41
  %v398 = vunpack.c.h.b16 %v41
  %v399 = vunpack.c.l.b16 %v42
  %v400 = vunpack.c.h.b16 %v42
  %v401 = vunpack.c.l.b16 %v43
  %v402 = vunpack.c.h.b16 %v43
  %v403 = vunpack.c.l.b16 %v44
  %v404 = vunpack.c.h.b16 %v44
  %v405 = vunpack.c.l.b16 %v45
  %v406 = vunpack.c.h.b16 %v45
  %v407 = vunpack.c.l.b16 %v46
  %v408 = vunpack.c.h.b16 %v46
  %v409 = vunpack.c.l.b16 %v47
  %v410 = vunpack.c.h.b16 %v47
  %v411 = vunpack.c.l.b16 %v48
  %v412 = vunpack.c.h.b16 %v48
  %v413 = vunpack.c.l.b16 %v49
  %v414 = vunpack.c.h.b16 %v49
  %v415 = vunpack.c.l.b16 %v50
  %v416 = vunpack.c.h.b16 %v50
  %v417 = vunpack.c.l.b16 %v51
  %v418 = vunpack.c.h.b16 %v51
  %v419 = vunpack.c.l.b16 %v52
  %v420 = vunpack.c.h.b16 %v52
  %v421 = vunpack.c.l.b16 %v53
  %v422 = vunpack.c.h.b16 %v53
  %v423 = vunpack.c.l.b16 %v54
  %v424 = vunpack.c.h.b16 %v54
  %v425 = vunpack.c.l.b16 %v55
  %v426 = vunpack.c.h.b16 %v55
  %v427 = vunpack.c.l.b16 %v56
  %v428 = vunpack.c.h.b16 %v56
  %v429 = vunpack.c.l.b16 %v57
  %v430 = vunpack.c.h.b16 %v57
  %v431 = vunpack.c.l.b16 %v58
  %v432 = vunpack.c.h.b16 %v58
  %v433 = vunpack.c.l.b16 %v59
  %v434 = vunpack.c.h.b16 %v59
  %v435 = vunpack.c.l.b16 %v60
  %v436 = vunpack.c.h.b16 %v60
  %v437 = vunpack.c.l.b16 %v61
  %v438 = vunpack.c.h.b16 %v61
  %v439 = vunpack.c.l.b16 %v62
  %v440 = vunpack.c.h.b16 %v62
  %v441 = vunpack.c.l.b16 %v63
  %v442 = vunpack.c.h.b16 %v63
  %v443 = vunpack.c.l.b16 %v64
  %v444 = vunpack.c.h.b16 %v64
  %v445 = vunpack.c.l.b16 %v65
  %v446 = vunpack.c.h.b16 %v65
  %v447 = vunpack.c.l.b16 %v66
  %v448 = vunpack.c.h.b16 %v66
  %v449 = vpack.c.b16 %v387, %v385
  %v450 = vpack.c.b16 %v388, %v386
  %v451 = vpack.c.b16 %v391, %v389
  %v452 = vpack.c.b16 %v392, %v390
  %v453 = vpack.c.b16 %v395, %v393
  %v454 = vpack.c.b16 %v396, %v394
  %v455 = vpack.c.b16 %v399, %v397
  %v456 = vpack.c.b16 %v400, %v398
  %v457 = vpack.c.b16 %v403, %v401
  %v458 = vpack.c.b16 %v404, %v402
  %v459 = vpack.c.b16 %v407, %v405
  %v460 = vpack.c.b16 %v408, %v406
  %v461 = vpack.c.b16 %v411, %v409
  %v462 = vpack.c.b16 %v412, %v410
  %v463 = vpack.c.b16 %v415, %v413
  %v464 = vpack.c.b16 %v416, %v414
  %v465 = vpack.c.b16 %v419, %v417
  %v466 = vpack.c.b16 %v420, %v418
  %v467 = vpack.c.b16 %v423, %v421
  %v468 = vpack.c.b16 %v424, %v422
  %v469 = vpack.c.b16 %v427, %v425
  %v470 = vpack.c.b16 %v428, %v426
  %v471 = vpack.c.b16 %v431, %v429
  %v472 = vpack.c.b16 %v432, %v430
  %v473 = vpack.c.b16 %v435, %v433
  %v474 = vpack.c.b16 %v436, %v434
  %v475 = vpack.c.b16 %v439, %v437
  %v476 = vpack.c.b16 %v440, %v438
  %v477 = vpack.c.b16 %v443, %v441
  %v478 = vpack.c.b16 %v444, %v442
  %v479 = vpack.c.b16 %v447, %v445
  %v480 = vpack.c.b16 %v448, %v446
  %513 = vmatprep.subr.bf16.mxu0 %v464
  %514 = vmatpush1.bf16.msra.mxu0 %v463
  %515 = vmatprep.subr.bf16.mxu0 %v462
  %516 = vmatpush1.bf16.msra.mxu0 %v461
  %517 = vmatprep.subr.bf16.mxu0 %v460
  %518 = vmatpush1.bf16.msra.mxu0 %v459
  %519 = vmatprep.subr.bf16.mxu0 %v458
  %520 = vmatpush1.bf16.msra.mxu0 %v457
  %521 = vmatprep.subr.bf16.mxu0 %v456
  %522 = vmatpush1.bf16.msra.mxu0 %v455
  %523 = vmatprep.subr.bf16.mxu0 %v454
  %524 = vmatpush1.bf16.msra.mxu0 %v453
  %525 = vmatprep.subr.bf16.mxu0 %v452
  %526 = vmatpush1.bf16.msra.mxu0 %v451
  %527 = vmatprep.subr.bf16.mxu0 %v450
  %528 = vmatpush1.bf16.msra.mxu0 %v449
  %529 = vmatprep.subr.bf16.mxu0 %v480
  %530 = vmatpush2.bf16.msra.mxu0 %v479
  %531 = vmatprep.subr.bf16.mxu0 %v478
  %532 = vmatpush2.bf16.msra.mxu0 %v477
  %533 = vmatprep.subr.bf16.mxu0 %v476
  %534 = vmatpush2.bf16.msra.mxu0 %v475
  %535 = vmatprep.subr.bf16.mxu0 %v474
  %536 = vmatpush2.bf16.msra.mxu0 %v473
  %537 = vmatprep.subr.bf16.mxu0 %v472
  %538 = vmatpush2.bf16.msra.mxu0 %v471
  %539 = vmatprep.subr.bf16.mxu0 %v470
  %540 = vmatpush2.bf16.msra.mxu0 %v469
  %541 = vmatprep.subr.bf16.mxu0 %v468
  %542 = vmatpush2.bf16.msra.mxu0 %v467
  %543 = vmatprep.subr.bf16.mxu0 %v466
  %544 = vmatpush2.bf16.msra.mxu0 %v465
  %545 = vmatprep.mubr.bf16.mxu0 %v346
  %546 = vmatmul.mubr.bf16.gmra.mxu0 %v345
  %v547 = vpop.f32.mrf.mxu0
  %v548 = vadd.f32 %v315, %v547
  %v549 = vpop.f32.mrf.mxu0
  %v550 = vadd.f32 %v317, %v549
  %v551 = vpop.f32.mrf.mxu0
  %v552 = vadd.f32 %v319, %v551
  %v553 = vpop.f32.mrf.mxu0
  %v554 = vadd.f32 %v321, %v553
  %555 = vmatprep.mubr.bf16.mxu0 %v348
  %556 = vmatmul.mubr.bf16.gmra.mxu0 %v347
  %v557 = vpop.f32.mrf.mxu0
  %v558 = vadd.f32 %v325, %v557
  %v559 = vpop.f32.mrf.mxu0
  %v560 = vadd.f32 %v327, %v559
  %v561 = vpop.f32.mrf.mxu0
  %v562 = vadd.f32 %v329, %v561
  %v563 = vpop.f32.mrf.mxu0
  %v564 = vadd.f32 %v331, %v563
  %565 = vdwg.mxu0
  %s566 = scalar_lea.vmem %s0, 32
  %v567 = vld [vmem:[%s566] sm:$0xff]
  %v568 = vld [vmem:[%s566 + $0x8] sm:$0xff]
  %v569 = vld [vmem:[%s566 + $0x10] sm:$0xff]
  %v570 = vld [vmem:[%s566 + $0x18] sm:$0xff]
  %s571 = scalar_lea.vmem %s1, 512
  %v572 = vld [vmem:[%s571] sm:$0xff]
  %v573 = vld [vmem:[%s571 + $0x8] sm:$0xff]
  %v574 = vld [vmem:[%s571 + $0x10] sm:$0xff]
  %v575 = vld [vmem:[%s571 + $0x18] sm:$0xff]
  %v576 = vld [vmem:[%s571 + $0x20] sm:$0xff]
  %v577 = vld [vmem:[%s571 + $0x28] sm:$0xff]
  %v578 = vld [vmem:[%s571 + $0x30] sm:$0xff]
  %v579 = vld [vmem:[%s571 + $0x38] sm:$0xff]
  %v580 = vld [vmem:[%s571 + $0x40] sm:$0xff]
  %v581 = vld [vmem:[%s571 + $0x48] sm:$0xff]
  %v582 = vld [vmem:[%s571 + $0x50] sm:$0xff]
  %v583 = vld [vmem:[%s571 + $0x58] sm:$0xff]
  %v584 = vld [vmem:[%s571 + $0x60] sm:$0xff]
  %v585 = vld [vmem:[%s571 + $0x68] sm:$0xff]
  %v586 = vld [vmem:[%s571 + $0x70] sm:$0xff]
  %v587 = vld [vmem:[%s571 + $0x78] sm:$0xff]
  %v588 = vld [vmem:[%s571 + $0x80] sm:$0xff]
  %v589 = vld [vmem:[%s571 + $0x88] sm:$0xff]
  %v590 = vld [vmem:[%s571 + $0x90] sm:$0xff]
  %v591 = vld [vmem:[%s571 + $0x98] sm:$0xff]
  %v592 = vld [vmem:[%s571 + $0xa0] sm:$0xff]
  %v593 = vld [vmem:[%s571 + $0xa8] sm:$0xff]
  %v594 = vld [vmem:[%s571 + $0xb0] sm:$0xff]
  %v595 = vld [vmem:[%s571 + $0xb8] sm:$0xff]
  %v596 = vld [vmem:[%s571 + $0xc0] sm:$0xff]
  %v597 = vld [vmem:[%s571 + $0xc8] sm:$0xff]
  %v598 = vld [vmem:[%s571 + $0xd0] sm:$0xff]
  %v599 = vld [vmem:[%s571 + $0xd8] sm:$0xff]
  %v600 = vld [vmem:[%s571 + $0xe0] sm:$0xff]
  %v601 = vld [vmem:[%s571 + $0xe8] sm:$0xff]
  %v602 = vld [vmem:[%s571 + $0xf0] sm:$0xff]
  %v603 = vld [vmem:[%s571 + $0xf8] sm:$0xff]
  %v608 = vunpack.c.l.b16 %v567
  %v609 = vunpack.c.h.b16 %v567
  %v610 = vunpack.c.l.b16 %v568
  %v611 = vunpack.c.h.b16 %v568
  %v612 = vunpack.c.l.b16 %v569
  %v613 = vunpack.c.h.b16 %v569
  %v614 = vunpack.c.l.b16 %v570
  %v615 = vunpack.c.h.b16 %v570
  %v616 = vpack.c.b16 %v610, %v608
  %v617 = vpack.c.b16 %v611, %v609
  %v618 = vpack.c.b16 %v614, %v612
  %v619 = vpack.c.b16 %v615, %v613
  %v656 = vunpack.c.l.b16 %v572
  %v657 = vunpack.c.h.b16 %v572
  %v658 = vunpack.c.l.b16 %v573
  %v659 = vunpack.c.h.b16 %v573
  %v660 = vunpack.c.l.b16 %v574
  %v661 = vunpack.c.h.b16 %v574
  %v662 = vunpack.c.l.b16 %v575
  %v663 = vunpack.c.h.b16 %v575
  %v664 = vunpack.c.l.b16 %v576
  %v665 = vunpack.c.h.b16 %v576
  %v666 = vunpack.c.l.b16 %v577
  %v667 = vunpack.c.h.b16 %v577
  %v668 = vunpack.c.l.b16 %v578
  %v669 = vunpack.c.h.b16 %v578
  %v670 = vunpack.c.l.b16 %v579
  %v671 = vunpack.c.h.b16 %v579
  %v672 = vunpack.c.l.b16 %v580
  %v673 = vunpack.c.h.b16 %v580
  %v674 = vunpack.c.l.b16 %v581
  %v675 = vunpack.c.h.b16 %v581
  %v676 = vunpack.c.l.b16 %v582
  %v677 = vunpack.c.h.b16 %v582
  %v678 = vunpack.c.l.b16 %v583
  %v679 = vunpack.c.h.b16 %v583
  %v680 = vunpack.c.l.b16 %v584
  %v681 = vunpack.c.h.b16 %v584
  %v682 = vunpack.c.l.b16 %v585
  %v683 = vunpack.c.h.b16 %v585
  %v684 = vunpack.c.l.b16 %v586
  %v685 = vunpack.c.h.b16 %v586
  %v686 = vunpack.c.l.b16 %v587
  %v687 = vunpack.c.h.b16 %v587
  %v688 = vunpack.c.l.b16 %v588
  %v689 = vunpack.c.h.b16 %v588
  %v690 = vunpack.c.l.b16 %v589
  %v691 = vunpack.c.h.b16 %v589
  %v692 = vunpack.c.l.b16 %v590
  %v693 = vunpack.c.h.b16 %v590
  %v694 = vunpack.c.l.b16 %v591
  %v695 = vunpack.c.h.b16 %v591
  %v696 = vunpack.c.l.b16 %v592
  %v697 = vunpack.c.h.b16 %v592
  %v698 = vunpack.c.l.b16 %v593
  %v699 = vunpack.c.h.b16 %v593
  %v700 = vunpack.c.l.b16 %v594
  %v701 = vunpack.c.h.b16 %v594
  %v702 = vunpack.c.l.b16 %v595
  %v703 = vunpack.c.h.b16 %v595
  %v704 = vunpack.c.l.b16 %v596
  %v705 = vunpack.c.h.b16 %v596
  %v706 = vunpack.c.l.b16 %v597
  %v707 = vunpack.c.h.b16 %v597
  %v708 = vunpack.c.l.b16 %v598
  %v709 = vunpack.c.h.b16 %v598
  %v710 = vunpack.c.l.b16 %v599
  %v711 = vunpack.c.h.b16 %v599
  %v712 = vunpack.c.l.b16 %v600
  %v713 = vunpack.c.h.b16 %v600
  %v714 = vunpack.c.l.b16 %v601
  %v715 = vunpack.c.h.b16 %v601
  %v716 = vunpack.c.l.b16 %v602
  %v717 = vunpack.c.h.b16 %v602
  %v718 = vunpack.c.l.b16 %v603
  %v719 = vunpack.c.h.b16 %v603
  %v720 = vpack.c.b16 %v658, %v656
  %v721 = vpack.c.b16 %v659, %v657
  %v722 = vpack.c.b16 %v662, %v660
  %v723 = vpack.c.b16 %v663, %v661
  %v724 = vpack.c.b16 %v666, %v664
  %v725 = vpack.c.b16 %v667, %v665
  %v726 = vpack.c.b16 %v670, %v668
  %v727 = vpack.c.b16 %v671, %v669
  %v728 = vpack.c.b16 %v674, %v672
  %v729 = vpack.c.b16 %v675, %v673
  %v730 = vpack.c.b16 %v678, %v676
  %v731 = vpack.c.b16 %v679, %v677
  %v732 = vpack.c.b16 %v682, %v680
  %v733 = vpack.c.b16 %v683, %v681
  %v734 = vpack.c.b16 %v686, %v684
  %v735 = vpack.c.b16 %v687, %v685
  %v736 = vpack.c.b16 %v690, %v688
  %v737 = vpack.c.b16 %v691, %v689
  %v738 = vpack.c.b16 %v694, %v692
  %v739 = vpack.c.b16 %v695, %v693
  %v740 = vpack.c.b16 %v698, %v696
  %v741 = vpack.c.b16 %v699, %v697
  %v742 = vpack.c.b16 %v702, %v700
  %v743 = vpack.c.b16 %v703, %v701
  %v744 = vpack.c.b16 %v706, %v704
  %v745 = vpack.c.b16 %v707, %v705
  %v746 = vpack.c.b16 %v710, %v708
  %v747 = vpack.c.b16 %v711, %v709
  %v748 = vpack.c.b16 %v714, %v712
  %v749 = vpack.c.b16 %v715, %v713
  %v750 = vpack.c.b16 %v718, %v716
  %v751 = vpack.c.b16 %v719, %v717
  %784 = vmatprep.subr.bf16.mxu0 %v735
  %785 = vmatpush1.bf16.msra.mxu0 %v734
  %786 = vmatprep.subr.bf16.mxu0 %v733
  %787 = vmatpush1.bf16.msra.mxu0 %v732
  %788 = vmatprep.subr.bf16.mxu0 %v731
  %789 = vmatpush1.bf16.msra.mxu0 %v730
  %790 = vmatprep.subr.bf16.mxu0 %v729
  %791 = vmatpush1.bf16.msra.mxu0 %v728
  %792 = vmatprep.subr.bf16.mxu0 %v727
  %793 = vmatpush1.bf16.msra.mxu0 %v726
  %794 = vmatprep.subr.bf16.mxu0 %v725
  %795 = vmatpush1.bf16.msra.mxu0 %v724
  %796 = vmatprep.subr.bf16.mxu0 %v723
  %797 = vmatpush1.bf16.msra.mxu0 %v722
  %798 = vmatprep.subr.bf16.mxu0 %v721
  %799 = vmatpush1.bf16.msra.mxu0 %v720
  %800 = vmatprep.subr.bf16.mxu0 %v751
  %801 = vmatpush2.bf16.msra.mxu0 %v750
  %802 = vmatprep.subr.bf16.mxu0 %v749
  %803 = vmatpush2.bf16.msra.mxu0 %v748
  %804 = vmatprep.subr.bf16.mxu0 %v747
  %805 = vmatpush2.bf16.msra.mxu0 %v746
  %806 = vmatprep.subr.bf16.mxu0 %v745
  %807 = vmatpush2.bf16.msra.mxu0 %v744
  %808 = vmatprep.subr.bf16.mxu0 %v743
  %809 = vmatpush2.bf16.msra.mxu0 %v742
  %810 = vmatprep.subr.bf16.mxu0 %v741
  %811 = vmatpush2.bf16.msra.mxu0 %v740
  %812 = vmatprep.subr.bf16.mxu0 %v739
  %813 = vmatpush2.bf16.msra.mxu0 %v738
  %814 = vmatprep.subr.bf16.mxu0 %v737
  %815 = vmatpush2.bf16.msra.mxu0 %v736
  %816 = vmatprep.mubr.bf16.mxu0 %v617
  %817 = vmatmul.mubr.bf16.gmra.mxu0 %v616
  %v818 = vpop.f32.mrf.mxu0
  %v819 = vadd.f32 0.0, %v818
  %v820 = vpop.f32.mrf.mxu0
  %v821 = vadd.f32 0.0, %v820
  %v822 = vpop.f32.mrf.mxu0
  %v823 = vadd.f32 0.0, %v822
  %v824 = vpop.f32.mrf.mxu0
  %v825 = vadd.f32 0.0, %v824
  %826 = vmatprep.mubr.bf16.mxu0 %v619
  %827 = vmatmul.mubr.bf16.gmra.mxu0 %v618
  %v828 = vpop.f32.mrf.mxu0
  %v829 = vadd.f32 0.0, %v828
  %v830 = vpop.f32.mrf.mxu0
  %v831 = vadd.f32 0.0, %v830
  %v832 = vpop.f32.mrf.mxu0
  %v833 = vadd.f32 0.0, %v832
  %v834 = vpop.f32.mrf.mxu0
  %v835 = vadd.f32 0.0, %v834
  %836 = vdwg.mxu0
  %v837 = vadd.f32 %v548, %v819
  %v838 = vadd.f32 %v550, %v821
  %v839 = vadd.f32 %v552, %v823
  %v840 = vadd.f32 %v554, %v825
  %v841 = vadd.f32 %v558, %v829
  %v842 = vadd.f32 %v560, %v831
  %v843 = vadd.f32 %v562, %v833
  %v844 = vadd.f32 %v564, %v835
  %v845 = vld [vmem:[%s2] sm:$0x3]
  %v847 = vlaneseq
  %v848 = vshrl.u32 %v847, 7
  %v849 = vsub.s32 0, %v848
  %v850 = vrot.slane %v845, %v849
  %v851 = vlaneseq
  %v852 = vshrl.u32 %v851, 7
  %v853 = vsub.s32 1, %v852
  %v854 = vrot.slane %v845, %v853
  %v857 = vmul.f32 %v837, %v850
  %v858 = vmul.f32 %v838, %v854
  %v859 = vmul.f32 %v839, %v850
  %v860 = vmul.f32 %v840, %v854
  %v861 = vmul.f32 %v841, %v850
  %v862 = vmul.f32 %v842, %v854
  %v863 = vmul.f32 %v843, %v850
  %v864 = vmul.f32 %v844, %v854
  %v865 = vld [vmem:[%s3] sm:$0x3]
  %v867 = vlaneseq
  %v868 = vshrl.u32 %v867, 7
  %v869 = vsub.s32 0, %v868
  %v870 = vrot.slane %v865, %v869
  %v871 = vlaneseq
  %v872 = vshrl.u32 %v871, 7
  %v873 = vsub.s32 1, %v872
  %v874 = vrot.slane %v865, %v873
  %v877 = vadd.f32 %v857, %v870
  %v878 = vadd.f32 %v858, %v874
  %v879 = vadd.f32 %v859, %v870
  %v880 = vadd.f32 %v860, %v874
  %v881 = vadd.f32 %v861, %v870
  %v882 = vadd.f32 %v862, %v874
  %v883 = vadd.f32 %v863, %v870
  %v884 = vadd.f32 %v864, %v874
  %v885 = vmax.f32 %v877, 0.0
  %v886 = vmax.f32 %v878, 0.0
  %v887 = vmax.f32 %v879, 0.0
  %v888 = vmax.f32 %v880, 0.0
  %v889 = vmax.f32 %v881, 0.0
  %v890 = vmax.f32 %v882, 0.0
  %v891 = vmax.f32 %v883, 0.0
  %v892 = vmax.f32 %v884, 0.0
  %v893 = vpack.c.bf16 0.0, 0.0
  %v894 = vpack.c.bf16 %v887, %v885
  %v895 = vpack.c.bf16 %v888, %v886
  %v896 = vld [vmem:[%s4] sm:$0xff]
  %v897 = vld [vmem:[%s4 + $0x8] sm:$0xff]
  %v898 = vld [vmem:[%s4 + $0x10] sm:$0xff]
  %v899 = vld [vmem:[%s4 + $0x18] sm:$0xff]
  %v900 = vld [vmem:[%s4 + $0x20] sm:$0xff]
  %v901 = vld [vmem:[%s4 + $0x28] sm:$0xff]
  %v902 = vld [vmem:[%s4 + $0x30] sm:$0xff]
  %v903 = vld [vmem:[%s4 + $0x38] sm:$0xff]
  %v904 = vld [vmem:[%s4 + $0x40] sm:$0xff]
  %v905 = vld [vmem:[%s4 + $0x48] sm:$0xff]
  %v906 = vld [vmem:[%s4 + $0x50] sm:$0xff]
  %v907 = vld [vmem:[%s4 + $0x58] sm:$0xff]
  %v908 = vld [vmem:[%s4 + $0x60] sm:$0xff]
  %v909 = vld [vmem:[%s4 + $0x68] sm:$0xff]
  %v910 = vld [vmem:[%s4 + $0x70] sm:$0xff]
  %v911 = vld [vmem:[%s4 + $0x78] sm:$0xff]
  %v912 = vld [vmem:[%s4 + $0x80] sm:$0xff]
  %v913 = vld [vmem:[%s4 + $0x88] sm:$0xff]
  %v914 = vld [vmem:[%s4 + $0x90] sm:$0xff]
  %v915 = vld [vmem:[%s4 + $0x98] sm:$0xff]
  %v916 = vld [vmem:[%s4 + $0xa0] sm:$0xff]
  %v917 = vld [vmem:[%s4 + $0xa8] sm:$0xff]
  %v918 = vld [vmem:[%s4 + $0xb0] sm:$0xff]
  %v919 = vld [vmem:[%s4 + $0xb8] sm:$0xff]
  %v920 = vld [vmem:[%s4 + $0xc0] sm:$0xff]
  %v921 = vld [vmem:[%s4 + $0xc8] sm:$0xff]
  %v922 = vld [vmem:[%s4 + $0xd0] sm:$0xff]
  %v923 = vld [vmem:[%s4 + $0xd8] sm:$0xff]
  %v924 = vld [vmem:[%s4 + $0xe0] sm:$0xff]
  %v925 = vld [vmem:[%s4 + $0xe8] sm:$0xff]
  %v926 = vld [vmem:[%s4 + $0xf0] sm:$0xff]
  %v927 = vld [vmem:[%s4 + $0xf8] sm:$0xff]
  %v928 = vpack.c.bf16 %v891, %v889
  %v929 = vpack.c.bf16 %v892, %v890
  %s930 = scalar_lea.vmem %s4, 256
  %v931 = vld [vmem:[%s930] sm:$0xff]
  %v932 = vld [vmem:[%s930 + $0x8] sm:$0xff]
  %v933 = vld [vmem:[%s930 + $0x10] sm:$0xff]
  %v934 = vld [vmem:[%s930 + $0x18] sm:$0xff]
  %v935 = vld [vmem:[%s930 + $0x20] sm:$0xff]
  %v936 = vld [vmem:[%s930 + $0x28] sm:$0xff]
  %v937 = vld [vmem:[%s930 + $0x30] sm:$0xff]
  %v938 = vld [vmem:[%s930 + $0x38] sm:$0xff]
  %v939 = vld [vmem:[%s930 + $0x40] sm:$0xff]
  %v940 = vld [vmem:[%s930 + $0x48] sm:$0xff]
  %v941 = vld [vmem:[%s930 + $0x50] sm:$0xff]
  %v942 = vld [vmem:[%s930 + $0x58] sm:$0xff]
  %v943 = vld [vmem:[%s930 + $0x60] sm:$0xff]
  %v944 = vld [vmem:[%s930 + $0x68] sm:$0xff]
  %v945 = vld [vmem:[%s930 + $0x70] sm:$0xff]
  %v946 = vld [vmem:[%s930 + $0x78] sm:$0xff]
  %v947 = vld [vmem:[%s930 + $0x80] sm:$0xff]
  %v948 = vld [vmem:[%s930 + $0x88] sm:$0xff]
  %v949 = vld [vmem:[%s930 + $0x90] sm:$0xff]
  %v950 = vld [vmem:[%s930 + $0x98] sm:$0xff]
  %v951 = vld [vmem:[%s930 + $0xa0] sm:$0xff]
  %v952 = vld [vmem:[%s930 + $0xa8] sm:$0xff]
  %v953 = vld [vmem:[%s930 + $0xb0] sm:$0xff]
  %v954 = vld [vmem:[%s930 + $0xb8] sm:$0xff]
  %v955 = vld [vmem:[%s930 + $0xc0] sm:$0xff]
  %v956 = vld [vmem:[%s930 + $0xc8] sm:$0xff]
  %v957 = vld [vmem:[%s930 + $0xd0] sm:$0xff]
  %v958 = vld [vmem:[%s930 + $0xd8] sm:$0xff]
  %v959 = vld [vmem:[%s930 + $0xe0] sm:$0xff]
  %v960 = vld [vmem:[%s930 + $0xe8] sm:$0xff]
  %v961 = vld [vmem:[%s930 + $0xf0] sm:$0xff]
  %v962 = vld [vmem:[%s930 + $0xf8] sm:$0xff]
  %v995 = vunpack.c.l.b16 %v931
  %v996 = vunpack.c.h.b16 %v931
  %v997 = vunpack.c.l.b16 %v932
  %v998 = vunpack.c.h.b16 %v932
  %v999 = vunpack.c.l.b16 %v933
  %v1000 = vunpack.c.h.b16 %v933
  %v1001 = vunpack.c.l.b16 %v934
  %v1002 = vunpack.c.h.b16 %v934
  %v1003 = vunpack.c.l.b16 %v935
  %v1004 = vunpack.c.h.b16 %v935
  %v1005 = vunpack.c.l.b16 %v936
  %v1006 = vunpack.c.h.b16 %v936
  %v1007 = vunpack.c.l.b16 %v937
  %v1008 = vunpack.c.h.b16 %v937
  %v1009 = vunpack.c.l.b16 %v938
  %v1010 = vunpack.c.h.b16 %v938
  %v1011 = vunpack.c.l.b16 %v939
  %v1012 = vunpack.c.h.b16 %v939
  %v1013 = vunpack.c.l.b16 %v940
  %v1014 = vunpack.c.h.b16 %v940
  %v1015 = vunpack.c.l.b16 %v941
  %v1016 = vunpack.c.h.b16 %v941
  %v1017 = vunpack.c.l.b16 %v942
  %v1018 = vunpack.c.h.b16 %v942
  %v1019 = vunpack.c.l.b16 %v943
  %v1020 = vunpack.c.h.b16 %v943
  %v1021 = vunpack.c.l.b16 %v944
  %v1022 = vunpack.c.h.b16 %v944
  %v1023 = vunpack.c.l.b16 %v945
  %v1024 = vunpack.c.h.b16 %v945
  %v1025 = vunpack.c.l.b16 %v946
  %v1026 = vunpack.c.h.b16 %v946
  %v1027 = vunpack.c.l.b16 %v947
  %v1028 = vunpack.c.h.b16 %v947
  %v1029 = vunpack.c.l.b16 %v948
  %v1030 = vunpack.c.h.b16 %v948
  %v1031 = vunpack.c.l.b16 %v949
  %v1032 = vunpack.c.h.b16 %v949
  %v1033 = vunpack.c.l.b16 %v950
  %v1034 = vunpack.c.h.b16 %v950
  %v1035 = vunpack.c.l.b16 %v951
  %v1036 = vunpack.c.h.b16 %v951
  %v1037 = vunpack.c.l.b16 %v952
  %v1038 = vunpack.c.h.b16 %v952
  %v1039 = vunpack.c.l.b16 %v953
  %v1040 = vunpack.c.h.b16 %v953
  %v1041 = vunpack.c.l.b16 %v954
  %v1042 = vunpack.c.h.b16 %v954
  %v1043 = vunpack.c.l.b16 %v955
  %v1044 = vunpack.c.h.b16 %v955
  %v1045 = vunpack.c.l.b16 %v956
  %v1046 = vunpack.c.h.b16 %v956
  %v1047 = vunpack.c.l.b16 %v957
  %v1048 = vunpack.c.h.b16 %v957
  %v1049 = vunpack.c.l.b16 %v958
  %v1050 = vunpack.c.h.b16 %v958
  %v1051 = vunpack.c.l.b16 %v959
  %v1052 = vunpack.c.h.b16 %v959
  %v1053 = vunpack.c.l.b16 %v960
  %v1054 = vunpack.c.h.b16 %v960
  %v1055 = vunpack.c.l.b16 %v961
  %v1056 = vunpack.c.h.b16 %v961
  %v1057 = vunpack.c.l.b16 %v962
  %v1058 = vunpack.c.h.b16 %v962
  %v1059 = vpack.c.b16 %v997, %v995
  %v1060 = vpack.c.b16 %v998, %v996
  %v1061 = vpack.c.b16 %v1001, %v999
  %v1062 = vpack.c.b16 %v1002, %v1000
  %v1063 = vpack.c.b16 %v1005, %v1003
  %v1064 = vpack.c.b16 %v1006, %v1004
  %v1065 = vpack.c.b16 %v1009, %v1007
  %v1066 = vpack.c.b16 %v1010, %v1008
  %v1067 = vpack.c.b16 %v1013, %v1011
  %v1068 = vpack.c.b16 %v1014, %v1012
  %v1069 = vpack.c.b16 %v1017, %v1015
  %v1070 = vpack.c.b16 %v1018, %v1016
  %v1071 = vpack.c.b16 %v1021, %v1019
  %v1072 = vpack.c.b16 %v1022, %v1020
  %v1073 = vpack.c.b16 %v1025, %v1023
  %v1074 = vpack.c.b16 %v1026, %v1024
  %v1075 = vpack.c.b16 %v1029, %v1027
  %v1076 = vpack.c.b16 %v1030, %v1028
  %v1077 = vpack.c.b16 %v1033, %v1031
  %v1078 = vpack.c.b16 %v1034, %v1032
  %v1079 = vpack.c.b16 %v1037, %v1035
  %v1080 = vpack.c.b16 %v1038, %v1036
  %v1081 = vpack.c.b16 %v1041, %v1039
  %v1082 = vpack.c.b16 %v1042, %v1040
  %v1083 = vpack.c.b16 %v1045, %v1043
  %v1084 = vpack.c.b16 %v1046, %v1044
  %v1085 = vpack.c.b16 %v1049, %v1047
  %v1086 = vpack.c.b16 %v1050, %v1048
  %v1087 = vpack.c.b16 %v1053, %v1051
  %v1088 = vpack.c.b16 %v1054, %v1052
  %v1089 = vpack.c.b16 %v1057, %v1055
  %v1090 = vpack.c.b16 %v1058, %v1056
  %1123 = vmatprep.subr.bf16.mxu0 %v1074
  %1124 = vmatpush1.bf16.msra.mxu0 %v1073
  %1125 = vmatprep.subr.bf16.mxu0 %v1072
  %1126 = vmatpush1.bf16.msra.mxu0 %v1071
  %1127 = vmatprep.subr.bf16.mxu0 %v1070
  %1128 = vmatpush1.bf16.msra.mxu0 %v1069
  %1129 = vmatprep.subr.bf16.mxu0 %v1068
  %1130 = vmatpush1.bf16.msra.mxu0 %v1067
  %1131 = vmatprep.subr.bf16.mxu0 %v1066
  %1132 = vmatpush1.bf16.msra.mxu0 %v1065
  %1133 = vmatprep.subr.bf16.mxu0 %v1064
  %1134 = vmatpush1.bf16.msra.mxu0 %v1063
  %1135 = vmatprep.subr.bf16.mxu0 %v1062
  %1136 = vmatpush1.bf16.msra.mxu0 %v1061
  %1137 = vmatprep.subr.bf16.mxu0 %v1060
  %1138 = vmatpush1.bf16.msra.mxu0 %v1059
  %1139 = vmatprep.subr.bf16.mxu0 %v1090
  %1140 = vmatpush2.bf16.msra.mxu0 %v1089
  %1141 = vmatprep.subr.bf16.mxu0 %v1088
  %1142 = vmatpush2.bf16.msra.mxu0 %v1087
  %1143 = vmatprep.subr.bf16.mxu0 %v1086
  %1144 = vmatpush2.bf16.msra.mxu0 %v1085
  %1145 = vmatprep.subr.bf16.mxu0 %v1084
  %1146 = vmatpush2.bf16.msra.mxu0 %v1083
  %1147 = vmatprep.subr.bf16.mxu0 %v1082
  %1148 = vmatpush2.bf16.msra.mxu0 %v1081
  %1149 = vmatprep.subr.bf16.mxu0 %v1080
  %1150 = vmatpush2.bf16.msra.mxu0 %v1079
  %1151 = vmatprep.subr.bf16.mxu0 %v1078
  %1152 = vmatpush2.bf16.msra.mxu0 %v1077
  %1153 = vmatprep.subr.bf16.mxu0 %v1076
  %1154 = vmatpush2.bf16.msra.mxu0 %v1075
  %1155 = vmatprep.mubr.bf16.mxu0 %v895
  %1156 = vmatmul.mubr.bf16.gmra.mxu0 %v894
  %v1157 = vpop.f32.mrf.mxu0
  %v1158 = vadd.f32 0.0, %v1157
  %v1159 = vpop.f32.mrf.mxu0
  %v1160 = vadd.f32 0.0, %v1159
  %v1161 = vpop.f32.mrf.mxu0
  %v1162 = vadd.f32 0.0, %v1161
  %v1163 = vpop.f32.mrf.mxu0
  %v1164 = vadd.f32 0.0, %v1163
  %1165 = vmatprep.mubr.bf16.mxu0 %v929
  %1166 = vmatmul.mubr.bf16.gmra.mxu0 %v928
  %v1167 = vpop.f32.mrf.mxu0
  %v1168 = vadd.f32 0.0, %v1167
  %v1169 = vpop.f32.mrf.mxu0
  %v1170 = vadd.f32 0.0, %v1169
  %v1171 = vpop.f32.mrf.mxu0
  %v1172 = vadd.f32 0.0, %v1171
  %v1173 = vpop.f32.mrf.mxu0
  %v1174 = vadd.f32 0.0, %v1173
  %1175 = vdwg.mxu0
  %v1208 = vunpack.c.l.b16 %v896
  %v1209 = vunpack.c.h.b16 %v896
  %v1210 = vunpack.c.l.b16 %v897
  %v1211 = vunpack.c.h.b16 %v897
  %v1212 = vunpack.c.l.b16 %v898
  %v1213 = vunpack.c.h.b16 %v898
  %v1214 = vunpack.c.l.b16 %v899
  %v1215 = vunpack.c.h.b16 %v899
  %v1216 = vunpack.c.l.b16 %v900
  %v1217 = vunpack.c.h.b16 %v900
  %v1218 = vunpack.c.l.b16 %v901
  %v1219 = vunpack.c.h.b16 %v901
  %v1220 = vunpack.c.l.b16 %v902
  %v1221 = vunpack.c.h.b16 %v902
  %v1222 = vunpack.c.l.b16 %v903
  %v1223 = vunpack.c.h.b16 %v903
  %v1224 = vunpack.c.l.b16 %v904
  %v1225 = vunpack.c.h.b16 %v904
  %v1226 = vunpack.c.l.b16 %v905
  %v1227 = vunpack.c.h.b16 %v905
  %v1228 = vunpack.c.l.b16 %v906
  %v1229 = vunpack.c.h.b16 %v906
  %v1230 = vunpack.c.l.b16 %v907
  %v1231 = vunpack.c.h.b16 %v907
  %v1232 = vunpack.c.l.b16 %v908
  %v1233 = vunpack.c.h.b16 %v908
  %v1234 = vunpack.c.l.b16 %v909
  %v1235 = vunpack.c.h.b16 %v909
  %v1236 = vunpack.c.l.b16 %v910
  %v1237 = vunpack.c.h.b16 %v910
  %v1238 = vunpack.c.l.b16 %v911
  %v1239 = vunpack.c.h.b16 %v911
  %v1240 = vunpack.c.l.b16 %v912
  %v1241 = vunpack.c.h.b16 %v912
  %v1242 = vunpack.c.l.b16 %v913
  %v1243 = vunpack.c.h.b16 %v913
  %v1244 = vunpack.c.l.b16 %v914
  %v1245 = vunpack.c.h.b16 %v914
  %v1246 = vunpack.c.l.b16 %v915
  %v1247 = vunpack.c.h.b16 %v915
  %v1248 = vunpack.c.l.b16 %v916
  %v1249 = vunpack.c.h.b16 %v916
  %v1250 = vunpack.c.l.b16 %v917
  %v1251 = vunpack.c.h.b16 %v917
  %v1252 = vunpack.c.l.b16 %v918
  %v1253 = vunpack.c.h.b16 %v918
  %v1254 = vunpack.c.l.b16 %v919
  %v1255 = vunpack.c.h.b16 %v919
  %v1256 = vunpack.c.l.b16 %v920
  %v1257 = vunpack.c.h.b16 %v920
  %v1258 = vunpack.c.l.b16 %v921
  %v1259 = vunpack.c.h.b16 %v921
  %v1260 = vunpack.c.l.b16 %v922
  %v1261 = vunpack.c.h.b16 %v922
  %v1262 = vunpack.c.l.b16 %v923
  %v1263 = vunpack.c.h.b16 %v923
  %v1264 = vunpack.c.l.b16 %v924
  %v1265 = vunpack.c.h.b16 %v924
  %v1266 = vunpack.c.l.b16 %v925
  %v1267 = vunpack.c.h.b16 %v925
  %v1268 = vunpack.c.l.b16 %v926
  %v1269 = vunpack.c.h.b16 %v926
  %v1270 = vunpack.c.l.b16 %v927
  %v1271 = vunpack.c.h.b16 %v927
  %v1272 = vpack.c.b16 %v1210, %v1208
  %v1273 = vpack.c.b16 %v1211, %v1209
  %v1274 = vpack.c.b16 %v1214, %v1212
  %v1275 = vpack.c.b16 %v1215, %v1213
  %v1276 = vpack.c.b16 %v1218, %v1216
  %v1277 = vpack.c.b16 %v1219, %v1217
  %v1278 = vpack.c.b16 %v1222, %v1220
  %v1279 = vpack.c.b16 %v1223, %v1221
  %v1280 = vpack.c.b16 %v1226, %v1224
  %v1281 = vpack.c.b16 %v1227, %v1225
  %v1282 = vpack.c.b16 %v1230, %v1228
  %v1283 = vpack.c.b16 %v1231, %v1229
  %v1284 = vpack.c.b16 %v1234, %v1232
  %v1285 = vpack.c.b16 %v1235, %v1233
  %v1286 = vpack.c.b16 %v1238, %v1236
  %v1287 = vpack.c.b16 %v1239, %v1237
  %v1288 = vpack.c.b16 %v1242, %v1240
  %v1289 = vpack.c.b16 %v1243, %v1241
  %v1290 = vpack.c.b16 %v1246, %v1244
  %v1291 = vpack.c.b16 %v1247, %v1245
  %v1292 = vpack.c.b16 %v1250, %v1248
  %v1293 = vpack.c.b16 %v1251, %v1249
  %v1294 = vpack.c.b16 %v1254, %v1252
  %v1295 = vpack.c.b16 %v1255, %v1253
  %v1296 = vpack.c.b16 %v1258, %v1256
  %v1297 = vpack.c.b16 %v1259, %v1257
  %v1298 = vpack.c.b16 %v1262, %v1260
  %v1299 = vpack.c.b16 %v1263, %v1261
  %v1300 = vpack.c.b16 %v1266, %v1264
  %v1301 = vpack.c.b16 %v1267, %v1265
  %v1302 = vpack.c.b16 %v1270, %v1268
  %v1303 = vpack.c.b16 %v1271, %v1269
  %1336 = vmatprep.subr.bf16.mxu0 %v1287
  %1337 = vmatpush1.bf16.msra.mxu0 %v1286
  %1338 = vmatprep.subr.bf16.mxu0 %v1285
  %1339 = vmatpush1.bf16.msra.mxu0 %v1284
  %1340 = vmatprep.subr.bf16.mxu0 %v1283
  %1341 = vmatpush1.bf16.msra.mxu0 %v1282
  %1342 = vmatprep.subr.bf16.mxu0 %v1281
  %1343 = vmatpush1.bf16.msra.mxu0 %v1280
  %1344 = vmatprep.subr.bf16.mxu0 %v1279
  %1345 = vmatpush1.bf16.msra.mxu0 %v1278
  %1346 = vmatprep.subr.bf16.mxu0 %v1277
  %1347 = vmatpush1.bf16.msra.mxu0 %v1276
  %1348 = vmatprep.subr.bf16.mxu0 %v1275
  %1349 = vmatpush1.bf16.msra.mxu0 %v1274
  %1350 = vmatprep.subr.bf16.mxu0 %v1273
  %1351 = vmatpush1.bf16.msra.mxu0 %v1272
  %1352 = vmatprep.subr.bf16.mxu0 %v1303
  %1353 = vmatpush2.bf16.msra.mxu0 %v1302
  %1354 = vmatprep.subr.bf16.mxu0 %v1301
  %1355 = vmatpush2.bf16.msra.mxu0 %v1300
  %1356 = vmatprep.subr.bf16.mxu0 %v1299
  %1357 = vmatpush2.bf16.msra.mxu0 %v1298
  %1358 = vmatprep.subr.bf16.mxu0 %v1297
  %1359 = vmatpush2.bf16.msra.mxu0 %v1296
  %1360 = vmatprep.subr.bf16.mxu0 %v1295
  %1361 = vmatpush2.bf16.msra.mxu0 %v1294
  %1362 = vmatprep.subr.bf16.mxu0 %v1293
  %1363 = vmatpush2.bf16.msra.mxu0 %v1292
  %1364 = vmatprep.subr.bf16.mxu0 %v1291
  %1365 = vmatpush2.bf16.msra.mxu0 %v1290
  %1366 = vmatprep.subr.bf16.mxu0 %v1289
  %1367 = vmatpush2.bf16.msra.mxu0 %v1288
  %1368 = vmatprep.mubr.bf16.mxu0 %v893
  %1369 = vmatmul.mubr.bf16.gmra.mxu0 %v893
  %v1370 = vpop.f32.mrf.mxu0
  %v1371 = vadd.f32 %v1158, %v1370
  %v1372 = vpop.f32.mrf.mxu0
  %v1373 = vadd.f32 %v1160, %v1372
  %v1374 = vpop.f32.mrf.mxu0
  %v1375 = vadd.f32 %v1162, %v1374
  %v1376 = vpop.f32.mrf.mxu0
  %v1377 = vadd.f32 %v1164, %v1376
  %1378 = vmatprep.mubr.bf16.mxu0 %v895
  %1379 = vmatmul.mubr.bf16.gmra.mxu0 %v894
  %v1380 = vpop.f32.mrf.mxu0
  %v1381 = vadd.f32 %v1168, %v1380
  %v1382 = vpop.f32.mrf.mxu0
  %v1383 = vadd.f32 %v1170, %v1382
  %v1384 = vpop.f32.mrf.mxu0
  %v1385 = vadd.f32 %v1172, %v1384
  %v1386 = vpop.f32.mrf.mxu0
  %v1387 = vadd.f32 %v1174, %v1386
  %1388 = vdwg.mxu0
  %s1389 = scalar_lea.vmem %s4, 512
  %v1390 = vld [vmem:[%s1389] sm:$0xff]
  %v1391 = vld [vmem:[%s1389 + $0x8] sm:$0xff]
  %v1392 = vld [vmem:[%s1389 + $0x10] sm:$0xff]
  %v1393 = vld [vmem:[%s1389 + $0x18] sm:$0xff]
  %v1394 = vld [vmem:[%s1389 + $0x20] sm:$0xff]
  %v1395 = vld [vmem:[%s1389 + $0x28] sm:$0xff]
  %v1396 = vld [vmem:[%s1389 + $0x30] sm:$0xff]
  %v1397 = vld [vmem:[%s1389 + $0x38] sm:$0xff]
  %v1398 = vld [vmem:[%s1389 + $0x40] sm:$0xff]
  %v1399 = vld [vmem:[%s1389 + $0x48] sm:$0xff]
  %v1400 = vld [vmem:[%s1389 + $0x50] sm:$0xff]
  %v1401 = vld [vmem:[%s1389 + $0x58] sm:$0xff]
  %v1402 = vld [vmem:[%s1389 + $0x60] sm:$0xff]
  %v1403 = vld [vmem:[%s1389 + $0x68] sm:$0xff]
  %v1404 = vld [vmem:[%s1389 + $0x70] sm:$0xff]
  %v1405 = vld [vmem:[%s1389 + $0x78] sm:$0xff]
  %v1406 = vld [vmem:[%s1389 + $0x80] sm:$0xff]
  %v1407 = vld [vmem:[%s1389 + $0x88] sm:$0xff]
  %v1408 = vld [vmem:[%s1389 + $0x90] sm:$0xff]
  %v1409 = vld [vmem:[%s1389 + $0x98] sm:$0xff]
  %v1410 = vld [vmem:[%s1389 + $0xa0] sm:$0xff]
  %v1411 = vld [vmem:[%s1389 + $0xa8] sm:$0xff]
  %v1412 = vld [vmem:[%s1389 + $0xb0] sm:$0xff]
  %v1413 = vld [vmem:[%s1389 + $0xb8] sm:$0xff]
  %v1414 = vld [vmem:[%s1389 + $0xc0] sm:$0xff]
  %v1415 = vld [vmem:[%s1389 + $0xc8] sm:$0xff]
  %v1416 = vld [vmem:[%s1389 + $0xd0] sm:$0xff]
  %v1417 = vld [vmem:[%s1389 + $0xd8] sm:$0xff]
  %v1418 = vld [vmem:[%s1389 + $0xe0] sm:$0xff]
  %v1419 = vld [vmem:[%s1389 + $0xe8] sm:$0xff]
  %v1420 = vld [vmem:[%s1389 + $0xf0] sm:$0xff]
  %v1421 = vld [vmem:[%s1389 + $0xf8] sm:$0xff]
  %v1454 = vunpack.c.l.b16 %v1390
  %v1455 = vunpack.c.h.b16 %v1390
  %v1456 = vunpack.c.l.b16 %v1391
  %v1457 = vunpack.c.h.b16 %v1391
  %v1458 = vunpack.c.l.b16 %v1392
  %v1459 = vunpack.c.h.b16 %v1392
  %v1460 = vunpack.c.l.b16 %v1393
  %v1461 = vunpack.c.h.b16 %v1393
  %v1462 = vunpack.c.l.b16 %v1394
  %v1463 = vunpack.c.h.b16 %v1394
  %v1464 = vunpack.c.l.b16 %v1395
  %v1465 = vunpack.c.h.b16 %v1395
  %v1466 = vunpack.c.l.b16 %v1396
  %v1467 = vunpack.c.h.b16 %v1396
  %v1468 = vunpack.c.l.b16 %v1397
  %v1469 = vunpack.c.h.b16 %v1397
  %v1470 = vunpack.c.l.b16 %v1398
  %v1471 = vunpack.c.h.b16 %v1398
  %v1472 = vunpack.c.l.b16 %v1399
  %v1473 = vunpack.c.h.b16 %v1399
  %v1474 = vunpack.c.l.b16 %v1400
  %v1475 = vunpack.c.h.b16 %v1400
  %v1476 = vunpack.c.l.b16 %v1401
  %v1477 = vunpack.c.h.b16 %v1401
  %v1478 = vunpack.c.l.b16 %v1402
  %v1479 = vunpack.c.h.b16 %v1402
  %v1480 = vunpack.c.l.b16 %v1403
  %v1481 = vunpack.c.h.b16 %v1403
  %v1482 = vunpack.c.l.b16 %v1404
  %v1483 = vunpack.c.h.b16 %v1404
  %v1484 = vunpack.c.l.b16 %v1405
  %v1485 = vunpack.c.h.b16 %v1405
  %v1486 = vunpack.c.l.b16 %v1406
  %v1487 = vunpack.c.h.b16 %v1406
  %v1488 = vunpack.c.l.b16 %v1407
  %v1489 = vunpack.c.h.b16 %v1407
  %v1490 = vunpack.c.l.b16 %v1408
  %v1491 = vunpack.c.h.b16 %v1408
  %v1492 = vunpack.c.l.b16 %v1409
  %v1493 = vunpack.c.h.b16 %v1409
  %v1494 = vunpack.c.l.b16 %v1410
  %v1495 = vunpack.c.h.b16 %v1410
  %v1496 = vunpack.c.l.b16 %v1411
  %v1497 = vunpack.c.h.b16 %v1411
  %v1498 = vunpack.c.l.b16 %v1412
  %v1499 = vunpack.c.h.b16 %v1412
  %v1500 = vunpack.c.l.b16 %v1413
  %v1501 = vunpack.c.h.b16 %v1413
  %v1502 = vunpack.c.l.b16 %v1414
  %v1503 = vunpack.c.h.b16 %v1414
  %v1504 = vunpack.c.l.b16 %v1415
  %v1505 = vunpack.c.h.b16 %v1415
  %v1506 = vunpack.c.l.b16 %v1416
  %v1507 = vunpack.c.h.b16 %v1416
  %v1508 = vunpack.c.l.b16 %v1417
  %v1509 = vunpack.c.h.b16 %v1417
  %v1510 = vunpack.c.l.b16 %v1418
  %v1511 = vunpack.c.h.b16 %v1418
  %v1512 = vunpack.c.l.b16 %v1419
  %v1513 = vunpack.c.h.b16 %v1419
  %v1514 = vunpack.c.l.b16 %v1420
  %v1515 = vunpack.c.h.b16 %v1420
  %v1516 = vunpack.c.l.b16 %v1421
  %v1517 = vunpack.c.h.b16 %v1421
  %v1518 = vpack.c.b16 %v1456, %v1454
  %v1519 = vpack.c.b16 %v1457, %v1455
  %v1520 = vpack.c.b16 %v1460, %v1458
  %v1521 = vpack.c.b16 %v1461, %v1459
  %v1522 = vpack.c.b16 %v1464, %v1462
  %v1523 = vpack.c.b16 %v1465, %v1463
  %v1524 = vpack.c.b16 %v1468, %v1466
  %v1525 = vpack.c.b16 %v1469, %v1467
  %v1526 = vpack.c.b16 %v1472, %v1470
  %v1527 = vpack.c.b16 %v1473, %v1471
  %v1528 = vpack.c.b16 %v1476, %v1474
  %v1529 = vpack.c.b16 %v1477, %v1475
  %v1530 = vpack.c.b16 %v1480, %v1478
  %v1531 = vpack.c.b16 %v1481, %v1479
  %v1532 = vpack.c.b16 %v1484, %v1482
  %v1533 = vpack.c.b16 %v1485, %v1483
  %v1534 = vpack.c.b16 %v1488, %v1486
  %v1535 = vpack.c.b16 %v1489, %v1487
  %v1536 = vpack.c.b16 %v1492, %v1490
  %v1537 = vpack.c.b16 %v1493, %v1491
  %v1538 = vpack.c.b16 %v1496, %v1494
  %v1539 = vpack.c.b16 %v1497, %v1495
  %v1540 = vpack.c.b16 %v1500, %v1498
  %v1541 = vpack.c.b16 %v1501, %v1499
  %v1542 = vpack.c.b16 %v1504, %v1502
  %v1543 = vpack.c.b16 %v1505, %v1503
  %v1544 = vpack.c.b16 %v1508, %v1506
  %v1545 = vpack.c.b16 %v1509, %v1507
  %v1546 = vpack.c.b16 %v1512, %v1510
  %v1547 = vpack.c.b16 %v1513, %v1511
  %v1548 = vpack.c.b16 %v1516, %v1514
  %v1549 = vpack.c.b16 %v1517, %v1515
  %1582 = vmatprep.subr.bf16.mxu0 %v1533
  %1583 = vmatpush1.bf16.msra.mxu0 %v1532
  %1584 = vmatprep.subr.bf16.mxu0 %v1531
  %1585 = vmatpush1.bf16.msra.mxu0 %v1530
  %1586 = vmatprep.subr.bf16.mxu0 %v1529
  %1587 = vmatpush1.bf16.msra.mxu0 %v1528
  %1588 = vmatprep.subr.bf16.mxu0 %v1527
  %1589 = vmatpush1.bf16.msra.mxu0 %v1526
  %1590 = vmatprep.subr.bf16.mxu0 %v1525
  %1591 = vmatpush1.bf16.msra.mxu0 %v1524
  %1592 = vmatprep.subr.bf16.mxu0 %v1523
  %1593 = vmatpush1.bf16.msra.mxu0 %v1522
  %1594 = vmatprep.subr.bf16.mxu0 %v1521
  %1595 = vmatpush1.bf16.msra.mxu0 %v1520
  %1596 = vmatprep.subr.bf16.mxu0 %v1519
  %1597 = vmatpush1.bf16.msra.mxu0 %v1518
  %1598 = vmatprep.subr.bf16.mxu0 %v1549
  %1599 = vmatpush2.bf16.msra.mxu0 %v1548
  %1600 = vmatprep.subr.bf16.mxu0 %v1547
  %1601 = vmatpush2.bf16.msra.mxu0 %v1546
  %1602 = vmatprep.subr.bf16.mxu0 %v1545
  %1603 = vmatpush2.bf16.msra.mxu0 %v1544
  %1604 = vmatprep.subr.bf16.mxu0 %v1543
  %1605 = vmatpush2.bf16.msra.mxu0 %v1542
  %1606 = vmatprep.subr.bf16.mxu0 %v1541
  %1607 = vmatpush2.bf16.msra.mxu0 %v1540
  %1608 = vmatprep.subr.bf16.mxu0 %v1539
  %1609 = vmatpush2.bf16.msra.mxu0 %v1538
  %1610 = vmatprep.subr.bf16.mxu0 %v1537
  %1611 = vmatpush2.bf16.msra.mxu0 %v1536
  %1612 = vmatprep.subr.bf16.mxu0 %v1535
  %1613 = vmatpush2.bf16.msra.mxu0 %v1534
  %1614 = vmatprep.mubr.bf16.mxu0 %v929
  %1615 = vmatmul.mubr.bf16.gmra.mxu0 %v928
  %v1616 = vpop.f32.mrf.mxu0
  %v1617 = vadd.f32 0.0, %v1616
  %v1618 = vpop.f32.mrf.mxu0
  %v1619 = vadd.f32 0.0, %v1618
  %v1620 = vpop.f32.mrf.mxu0
  %v1621 = vadd.f32 0.0, %v1620
  %v1622 = vpop.f32.mrf.mxu0
  %v1623 = vadd.f32 0.0, %v1622
  %1624 = vmatprep.mubr.bf16.mxu0 %v893
  %1625 = vmatmul.mubr.bf16.gmra.mxu0 %v893
  %v1626 = vpop.f32.mrf.mxu0
  %v1627 = vadd.f32 0.0, %v1626
  %v1628 = vpop.f32.mrf.mxu0
  %v1629 = vadd.f32 0.0, %v1628
  %v1630 = vpop.f32.mrf.mxu0
  %v1631 = vadd.f32 0.0, %v1630
  %v1632 = vpop.f32.mrf.mxu0
  %v1633 = vadd.f32 0.0, %v1632
  %1634 = vdwg.mxu0
  %v1635 = vadd.f32 %v1371, %v1617
  %v1636 = vadd.f32 %v1373, %v1619
  %v1637 = vadd.f32 %v1375, %v1621
  %v1638 = vadd.f32 %v1377, %v1623
  %v1639 = vadd.f32 %v1381, %v1627
  %v1640 = vadd.f32 %v1383, %v1629
  %v1641 = vadd.f32 %v1385, %v1631
  %v1642 = vadd.f32 %v1387, %v1633
  %v1643 = vld [vmem:[%s5] sm:$0x3]
  %v1645 = vlaneseq
  %v1646 = vshrl.u32 %v1645, 7
  %v1647 = vsub.s32 0, %v1646
  %v1648 = vrot.slane %v1643, %v1647
  %v1649 = vlaneseq
  %v1650 = vshrl.u32 %v1649, 7
  %v1651 = vsub.s32 1, %v1650
  %v1652 = vrot.slane %v1643, %v1651
  %v1655 = vmul.f32 %v1635, %v1648
  %v1656 = vmul.f32 %v1636, %v1652
  %v1657 = vmul.f32 %v1637, %v1648
  %v1658 = vmul.f32 %v1638, %v1652
  %v1659 = vmul.f32 %v1639, %v1648
  %v1660 = vmul.f32 %v1640, %v1652
  %v1661 = vmul.f32 %v1641, %v1648
  %v1662 = vmul.f32 %v1642, %v1652
  %v1663 = vld [vmem:[%s6] sm:$0x3]
  %v1665 = vlaneseq
  %v1666 = vshrl.u32 %v1665, 7
  %v1667 = vsub.s32 0, %v1666
  %v1668 = vrot.slane %v1663, %v1667
  %v1669 = vlaneseq
  %v1670 = vshrl.u32 %v1669, 7
  %v1671 = vsub.s32 1, %v1670
  %v1672 = vrot.slane %v1663, %v1671
  %v1675 = vadd.f32 %v1655, %v1668
  %v1676 = vadd.f32 %v1656, %v1672
  %v1677 = vadd.f32 %v1657, %v1668
  %v1678 = vadd.f32 %v1658, %v1672
  %v1679 = vadd.f32 %v1659, %v1668
  %v1680 = vadd.f32 %v1660, %v1672
  %v1681 = vadd.f32 %v1661, %v1668
  %v1682 = vadd.f32 %v1662, %v1672
  %v1683 = vunpack.c.l.bf16 %v27
  %v1684 = vunpack.c.h.bf16 %v27
  %v1685 = vunpack.c.l.bf16 %v28
  %v1686 = vunpack.c.h.bf16 %v28
  %v1687 = vunpack.c.l.bf16 %v29
  %v1688 = vunpack.c.h.bf16 %v29
  %v1689 = vunpack.c.l.bf16 %v30
  %v1690 = vunpack.c.h.bf16 %v30
  %v1691 = vadd.f32 %v1675, %v1683
  %v1692 = vadd.f32 %v1676, %v1684
  %v1693 = vadd.f32 %v1677, %v1685
  %v1694 = vadd.f32 %v1678, %v1686
  %v1695 = vadd.f32 %v1679, %v1687
  %v1696 = vadd.f32 %v1680, %v1688
  %v1697 = vadd.f32 %v1681, %v1689
  %v1698 = vadd.f32 %v1682, %v1690
  %v1699 = vmax.f32 %v1691, 0.0
  %v1700 = vmax.f32 %v1692, 0.0
  %v1701 = vmax.f32 %v1693, 0.0
  %v1702 = vmax.f32 %v1694, 0.0
  %v1703 = vmax.f32 %v1695, 0.0
  %v1704 = vmax.f32 %v1696, 0.0
  %v1705 = vmax.f32 %v1697, 0.0
  %v1706 = vmax.f32 %v1698, 0.0
  %v1707 = vpack.c.bf16 %v1701, %v1699
  %v1708 = vpack.c.bf16 %v1702, %v1700
  %v1709 = vpack.c.bf16 %v1705, %v1703
  %v1710 = vpack.c.bf16 %v1706, %v1704
  %v1715 = vunpack.c.l.b16 %v1707
  %v1716 = vunpack.c.l.b16 %v1708
  %v1717 = vunpack.c.h.b16 %v1707
  %v1718 = vunpack.c.h.b16 %v1708
  %v1719 = vunpack.c.l.b16 %v1709
  %v1720 = vunpack.c.l.b16 %v1710
  %v1721 = vunpack.c.h.b16 %v1709
  %v1722 = vunpack.c.h.b16 %v1710
  %v1723 = vpack.c.b16 %v1716, %v1715
  %v1724 = vpack.c.b16 %v1718, %v1717
  %v1725 = vpack.c.b16 %v1720, %v1719
  %v1726 = vpack.c.b16 %v1722, %v1721
  %1731 = vst [vmem:[%s7] sm:$0xff] %v1723
  %1732 = vst [vmem:[%s7 + $0x8] sm:$0xff] %v1724
  %1733 = vst [vmem:[%s7 + $0x10] sm:$0xff] %v1725
  %1734 = vst [vmem:[%s7 + $0x18] sm:$0xff] %v1726
  // Predicated region
  $region30: #{resnet1d_forward.16} parent=0 // pred_check
    _
  $region31: #{resnet1d_forward.16} parent=0 // pred_check_branch
    %1736 = sbr.rel (0) target = $region33
  $region32: #{resnet1d_forward.16} parent=0 // pred_region
    _
  $region33: #{resnet1d_forward.16} parent=0 // pred_fallthru
    _
  // Predicated region
  $region34: #{resnet1d_forward.16} parent=0 // pred_check
    _
  $region35: #{resnet1d_forward.16} parent=0 // pred_check_branch
    %1738 = sbr.rel (0) target = $region37
  $region36: #{resnet1d_forward.16} parent=0 // pred_region
    _
  $region37: #{resnet1d_forward.16} parent=0 // pred_fallthru
    _

// kernel: resnet1d_forward.18
$region0: #{resnet1d_forward.18}
  #allocation0 [shape = 'u32[]', space=smem, size = 0x4, offset = 0x4, fixed_abs, tag = 'smem constant byte address 0x4 - core index']
  #allocation1 [shape = 'u32[144,128]{1,0:T(1,128)}', space=vmem, size = 0x12000, scoped, tag = 'internal scratch']
  %s0 = inlined_call_operand.vmem [shape: bf16[3,16,128], index: 0, kind: input, shape index: {}]
  %s1 = inlined_call_operand.vmem [shape: bf16[3,128,128], index: 1, kind: input, shape index: {}]
  %s2 = inlined_call_operand.vmem [shape: f32[1,128], index: 2, kind: input, shape index: {}, may-alias: {2,5}]
  %s3 = inlined_call_operand.vmem [shape: f32[1,128], index: 3, kind: input, shape index: {}, may-alias: {3,6}]
  %s4 = inlined_call_operand.vmem [shape: bf16[3,128,128], index: 4, kind: input, shape index: {}]
  %s5 = inlined_call_operand.vmem [shape: f32[1,128], index: 5, kind: input, shape index: {}, may-alias: {2,5}]
  %s6 = inlined_call_operand.vmem [shape: f32[1,128], index: 6, kind: input, shape index: {}, may-alias: {3,6}]
  %s7 = inlined_call_operand.vmem [shape: bf16[1,16,128], index: 7, kind: output, shape index: {}]
  %s8 = sld [smem:[#allocation0]]
  $region38: #{resnet1d_forward.18} parent=0
    _
  %s10 = ssub.s32 1, %s8
  %s11 = scalar_select 0, %s10, %s8
  // Predicated region
  $region2: #{resnet1d_forward.18} parent=0 // pred_check
    _
  $region3: #{resnet1d_forward.18} parent=0 // pred_check_branch
    %13 = sbr.rel (0) target = $region5
  $region4: #{resnet1d_forward.18} parent=0 // pred_region
    _
  $region5: #{resnet1d_forward.18} parent=0 // pred_fallthru
    _
  // Predicated region
  $region6: #{resnet1d_forward.18} parent=0 // pred_check
    _
  $region7: #{resnet1d_forward.18} parent=0 // pred_check_branch
    %15 = sbr.rel (0) target = $region9
  $region8: #{resnet1d_forward.18} parent=0 // pred_region
    _
  $region9: #{resnet1d_forward.18} parent=0 // pred_fallthru
    _
  // Predicated region
  $region10: #{resnet1d_forward.18} parent=0 // pred_check
    _
  $region11: #{resnet1d_forward.18} parent=0 // pred_check_branch
    %17 = sbr.rel (0) target = $region13
  $region12: #{resnet1d_forward.18} parent=0 // pred_region
    _
  $region13: #{resnet1d_forward.18} parent=0 // pred_fallthru
    _
  // Predicated region
  $region14: #{resnet1d_forward.18} parent=0 // pred_check
    _
  $region15: #{resnet1d_forward.18} parent=0 // pred_check_branch
    %19 = sbr.rel (0) target = $region17
  $region16: #{resnet1d_forward.18} parent=0 // pred_region
    _
  $region17: #{resnet1d_forward.18} parent=0 // pred_fallthru
    _
  // Predicated region
  $region18: #{resnet1d_forward.18} parent=0 // pred_check
    _
  $region19: #{resnet1d_forward.18} parent=0 // pred_check_branch
    %21 = sbr.rel (0) target = $region21
  $region20: #{resnet1d_forward.18} parent=0 // pred_region
    _
  $region21: #{resnet1d_forward.18} parent=0 // pred_fallthru
    _
  // Predicated region
  $region22: #{resnet1d_forward.18} parent=0 // pred_check
    _
  $region23: #{resnet1d_forward.18} parent=0 // pred_check_branch
    %23 = sbr.rel (0) target = $region25
  $region24: #{resnet1d_forward.18} parent=0 // pred_region
    _
  $region25: #{resnet1d_forward.18} parent=0 // pred_fallthru
    _
  // Predicated region
  $region26: #{resnet1d_forward.18} parent=0 // pred_check
    _
  $region27: #{resnet1d_forward.18} parent=0 // pred_check_branch
    %25 = sbr.rel (0) target = $region29
  $region28: #{resnet1d_forward.18} parent=0 // pred_region
    _
  $region29: #{resnet1d_forward.18} parent=0 // pred_fallthru
    _
  %s27 = scalar_lea.vmem %s0, 8
  %v28 = vld [vmem:[%s27] sm:$0xf]
  %v29 = vld [vmem:[%s27 + $0x4] sm:$0xf]
  %v30 = vld [vmem:[%s0] sm:$0xf]
  %v31 = vld [vmem:[%s0 + $0x4] sm:$0xf]
  %v32 = vld [vmem:[%s1] sm:$0xf]
  %v33 = vld [vmem:[%s1 + $0x4] sm:$0xf]
  %v34 = vld [vmem:[%s1 + $0x8] sm:$0xf]
  %v35 = vld [vmem:[%s1 + $0xc] sm:$0xf]
  %v36 = vld [vmem:[%s1 + $0x10] sm:$0xf]
  %v37 = vld [vmem:[%s1 + $0x14] sm:$0xf]
  %v38 = vld [vmem:[%s1 + $0x18] sm:$0xf]
  %v39 = vld [vmem:[%s1 + $0x1c] sm:$0xf]
  %v40 = vld [vmem:[%s1 + $0x20] sm:$0xf]
  %v41 = vld [vmem:[%s1 + $0x24] sm:$0xf]
  %v42 = vld [vmem:[%s1 + $0x28] sm:$0xf]
  %v43 = vld [vmem:[%s1 + $0x2c] sm:$0xf]
  %v44 = vld [vmem:[%s1 + $0x30] sm:$0xf]
  %v45 = vld [vmem:[%s1 + $0x34] sm:$0xf]
  %v46 = vld [vmem:[%s1 + $0x38] sm:$0xf]
  %v47 = vld [vmem:[%s1 + $0x3c] sm:$0xf]
  %s48 = scalar_lea.vmem %s1, 64
  %v49 = vld [vmem:[%s48] sm:$0xf]
  %v50 = vld [vmem:[%s48 + $0x4] sm:$0xf]
  %v51 = vld [vmem:[%s48 + $0x8] sm:$0xf]
  %v52 = vld [vmem:[%s48 + $0xc] sm:$0xf]
  %v53 = vld [vmem:[%s48 + $0x10] sm:$0xf]
  %v54 = vld [vmem:[%s48 + $0x14] sm:$0xf]
  %v55 = vld [vmem:[%s48 + $0x18] sm:$0xf]
  %v56 = vld [vmem:[%s48 + $0x1c] sm:$0xf]
  %v57 = vld [vmem:[%s48 + $0x20] sm:$0xf]
  %v58 = vld [vmem:[%s48 + $0x24] sm:$0xf]
  %v59 = vld [vmem:[%s48 + $0x28] sm:$0xf]
  %v60 = vld [vmem:[%s48 + $0x2c] sm:$0xf]
  %v61 = vld [vmem:[%s48 + $0x30] sm:$0xf]
  %v62 = vld [vmem:[%s48 + $0x34] sm:$0xf]
  %v63 = vld [vmem:[%s48 + $0x38] sm:$0xf]
  %v64 = vld [vmem:[%s48 + $0x3c] sm:$0xf]
  %v67 = vunpack.c.l.b16 %v28
  %v68 = vunpack.c.l.b16 %v29
  %v69 = vpack.c.b16 %v68, %v67
  %v87 = vunpack.c.l.b16 %v49
  %v88 = vunpack.c.l.b16 %v50
  %v89 = vunpack.c.l.b16 %v51
  %v90 = vunpack.c.l.b16 %v52
  %v91 = vunpack.c.l.b16 %v53
  %v92 = vunpack.c.l.b16 %v54
  %v93 = vunpack.c.l.b16 %v55
  %v94 = vunpack.c.l.b16 %v56
  %v95 = vunpack.c.l.b16 %v57
  %v96 = vunpack.c.l.b16 %v58
  %v97 = vunpack.c.l.b16 %v59
  %v98 = vunpack.c.l.b16 %v60
  %v99 = vunpack.c.l.b16 %v61
  %v100 = vunpack.c.l.b16 %v62
  %v101 = vunpack.c.l.b16 %v63
  %v102 = vunpack.c.l.b16 %v64
  %v103 = vpack.c.b16 %v88, %v87
  %v104 = vpack.c.b16 %v90, %v89
  %v105 = vpack.c.b16 %v92, %v91
  %v106 = vpack.c.b16 %v94, %v93
  %v107 = vpack.c.b16 %v96, %v95
  %v108 = vpack.c.b16 %v98, %v97
  %v109 = vpack.c.b16 %v100, %v99
  %v110 = vpack.c.b16 %v102, %v101
  %119 = vmatprep.subr.bf16.mxu0 0
  %120 = vmatpush1.bf16.msra.mxu0 %v110
  %121 = vmatprep.subr.bf16.mxu0 0
  %122 = vmatpush1.bf16.msra.mxu0 %v109
  %123 = vmatprep.subr.bf16.mxu0 0
  %124 = vmatpush1.bf16.msra.mxu0 %v108
  %125 = vmatprep.subr.bf16.mxu0 0
  %126 = vmatpush1.bf16.msra.mxu0 %v107
  %127 = vmatprep.subr.bf16.mxu0 0
  %128 = vmatpush1.bf16.msra.mxu0 %v106
  %129 = vmatprep.subr.bf16.mxu0 0
  %130 = vmatpush1.bf16.msra.mxu0 %v105
  %131 = vmatprep.subr.bf16.mxu0 0
  %132 = vmatpush1.bf16.msra.mxu0 %v104
  %133 = vmatprep.subr.bf16.mxu0 0
  %134 = vmatpush1.bf16.msra.mxu0 %v103
  %135 = vmatprep.subr.bf16.mxu0 0
  %136 = vmatpush2.bf16.msra.mxu0 0
  %137 = vmatprep.subr.bf16.mxu0 0
  %138 = vmatpush2.bf16.msra.mxu0 0
  %139 = vmatprep.subr.bf16.mxu0 0
  %140 = vmatpush2.bf16.msra.mxu0 0
  %141 = vmatprep.subr.bf16.mxu0 0
  %142 = vmatpush2.bf16.msra.mxu0 0
  %143 = vmatprep.subr.bf16.mxu0 0
  %144 = vmatpush2.bf16.msra.mxu0 0
  %145 = vmatprep.subr.bf16.mxu0 0
  %146 = vmatpush2.bf16.msra.mxu0 0
  %147 = vmatprep.subr.bf16.mxu0 0
  %148 = vmatpush2.bf16.msra.mxu0 0
  %149 = vmatprep.subr.bf16.mxu0 0
  %150 = vmatpush2.bf16.msra.mxu0 0
  %151 = vmatprep.mubr.bf16.mxu0 0
  %152 = vmatmul.mubr.bf16.gmra.mxu0 %v69
  %v153 = vpop.f32.mrf.mxu0
  %v154 = vadd.f32 0.0, %v153
  %v155 = vpop.f32.mrf.mxu0
  %v156 = vpop.f32.mrf.mxu0
  %v157 = vadd.f32 0.0, %v156
  %v158 = vpop.f32.mrf.mxu0
  %159 = vdwg.mxu0
  %v162 = vunpack.c.l.b16 %v30
  %v163 = vunpack.c.l.b16 %v31
  %v164 = vpack.c.b16 %v163, %v162
  %v182 = vunpack.c.l.b16 %v32
  %v183 = vunpack.c.l.b16 %v33
  %v184 = vunpack.c.l.b16 %v34
  %v185 = vunpack.c.l.b16 %v35
  %v186 = vunpack.c.l.b16 %v36
  %v187 = vunpack.c.l.b16 %v37
  %v188 = vunpack.c.l.b16 %v38
  %v189 = vunpack.c.l.b16 %v39
  %v190 = vunpack.c.l.b16 %v40
  %v191 = vunpack.c.l.b16 %v41
  %v192 = vunpack.c.l.b16 %v42
  %v193 = vunpack.c.l.b16 %v43
  %v194 = vunpack.c.l.b16 %v44
  %v195 = vunpack.c.l.b16 %v45
  %v196 = vunpack.c.l.b16 %v46
  %v197 = vunpack.c.l.b16 %v47
  %v198 = vpack.c.b16 %v183, %v182
  %v199 = vpack.c.b16 %v185, %v184
  %v200 = vpack.c.b16 %v187, %v186
  %v201 = vpack.c.b16 %v189, %v188
  %v202 = vpack.c.b16 %v191, %v190
  %v203 = vpack.c.b16 %v193, %v192
  %v204 = vpack.c.b16 %v195, %v194
  %v205 = vpack.c.b16 %v197, %v196
  %214 = vmatprep.subr.bf16.mxu0 0
  %215 = vmatpush1.bf16.msra.mxu0 %v205
  %216 = vmatprep.subr.bf16.mxu0 0
  %217 = vmatpush1.bf16.msra.mxu0 %v204
  %218 = vmatprep.subr.bf16.mxu0 0
  %219 = vmatpush1.bf16.msra.mxu0 %v203
  %220 = vmatprep.subr.bf16.mxu0 0
  %221 = vmatpush1.bf16.msra.mxu0 %v202
  %222 = vmatprep.subr.bf16.mxu0 0
  %223 = vmatpush1.bf16.msra.mxu0 %v201
  %224 = vmatprep.subr.bf16.mxu0 0
  %225 = vmatpush1.bf16.msra.mxu0 %v200
  %226 = vmatprep.subr.bf16.mxu0 0
  %227 = vmatpush1.bf16.msra.mxu0 %v199
  %228 = vmatprep.subr.bf16.mxu0 0
  %229 = vmatpush1.bf16.msra.mxu0 %v198
  %230 = vmatprep.subr.bf16.mxu0 0
  %231 = vmatpush2.bf16.msra.mxu0 0
  %232 = vmatprep.subr.bf16.mxu0 0
  %233 = vmatpush2.bf16.msra.mxu0 0
  %234 = vmatprep.subr.bf16.mxu0 0
  %235 = vmatpush2.bf16.msra.mxu0 0
  %236 = vmatprep.subr.bf16.mxu0 0
  %237 = vmatpush2.bf16.msra.mxu0 0
  %238 = vmatprep.subr.bf16.mxu0 0
  %239 = vmatpush2.bf16.msra.mxu0 0
  %240 = vmatprep.subr.bf16.mxu0 0
  %241 = vmatpush2.bf16.msra.mxu0 0
  %242 = vmatprep.subr.bf16.mxu0 0
  %243 = vmatpush2.bf16.msra.mxu0 0
  %244 = vmatprep.subr.bf16.mxu0 0
  %245 = vmatpush2.bf16.msra.mxu0 0
  %246 = vmatprep.mubr.bf16.mxu0 0
  %247 = vmatmul.mubr.bf16.gmra.mxu0 %v164
  %v248 = vpop.f32.mrf.mxu0
  %v249 = vadd.f32 %v154, %v248
  %v250 = vpop.f32.mrf.mxu0
  %v251 = vpop.f32.mrf.mxu0
  %v252 = vadd.f32 %v157, %v251
  %v253 = vpop.f32.mrf.mxu0
  %254 = vdwg.mxu0
  %s255 = scalar_lea.vmem %s0, 16
  %v256 = vld [vmem:[%s255] sm:$0xf]
  %v257 = vld [vmem:[%s255 + $0x4] sm:$0xf]
  %s258 = scalar_lea.vmem %s1, 128
  %v259 = vld [vmem:[%s258] sm:$0xf]
  %v260 = vld [vmem:[%s258 + $0x4] sm:$0xf]
  %v261 = vld [vmem:[%s258 + $0x8] sm:$0xf]
  %v262 = vld [vmem:[%s258 + $0xc] sm:$0xf]
  %v263 = vld [vmem:[%s258 + $0x10] sm:$0xf]
  %v264 = vld [vmem:[%s258 + $0x14] sm:$0xf]
  %v265 = vld [vmem:[%s258 + $0x18] sm:$0xf]
  %v266 = vld [vmem:[%s258 + $0x1c] sm:$0xf]
  %v267 = vld [vmem:[%s258 + $0x20] sm:$0xf]
  %v268 = vld [vmem:[%s258 + $0x24] sm:$0xf]
  %v269 = vld [vmem:[%s258 + $0x28] sm:$0xf]
  %v270 = vld [vmem:[%s258 + $0x2c] sm:$0xf]
  %v271 = vld [vmem:[%s258 + $0x30] sm:$0xf]
  %v272 = vld [vmem:[%s258 + $0x34] sm:$0xf]
  %v273 = vld [vmem:[%s258 + $0x38] sm:$0xf]
  %v274 = vld [vmem:[%s258 + $0x3c] sm:$0xf]
  %v277 = vunpack.c.l.b16 %v256
  %v278 = vunpack.c.l.b16 %v257
  %v279 = vpack.c.b16 %v278, %v277
  %v297 = vunpack.c.l.b16 %v259
  %v298 = vunpack.c.l.b16 %v260
  %v299 = vunpack.c.l.b16 %v261
  %v300 = vunpack.c.l.b16 %v262
  %v301 = vunpack.c.l.b16 %v263
  %v302 = vunpack.c.l.b16 %v264
  %v303 = vunpack.c.l.b16 %v265
  %v304 = vunpack.c.l.b16 %v266
  %v305 = vunpack.c.l.b16 %v267
  %v306 = vunpack.c.l.b16 %v268
  %v307 = vunpack.c.l.b16 %v269
  %v308 = vunpack.c.l.b16 %v270
  %v309 = vunpack.c.l.b16 %v271
  %v310 = vunpack.c.l.b16 %v272
  %v311 = vunpack.c.l.b16 %v273
  %v312 = vunpack.c.l.b16 %v274
  %v313 = vpack.c.b16 %v298, %v297
  %v314 = vpack.c.b16 %v300, %v299
  %v315 = vpack.c.b16 %v302, %v301
  %v316 = vpack.c.b16 %v304, %v303
  %v317 = vpack.c.b16 %v306, %v305
  %v318 = vpack.c.b16 %v308, %v307
  %v319 = vpack.c.b16 %v310, %v309
  %v320 = vpack.c.b16 %v312, %v311
  %329 = vmatprep.subr.bf16.mxu0 0
  %330 = vmatpush1.bf16.msra.mxu0 %v320
  %331 = vmatprep.subr.bf16.mxu0 0
  %332 = vmatpush1.bf16.msra.mxu0 %v319
  %333 = vmatprep.subr.bf16.mxu0 0
  %334 = vmatpush1.bf16.msra.mxu0 %v318
  %335 = vmatprep.subr.bf16.mxu0 0
  %336 = vmatpush1.bf16.msra.mxu0 %v317
  %337 = vmatprep.subr.bf16.mxu0 0
  %338 = vmatpush1.bf16.msra.mxu0 %v316
  %339 = vmatprep.subr.bf16.mxu0 0
  %340 = vmatpush1.bf16.msra.mxu0 %v315
  %341 = vmatprep.subr.bf16.mxu0 0
  %342 = vmatpush1.bf16.msra.mxu0 %v314
  %343 = vmatprep.subr.bf16.mxu0 0
  %344 = vmatpush1.bf16.msra.mxu0 %v313
  %345 = vmatprep.subr.bf16.mxu0 0
  %346 = vmatpush2.bf16.msra.mxu0 0
  %347 = vmatprep.subr.bf16.mxu0 0
  %348 = vmatpush2.bf16.msra.mxu0 0
  %349 = vmatprep.subr.bf16.mxu0 0
  %350 = vmatpush2.bf16.msra.mxu0 0
  %351 = vmatprep.subr.bf16.mxu0 0
  %352 = vmatpush2.bf16.msra.mxu0 0
  %353 = vmatprep.subr.bf16.mxu0 0
  %354 = vmatpush2.bf16.msra.mxu0 0
  %355 = vmatprep.subr.bf16.mxu0 0
  %356 = vmatpush2.bf16.msra.mxu0 0
  %357 = vmatprep.subr.bf16.mxu0 0
  %358 = vmatpush2.bf16.msra.mxu0 0
  %359 = vmatprep.subr.bf16.mxu0 0
  %360 = vmatpush2.bf16.msra.mxu0 0
  %361 = vmatprep.mubr.bf16.mxu0 0
  %362 = vmatmul.mubr.bf16.gmra.mxu0 %v279
  %v363 = vpop.f32.mrf.mxu0
  %v364 = vadd.f32 0.0, %v363
  %v365 = vpop.f32.mrf.mxu0
  %v366 = vpop.f32.mrf.mxu0
  %v367 = vadd.f32 0.0, %v366
  %v368 = vpop.f32.mrf.mxu0
  %369 = vdwg.mxu0
  %v370 = vadd.f32 %v249, %v364
  %v371 = vadd.f32 %v252, %v367
  %v372 = vld [vmem:[%s2] sm:$0x1]
  %v374 = vlaneseq
  %v375 = vshrl.u32 %v374, 7
  %v376 = vsub.s32 0, %v375
  %v377 = vrot.slane %v372, %v376
  %v379 = vmul.f32 %v370, %v377
  %v380 = vmul.f32 %v371, %v377
  %v381 = vld [vmem:[%s3] sm:$0x1]
  %v383 = vlaneseq
  %v384 = vshrl.u32 %v383, 7
  %v385 = vsub.s32 0, %v384
  %v386 = vrot.slane %v381, %v385
  %v388 = vadd.f32 %v379, %v386
  %v389 = vadd.f32 %v380, %v386
  %v390 = vmax.f32 %v388, 0.0
  %v391 = vmax.f32 %v389, 0.0
  %v392 = vpack.c.bf16 0.0, 0.0
  %v393 = vld [vmem:[%s4] sm:$0xf]
  %v394 = vld [vmem:[%s4 + $0x4] sm:$0xf]
  %v395 = vld [vmem:[%s4 + $0x8] sm:$0xf]
  %v396 = vld [vmem:[%s4 + $0xc] sm:$0xf]
  %v397 = vld [vmem:[%s4 + $0x10] sm:$0xf]
  %v398 = vld [vmem:[%s4 + $0x14] sm:$0xf]
  %v399 = vld [vmem:[%s4 + $0x18] sm:$0xf]
  %v400 = vld [vmem:[%s4 + $0x1c] sm:$0xf]
  %v401 = vld [vmem:[%s4 + $0x20] sm:$0xf]
  %v402 = vld [vmem:[%s4 + $0x24] sm:$0xf]
  %v403 = vld [vmem:[%s4 + $0x28] sm:$0xf]
  %v404 = vld [vmem:[%s4 + $0x2c] sm:$0xf]
  %v405 = vld [vmem:[%s4 + $0x30] sm:$0xf]
  %v406 = vld [vmem:[%s4 + $0x34] sm:$0xf]
  %v407 = vld [vmem:[%s4 + $0x38] sm:$0xf]
  %v408 = vld [vmem:[%s4 + $0x3c] sm:$0xf]
  %v409 = vpack.c.bf16 %v391, %v390
  %s410 = scalar_lea.vmem %s4, 64
  %v411 = vld [vmem:[%s410] sm:$0xf]
  %v412 = vld [vmem:[%s410 + $0x4] sm:$0xf]
  %v413 = vld [vmem:[%s410 + $0x8] sm:$0xf]
  %v414 = vld [vmem:[%s410 + $0xc] sm:$0xf]
  %v415 = vld [vmem:[%s410 + $0x10] sm:$0xf]
  %v416 = vld [vmem:[%s410 + $0x14] sm:$0xf]
  %v417 = vld [vmem:[%s410 + $0x18] sm:$0xf]
  %v418 = vld [vmem:[%s410 + $0x1c] sm:$0xf]
  %v419 = vld [vmem:[%s410 + $0x20] sm:$0xf]
  %v420 = vld [vmem:[%s410 + $0x24] sm:$0xf]
  %v421 = vld [vmem:[%s410 + $0x28] sm:$0xf]
  %v422 = vld [vmem:[%s410 + $0x2c] sm:$0xf]
  %v423 = vld [vmem:[%s410 + $0x30] sm:$0xf]
  %v424 = vld [vmem:[%s410 + $0x34] sm:$0xf]
  %v425 = vld [vmem:[%s410 + $0x38] sm:$0xf]
  %v426 = vld [vmem:[%s410 + $0x3c] sm:$0xf]
  %v443 = vunpack.c.l.b16 %v411
  %v444 = vunpack.c.l.b16 %v412
  %v445 = vunpack.c.l.b16 %v413
  %v446 = vunpack.c.l.b16 %v414
  %v447 = vunpack.c.l.b16 %v415
  %v448 = vunpack.c.l.b16 %v416
  %v449 = vunpack.c.l.b16 %v417
  %v450 = vunpack.c.l.b16 %v418
  %v451 = vunpack.c.l.b16 %v419
  %v452 = vunpack.c.l.b16 %v420
  %v453 = vunpack.c.l.b16 %v421
  %v454 = vunpack.c.l.b16 %v422
  %v455 = vunpack.c.l.b16 %v423
  %v456 = vunpack.c.l.b16 %v424
  %v457 = vunpack.c.l.b16 %v425
  %v458 = vunpack.c.l.b16 %v426
  %v459 = vpack.c.b16 %v444, %v443
  %v460 = vpack.c.b16 %v446, %v445
  %v461 = vpack.c.b16 %v448, %v447
  %v462 = vpack.c.b16 %v450, %v449
  %v463 = vpack.c.b16 %v452, %v451
  %v464 = vpack.c.b16 %v454, %v453
  %v465 = vpack.c.b16 %v456, %v455
  %v466 = vpack.c.b16 %v458, %v457
  %475 = vmatprep.subr.bf16.mxu0 0
  %476 = vmatpush1.bf16.msra.mxu0 %v466
  %477 = vmatprep.subr.bf16.mxu0 0
  %478 = vmatpush1.bf16.msra.mxu0 %v465
  %479 = vmatprep.subr.bf16.mxu0 0
  %480 = vmatpush1.bf16.msra.mxu0 %v464
  %481 = vmatprep.subr.bf16.mxu0 0
  %482 = vmatpush1.bf16.msra.mxu0 %v463
  %483 = vmatprep.subr.bf16.mxu0 0
  %484 = vmatpush1.bf16.msra.mxu0 %v462
  %485 = vmatprep.subr.bf16.mxu0 0
  %486 = vmatpush1.bf16.msra.mxu0 %v461
  %487 = vmatprep.subr.bf16.mxu0 0
  %488 = vmatpush1.bf16.msra.mxu0 %v460
  %489 = vmatprep.subr.bf16.mxu0 0
  %490 = vmatpush1.bf16.msra.mxu0 %v459
  %491 = vmatprep.subr.bf16.mxu0 0
  %492 = vmatpush2.bf16.msra.mxu0 0
  %493 = vmatprep.subr.bf16.mxu0 0
  %494 = vmatpush2.bf16.msra.mxu0 0
  %495 = vmatprep.subr.bf16.mxu0 0
  %496 = vmatpush2.bf16.msra.mxu0 0
  %497 = vmatprep.subr.bf16.mxu0 0
  %498 = vmatpush2.bf16.msra.mxu0 0
  %499 = vmatprep.subr.bf16.mxu0 0
  %500 = vmatpush2.bf16.msra.mxu0 0
  %501 = vmatprep.subr.bf16.mxu0 0
  %502 = vmatpush2.bf16.msra.mxu0 0
  %503 = vmatprep.subr.bf16.mxu0 0
  %504 = vmatpush2.bf16.msra.mxu0 0
  %505 = vmatprep.subr.bf16.mxu0 0
  %506 = vmatpush2.bf16.msra.mxu0 0
  %507 = vmatprep.mubr.bf16.mxu0 0
  %508 = vmatmul.mubr.bf16.gmra.mxu0 %v409
  %v509 = vpop.f32.mrf.mxu0
  %v510 = vadd.f32 0.0, %v509
  %v511 = vpop.f32.mrf.mxu0
  %v512 = vpop.f32.mrf.mxu0
  %v513 = vadd.f32 0.0, %v512
  %v514 = vpop.f32.mrf.mxu0
  %515 = vdwg.mxu0
  %v532 = vunpack.c.l.b16 %v393
  %v533 = vunpack.c.l.b16 %v394
  %v534 = vunpack.c.l.b16 %v395
  %v535 = vunpack.c.l.b16 %v396
  %v536 = vunpack.c.l.b16 %v397
  %v537 = vunpack.c.l.b16 %v398
  %v538 = vunpack.c.l.b16 %v399
  %v539 = vunpack.c.l.b16 %v400
  %v540 = vunpack.c.l.b16 %v401
  %v541 = vunpack.c.l.b16 %v402
  %v542 = vunpack.c.l.b16 %v403
  %v543 = vunpack.c.l.b16 %v404
  %v544 = vunpack.c.l.b16 %v405
  %v545 = vunpack.c.l.b16 %v406
  %v546 = vunpack.c.l.b16 %v407
  %v547 = vunpack.c.l.b16 %v408
  %v548 = vpack.c.b16 %v533, %v532
  %v549 = vpack.c.b16 %v535, %v534
  %v550 = vpack.c.b16 %v537, %v536
  %v551 = vpack.c.b16 %v539, %v538
  %v552 = vpack.c.b16 %v541, %v540
  %v553 = vpack.c.b16 %v543, %v542
  %v554 = vpack.c.b16 %v545, %v544
  %v555 = vpack.c.b16 %v547, %v546
  %564 = vmatprep.subr.bf16.mxu0 0
  %565 = vmatpush1.bf16.msra.mxu0 %v555
  %566 = vmatprep.subr.bf16.mxu0 0
  %567 = vmatpush1.bf16.msra.mxu0 %v554
  %568 = vmatprep.subr.bf16.mxu0 0
  %569 = vmatpush1.bf16.msra.mxu0 %v553
  %570 = vmatprep.subr.bf16.mxu0 0
  %571 = vmatpush1.bf16.msra.mxu0 %v552
  %572 = vmatprep.subr.bf16.mxu0 0
  %573 = vmatpush1.bf16.msra.mxu0 %v551
  %574 = vmatprep.subr.bf16.mxu0 0
  %575 = vmatpush1.bf16.msra.mxu0 %v550
  %576 = vmatprep.subr.bf16.mxu0 0
  %577 = vmatpush1.bf16.msra.mxu0 %v549
  %578 = vmatprep.subr.bf16.mxu0 0
  %579 = vmatpush1.bf16.msra.mxu0 %v548
  %580 = vmatprep.subr.bf16.mxu0 0
  %581 = vmatpush2.bf16.msra.mxu0 0
  %582 = vmatprep.subr.bf16.mxu0 0
  %583 = vmatpush2.bf16.msra.mxu0 0
  %584 = vmatprep.subr.bf16.mxu0 0
  %585 = vmatpush2.bf16.msra.mxu0 0
  %586 = vmatprep.subr.bf16.mxu0 0
  %587 = vmatpush2.bf16.msra.mxu0 0
  %588 = vmatprep.subr.bf16.mxu0 0
  %589 = vmatpush2.bf16.msra.mxu0 0
  %590 = vmatprep.subr.bf16.mxu0 0
  %591 = vmatpush2.bf16.msra.mxu0 0
  %592 = vmatprep.subr.bf16.mxu0 0
  %593 = vmatpush2.bf16.msra.mxu0 0
  %594 = vmatprep.subr.bf16.mxu0 0
  %595 = vmatpush2.bf16.msra.mxu0 0
  %596 = vmatprep.mubr.bf16.mxu0 0
  %597 = vmatmul.mubr.bf16.gmra.mxu0 %v392
  %v598 = vpop.f32.mrf.mxu0
  %v599 = vadd.f32 %v510, %v598
  %v600 = vpop.f32.mrf.mxu0
  %v601 = vpop.f32.mrf.mxu0
  %v602 = vadd.f32 %v513, %v601
  %v603 = vpop.f32.mrf.mxu0
  %604 = vdwg.mxu0
  %s605 = scalar_lea.vmem %s4, 128
  %v606 = vld [vmem:[%s605] sm:$0xf]
  %v607 = vld [vmem:[%s605 + $0x4] sm:$0xf]
  %v608 = vld [vmem:[%s605 + $0x8] sm:$0xf]
  %v609 = vld [vmem:[%s605 + $0xc] sm:$0xf]
  %v610 = vld [vmem:[%s605 + $0x10] sm:$0xf]
  %v611 = vld [vmem:[%s605 + $0x14] sm:$0xf]
  %v612 = vld [vmem:[%s605 + $0x18] sm:$0xf]
  %v613 = vld [vmem:[%s605 + $0x1c] sm:$0xf]
  %v614 = vld [vmem:[%s605 + $0x20] sm:$0xf]
  %v615 = vld [vmem:[%s605 + $0x24] sm:$0xf]
  %v616 = vld [vmem:[%s605 + $0x28] sm:$0xf]
  %v617 = vld [vmem:[%s605 + $0x2c] sm:$0xf]
  %v618 = vld [vmem:[%s605 + $0x30] sm:$0xf]
  %v619 = vld [vmem:[%s605 + $0x34] sm:$0xf]
  %v620 = vld [vmem:[%s605 + $0x38] sm:$0xf]
  %v621 = vld [vmem:[%s605 + $0x3c] sm:$0xf]
  %v638 = vunpack.c.l.b16 %v606
  %v639 = vunpack.c.l.b16 %v607
  %v640 = vunpack.c.l.b16 %v608
  %v641 = vunpack.c.l.b16 %v609
  %v642 = vunpack.c.l.b16 %v610
  %v643 = vunpack.c.l.b16 %v611
  %v644 = vunpack.c.l.b16 %v612
  %v645 = vunpack.c.l.b16 %v613
  %v646 = vunpack.c.l.b16 %v614
  %v647 = vunpack.c.l.b16 %v615
  %v648 = vunpack.c.l.b16 %v616
  %v649 = vunpack.c.l.b16 %v617
  %v650 = vunpack.c.l.b16 %v618
  %v651 = vunpack.c.l.b16 %v619
  %v652 = vunpack.c.l.b16 %v620
  %v653 = vunpack.c.l.b16 %v621
  %v654 = vpack.c.b16 %v639, %v638
  %v655 = vpack.c.b16 %v641, %v640
  %v656 = vpack.c.b16 %v643, %v642
  %v657 = vpack.c.b16 %v645, %v644
  %v658 = vpack.c.b16 %v647, %v646
  %v659 = vpack.c.b16 %v649, %v648
  %v660 = vpack.c.b16 %v651, %v650
  %v661 = vpack.c.b16 %v653, %v652
  %670 = vmatprep.subr.bf16.mxu0 0
  %671 = vmatpush1.bf16.msra.mxu0 %v661
  %672 = vmatprep.subr.bf16.mxu0 0
  %673 = vmatpush1.bf16.msra.mxu0 %v660
  %674 = vmatprep.subr.bf16.mxu0 0
  %675 = vmatpush1.bf16.msra.mxu0 %v659
  %676 = vmatprep.subr.bf16.mxu0 0
  %677 = vmatpush1.bf16.msra.mxu0 %v658
  %678 = vmatprep.subr.bf16.mxu0 0
  %679 = vmatpush1.bf16.msra.mxu0 %v657
  %680 = vmatprep.subr.bf16.mxu0 0
  %681 = vmatpush1.bf16.msra.mxu0 %v656
  %682 = vmatprep.subr.bf16.mxu0 0
  %683 = vmatpush1.bf16.msra.mxu0 %v655
  %684 = vmatprep.subr.bf16.mxu0 0
  %685 = vmatpush1.bf16.msra.mxu0 %v654
  %686 = vmatprep.subr.bf16.mxu0 0
  %687 = vmatpush2.bf16.msra.mxu0 0
  %688 = vmatprep.subr.bf16.mxu0 0
  %689 = vmatpush2.bf16.msra.mxu0 0
  %690 = vmatprep.subr.bf16.mxu0 0
  %691 = vmatpush2.bf16.msra.mxu0 0
  %692 = vmatprep.subr.bf16.mxu0 0
  %693 = vmatpush2.bf16.msra.mxu0 0
  %694 = vmatprep.subr.bf16.mxu0 0
  %695 = vmatpush2.bf16.msra.mxu0 0
  %696 = vmatprep.subr.bf16.mxu0 0
  %697 = vmatpush2.bf16.msra.mxu0 0
  %698 = vmatprep.subr.bf16.mxu0 0
  %699 = vmatpush2.bf16.msra.mxu0 0
  %700 = vmatprep.subr.bf16.mxu0 0
  %701 = vmatpush2.bf16.msra.mxu0 0
  %702 = vmatprep.mubr.bf16.mxu0 0
  %703 = vmatmul.mubr.bf16.gmra.mxu0 %v392
  %v704 = vpop.f32.mrf.mxu0
  %v705 = vadd.f32 0.0, %v704
  %v706 = vpop.f32.mrf.mxu0
  %v707 = vpop.f32.mrf.mxu0
  %v708 = vadd.f32 0.0, %v707
  %v709 = vpop.f32.mrf.mxu0
  %710 = vdwg.mxu0
  %v711 = vadd.f32 %v599, %v705
  %v712 = vadd.f32 %v602, %v708
  %v713 = vld [vmem:[%s5] sm:$0x1]
  %v715 = vlaneseq
  %v716 = vshrl.u32 %v715, 7
  %v717 = vsub.s32 0, %v716
  %v718 = vrot.slane %v713, %v717
  %v720 = vmul.f32 %v711, %v718
  %v721 = vmul.f32 %v712, %v718
  %v722 = vld [vmem:[%s6] sm:$0x1]
  %v724 = vlaneseq
  %v725 = vshrl.u32 %v724, 7
  %v726 = vsub.s32 0, %v725
  %v727 = vrot.slane %v722, %v726
  %v729 = vadd.f32 %v720, %v727
  %v730 = vadd.f32 %v721, %v727
  %v731 = vunpack.c.l.bf16 %v28
  %v732 = vunpack.c.l.bf16 %v29
  %v733 = vadd.f32 %v729, %v731
  %v734 = vadd.f32 %v730, %v732
  %v735 = vmax.f32 %v733, 0.0
  %v736 = vmax.f32 %v734, 0.0
  %v737 = vpack.c.bf16 %v736, %v735
  %v739 = vunpack.c.l.b16 %v737
  %v740 = vunpack.c.h.b16 %v737
  %v741 = vpack.c.b16 %v739, %v739
  %v742 = vpack.c.b16 %v740, %v740
  %745 = vst [vmem:[%s7] sm:$0xf] %v741
  %746 = vst [vmem:[%s7 + $0x4] sm:$0xf] %v742
  // Predicated region
  $region30: #{resnet1d_forward.18} parent=0 // pred_check
    _
  $region31: #{resnet1d_forward.18} parent=0 // pred_check_branch
    %748 = sbr.rel (0) target = $region33
  $region32: #{resnet1d_forward.18} parent=0 // pred_region
    _
  $region33: #{resnet1d_forward.18} parent=0 // pred_fallthru
    _
  // Predicated region
  $region34: #{resnet1d_forward.18} parent=0 // pred_check
    _
  $region35: #{resnet1d_forward.18} parent=0 // pred_check_branch
    %750 = sbr.rel (0) target = $region37
  $region36: #{resnet1d_forward.18} parent=0 // pred_region
    _
  $region37: #{resnet1d_forward.18} parent=0 // pred_fallthru
    _

// kernel: resnet1d_forward.17
$region0: #{resnet1d_forward.17}
  #allocation0 [shape = 'u32[]', space=smem, size = 0x4, offset = 0x4, fixed_abs, tag = 'smem constant byte address 0x4 - core index']
  #allocation1 [shape = 'u32[144,128]{1,0:T(1,128)}', space=vmem, size = 0x12000, scoped, tag = 'internal scratch']
  %s0 = inlined_call_operand.vmem [shape: bf16[4,16,256], index: 0, kind: input, shape index: {}]
  %s1 = inlined_call_operand.vmem [shape: bf16[3,256,128], index: 1, kind: input, shape index: {}]
  %s2 = inlined_call_operand.vmem [shape: f32[1,128], index: 2, kind: input, shape index: {}, may-alias: {2,5,8}]
  %s3 = inlined_call_operand.vmem [shape: f32[1,128], index: 3, kind: input, shape index: {}, may-alias: {3,6,9}]
  %s4 = inlined_call_operand.vmem [shape: bf16[3,128,128], index: 4, kind: input, shape index: {}]
  %s5 = inlined_call_operand.vmem [shape: f32[1,128], index: 5, kind: input, shape index: {}, may-alias: {2,5,8}]
  %s6 = inlined_call_operand.vmem [shape: f32[1,128], index: 6, kind: input, shape index: {}, may-alias: {3,6,9}]
  %s7 = inlined_call_operand.vmem [shape: bf16[1,256,128], index: 7, kind: input, shape index: {}]
  %s8 = inlined_call_operand.vmem [shape: f32[1,128], index: 8, kind: input, shape index: {}, may-alias: {2,5,8}]
  %s9 = inlined_call_operand.vmem [shape: f32[1,128], index: 9, kind: input, shape index: {}, may-alias: {3,6,9}]
  %s10 = inlined_call_operand.vmem [shape: bf16[1,16,128], index: 10, kind: output, shape index: {}]
  %s11 = sld [smem:[#allocation0]]
  $region50: #{resnet1d_forward.17} parent=0
    _
  %s13 = ssub.s32 1, %s11
  %s14 = scalar_select 0, %s13, %s11
  // Predicated region
  $region2: #{resnet1d_forward.17} parent=0 // pred_check
    _
  $region3: #{resnet1d_forward.17} parent=0 // pred_check_branch
    %16 = sbr.rel (0) target = $region5
  $region4: #{resnet1d_forward.17} parent=0 // pred_region
    _
  $region5: #{resnet1d_forward.17} parent=0 // pred_fallthru
    _
  // Predicated region
  $region6: #{resnet1d_forward.17} parent=0 // pred_check
    _
  $region7: #{resnet1d_forward.17} parent=0 // pred_check_branch
    %18 = sbr.rel (0) target = $region9
  $region8: #{resnet1d_forward.17} parent=0 // pred_region
    _
  $region9: #{resnet1d_forward.17} parent=0 // pred_fallthru
    _
  // Predicated region
  $region10: #{resnet1d_forward.17} parent=0 // pred_check
    _
  $region11: #{resnet1d_forward.17} parent=0 // pred_check_branch
    %20 = sbr.rel (0) target = $region13
  $region12: #{resnet1d_forward.17} parent=0 // pred_region
    _
  $region13: #{resnet1d_forward.17} parent=0 // pred_fallthru
    _
  // Predicated region
  $region14: #{resnet1d_forward.17} parent=0 // pred_check
    _
  $region15: #{resnet1d_forward.17} parent=0 // pred_check_branch
    %22 = sbr.rel (0) target = $region17
  $region16: #{resnet1d_forward.17} parent=0 // pred_region
    _
  $region17: #{resnet1d_forward.17} parent=0 // pred_fallthru
    _
  // Predicated region
  $region18: #{resnet1d_forward.17} parent=0 // pred_check
    _
  $region19: #{resnet1d_forward.17} parent=0 // pred_check_branch
    %24 = sbr.rel (0) target = $region21
  $region20: #{resnet1d_forward.17} parent=0 // pred_region
    _
  $region21: #{resnet1d_forward.17} parent=0 // pred_fallthru
    _
  // Predicated region
  $region22: #{resnet1d_forward.17} parent=0 // pred_check
    _
  $region23: #{resnet1d_forward.17} parent=0 // pred_check_branch
    %26 = sbr.rel (0) target = $region25
  $region24: #{resnet1d_forward.17} parent=0 // pred_region
    _
  $region25: #{resnet1d_forward.17} parent=0 // pred_fallthru
    _
  // Predicated region
  $region26: #{resnet1d_forward.17} parent=0 // pred_check
    _
  $region27: #{resnet1d_forward.17} parent=0 // pred_check_branch
    %28 = sbr.rel (0) target = $region29
  $region28: #{resnet1d_forward.17} parent=0 // pred_region
    _
  $region29: #{resnet1d_forward.17} parent=0 // pred_fallthru
    _
  // Predicated region
  $region30: #{resnet1d_forward.17} parent=0 // pred_check
    _
  $region31: #{resnet1d_forward.17} parent=0 // pred_check_branch
    %30 = sbr.rel (0) target = $region33
  $region32: #{resnet1d_forward.17} parent=0 // pred_region
    _
  $region33: #{resnet1d_forward.17} parent=0 // pred_fallthru
    _
  // Predicated region
  $region34: #{resnet1d_forward.17} parent=0 // pred_check
    _
  $region35: #{resnet1d_forward.17} parent=0 // pred_check_branch
    %32 = sbr.rel (0) target = $region37
  $region36: #{resnet1d_forward.17} parent=0 // pred_region
    _
  $region37: #{resnet1d_forward.17} parent=0 // pred_fallthru
    _
  // Predicated region
  $region38: #{resnet1d_forward.17} parent=0 // pred_check
    _
  $region39: #{resnet1d_forward.17} parent=0 // pred_check_branch
    %34 = sbr.rel (0) target = $region41
  $region40: #{resnet1d_forward.17} parent=0 // pred_region
    _
  $region41: #{resnet1d_forward.17} parent=0 // pred_fallthru
    _
  %s36 = scalar_lea.vmem %s0, 16
  %v37 = vld [vmem:[%s36] sm:$0xff]
  %v38 = vld [vmem:[%s36 + $0x8] sm:$0xff]
  %v39 = vld [vmem:[%s0] sm:$0xff]
  %v40 = vld [vmem:[%s0 + $0x8] sm:$0xff]
  %v41 = vld [vmem:[%s1] sm:$0xf]
  %v42 = vld [vmem:[%s1 + $0x4] sm:$0xf]
  %v43 = vld [vmem:[%s1 + $0x8] sm:$0xf]
  %v44 = vld [vmem:[%s1 + $0xc] sm:$0xf]
  %v45 = vld [vmem:[%s1 + $0x10] sm:$0xf]
  %v46 = vld [vmem:[%s1 + $0x14] sm:$0xf]
  %v47 = vld [vmem:[%s1 + $0x18] sm:$0xf]
  %v48 = vld [vmem:[%s1 + $0x1c] sm:$0xf]
  %v49 = vld [vmem:[%s1 + $0x20] sm:$0xf]
  %v50 = vld [vmem:[%s1 + $0x24] sm:$0xf]
  %v51 = vld [vmem:[%s1 + $0x28] sm:$0xf]
  %v52 = vld [vmem:[%s1 + $0x2c] sm:$0xf]
  %v53 = vld [vmem:[%s1 + $0x30] sm:$0xf]
  %v54 = vld [vmem:[%s1 + $0x34] sm:$0xf]
  %v55 = vld [vmem:[%s1 + $0x38] sm:$0xf]
  %v56 = vld [vmem:[%s1 + $0x3c] sm:$0xf]
  %v57 = vld [vmem:[%s1 + $0x40] sm:$0xf]
  %v58 = vld [vmem:[%s1 + $0x44] sm:$0xf]
  %v59 = vld [vmem:[%s1 + $0x48] sm:$0xf]
  %v60 = vld [vmem:[%s1 + $0x4c] sm:$0xf]
  %v61 = vld [vmem:[%s1 + $0x50] sm:$0xf]
  %v62 = vld [vmem:[%s1 + $0x54] sm:$0xf]
  %v63 = vld [vmem:[%s1 + $0x58] sm:$0xf]
  %v64 = vld [vmem:[%s1 + $0x5c] sm:$0xf]
  %v65 = vld [vmem:[%s1 + $0x60] sm:$0xf]
  %v66 = vld [vmem:[%s1 + $0x64] sm:$0xf]
  %v67 = vld [vmem:[%s1 + $0x68] sm:$0xf]
  %v68 = vld [vmem:[%s1 + $0x6c] sm:$0xf]
  %v69 = vld [vmem:[%s1 + $0x70] sm:$0xf]
  %v70 = vld [vmem:[%s1 + $0x74] sm:$0xf]
  %v71 = vld [vmem:[%s1 + $0x78] sm:$0xf]
  %v72 = vld [vmem:[%s1 + $0x7c] sm:$0xf]
  %s73 = scalar_lea.vmem %s1, 128
  %v74 = vld [vmem:[%s73] sm:$0xf]
  %v75 = vld [vmem:[%s73 + $0x4] sm:$0xf]
  %v76 = vld [vmem:[%s73 + $0x8] sm:$0xf]
  %v77 = vld [vmem:[%s73 + $0xc] sm:$0xf]
  %v78 = vld [vmem:[%s73 + $0x10] sm:$0xf]
  %v79 = vld [vmem:[%s73 + $0x14] sm:$0xf]
  %v80 = vld [vmem:[%s73 + $0x18] sm:$0xf]
  %v81 = vld [vmem:[%s73 + $0x1c] sm:$0xf]
  %v82 = vld [vmem:[%s73 + $0x20] sm:$0xf]
  %v83 = vld [vmem:[%s73 + $0x24] sm:$0xf]
  %v84 = vld [vmem:[%s73 + $0x28] sm:$0xf]
  %v85 = vld [vmem:[%s73 + $0x2c] sm:$0xf]
  %v86 = vld [vmem:[%s73 + $0x30] sm:$0xf]
  %v87 = vld [vmem:[%s73 + $0x34] sm:$0xf]
  %v88 = vld [vmem:[%s73 + $0x38] sm:$0xf]
  %v89 = vld [vmem:[%s73 + $0x3c] sm:$0xf]
  %v90 = vld [vmem:[%s73 + $0x40] sm:$0xf]
  %v91 = vld [vmem:[%s73 + $0x44] sm:$0xf]
  %v92 = vld [vmem:[%s73 + $0x48] sm:$0xf]
  %v93 = vld [vmem:[%s73 + $0x4c] sm:$0xf]
  %v94 = vld [vmem:[%s73 + $0x50] sm:$0xf]
  %v95 = vld [vmem:[%s73 + $0x54] sm:$0xf]
  %v96 = vld [vmem:[%s73 + $0x58] sm:$0xf]
  %v97 = vld [vmem:[%s73 + $0x5c] sm:$0xf]
  %v98 = vld [vmem:[%s73 + $0x60] sm:$0xf]
  %v99 = vld [vmem:[%s73 + $0x64] sm:$0xf]
  %v100 = vld [vmem:[%s73 + $0x68] sm:$0xf]
  %v101 = vld [vmem:[%s73 + $0x6c] sm:$0xf]
  %v102 = vld [vmem:[%s73 + $0x70] sm:$0xf]
  %v103 = vld [vmem:[%s73 + $0x74] sm:$0xf]
  %v104 = vld [vmem:[%s73 + $0x78] sm:$0xf]
  %v105 = vld [vmem:[%s73 + $0x7c] sm:$0xf]
  %v108 = vunpack.c.l.b16 %v37
  %v109 = vunpack.c.h.b16 %v37
  %v110 = vunpack.c.l.b16 %v38
  %v111 = vunpack.c.h.b16 %v38
  %v112 = vpack.c.b16 %v110, %v108
  %v113 = vpack.c.b16 %v111, %v109
  %v148 = vunpack.c.l.b16 %v74
  %v149 = vunpack.c.l.b16 %v75
  %v150 = vunpack.c.l.b16 %v76
  %v151 = vunpack.c.l.b16 %v77
  %v152 = vunpack.c.l.b16 %v78
  %v153 = vunpack.c.l.b16 %v79
  %v154 = vunpack.c.l.b16 %v80
  %v155 = vunpack.c.l.b16 %v81
  %v156 = vunpack.c.l.b16 %v82
  %v157 = vunpack.c.l.b16 %v83
  %v158 = vunpack.c.l.b16 %v84
  %v159 = vunpack.c.l.b16 %v85
  %v160 = vunpack.c.l.b16 %v86
  %v161 = vunpack.c.l.b16 %v87
  %v162 = vunpack.c.l.b16 %v88
  %v163 = vunpack.c.l.b16 %v89
  %v164 = vunpack.c.l.b16 %v90
  %v165 = vunpack.c.l.b16 %v91
  %v166 = vunpack.c.l.b16 %v92
  %v167 = vunpack.c.l.b16 %v93
  %v168 = vunpack.c.l.b16 %v94
  %v169 = vunpack.c.l.b16 %v95
  %v170 = vunpack.c.l.b16 %v96
  %v171 = vunpack.c.l.b16 %v97
  %v172 = vunpack.c.l.b16 %v98
  %v173 = vunpack.c.l.b16 %v99
  %v174 = vunpack.c.l.b16 %v100
  %v175 = vunpack.c.l.b16 %v101
  %v176 = vunpack.c.l.b16 %v102
  %v177 = vunpack.c.l.b16 %v103
  %v178 = vunpack.c.l.b16 %v104
  %v179 = vunpack.c.l.b16 %v105
  %v180 = vpack.c.b16 %v149, %v148
  %v181 = vpack.c.b16 %v151, %v150
  %v182 = vpack.c.b16 %v153, %v152
  %v183 = vpack.c.b16 %v155, %v154
  %v184 = vpack.c.b16 %v157, %v156
  %v185 = vpack.c.b16 %v159, %v158
  %v186 = vpack.c.b16 %v161, %v160
  %v187 = vpack.c.b16 %v163, %v162
  %v188 = vpack.c.b16 %v165, %v164
  %v189 = vpack.c.b16 %v167, %v166
  %v190 = vpack.c.b16 %v169, %v168
  %v191 = vpack.c.b16 %v171, %v170
  %v192 = vpack.c.b16 %v173, %v172
  %v193 = vpack.c.b16 %v175, %v174
  %v194 = vpack.c.b16 %v177, %v176
  %v195 = vpack.c.b16 %v179, %v178
  %212 = vmatprep.subr.bf16.mxu0 0
  %213 = vmatpush1.bf16.msra.mxu0 %v187
  %214 = vmatprep.subr.bf16.mxu0 0
  %215 = vmatpush1.bf16.msra.mxu0 %v186
  %216 = vmatprep.subr.bf16.mxu0 0
  %217 = vmatpush1.bf16.msra.mxu0 %v185
  %218 = vmatprep.subr.bf16.mxu0 0
  %219 = vmatpush1.bf16.msra.mxu0 %v184
  %220 = vmatprep.subr.bf16.mxu0 0
  %221 = vmatpush1.bf16.msra.mxu0 %v183
  %222 = vmatprep.subr.bf16.mxu0 0
  %223 = vmatpush1.bf16.msra.mxu0 %v182
  %224 = vmatprep.subr.bf16.mxu0 0
  %225 = vmatpush1.bf16.msra.mxu0 %v181
  %226 = vmatprep.subr.bf16.mxu0 0
  %227 = vmatpush1.bf16.msra.mxu0 %v180
  %228 = vmatprep.subr.bf16.mxu0 0
  %229 = vmatpush2.bf16.msra.mxu0 %v195
  %230 = vmatprep.subr.bf16.mxu0 0
  %231 = vmatpush2.bf16.msra.mxu0 %v194
  %232 = vmatprep.subr.bf16.mxu0 0
  %233 = vmatpush2.bf16.msra.mxu0 %v193
  %234 = vmatprep.subr.bf16.mxu0 0
  %235 = vmatpush2.bf16.msra.mxu0 %v192
  %236 = vmatprep.subr.bf16.mxu0 0
  %237 = vmatpush2.bf16.msra.mxu0 %v191
  %238 = vmatprep.subr.bf16.mxu0 0
  %239 = vmatpush2.bf16.msra.mxu0 %v190
  %240 = vmatprep.subr.bf16.mxu0 0
  %241 = vmatpush2.bf16.msra.mxu0 %v189
  %242 = vmatprep.subr.bf16.mxu0 0
  %243 = vmatpush2.bf16.msra.mxu0 %v188
  %244 = vmatprep.mubr.bf16.mxu0 %v113
  %245 = vmatmul.mubr.bf16.gmra.mxu0 %v112
  %v246 = vpop.f32.mrf.mxu0
  %v247 = vadd.f32 0.0, %v246
  %v248 = vpop.f32.mrf.mxu0
  %v249 = vpop.f32.mrf.mxu0
  %v250 = vadd.f32 0.0, %v249
  %v251 = vpop.f32.mrf.mxu0
  %252 = vdwg.mxu0
  %v255 = vunpack.c.l.b16 %v39
  %v256 = vunpack.c.h.b16 %v39
  %v257 = vunpack.c.l.b16 %v40
  %v258 = vunpack.c.h.b16 %v40
  %v259 = vpack.c.b16 %v257, %v255
  %v260 = vpack.c.b16 %v258, %v256
  %v295 = vunpack.c.l.b16 %v41
  %v296 = vunpack.c.l.b16 %v42
  %v297 = vunpack.c.l.b16 %v43
  %v298 = vunpack.c.l.b16 %v44
  %v299 = vunpack.c.l.b16 %v45
  %v300 = vunpack.c.l.b16 %v46
  %v301 = vunpack.c.l.b16 %v47
  %v302 = vunpack.c.l.b16 %v48
  %v303 = vunpack.c.l.b16 %v49
  %v304 = vunpack.c.l.b16 %v50
  %v305 = vunpack.c.l.b16 %v51
  %v306 = vunpack.c.l.b16 %v52
  %v307 = vunpack.c.l.b16 %v53
  %v308 = vunpack.c.l.b16 %v54
  %v309 = vunpack.c.l.b16 %v55
  %v310 = vunpack.c.l.b16 %v56
  %v311 = vunpack.c.l.b16 %v57
  %v312 = vunpack.c.l.b16 %v58
  %v313 = vunpack.c.l.b16 %v59
  %v314 = vunpack.c.l.b16 %v60
  %v315 = vunpack.c.l.b16 %v61
  %v316 = vunpack.c.l.b16 %v62
  %v317 = vunpack.c.l.b16 %v63
  %v318 = vunpack.c.l.b16 %v64
  %v319 = vunpack.c.l.b16 %v65
  %v320 = vunpack.c.l.b16 %v66
  %v321 = vunpack.c.l.b16 %v67
  %v322 = vunpack.c.l.b16 %v68
  %v323 = vunpack.c.l.b16 %v69
  %v324 = vunpack.c.l.b16 %v70
  %v325 = vunpack.c.l.b16 %v71
  %v326 = vunpack.c.l.b16 %v72
  %v327 = vpack.c.b16 %v296, %v295
  %v328 = vpack.c.b16 %v298, %v297
  %v329 = vpack.c.b16 %v300, %v299
  %v330 = vpack.c.b16 %v302, %v301
  %v331 = vpack.c.b16 %v304, %v303
  %v332 = vpack.c.b16 %v306, %v305
  %v333 = vpack.c.b16 %v308, %v307
  %v334 = vpack.c.b16 %v310, %v309
  %v335 = vpack.c.b16 %v312, %v311
  %v336 = vpack.c.b16 %v314, %v313
  %v337 = vpack.c.b16 %v316, %v315
  %v338 = vpack.c.b16 %v318, %v317
  %v339 = vpack.c.b16 %v320, %v319
  %v340 = vpack.c.b16 %v322, %v321
  %v341 = vpack.c.b16 %v324, %v323
  %v342 = vpack.c.b16 %v326, %v325
  %359 = vmatprep.subr.bf16.mxu0 0
  %360 = vmatpush1.bf16.msra.mxu0 %v334
  %361 = vmatprep.subr.bf16.mxu0 0
  %362 = vmatpush1.bf16.msra.mxu0 %v333
  %363 = vmatprep.subr.bf16.mxu0 0
  %364 = vmatpush1.bf16.msra.mxu0 %v332
  %365 = vmatprep.subr.bf16.mxu0 0
  %366 = vmatpush1.bf16.msra.mxu0 %v331
  %367 = vmatprep.subr.bf16.mxu0 0
  %368 = vmatpush1.bf16.msra.mxu0 %v330
  %369 = vmatprep.subr.bf16.mxu0 0
  %370 = vmatpush1.bf16.msra.mxu0 %v329
  %371 = vmatprep.subr.bf16.mxu0 0
  %372 = vmatpush1.bf16.msra.mxu0 %v328
  %373 = vmatprep.subr.bf16.mxu0 0
  %374 = vmatpush1.bf16.msra.mxu0 %v327
  %375 = vmatprep.subr.bf16.mxu0 0
  %376 = vmatpush2.bf16.msra.mxu0 %v342
  %377 = vmatprep.subr.bf16.mxu0 0
  %378 = vmatpush2.bf16.msra.mxu0 %v341
  %379 = vmatprep.subr.bf16.mxu0 0
  %380 = vmatpush2.bf16.msra.mxu0 %v340
  %381 = vmatprep.subr.bf16.mxu0 0
  %382 = vmatpush2.bf16.msra.mxu0 %v339
  %383 = vmatprep.subr.bf16.mxu0 0
  %384 = vmatpush2.bf16.msra.mxu0 %v338
  %385 = vmatprep.subr.bf16.mxu0 0
  %386 = vmatpush2.bf16.msra.mxu0 %v337
  %387 = vmatprep.subr.bf16.mxu0 0
  %388 = vmatpush2.bf16.msra.mxu0 %v336
  %389 = vmatprep.subr.bf16.mxu0 0
  %390 = vmatpush2.bf16.msra.mxu0 %v335
  %391 = vmatprep.mubr.bf16.mxu0 %v260
  %392 = vmatmul.mubr.bf16.gmra.mxu0 %v259
  %v393 = vpop.f32.mrf.mxu0
  %v394 = vadd.f32 %v247, %v393
  %v395 = vpop.f32.mrf.mxu0
  %v396 = vpop.f32.mrf.mxu0
  %v397 = vadd.f32 %v250, %v396
  %v398 = vpop.f32.mrf.mxu0
  %399 = vdwg.mxu0
  %s400 = scalar_lea.vmem %s0, 32
  %v401 = vld [vmem:[%s400] sm:$0xff]
  %v402 = vld [vmem:[%s400 + $0x8] sm:$0xff]
  %s403 = scalar_lea.vmem %s1, 256
  %v404 = vld [vmem:[%s403] sm:$0xf]
  %v405 = vld [vmem:[%s403 + $0x4] sm:$0xf]
  %v406 = vld [vmem:[%s403 + $0x8] sm:$0xf]
  %v407 = vld [vmem:[%s403 + $0xc] sm:$0xf]
  %v408 = vld [vmem:[%s403 + $0x10] sm:$0xf]
  %v409 = vld [vmem:[%s403 + $0x14] sm:$0xf]
  %v410 = vld [vmem:[%s403 + $0x18] sm:$0xf]
  %v411 = vld [vmem:[%s403 + $0x1c] sm:$0xf]
  %v412 = vld [vmem:[%s403 + $0x20] sm:$0xf]
  %v413 = vld [vmem:[%s403 + $0x24] sm:$0xf]
  %v414 = vld [vmem:[%s403 + $0x28] sm:$0xf]
  %v415 = vld [vmem:[%s403 + $0x2c] sm:$0xf]
  %v416 = vld [vmem:[%s403 + $0x30] sm:$0xf]
  %v417 = vld [vmem:[%s403 + $0x34] sm:$0xf]
  %v418 = vld [vmem:[%s403 + $0x38] sm:$0xf]
  %v419 = vld [vmem:[%s403 + $0x3c] sm:$0xf]
  %v420 = vld [vmem:[%s403 + $0x40] sm:$0xf]
  %v421 = vld [vmem:[%s403 + $0x44] sm:$0xf]
  %v422 = vld [vmem:[%s403 + $0x48] sm:$0xf]
  %v423 = vld [vmem:[%s403 + $0x4c] sm:$0xf]
  %v424 = vld [vmem:[%s403 + $0x50] sm:$0xf]
  %v425 = vld [vmem:[%s403 + $0x54] sm:$0xf]
  %v426 = vld [vmem:[%s403 + $0x58] sm:$0xf]
  %v427 = vld [vmem:[%s403 + $0x5c] sm:$0xf]
  %v428 = vld [vmem:[%s403 + $0x60] sm:$0xf]
  %v429 = vld [vmem:[%s403 + $0x64] sm:$0xf]
  %v430 = vld [vmem:[%s403 + $0x68] sm:$0xf]
  %v431 = vld [vmem:[%s403 + $0x6c] sm:$0xf]
  %v432 = vld [vmem:[%s403 + $0x70] sm:$0xf]
  %v433 = vld [vmem:[%s403 + $0x74] sm:$0xf]
  %v434 = vld [vmem:[%s403 + $0x78] sm:$0xf]
  %v435 = vld [vmem:[%s403 + $0x7c] sm:$0xf]
  %v438 = vunpack.c.l.b16 %v401
  %v439 = vunpack.c.h.b16 %v401
  %v440 = vunpack.c.l.b16 %v402
  %v441 = vunpack.c.h.b16 %v402
  %v442 = vpack.c.b16 %v440, %v438
  %v443 = vpack.c.b16 %v441, %v439
  %v478 = vunpack.c.l.b16 %v404
  %v479 = vunpack.c.l.b16 %v405
  %v480 = vunpack.c.l.b16 %v406
  %v481 = vunpack.c.l.b16 %v407
  %v482 = vunpack.c.l.b16 %v408
  %v483 = vunpack.c.l.b16 %v409
  %v484 = vunpack.c.l.b16 %v410
  %v485 = vunpack.c.l.b16 %v411
  %v486 = vunpack.c.l.b16 %v412
  %v487 = vunpack.c.l.b16 %v413
  %v488 = vunpack.c.l.b16 %v414
  %v489 = vunpack.c.l.b16 %v415
  %v490 = vunpack.c.l.b16 %v416
  %v491 = vunpack.c.l.b16 %v417
  %v492 = vunpack.c.l.b16 %v418
  %v493 = vunpack.c.l.b16 %v419
  %v494 = vunpack.c.l.b16 %v420
  %v495 = vunpack.c.l.b16 %v421
  %v496 = vunpack.c.l.b16 %v422
  %v497 = vunpack.c.l.b16 %v423
  %v498 = vunpack.c.l.b16 %v424
  %v499 = vunpack.c.l.b16 %v425
  %v500 = vunpack.c.l.b16 %v426
  %v501 = vunpack.c.l.b16 %v427
  %v502 = vunpack.c.l.b16 %v428
  %v503 = vunpack.c.l.b16 %v429
  %v504 = vunpack.c.l.b16 %v430
  %v505 = vunpack.c.l.b16 %v431
  %v506 = vunpack.c.l.b16 %v432
  %v507 = vunpack.c.l.b16 %v433
  %v508 = vunpack.c.l.b16 %v434
  %v509 = vunpack.c.l.b16 %v435
  %v510 = vpack.c.b16 %v479, %v478
  %v511 = vpack.c.b16 %v481, %v480
  %v512 = vpack.c.b16 %v483, %v482
  %v513 = vpack.c.b16 %v485, %v484
  %v514 = vpack.c.b16 %v487, %v486
  %v515 = vpack.c.b16 %v489, %v488
  %v516 = vpack.c.b16 %v491, %v490
  %v517 = vpack.c.b16 %v493, %v492
  %v518 = vpack.c.b16 %v495, %v494
  %v519 = vpack.c.b16 %v497, %v496
  %v520 = vpack.c.b16 %v499, %v498
  %v521 = vpack.c.b16 %v501, %v500
  %v522 = vpack.c.b16 %v503, %v502
  %v523 = vpack.c.b16 %v505, %v504
  %v524 = vpack.c.b16 %v507, %v506
  %v525 = vpack.c.b16 %v509, %v508
  %542 = vmatprep.subr.bf16.mxu0 0
  %543 = vmatpush1.bf16.msra.mxu0 %v517
  %544 = vmatprep.subr.bf16.mxu0 0
  %545 = vmatpush1.bf16.msra.mxu0 %v516
  %546 = vmatprep.subr.bf16.mxu0 0
  %547 = vmatpush1.bf16.msra.mxu0 %v515
  %548 = vmatprep.subr.bf16.mxu0 0
  %549 = vmatpush1.bf16.msra.mxu0 %v514
  %550 = vmatprep.subr.bf16.mxu0 0
  %551 = vmatpush1.bf16.msra.mxu0 %v513
  %552 = vmatprep.subr.bf16.mxu0 0
  %553 = vmatpush1.bf16.msra.mxu0 %v512
  %554 = vmatprep.subr.bf16.mxu0 0
  %555 = vmatpush1.bf16.msra.mxu0 %v511
  %556 = vmatprep.subr.bf16.mxu0 0
  %557 = vmatpush1.bf16.msra.mxu0 %v510
  %558 = vmatprep.subr.bf16.mxu0 0
  %559 = vmatpush2.bf16.msra.mxu0 %v525
  %560 = vmatprep.subr.bf16.mxu0 0
  %561 = vmatpush2.bf16.msra.mxu0 %v524
  %562 = vmatprep.subr.bf16.mxu0 0
  %563 = vmatpush2.bf16.msra.mxu0 %v523
  %564 = vmatprep.subr.bf16.mxu0 0
  %565 = vmatpush2.bf16.msra.mxu0 %v522
  %566 = vmatprep.subr.bf16.mxu0 0
  %567 = vmatpush2.bf16.msra.mxu0 %v521
  %568 = vmatprep.subr.bf16.mxu0 0
  %569 = vmatpush2.bf16.msra.mxu0 %v520
  %570 = vmatprep.subr.bf16.mxu0 0
  %571 = vmatpush2.bf16.msra.mxu0 %v519
  %572 = vmatprep.subr.bf16.mxu0 0
  %573 = vmatpush2.bf16.msra.mxu0 %v518
  %574 = vmatprep.mubr.bf16.mxu0 %v443
  %575 = vmatmul.mubr.bf16.gmra.mxu0 %v442
  %v576 = vpop.f32.mrf.mxu0
  %v577 = vadd.f32 0.0, %v576
  %v578 = vpop.f32.mrf.mxu0
  %v579 = vpop.f32.mrf.mxu0
  %v580 = vadd.f32 0.0, %v579
  %v581 = vpop.f32.mrf.mxu0
  %582 = vdwg.mxu0
  %v583 = vadd.f32 %v394, %v577
  %v584 = vadd.f32 %v397, %v580
  %v585 = vld [vmem:[%s2] sm:$0x1]
  %v587 = vlaneseq
  %v588 = vshrl.u32 %v587, 7
  %v589 = vsub.s32 0, %v588
  %v590 = vrot.slane %v585, %v589
  %v592 = vmul.f32 %v583, %v590
  %v593 = vmul.f32 %v584, %v590
  %v594 = vld [vmem:[%s3] sm:$0x1]
  %v596 = vlaneseq
  %v597 = vshrl.u32 %v596, 7
  %v598 = vsub.s32 0, %v597
  %v599 = vrot.slane %v594, %v598
  %v601 = vadd.f32 %v592, %v599
  %v602 = vadd.f32 %v593, %v599
  %v603 = vmax.f32 %v601, 0.0
  %v604 = vmax.f32 %v602, 0.0
  %v605 = vpack.c.bf16 0.0, 0.0
  %v606 = vld [vmem:[%s4] sm:$0xf]
  %v607 = vld [vmem:[%s4 + $0x4] sm:$0xf]
  %v608 = vld [vmem:[%s4 + $0x8] sm:$0xf]
  %v609 = vld [vmem:[%s4 + $0xc] sm:$0xf]
  %v610 = vld [vmem:[%s4 + $0x10] sm:$0xf]
  %v611 = vld [vmem:[%s4 + $0x14] sm:$0xf]
  %v612 = vld [vmem:[%s4 + $0x18] sm:$0xf]
  %v613 = vld [vmem:[%s4 + $0x1c] sm:$0xf]
  %v614 = vld [vmem:[%s4 + $0x20] sm:$0xf]
  %v615 = vld [vmem:[%s4 + $0x24] sm:$0xf]
  %v616 = vld [vmem:[%s4 + $0x28] sm:$0xf]
  %v617 = vld [vmem:[%s4 + $0x2c] sm:$0xf]
  %v618 = vld [vmem:[%s4 + $0x30] sm:$0xf]
  %v619 = vld [vmem:[%s4 + $0x34] sm:$0xf]
  %v620 = vld [vmem:[%s4 + $0x38] sm:$0xf]
  %v621 = vld [vmem:[%s4 + $0x3c] sm:$0xf]
  %v622 = vpack.c.bf16 %v604, %v603
  %s623 = scalar_lea.vmem %s4, 64
  %v624 = vld [vmem:[%s623] sm:$0xf]
  %v625 = vld [vmem:[%s623 + $0x4] sm:$0xf]
  %v626 = vld [vmem:[%s623 + $0x8] sm:$0xf]
  %v627 = vld [vmem:[%s623 + $0xc] sm:$0xf]
  %v628 = vld [vmem:[%s623 + $0x10] sm:$0xf]
  %v629 = vld [vmem:[%s623 + $0x14] sm:$0xf]
  %v630 = vld [vmem:[%s623 + $0x18] sm:$0xf]
  %v631 = vld [vmem:[%s623 + $0x1c] sm:$0xf]
  %v632 = vld [vmem:[%s623 + $0x20] sm:$0xf]
  %v633 = vld [vmem:[%s623 + $0x24] sm:$0xf]
  %v634 = vld [vmem:[%s623 + $0x28] sm:$0xf]
  %v635 = vld [vmem:[%s623 + $0x2c] sm:$0xf]
  %v636 = vld [vmem:[%s623 + $0x30] sm:$0xf]
  %v637 = vld [vmem:[%s623 + $0x34] sm:$0xf]
  %v638 = vld [vmem:[%s623 + $0x38] sm:$0xf]
  %v639 = vld [vmem:[%s623 + $0x3c] sm:$0xf]
  %v656 = vunpack.c.l.b16 %v624
  %v657 = vunpack.c.l.b16 %v625
  %v658 = vunpack.c.l.b16 %v626
  %v659 = vunpack.c.l.b16 %v627
  %v660 = vunpack.c.l.b16 %v628
  %v661 = vunpack.c.l.b16 %v629
  %v662 = vunpack.c.l.b16 %v630
  %v663 = vunpack.c.l.b16 %v631
  %v664 = vunpack.c.l.b16 %v632
  %v665 = vunpack.c.l.b16 %v633
  %v666 = vunpack.c.l.b16 %v634
  %v667 = vunpack.c.l.b16 %v635
  %v668 = vunpack.c.l.b16 %v636
  %v669 = vunpack.c.l.b16 %v637
  %v670 = vunpack.c.l.b16 %v638
  %v671 = vunpack.c.l.b16 %v639
  %v672 = vpack.c.b16 %v657, %v656
  %v673 = vpack.c.b16 %v659, %v658
  %v674 = vpack.c.b16 %v661, %v660
  %v675 = vpack.c.b16 %v663, %v662
  %v676 = vpack.c.b16 %v665, %v664
  %v677 = vpack.c.b16 %v667, %v666
  %v678 = vpack.c.b16 %v669, %v668
  %v679 = vpack.c.b16 %v671, %v670
  %688 = vmatprep.subr.bf16.mxu0 0
  %689 = vmatpush1.bf16.msra.mxu0 %v679
  %690 = vmatprep.subr.bf16.mxu0 0
  %691 = vmatpush1.bf16.msra.mxu0 %v678
  %692 = vmatprep.subr.bf16.mxu0 0
  %693 = vmatpush1.bf16.msra.mxu0 %v677
  %694 = vmatprep.subr.bf16.mxu0 0
  %695 = vmatpush1.bf16.msra.mxu0 %v676
  %696 = vmatprep.subr.bf16.mxu0 0
  %697 = vmatpush1.bf16.msra.mxu0 %v675
  %698 = vmatprep.subr.bf16.mxu0 0
  %699 = vmatpush1.bf16.msra.mxu0 %v674
  %700 = vmatprep.subr.bf16.mxu0 0
  %701 = vmatpush1.bf16.msra.mxu0 %v673
  %702 = vmatprep.subr.bf16.mxu0 0
  %703 = vmatpush1.bf16.msra.mxu0 %v672
  %704 = vmatprep.subr.bf16.mxu0 0
  %705 = vmatpush2.bf16.msra.mxu0 0
  %706 = vmatprep.subr.bf16.mxu0 0
  %707 = vmatpush2.bf16.msra.mxu0 0
  %708 = vmatprep.subr.bf16.mxu0 0
  %709 = vmatpush2.bf16.msra.mxu0 0
  %710 = vmatprep.subr.bf16.mxu0 0
  %711 = vmatpush2.bf16.msra.mxu0 0
  %712 = vmatprep.subr.bf16.mxu0 0
  %713 = vmatpush2.bf16.msra.mxu0 0
  %714 = vmatprep.subr.bf16.mxu0 0
  %715 = vmatpush2.bf16.msra.mxu0 0
  %716 = vmatprep.subr.bf16.mxu0 0
  %717 = vmatpush2.bf16.msra.mxu0 0
  %718 = vmatprep.subr.bf16.mxu0 0
  %719 = vmatpush2.bf16.msra.mxu0 0
  %720 = vmatprep.mubr.bf16.mxu0 0
  %721 = vmatmul.mubr.bf16.gmra.mxu0 %v622
  %v722 = vpop.f32.mrf.mxu0
  %v723 = vadd.f32 0.0, %v722
  %v724 = vpop.f32.mrf.mxu0
  %v725 = vpop.f32.mrf.mxu0
  %v726 = vadd.f32 0.0, %v725
  %v727 = vpop.f32.mrf.mxu0
  %728 = vdwg.mxu0
  %v745 = vunpack.c.l.b16 %v606
  %v746 = vunpack.c.l.b16 %v607
  %v747 = vunpack.c.l.b16 %v608
  %v748 = vunpack.c.l.b16 %v609
  %v749 = vunpack.c.l.b16 %v610
  %v750 = vunpack.c.l.b16 %v611
  %v751 = vunpack.c.l.b16 %v612
  %v752 = vunpack.c.l.b16 %v613
  %v753 = vunpack.c.l.b16 %v614
  %v754 = vunpack.c.l.b16 %v615
  %v755 = vunpack.c.l.b16 %v616
  %v756 = vunpack.c.l.b16 %v617
  %v757 = vunpack.c.l.b16 %v618
  %v758 = vunpack.c.l.b16 %v619
  %v759 = vunpack.c.l.b16 %v620
  %v760 = vunpack.c.l.b16 %v621
  %v761 = vpack.c.b16 %v746, %v745
  %v762 = vpack.c.b16 %v748, %v747
  %v763 = vpack.c.b16 %v750, %v749
  %v764 = vpack.c.b16 %v752, %v751
  %v765 = vpack.c.b16 %v754, %v753
  %v766 = vpack.c.b16 %v756, %v755
  %v767 = vpack.c.b16 %v758, %v757
  %v768 = vpack.c.b16 %v760, %v759
  %777 = vmatprep.subr.bf16.mxu0 0
  %778 = vmatpush1.bf16.msra.mxu0 %v768
  %779 = vmatprep.subr.bf16.mxu0 0
  %780 = vmatpush1.bf16.msra.mxu0 %v767
  %781 = vmatprep.subr.bf16.mxu0 0
  %782 = vmatpush1.bf16.msra.mxu0 %v766
  %783 = vmatprep.subr.bf16.mxu0 0
  %784 = vmatpush1.bf16.msra.mxu0 %v765
  %785 = vmatprep.subr.bf16.mxu0 0
  %786 = vmatpush1.bf16.msra.mxu0 %v764
  %787 = vmatprep.subr.bf16.mxu0 0
  %788 = vmatpush1.bf16.msra.mxu0 %v763
  %789 = vmatprep.subr.bf16.mxu0 0
  %790 = vmatpush1.bf16.msra.mxu0 %v762
  %791 = vmatprep.subr.bf16.mxu0 0
  %792 = vmatpush1.bf16.msra.mxu0 %v761
  %793 = vmatprep.subr.bf16.mxu0 0
  %794 = vmatpush2.bf16.msra.mxu0 0
  %795 = vmatprep.subr.bf16.mxu0 0
  %796 = vmatpush2.bf16.msra.mxu0 0
  %797 = vmatprep.subr.bf16.mxu0 0
  %798 = vmatpush2.bf16.msra.mxu0 0
  %799 = vmatprep.subr.bf16.mxu0 0
  %800 = vmatpush2.bf16.msra.mxu0 0
  %801 = vmatprep.subr.bf16.mxu0 0
  %802 = vmatpush2.bf16.msra.mxu0 0
  %803 = vmatprep.subr.bf16.mxu0 0
  %804 = vmatpush2.bf16.msra.mxu0 0
  %805 = vmatprep.subr.bf16.mxu0 0
  %806 = vmatpush2.bf16.msra.mxu0 0
  %807 = vmatprep.subr.bf16.mxu0 0
  %808 = vmatpush2.bf16.msra.mxu0 0
  %809 = vmatprep.mubr.bf16.mxu0 0
  %810 = vmatmul.mubr.bf16.gmra.mxu0 %v605
  %v811 = vpop.f32.mrf.mxu0
  %v812 = vadd.f32 %v723, %v811
  %v813 = vpop.f32.mrf.mxu0
  %v814 = vpop.f32.mrf.mxu0
  %v815 = vadd.f32 %v726, %v814
  %v816 = vpop.f32.mrf.mxu0
  %817 = vdwg.mxu0
  %s818 = scalar_lea.vmem %s4, 128
  %v819 = vld [vmem:[%s818] sm:$0xf]
  %v820 = vld [vmem:[%s818 + $0x4] sm:$0xf]
  %v821 = vld [vmem:[%s818 + $0x8] sm:$0xf]
  %v822 = vld [vmem:[%s818 + $0xc] sm:$0xf]
  %v823 = vld [vmem:[%s818 + $0x10] sm:$0xf]
  %v824 = vld [vmem:[%s818 + $0x14] sm:$0xf]
  %v825 = vld [vmem:[%s818 + $0x18] sm:$0xf]
  %v826 = vld [vmem:[%s818 + $0x1c] sm:$0xf]
  %v827 = vld [vmem:[%s818 + $0x20] sm:$0xf]
  %v828 = vld [vmem:[%s818 + $0x24] sm:$0xf]
  %v829 = vld [vmem:[%s818 + $0x28] sm:$0xf]
  %v830 = vld [vmem:[%s818 + $0x2c] sm:$0xf]
  %v831 = vld [vmem:[%s818 + $0x30] sm:$0xf]
  %v832 = vld [vmem:[%s818 + $0x34] sm:$0xf]
  %v833 = vld [vmem:[%s818 + $0x38] sm:$0xf]
  %v834 = vld [vmem:[%s818 + $0x3c] sm:$0xf]
  %v851 = vunpack.c.l.b16 %v819
  %v852 = vunpack.c.l.b16 %v820
  %v853 = vunpack.c.l.b16 %v821
  %v854 = vunpack.c.l.b16 %v822
  %v855 = vunpack.c.l.b16 %v823
  %v856 = vunpack.c.l.b16 %v824
  %v857 = vunpack.c.l.b16 %v825
  %v858 = vunpack.c.l.b16 %v826
  %v859 = vunpack.c.l.b16 %v827
  %v860 = vunpack.c.l.b16 %v828
  %v861 = vunpack.c.l.b16 %v829
  %v862 = vunpack.c.l.b16 %v830
  %v863 = vunpack.c.l.b16 %v831
  %v864 = vunpack.c.l.b16 %v832
  %v865 = vunpack.c.l.b16 %v833
  %v866 = vunpack.c.l.b16 %v834
  %v867 = vpack.c.b16 %v852, %v851
  %v868 = vpack.c.b16 %v854, %v853
  %v869 = vpack.c.b16 %v856, %v855
  %v870 = vpack.c.b16 %v858, %v857
  %v871 = vpack.c.b16 %v860, %v859
  %v872 = vpack.c.b16 %v862, %v861
  %v873 = vpack.c.b16 %v864, %v863
  %v874 = vpack.c.b16 %v866, %v865
  %883 = vmatprep.subr.bf16.mxu0 0
  %884 = vmatpush1.bf16.msra.mxu0 %v874
  %885 = vmatprep.subr.bf16.mxu0 0
  %886 = vmatpush1.bf16.msra.mxu0 %v873
  %887 = vmatprep.subr.bf16.mxu0 0
  %888 = vmatpush1.bf16.msra.mxu0 %v872
  %889 = vmatprep.subr.bf16.mxu0 0
  %890 = vmatpush1.bf16.msra.mxu0 %v871
  %891 = vmatprep.subr.bf16.mxu0 0
  %892 = vmatpush1.bf16.msra.mxu0 %v870
  %893 = vmatprep.subr.bf16.mxu0 0
  %894 = vmatpush1.bf16.msra.mxu0 %v869
  %895 = vmatprep.subr.bf16.mxu0 0
  %896 = vmatpush1.bf16.msra.mxu0 %v868
  %897 = vmatprep.subr.bf16.mxu0 0
  %898 = vmatpush1.bf16.msra.mxu0 %v867
  %899 = vmatprep.subr.bf16.mxu0 0
  %900 = vmatpush2.bf16.msra.mxu0 0
  %901 = vmatprep.subr.bf16.mxu0 0
  %902 = vmatpush2.bf16.msra.mxu0 0
  %903 = vmatprep.subr.bf16.mxu0 0
  %904 = vmatpush2.bf16.msra.mxu0 0
  %905 = vmatprep.subr.bf16.mxu0 0
  %906 = vmatpush2.bf16.msra.mxu0 0
  %907 = vmatprep.subr.bf16.mxu0 0
  %908 = vmatpush2.bf16.msra.mxu0 0
  %909 = vmatprep.subr.bf16.mxu0 0
  %910 = vmatpush2.bf16.msra.mxu0 0
  %911 = vmatprep.subr.bf16.mxu0 0
  %912 = vmatpush2.bf16.msra.mxu0 0
  %913 = vmatprep.subr.bf16.mxu0 0
  %914 = vmatpush2.bf16.msra.mxu0 0
  %915 = vmatprep.mubr.bf16.mxu0 0
  %916 = vmatmul.mubr.bf16.gmra.mxu0 %v605
  %v917 = vpop.f32.mrf.mxu0
  %v918 = vadd.f32 0.0, %v917
  %v919 = vpop.f32.mrf.mxu0
  %v920 = vpop.f32.mrf.mxu0
  %v921 = vadd.f32 0.0, %v920
  %v922 = vpop.f32.mrf.mxu0
  %923 = vdwg.mxu0
  %v924 = vadd.f32 %v812, %v918
  %v925 = vadd.f32 %v815, %v921
  %v926 = vld [vmem:[%s5] sm:$0x1]
  %v928 = vlaneseq
  %v929 = vshrl.u32 %v928, 7
  %v930 = vsub.s32 0, %v929
  %v931 = vrot.slane %v926, %v930
  %v933 = vmul.f32 %v924, %v931
  %v934 = vmul.f32 %v925, %v931
  %v935 = vld [vmem:[%s6] sm:$0x1]
  %v937 = vlaneseq
  %v938 = vshrl.u32 %v937, 7
  %v939 = vsub.s32 0, %v938
  %v940 = vrot.slane %v935, %v939
  %v942 = vadd.f32 %v933, %v940
  %v943 = vadd.f32 %v934, %v940
  %v944 = vld [vmem:[%s7] sm:$0xf]
  %v945 = vld [vmem:[%s7 + $0x4] sm:$0xf]
  %v946 = vld [vmem:[%s7 + $0x8] sm:$0xf]
  %v947 = vld [vmem:[%s7 + $0xc] sm:$0xf]
  %v948 = vld [vmem:[%s7 + $0x10] sm:$0xf]
  %v949 = vld [vmem:[%s7 + $0x14] sm:$0xf]
  %v950 = vld [vmem:[%s7 + $0x18] sm:$0xf]
  %v951 = vld [vmem:[%s7 + $0x1c] sm:$0xf]
  %v952 = vld [vmem:[%s7 + $0x20] sm:$0xf]
  %v953 = vld [vmem:[%s7 + $0x24] sm:$0xf]
  %v954 = vld [vmem:[%s7 + $0x28] sm:$0xf]
  %v955 = vld [vmem:[%s7 + $0x2c] sm:$0xf]
  %v956 = vld [vmem:[%s7 + $0x30] sm:$0xf]
  %v957 = vld [vmem:[%s7 + $0x34] sm:$0xf]
  %v958 = vld [vmem:[%s7 + $0x38] sm:$0xf]
  %v959 = vld [vmem:[%s7 + $0x3c] sm:$0xf]
  %v960 = vld [vmem:[%s7 + $0x40] sm:$0xf]
  %v961 = vld [vmem:[%s7 + $0x44] sm:$0xf]
  %v962 = vld [vmem:[%s7 + $0x48] sm:$0xf]
  %v963 = vld [vmem:[%s7 + $0x4c] sm:$0xf]
  %v964 = vld [vmem:[%s7 + $0x50] sm:$0xf]
  %v965 = vld [vmem:[%s7 + $0x54] sm:$0xf]
  %v966 = vld [vmem:[%s7 + $0x58] sm:$0xf]
  %v967 = vld [vmem:[%s7 + $0x5c] sm:$0xf]
  %v968 = vld [vmem:[%s7 + $0x60] sm:$0xf]
  %v969 = vld [vmem:[%s7 + $0x64] sm:$0xf]
  %v970 = vld [vmem:[%s7 + $0x68] sm:$0xf]
  %v971 = vld [vmem:[%s7 + $0x6c] sm:$0xf]
  %v972 = vld [vmem:[%s7 + $0x70] sm:$0xf]
  %v973 = vld [vmem:[%s7 + $0x74] sm:$0xf]
  %v974 = vld [vmem:[%s7 + $0x78] sm:$0xf]
  %v975 = vld [vmem:[%s7 + $0x7c] sm:$0xf]
  %v1008 = vunpack.c.l.b16 %v944
  %v1009 = vunpack.c.l.b16 %v945
  %v1010 = vunpack.c.l.b16 %v946
  %v1011 = vunpack.c.l.b16 %v947
  %v1012 = vunpack.c.l.b16 %v948
  %v1013 = vunpack.c.l.b16 %v949
  %v1014 = vunpack.c.l.b16 %v950
  %v1015 = vunpack.c.l.b16 %v951
  %v1016 = vunpack.c.l.b16 %v952
  %v1017 = vunpack.c.l.b16 %v953
  %v1018 = vunpack.c.l.b16 %v954
  %v1019 = vunpack.c.l.b16 %v955
  %v1020 = vunpack.c.l.b16 %v956
  %v1021 = vunpack.c.l.b16 %v957
  %v1022 = vunpack.c.l.b16 %v958
  %v1023 = vunpack.c.l.b16 %v959
  %v1024 = vunpack.c.l.b16 %v960
  %v1025 = vunpack.c.l.b16 %v961
  %v1026 = vunpack.c.l.b16 %v962
  %v1027 = vunpack.c.l.b16 %v963
  %v1028 = vunpack.c.l.b16 %v964
  %v1029 = vunpack.c.l.b16 %v965
  %v1030 = vunpack.c.l.b16 %v966
  %v1031 = vunpack.c.l.b16 %v967
  %v1032 = vunpack.c.l.b16 %v968
  %v1033 = vunpack.c.l.b16 %v969
  %v1034 = vunpack.c.l.b16 %v970
  %v1035 = vunpack.c.l.b16 %v971
  %v1036 = vunpack.c.l.b16 %v972
  %v1037 = vunpack.c.l.b16 %v973
  %v1038 = vunpack.c.l.b16 %v974
  %v1039 = vunpack.c.l.b16 %v975
  %v1040 = vpack.c.b16 %v1009, %v1008
  %v1041 = vpack.c.b16 %v1011, %v1010
  %v1042 = vpack.c.b16 %v1013, %v1012
  %v1043 = vpack.c.b16 %v1015, %v1014
  %v1044 = vpack.c.b16 %v1017, %v1016
  %v1045 = vpack.c.b16 %v1019, %v1018
  %v1046 = vpack.c.b16 %v1021, %v1020
  %v1047 = vpack.c.b16 %v1023, %v1022
  %v1048 = vpack.c.b16 %v1025, %v1024
  %v1049 = vpack.c.b16 %v1027, %v1026
  %v1050 = vpack.c.b16 %v1029, %v1028
  %v1051 = vpack.c.b16 %v1031, %v1030
  %v1052 = vpack.c.b16 %v1033, %v1032
  %v1053 = vpack.c.b16 %v1035, %v1034
  %v1054 = vpack.c.b16 %v1037, %v1036
  %v1055 = vpack.c.b16 %v1039, %v1038
  %1072 = vmatprep.subr.bf16.mxu0 0
  %1073 = vmatpush1.bf16.msra.mxu0 %v1047
  %1074 = vmatprep.subr.bf16.mxu0 0
  %1075 = vmatpush1.bf16.msra.mxu0 %v1046
  %1076 = vmatprep.subr.bf16.mxu0 0
  %1077 = vmatpush1.bf16.msra.mxu0 %v1045
  %1078 = vmatprep.subr.bf16.mxu0 0
  %1079 = vmatpush1.bf16.msra.mxu0 %v1044
  %1080 = vmatprep.subr.bf16.mxu0 0
  %1081 = vmatpush1.bf16.msra.mxu0 %v1043
  %1082 = vmatprep.subr.bf16.mxu0 0
  %1083 = vmatpush1.bf16.msra.mxu0 %v1042
  %1084 = vmatprep.subr.bf16.mxu0 0
  %1085 = vmatpush1.bf16.msra.mxu0 %v1041
  %1086 = vmatprep.subr.bf16.mxu0 0
  %1087 = vmatpush1.bf16.msra.mxu0 %v1040
  %1088 = vmatprep.subr.bf16.mxu0 0
  %1089 = vmatpush2.bf16.msra.mxu0 %v1055
  %1090 = vmatprep.subr.bf16.mxu0 0
  %1091 = vmatpush2.bf16.msra.mxu0 %v1054
  %1092 = vmatprep.subr.bf16.mxu0 0
  %1093 = vmatpush2.bf16.msra.mxu0 %v1053
  %1094 = vmatprep.subr.bf16.mxu0 0
  %1095 = vmatpush2.bf16.msra.mxu0 %v1052
  %1096 = vmatprep.subr.bf16.mxu0 0
  %1097 = vmatpush2.bf16.msra.mxu0 %v1051
  %1098 = vmatprep.subr.bf16.mxu0 0
  %1099 = vmatpush2.bf16.msra.mxu0 %v1050
  %1100 = vmatprep.subr.bf16.mxu0 0
  %1101 = vmatpush2.bf16.msra.mxu0 %v1049
  %1102 = vmatprep.subr.bf16.mxu0 0
  %1103 = vmatpush2.bf16.msra.mxu0 %v1048
  %1104 = vmatprep.mubr.bf16.mxu0 %v113
  %1105 = vmatmul.mubr.bf16.gmra.mxu0 %v112
  %v1106 = vpop.f32.mrf.mxu0
  %v1107 = vadd.f32 0.0, %v1106
  %v1108 = vpop.f32.mrf.mxu0
  %v1109 = vpop.f32.mrf.mxu0
  %v1110 = vadd.f32 0.0, %v1109
  %v1111 = vpop.f32.mrf.mxu0
  %1112 = vdwg.mxu0
  %v1113 = vld [vmem:[%s8] sm:$0x1]
  %v1115 = vlaneseq
  %v1116 = vshrl.u32 %v1115, 7
  %v1117 = vsub.s32 0, %v1116
  %v1118 = vrot.slane %v1113, %v1117
  %v1120 = vmul.f32 %v1107, %v1118
  %v1121 = vmul.f32 %v1110, %v1118
  %v1122 = vld [vmem:[%s9] sm:$0x1]
  %v1124 = vlaneseq
  %v1125 = vshrl.u32 %v1124, 7
  %v1126 = vsub.s32 0, %v1125
  %v1127 = vrot.slane %v1122, %v1126
  %v1129 = vadd.f32 %v1120, %v1127
  %v1130 = vadd.f32 %v1121, %v1127
  %v1131 = vadd.f32 %v942, %v1129
  %v1132 = vadd.f32 %v943, %v1130
  %v1133 = vmax.f32 %v1131, 0.0
  %v1134 = vmax.f32 %v1132, 0.0
  %v1135 = vpack.c.bf16 %v1134, %v1133
  %v1137 = vunpack.c.l.b16 %v1135
  %v1138 = vunpack.c.h.b16 %v1135
  %v1139 = vpack.c.b16 %v1137, %v1137
  %v1140 = vpack.c.b16 %v1138, %v1138
  %1143 = vst [vmem:[%s10] sm:$0xf] %v1139
  %1144 = vst [vmem:[%s10 + $0x4] sm:$0xf] %v1140
  // Predicated region
  $region42: #{resnet1d_forward.17} parent=0 // pred_check
    _
  $region43: #{resnet1d_forward.17} parent=0 // pred_check_branch
    %1146 = sbr.rel (0) target = $region45
  $region44: #{resnet1d_forward.17} parent=0 // pred_region
    _
  $region45: #{resnet1d_forward.17} parent=0 // pred_fallthru
    _
  // Predicated region
  $region46: #{resnet1d_forward.17} parent=0 // pred_check
    _
  $region47: #{resnet1d_forward.17} parent=0 // pred_check_branch
    %1148 = sbr.rel (0) target = $region49
  $region48: #{resnet1d_forward.17} parent=0 // pred_region
    _
  $region49: #{resnet1d_forward.17} parent=0 // pred_fallthru
    _

// kernel: resnet1d_forward.19
$region0: #{resnet1d_forward.19}
  #allocation0 [shape = 'u32[]', space=smem, size = 0x4, offset = 0x4, fixed_abs, tag = 'smem constant byte address 0x4 - core index']
  #allocation1 [shape = 'u32[144,128]{1,0:T(1,128)}', space=vmem, size = 0x12000, scoped, tag = 'internal scratch']
  %s0 = inlined_call_operand.vmem [shape: bf16[1,16,128], index: 0, kind: input, shape index: {}]
  %s1 = inlined_call_operand.vmem [shape: f32[1,128], index: 1, kind: input, shape index: {}]
  %s2 = inlined_call_operand.vmem [shape: f32[1,128], index: 2, kind: input, shape index: {}]
  %s3 = inlined_call_operand.vmem [shape: f32[16,128], index: 3, kind: output, shape index: {}]
  %s4 = sld [smem:[#allocation0]]
  $region22: #{resnet1d_forward.19} parent=0
    _
  %s6 = ssub.s32 1, %s4
  %s7 = scalar_select 0, %s6, %s4
  // Predicated region
  $region2: #{resnet1d_forward.19} parent=0 // pred_check
    _
  $region3: #{resnet1d_forward.19} parent=0 // pred_check_branch
    %9 = sbr.rel (0) target = $region5
  $region4: #{resnet1d_forward.19} parent=0 // pred_region
    _
  $region5: #{resnet1d_forward.19} parent=0 // pred_fallthru
    _
  // Predicated region
  $region6: #{resnet1d_forward.19} parent=0 // pred_check
    _
  $region7: #{resnet1d_forward.19} parent=0 // pred_check_branch
    %11 = sbr.rel (0) target = $region9
  $region8: #{resnet1d_forward.19} parent=0 // pred_region
    _
  $region9: #{resnet1d_forward.19} parent=0 // pred_fallthru
    _
  // Predicated region
  $region10: #{resnet1d_forward.19} parent=0 // pred_check
    _
  $region11: #{resnet1d_forward.19} parent=0 // pred_check_branch
    %13 = sbr.rel (0) target = $region13
  $region12: #{resnet1d_forward.19} parent=0 // pred_region
    _
  $region13: #{resnet1d_forward.19} parent=0 // pred_fallthru
    _
  %v14 = vld [vmem:[%s0] sm:$0xf]
  %v15 = vld [vmem:[%s0 + $0x4] sm:$0xf]
  %v16 = vunpack.c.l.bf16 %v14
  %v17 = vunpack.c.l.bf16 %v15
  %v18 = vadd.f32 %v16, 0.0
  %v19 = vadd.f32 %v17, 0.0
  %v20 = vld [vmem:[%s1] sm:$0x1]
  %v22 = vlaneseq
  %v23 = vshrl.u32 %v22, 7
  %v24 = vsub.s32 0, %v23
  %v25 = vrot.slane %v20, %v24
  %v27 = vmul.f32 %v18, %v25
  %v28 = vmul.f32 %v19, %v25
  %v29 = vld [vmem:[%s2] sm:$0x1]
  %v31 = vlaneseq
  %v32 = vshrl.u32 %v31, 7
  %v33 = vsub.s32 0, %v32
  %v34 = vrot.slane %v29, %v33
  %v36 = vadd.f32 %v27, %v34
  %v37 = vadd.f32 %v28, %v34
  %38 = vst [vmem:[%s3] sm:$0xff] %v36
  %39 = vst [vmem:[%s3 + $0x8] sm:$0xff] %v37
  // Predicated region
  $region14: #{resnet1d_forward.19} parent=0 // pred_check
    _
  $region15: #{resnet1d_forward.19} parent=0 // pred_check_branch
    %41 = sbr.rel (0) target = $region17
  $region16: #{resnet1d_forward.19} parent=0 // pred_region
    _
  $region17: #{resnet1d_forward.19} parent=0 // pred_fallthru
    _
  // Predicated region
  $region18: #{resnet1d_forward.19} parent=0 // pred_check
    _
  $region19: #{resnet1d_forward.19} parent=0 // pred_check_branch
    %43 = sbr.rel (0) target = $region21
  $region20: #{resnet1d_forward.19} parent=0 // pred_region
    _
  $region21: #{resnet1d_forward.19} parent=0 // pred_fallthru
    _

</llo_original>
